<compile_context>
chip_gen: v5e
topology: v5e:2x2
jax: 0.10.0
libtpu: 0.0.40
codegen_flags: <defaults>
</compile_context>

<pallas_src>
import jax
import jax.numpy as jnp
from jax.experimental import pallas as pl
from jax.experimental.pallas import tpu as pltpu


def _leaky_relu(x, slope=0.2):
    # max(x, slope*x) == LeakyReLU(slope) for 0 < slope < 1; 2 VALU ops/elem.
    return jnp.maximum(x, slope * x)


def discriminator_kernel(x_ref, w1_ref, w2_ref, w3_ref, w4_ref, o_ref):
    # fc1..fc3: bf16 MXU operands, f32 accumulation, f32 activations
    # (v5e has no bf16 VPU).  The cast is a no-op if x was fed as bf16.
    x = x_ref[...].astype(jnp.bfloat16)
    h = _leaky_relu(jnp.dot(x, w1_ref[...], preferred_element_type=jnp.float32))
    h = _leaky_relu(jnp.dot(h.astype(jnp.bfloat16), w2_ref[...],
                            preferred_element_type=jnp.float32))
    h = _leaky_relu(jnp.dot(h.astype(jnp.bfloat16), w3_ref[...],
                            preferred_element_type=jnp.float32))   # (TM, 256) f32

    # fc4 (out_features = 1) + Sigmoid: keep the degenerate N=1 matmul off the
    # MXU and avoid the transpose -- broadcast-multiply by the (1, 256) weight
    # row on the VPU, lane-reduce to (TM, 1), exact sigmoid.
    logits = jnp.sum(h * w4_ref[...], axis=1, keepdims=True)       # (TM, 1) f32
    probs = 1.0 / (1.0 + jnp.exp(-logits))
    o_ref[...] = probs.astype(o_ref.dtype)


def prepare_params(w1, w2, w3, w4):
    """One-time parameter prep, hoisted out of the per-call path.

    PyTorch Linear weights are (out, in); fc1..fc3 are pre-transposed to
    (in, out) and cast to bf16 for the MXU.  fc4 stays as its (1, 256) f32 row
    (untransposed): it only feeds the f32 VPU broadcast-multiply + lane reduce.
    """
    return (
        jnp.asarray(w1.T, dtype=jnp.bfloat16),   # (n_in, 1024)
        jnp.asarray(w2.T, dtype=jnp.bfloat16),   # (1024, 512)
        jnp.asarray(w3.T, dtype=jnp.bfloat16),   # (512, 256)
        jnp.asarray(w4, dtype=jnp.float32),      # (1, 256)
    )


def _default_block_m():
    """512 on v6e/v7x (amortize per-step overhead), 256 on older/MXU-slower chips."""
    try:
        kind = jax.devices()[0].device_kind.lower()
    except Exception:
        return 256
    if any(v in kind for v in ("v2", "v3", "v4", "v5")):
        return 256
    return 512


def _pick_tile(B, block_m):
    """Batch rows per grid step.

    * B <= 128: one tile covering the full batch (block dim == array dim, so
      any B is layout-legal; megacore cannot be usefully fed at these sizes).
    * B > 128: a multiple of 128, capped at block_m and at ~B/2 so the grid
      has >= 2 steps (v7x megacore sharding; review item #1).
    """
    if B <= 128:
        return B
    half = (B // 2 // 128) * 128          # largest multiple of 128 <= B/2
    return min(block_m, max(128, half))


def vanilla_discriminator(x, params, *, n_in, block_m=None):
    """Forward pass.  x: any shape with total size B * n_in (f32 or bf16).

    For GAN training, concatenate the real and fake batches and make a single
    call (halves the fixed weight-DMA / call-setup cost per training step).
    """
    w1t, w2t, w3t, w4r = params
    x2 = x.reshape(-1, n_in)              # == x.view(-1, n_in)
    B = x2.shape[0]

    if block_m is None:
        block_m = _default_block_m()
    tm = _pick_tile(B, block_m)
    num_tiles = pl.cdiv(B, tm)            # last block may be partial: no jnp.pad

    d1 = w1t.shape[1]   # 1024
    d2 = w2t.shape[1]   # 512
    d3 = w3t.shape[1]   # 256

    def call(weight_mode):
        def w_spec(shape):
            # Constant index_map -> weights DMA'd once and stay VMEM-resident.
            return pl.BlockSpec(shape, lambda i: (0, 0), pipeline_mode=weight_mode)

        return pl.pallas_call(
            discriminator_kernel,
            out_shape=jax.ShapeDtypeStruct((B, 1), jnp.float32),
            grid=(num_tiles,),
            in_specs=[
                pl.BlockSpec((tm, n_in), lambda i: (i, 0)),   # x tile (pipelined)
                w_spec((n_in, d1)),
                w_spec((d1, d2)),
                w_spec((d2, d3)),
                w_spec((1, d3)),
            ],
            out_specs=pl.BlockSpec((tm, 1), lambda i: (i, 0)),
            compiler_params=pltpu.CompilerParams(
                dimension_semantics=("parallel",),            # megacore on v7x
            ),
        )(x2, w1t, w2t, w3t, w4r)

    try:
        # Single-buffer the resident weights (their blocks never change).
        out = call(pl.Buffered(1))
    except Exception:
        # Some jax versions reject Buffered(1); the fallback only costs the
        # (small) second weight buffer in VMEM.
        out = call(None)

    return out[:, 0]                      # == .squeeze(1)


def init_params(key, n_in):
    """Deterministic synthetic weights with PyTorch Linear shapes (out, in)."""
    k1, k2, k3, k4 = jax.random.split(key, 4)
    scale = 0.02
    w1 = scale * jax.random.normal(k1, (1024, n_in), jnp.float32)
    w2 = scale * jax.random.normal(k2, (512, 1024), jnp.float32)
    w3 = scale * jax.random.normal(k3, (256, 512), jnp.float32)
    w4 = scale * jax.random.normal(k4, (1, 256), jnp.float32)
    return w1, w2, w3, w4


def reference(x, w1, w2, w3, w4, *, n_in):
    """Pure-JAX f32 reference of the PyTorch forward (bias=False everywhere)."""
    h = x.reshape(-1, n_in).astype(jnp.float32)
    h = _leaky_relu(h @ w1.T)
    h = _leaky_relu(h @ w2.T)
    h = _leaky_relu(h @ w3.T)
    h = jax.nn.sigmoid(h @ w4.T)
    return h[:, 0]


if __name__ == "__main__":
    key = jax.random.PRNGKey(0)
    kx, kp = jax.random.split(key)

    n_c, n_spatial = 1, 32                 # n_c * 32 * 32 = 1024 = module default n_in
    n_in = n_c * n_spatial * n_spatial
    B = 8
    # NCHW-style input, flattened inside the wrapper (like x.view(-1, n_in)).
    x = jax.random.normal(kx, (B, n_c, n_spatial, n_spatial), jnp.float32)

    w1, w2, w3, w4 = init_params(kp, n_in)
    params = prepare_params(w1, w2, w3, w4)   # hoisted: done once, not per call

    y = vanilla_discriminator(x, params, n_in=n_in)
    y = jax.block_until_ready(y)

    y_ref = reference(x, w1, w2, w3, w4, n_in=n_in)
    assert y.shape == (B,)
    # bf16 MXU matmuls -> relaxed tolerance vs the f32 reference.
    assert jnp.allclose(y, y_ref, atol=1e-2, rtol=1e-2), (
        f"max abs err {jnp.max(jnp.abs(y - y_ref))}")

    print("KERNEL_OK")
</pallas_src>

<mosaic_0001>
module attributes {stable_mosaic.version = 11 : i64} {
  func.func @discriminator_kernel(%arg0: i32, %arg1: memref<8x1024xf32, #tpu.memory_space<vmem>>, %arg2: memref<1024x1024xbf16, #tpu.memory_space<vmem>>, %arg3: memref<1024x512xbf16, #tpu.memory_space<vmem>>, %arg4: memref<512x256xbf16, #tpu.memory_space<vmem>>, %arg5: memref<1x256xf32, #tpu.memory_space<vmem>>, %arg6: memref<8x1xf32, #tpu.memory_space<vmem>>) attributes {dimension_semantics = [#tpu.dimension_semantics<parallel>], iteration_bounds = array<i64: 1>, scalar_prefetch = 0 : i64, scratch_operands = 0 : i64, tpu.core_type = #tpu.core_type<tc>, window_params = [{transform_indices = @transform_0, window_bounds = array<i64: 8, 1024>}, {pipeline_mode = #tpu.pipeline_mode<synchronous>, transform_indices = @transform_1, window_bounds = array<i64: 1024, 1024>}, {pipeline_mode = #tpu.pipeline_mode<synchronous>, transform_indices = @transform_2, window_bounds = array<i64: 1024, 512>}, {pipeline_mode = #tpu.pipeline_mode<synchronous>, transform_indices = @transform_3, window_bounds = array<i64: 512, 256>}, {pipeline_mode = #tpu.pipeline_mode<synchronous>, transform_indices = @transform_4, window_bounds = array<i64: 1, 256>}, {transform_indices = @transform_5, window_bounds = array<i64: 8, 1>}]} {
    %c0 = arith.constant 0 : index
    %c0_0 = arith.constant 0 : index
    %0 = vector.load %arg1[%c0, %c0_0] : memref<8x1024xf32, #tpu.memory_space<vmem>>, vector<8x1024xf32>
    %1 = arith.truncf %0 : vector<8x1024xf32> to vector<8x1024xbf16>
    %c0_1 = arith.constant 0 : index
    %c0_2 = arith.constant 0 : index
    %2 = vector.load %arg2[%c0_1, %c0_2] : memref<1024x1024xbf16, #tpu.memory_space<vmem>>, vector<1024x1024xbf16>
    %cst = arith.constant dense<0.000000e+00> : vector<8x1024xf32>
    %3 = tpu.matmul %1, %2, %cst {dimension_numbers = #tpu.dot_dimension_numbers<[1], [0], [0], [1], [0, 0, 1, 1], [], []>} : vector<8x1024xbf16>, vector<1024x1024xbf16>, vector<8x1024xf32> -> vector<8x1024xf32>
    %cst_3 = arith.constant 2.000000e-01 : f32
    %4 = vector.broadcast %cst_3 : f32 to vector<8x1024xf32>
    %5 = arith.mulf %4, %3 : vector<8x1024xf32>
    %6 = arith.maximumf %3, %5 : vector<8x1024xf32>
    %7 = arith.truncf %6 : vector<8x1024xf32> to vector<8x1024xbf16>
    %c0_4 = arith.constant 0 : index
    %c0_5 = arith.constant 0 : index
    %8 = vector.load %arg3[%c0_4, %c0_5] : memref<1024x512xbf16, #tpu.memory_space<vmem>>, vector<1024x512xbf16>
    %cst_6 = arith.constant dense<0.000000e+00> : vector<8x512xf32>
    %9 = tpu.matmul %7, %8, %cst_6 {dimension_numbers = #tpu.dot_dimension_numbers<[1], [0], [0], [1], [0, 0, 1, 1], [], []>} : vector<8x1024xbf16>, vector<1024x512xbf16>, vector<8x512xf32> -> vector<8x512xf32>
    %cst_7 = arith.constant 2.000000e-01 : f32
    %10 = vector.broadcast %cst_7 : f32 to vector<8x512xf32>
    %11 = arith.mulf %10, %9 : vector<8x512xf32>
    %12 = arith.maximumf %9, %11 : vector<8x512xf32>
    %13 = arith.truncf %12 : vector<8x512xf32> to vector<8x512xbf16>
    %c0_8 = arith.constant 0 : index
    %c0_9 = arith.constant 0 : index
    %14 = vector.load %arg4[%c0_8, %c0_9] : memref<512x256xbf16, #tpu.memory_space<vmem>>, vector<512x256xbf16>
    %cst_10 = arith.constant dense<0.000000e+00> : vector<8x256xf32>
    %15 = tpu.matmul %13, %14, %cst_10 {dimension_numbers = #tpu.dot_dimension_numbers<[1], [0], [0], [1], [0, 0, 1, 1], [], []>} : vector<8x512xbf16>, vector<512x256xbf16>, vector<8x256xf32> -> vector<8x256xf32>
    %cst_11 = arith.constant 2.000000e-01 : f32
    %16 = vector.broadcast %cst_11 : f32 to vector<8x256xf32>
    %17 = arith.mulf %16, %15 : vector<8x256xf32>
    %18 = arith.maximumf %15, %17 : vector<8x256xf32>
    %c0_12 = arith.constant 0 : index
    %c0_13 = arith.constant 0 : index
    %19 = vector.load %arg5[%c0_12, %c0_13] : memref<1x256xf32, #tpu.memory_space<vmem>>, vector<1x256xf32>
    %20 = vector.broadcast %19 : vector<1x256xf32> to vector<8x256xf32>
    %21 = arith.mulf %18, %20 : vector<8x256xf32>
    %cst_14 = arith.constant dense<0.000000e+00> : vector<8xf32>
    %22 = vector.multi_reduction <add>, %21, %cst_14 [1] : vector<8x256xf32> to vector<8xf32>
    %23 = vector.shape_cast %22 : vector<8xf32> to vector<8x1xf32>
    %cst_15 = arith.constant 0.000000e+00 : f32
    %24 = vector.broadcast %cst_15 : f32 to vector<8x1xf32>
    %25 = arith.subf %24, %23 : vector<8x1xf32>
    %26 = math.exp %25 : vector<8x1xf32>
    %cst_16 = arith.constant 1.000000e+00 : f32
    %27 = vector.broadcast %cst_16 : f32 to vector<8x1xf32>
    %28 = arith.addf %27, %26 : vector<8x1xf32>
    %cst_17 = arith.constant 1.000000e+00 : f32
    %29 = vector.broadcast %cst_17 : f32 to vector<8x1xf32>
    %30 = arith.divf %29, %28 : vector<8x1xf32>
    %c0_18 = arith.constant 0 : index
    %c0_19 = arith.constant 0 : index
    %31 = vector.load %arg6[%c0_18, %c0_19] : memref<8x1xf32, #tpu.memory_space<vmem>>, vector<8x1xf32>
    tpu.vector_store %arg6[%c0_18, %c0_19], %30 {strides = array<i32>} : memref<8x1xf32, #tpu.memory_space<vmem>>, vector<8x1xf32>,
    return
  }
  func.func @transform_0(%arg0: i32) -> (i32, i32) {
    %c0_i32 = arith.constant 0 : i32
    %c0_i32_0 = arith.constant 0 : i32
    return %arg0, %c0_i32 : i32, i32
  }
  func.func @transform_1(%arg0: i32) -> (i32, i32) {
    %c0_i32 = arith.constant 0 : i32
    %c0_i32_0 = arith.constant 0 : i32
    %c0_i32_1 = arith.constant 0 : i32
    return %c0_i32, %c0_i32_0 : i32, i32
  }
  func.func @transform_2(%arg0: i32) -> (i32, i32) {
    %c0_i32 = arith.constant 0 : i32
    %c0_i32_0 = arith.constant 0 : i32
    %c0_i32_1 = arith.constant 0 : i32
    return %c0_i32, %c0_i32_0 : i32, i32
  }
  func.func @transform_3(%arg0: i32) -> (i32, i32) {
    %c0_i32 = arith.constant 0 : i32
    %c0_i32_0 = arith.constant 0 : i32
    %c0_i32_1 = arith.constant 0 : i32
    return %c0_i32, %c0_i32_0 : i32, i32
  }
  func.func @transform_4(%arg0: i32) -> (i32, i32) {
    %c0_i32 = arith.constant 0 : i32
    %c0_i32_0 = arith.constant 0 : i32
    %c0_i32_1 = arith.constant 0 : i32
    return %c0_i32, %c0_i32_0 : i32, i32
  }
  func.func @transform_5(%arg0: i32) -> (i32, i32) {
    %c0_i32 = arith.constant 0 : i32
    %c0_i32_0 = arith.constant 0 : i32
    return %arg0, %c0_i32 : i32, i32
  }
}

module attributes {stable_mosaic.version = 11 : i64} {
  func.func @discriminator_kernel(%arg0: i32, %arg1: memref<8x1024xf32, #tpu.memory_space<vmem>>, %arg2: memref<1024x1024xbf16, #tpu.memory_space<vmem>>, %arg3: memref<1024x512xbf16, #tpu.memory_space<vmem>>, %arg4: memref<512x256xbf16, #tpu.memory_space<vmem>>, %arg5: memref<1x256xf32, #tpu.memory_space<vmem>>, %arg6: memref<8x1xf32, #tpu.memory_space<vmem>>) attributes {dimension_semantics = [#tpu.dimension_semantics<parallel>], iteration_bounds = array<i64: 1>, scalar_prefetch = 0 : i64, scratch_operands = 0 : i64, tpu.core_type = #tpu.core_type<tc>, window_params = [{transform_indices = @transform_0, window_bounds = array<i64: 8, 1024>}, {pipeline_mode = #tpu.pipeline_mode<synchronous>, transform_indices = @transform_1, window_bounds = array<i64: 1024, 1024>}, {pipeline_mode = #tpu.pipeline_mode<synchronous>, transform_indices = @transform_2, window_bounds = array<i64: 1024, 512>}, {pipeline_mode = #tpu.pipeline_mode<synchronous>, transform_indices = @transform_3, window_bounds = array<i64: 512, 256>}, {pipeline_mode = #tpu.pipeline_mode<synchronous>, transform_indices = @transform_4, window_bounds = array<i64: 1, 256>}, {transform_indices = @transform_5, window_bounds = array<i64: 8, 1>}]} {
    %c0 = arith.constant 0 : index
    %c0_0 = arith.constant 0 : index
    %0 = vector.load %arg1[%c0, %c0_0] : memref<8x1024xf32, #tpu.memory_space<vmem>>, vector<8x1024xf32>
    %1 = arith.truncf %0 : vector<8x1024xf32> to vector<8x1024xbf16>
    %c0_1 = arith.constant 0 : index
    %c0_2 = arith.constant 0 : index
    %2 = vector.load %arg2[%c0_1, %c0_2] : memref<1024x1024xbf16, #tpu.memory_space<vmem>>, vector<1024x1024xbf16>
    %cst = arith.constant dense<0.000000e+00> : vector<8x1024xf32>
    %3 = tpu.matmul %1, %2, %cst {dimension_numbers = #tpu.dot_dimension_numbers<[1], [0], [0], [1], [0, 0, 1, 1], [], []>} : vector<8x1024xbf16>, vector<1024x1024xbf16>, vector<8x1024xf32> -> vector<8x1024xf32>
    %cst_3 = arith.constant 2.000000e-01 : f32
    %4 = vector.broadcast %cst_3 : f32 to vector<8x1024xf32>
    %5 = arith.mulf %4, %3 : vector<8x1024xf32>
    %6 = arith.maximumf %3, %5 : vector<8x1024xf32>
    %7 = arith.truncf %6 : vector<8x1024xf32> to vector<8x1024xbf16>
    %c0_4 = arith.constant 0 : index
    %c0_5 = arith.constant 0 : index
    %8 = vector.load %arg3[%c0_4, %c0_5] : memref<1024x512xbf16, #tpu.memory_space<vmem>>, vector<1024x512xbf16>
    %cst_6 = arith.constant dense<0.000000e+00> : vector<8x512xf32>
    %9 = tpu.matmul %7, %8, %cst_6 {dimension_numbers = #tpu.dot_dimension_numbers<[1], [0], [0], [1], [0, 0, 1, 1], [], []>} : vector<8x1024xbf16>, vector<1024x512xbf16>, vector<8x512xf32> -> vector<8x512xf32>
    %cst_7 = arith.constant 2.000000e-01 : f32
    %10 = vector.broadcast %cst_7 : f32 to vector<8x512xf32>
    %11 = arith.mulf %10, %9 : vector<8x512xf32>
    %12 = arith.maximumf %9, %11 : vector<8x512xf32>
    %13 = arith.truncf %12 : vector<8x512xf32> to vector<8x512xbf16>
    %c0_8 = arith.constant 0 : index
    %c0_9 = arith.constant 0 : index
    %14 = vector.load %arg4[%c0_8, %c0_9] : memref<512x256xbf16, #tpu.memory_space<vmem>>, vector<512x256xbf16>
    %cst_10 = arith.constant dense<0.000000e+00> : vector<8x256xf32>
    %15 = tpu.matmul %13, %14, %cst_10 {dimension_numbers = #tpu.dot_dimension_numbers<[1], [0], [0], [1], [0, 0, 1, 1], [], []>} : vector<8x512xbf16>, vector<512x256xbf16>, vector<8x256xf32> -> vector<8x256xf32>
    %cst_11 = arith.constant 2.000000e-01 : f32
    %16 = vector.broadcast %cst_11 : f32 to vector<8x256xf32>
    %17 = arith.mulf %16, %15 : vector<8x256xf32>
    %18 = arith.maximumf %15, %17 : vector<8x256xf32>
    %c0_12 = arith.constant 0 : index
    %c0_13 = arith.constant 0 : index
    %19 = vector.load %arg5[%c0_12, %c0_13] : memref<1x256xf32, #tpu.memory_space<vmem>>, vector<1x256xf32>
    %20 = vector.broadcast %19 : vector<1x256xf32> to vector<8x256xf32>
    %21 = arith.mulf %18, %20 : vector<8x256xf32>
    %cst_14 = arith.constant dense<0.000000e+00> : vector<8xf32>
    %22 = vector.multi_reduction <add>, %21, %cst_14 [1] : vector<8x256xf32> to vector<8xf32>
    %23 = vector.shape_cast %22 : vector<8xf32> to vector<8x1xf32>
    %cst_15 = arith.constant 0.000000e+00 : f32
    %24 = vector.broadcast %cst_15 : f32 to vector<8x1xf32>
    %25 = arith.subf %24, %23 : vector<8x1xf32>
    %26 = math.exp %25 : vector<8x1xf32>
    %cst_16 = arith.constant 1.000000e+00 : f32
    %27 = vector.broadcast %cst_16 : f32 to vector<8x1xf32>
    %28 = arith.addf %27, %26 : vector<8x1xf32>
    %cst_17 = arith.constant 1.000000e+00 : f32
    %29 = vector.broadcast %cst_17 : f32 to vector<8x1xf32>
    %30 = arith.divf %29, %28 : vector<8x1xf32>
    %c0_18 = arith.constant 0 : index
    %c0_19 = arith.constant 0 : index
    %31 = vector.load %arg6[%c0_18, %c0_19] : memref<8x1xf32, #tpu.memory_space<vmem>>, vector<8x1xf32>
    tpu.vector_store %arg6[%c0_18, %c0_19], %30 {strides = array<i32>} : memref<8x1xf32, #tpu.memory_space<vmem>>, vector<8x1xf32>,
    return
  }
  func.func @transform_0(%arg0: i32) -> (i32, i32) {
    %c0_i32 = arith.constant 0 : i32
    %c0_i32_0 = arith.constant 0 : i32
    return %arg0, %c0_i32 : i32, i32
  }
  func.func @transform_1(%arg0: i32) -> (i32, i32) {
    %c0_i32 = arith.constant 0 : i32
    %c0_i32_0 = arith.constant 0 : i32
    %c0_i32_1 = arith.constant 0 : i32
    return %c0_i32, %c0_i32_0 : i32, i32
  }
  func.func @transform_2(%arg0: i32) -> (i32, i32) {
    %c0_i32 = arith.constant 0 : i32
    %c0_i32_0 = arith.constant 0 : i32
    %c0_i32_1 = arith.constant 0 : i32
    return %c0_i32, %c0_i32_0 : i32, i32
  }
  func.func @transform_3(%arg0: i32) -> (i32, i32) {
    %c0_i32 = arith.constant 0 : i32
    %c0_i32_0 = arith.constant 0 : i32
    %c0_i32_1 = arith.constant 0 : i32
    return %c0_i32, %c0_i32_0 : i32, i32
  }
  func.func @transform_4(%arg0: i32) -> (i32, i32) {
    %c0_i32 = arith.constant 0 : i32
    %c0_i32_0 = arith.constant 0 : i32
    %c0_i32_1 = arith.constant 0 : i32
    return %c0_i32, %c0_i32_0 : i32, i32
  }
  func.func @transform_5(%arg0: i32) -> (i32, i32) {
    %c0_i32 = arith.constant 0 : i32
    %c0_i32_0 = arith.constant 0 : i32
    return %arg0, %c0_i32 : i32, i32
  }
}

</mosaic_0001>

<llo_original>
// kernel: tpu_custom_call.1
$region0: #{tpu_custom_call.1}
  #allocation0 [shape = 'u32[]', space=smem, size = 0x4, offset = 0x4, fixed_abs, tag = 'smem constant byte address 0x4 - core index']
  #allocation1 [shape = 'u32[72,128]{1,0:T(1,128)}', space=vmem, size = 0x9000, scoped, tag = 'internal scratch']
  %s0 = inlined_call_operand.hbm [shape: f32[8,1024], index: 0, kind: input, shape index: {}]
  %s1 = inlined_call_operand.hbm [shape: bf16[1024,1024], index: 1, kind: input, shape index: {}]
  %s2 = inlined_call_operand.hbm [shape: bf16[1024,512], index: 2, kind: input, shape index: {}]
  %s3 = inlined_call_operand.hbm [shape: bf16[512,256], index: 3, kind: input, shape index: {}]
  %s4 = inlined_call_operand.hbm [shape: f32[1,256], index: 4, kind: input, shape index: {}]
  %s5 = inlined_call_operand.vmem [shape: f32[8,1], index: 5, kind: output, shape index: {}]
  %s6 = sld [smem:[#allocation0]]
  $region50: #{tpu_custom_call.1} parent=0
    _
  %s8 = ssub.s32 1, %s6
  %s9 = scalar_select 0, %s8, %s6
  $region1: #{tpu_custom_call.1} parent=0
    #allocation2 [shape = 'u8[32768]{0}', space=vmem, size = 0x8000, scoped, tag = 'input window, operand 0, single buffered']
    #allocation3 [shape = 's32[1]{0}', space=sflag, size = 0x4, scoped, tag = 'scoped memory for tpu_custom_call.1']
    #allocation4 [shape = 'u8[2097152]{0}', space=vmem, size = 0x200000, scoped, tag = 'input window, operand 1, single buffered']
    #allocation5 [shape = 's32[1]{0}', space=sflag, size = 0x4, scoped, tag = 'scoped memory for tpu_custom_call.1']
    #allocation6 [shape = 'u8[1048576]{0}', space=vmem, size = 0x100000, scoped, tag = 'input window, operand 2, single buffered']
    #allocation7 [shape = 'u8[262144]{0}', space=vmem, size = 0x40000, scoped, tag = 'input window, operand 3, single buffered']
    #allocation8 [shape = 's32[1]{0}', space=sflag, size = 0x4, scoped, tag = 'scoped memory for tpu_custom_call.1']
    #allocation9 [shape = 'u8[1024]{0}', space=vmem, size = 0x400, scoped, tag = 'input window, operand 4, single buffered']
    %10 = vsyncpa [#allocation3], 0
    %11 = vsyncpa [#allocation5], 0
    %12 = vsyncpa [#allocation8], 0
    // Predicated region
    $region2: #{tpu_custom_call.1} parent=1 // pred_check
      _
    $region3: #{tpu_custom_call.1} parent=1 // pred_check_branch
      %14 = sbr.rel (0) target = $region5
    $region4: #{tpu_custom_call.1} parent=1 // pred_region
      %16 = vsyncadd [#allocation3], 0
      %s18 = sshll.u32 %s0, 4
      %s19 = int_to_ptr.hbm [resolvable:$true] %s18
      %s20 = sshll.u32 [#allocation2], 4
      %s21 = int_to_ptr.vmem [resolvable:$true] %s20
      %23 = dma.hbm_to_vmem [thread:$0]  %s19, 1024, %s21, [#allocation3]
    $region5: #{tpu_custom_call.1} parent=1 // pred_fallthru
      _
    // Predicated region
    $region6: #{tpu_custom_call.1} parent=1 // pred_check
      _
    $region7: #{tpu_custom_call.1} parent=1 // pred_check_branch
      %25 = sbr.rel (0) target = $region9
    $region8: #{tpu_custom_call.1} parent=1 // pred_region
      %27 = vsyncadd [#allocation5], 0
      %s28 = sshll.u32 %s1, 4
      %s29 = int_to_ptr.hbm [resolvable:$true] %s28
      %s30 = sshll.u32 [#allocation4], 4
      %s31 = int_to_ptr.vmem [resolvable:$true] %s30
      %36 = dma.hbm_to_vmem [thread:$0]  %s29, 65536, %s31, [#allocation5], 512, 512, 32
    $region9: #{tpu_custom_call.1} parent=1 // pred_fallthru
      _
    // Predicated region
    $region10: #{tpu_custom_call.1} parent=1 // pred_check
      _
    $region11: #{tpu_custom_call.1} parent=1 // pred_check_branch
      %38 = sbr.rel (0) target = $region13
    $region12: #{tpu_custom_call.1} parent=1 // pred_region
      %40 = vsyncadd [#allocation5], 0
      %s41 = sshll.u32 %s2, 4
      %s42 = int_to_ptr.hbm [resolvable:$true] %s41
      %s43 = sshll.u32 [#allocation6], 4
      %s44 = int_to_ptr.vmem [resolvable:$true] %s43
      %49 = dma.hbm_to_vmem [thread:$0]  %s42, 32768, %s44, [#allocation5], 256, 256, 16
    $region13: #{tpu_custom_call.1} parent=1 // pred_fallthru
      _
    // Predicated region
    $region14: #{tpu_custom_call.1} parent=1 // pred_check
      _
    $region15: #{tpu_custom_call.1} parent=1 // pred_check_branch
      %51 = sbr.rel (0) target = $region17
    $region16: #{tpu_custom_call.1} parent=1 // pred_region
      %53 = vsyncadd [#allocation8], 0
      %s54 = sshll.u32 %s3, 4
      %s55 = int_to_ptr.hbm [resolvable:$true] %s54
      %s56 = sshll.u32 [#allocation7], 4
      %s57 = int_to_ptr.vmem [resolvable:$true] %s56
      %62 = dma.hbm_to_vmem [thread:$0]  %s55, 8192, %s57, [#allocation8], 128, 128, 8
    $region17: #{tpu_custom_call.1} parent=1 // pred_fallthru
      _
    // Predicated region
    $region18: #{tpu_custom_call.1} parent=1 // pred_check
      _
    $region19: #{tpu_custom_call.1} parent=1 // pred_check_branch
      %64 = sbr.rel (0) target = $region21
    $region20: #{tpu_custom_call.1} parent=1 // pred_region
      %66 = vsyncadd [#allocation8], 0
      %s68 = sshll.u32 %s4, 4
      %s69 = int_to_ptr.hbm [resolvable:$true] %s68
      %s70 = sshll.u32 [#allocation9], 4
      %s71 = int_to_ptr.vmem [resolvable:$true] %s70
      %73 = dma.hbm_to_vmem [thread:$0]  %s69, 32, %s71, [#allocation8]
    $region21: #{tpu_custom_call.1} parent=1 // pred_fallthru
      _
    // Predicated region
    $region22: #{tpu_custom_call.1} parent=1 // pred_check
      _
    $region23: #{tpu_custom_call.1} parent=1 // pred_check_branch
      %75 = sbr.rel (0) target = $region25
    $region24: #{tpu_custom_call.1} parent=1 // pred_region
      %77 = dma.done [#allocation3], 1024
    $region25: #{tpu_custom_call.1} parent=1 // pred_fallthru
      _
    // Predicated region
    $region26: #{tpu_custom_call.1} parent=1 // pred_check
      _
    $region27: #{tpu_custom_call.1} parent=1 // pred_check_branch
      %79 = sbr.rel (0) target = $region29
    $region28: #{tpu_custom_call.1} parent=1 // pred_region
      %81 = dma.done [#allocation5], 65536
    $region29: #{tpu_custom_call.1} parent=1 // pred_fallthru
      _
    // Predicated region
    $region30: #{tpu_custom_call.1} parent=1 // pred_check
      _
    $region31: #{tpu_custom_call.1} parent=1 // pred_check_branch
      %83 = sbr.rel (0) target = $region33
    $region32: #{tpu_custom_call.1} parent=1 // pred_region
      %85 = dma.done [#allocation5], 32768
    $region33: #{tpu_custom_call.1} parent=1 // pred_fallthru
      _
    // Predicated region
    $region34: #{tpu_custom_call.1} parent=1 // pred_check
      _
    $region35: #{tpu_custom_call.1} parent=1 // pred_check_branch
      %87 = sbr.rel (0) target = $region37
    $region36: #{tpu_custom_call.1} parent=1 // pred_region
      %89 = dma.done [#allocation8], 8192
    $region37: #{tpu_custom_call.1} parent=1 // pred_fallthru
      _
    // Predicated region
    $region38: #{tpu_custom_call.1} parent=1 // pred_check
      _
    $region39: #{tpu_custom_call.1} parent=1 // pred_check_branch
      %91 = sbr.rel (0) target = $region41
    $region40: #{tpu_custom_call.1} parent=1 // pred_region
      %93 = dma.done [#allocation8], 32
    $region41: #{tpu_custom_call.1} parent=1 // pred_fallthru
      _
    %v94 = vld [vmem:[#allocation2] sm:$0xff]
    %v95 = vld [vmem:[#allocation2 + $0x8] sm:$0xff]
    %v96 = vld [vmem:[#allocation2 + $0x10] sm:$0xff]
    %v97 = vld [vmem:[#allocation2 + $0x18] sm:$0xff]
    %v98 = vld [vmem:[#allocation2 + $0x20] sm:$0xff]
    %v99 = vld [vmem:[#allocation2 + $0x28] sm:$0xff]
    %v100 = vld [vmem:[#allocation2 + $0x30] sm:$0xff]
    %v101 = vld [vmem:[#allocation2 + $0x38] sm:$0xff]
    %v102 = vpack.c.bf16 %v94, %v94
    %v103 = vpack.c.bf16 %v95, %v95
    %v104 = vpack.c.bf16 %v96, %v96
    %v105 = vpack.c.bf16 %v97, %v97
    %v106 = vpack.c.bf16 %v98, %v98
    %v107 = vpack.c.bf16 %v99, %v99
    %v108 = vpack.c.bf16 %v100, %v100
    %v109 = vpack.c.bf16 %v101, %v101
    %v110 = vld [vmem:[#allocation4] sm:$0xff]
    %v111 = vld [vmem:[#allocation4 + $0x8] sm:$0xff]
    %v112 = vld [vmem:[#allocation4 + $0x10] sm:$0xff]
    %v113 = vld [vmem:[#allocation4 + $0x18] sm:$0xff]
    %v114 = vld [vmem:[#allocation4 + $0x20] sm:$0xff]
    %v115 = vld [vmem:[#allocation4 + $0x28] sm:$0xff]
    %v116 = vld [vmem:[#allocation4 + $0x30] sm:$0xff]
    %v117 = vld [vmem:[#allocation4 + $0x38] sm:$0xff]
    %v118 = vld [vmem:[#allocation4 + $0x40] sm:$0xff]
    %v119 = vld [vmem:[#allocation4 + $0x48] sm:$0xff]
    %v120 = vld [vmem:[#allocation4 + $0x50] sm:$0xff]
    %v121 = vld [vmem:[#allocation4 + $0x58] sm:$0xff]
    %v122 = vld [vmem:[#allocation4 + $0x60] sm:$0xff]
    %v123 = vld [vmem:[#allocation4 + $0x68] sm:$0xff]
    %v124 = vld [vmem:[#allocation4 + $0x70] sm:$0xff]
    %v125 = vld [vmem:[#allocation4 + $0x78] sm:$0xff]
    %v126 = vld [vmem:[#allocation4 + $0x80] sm:$0xff]
    %v127 = vld [vmem:[#allocation4 + $0x88] sm:$0xff]
    %v128 = vld [vmem:[#allocation4 + $0x90] sm:$0xff]
    %v129 = vld [vmem:[#allocation4 + $0x98] sm:$0xff]
    %v130 = vld [vmem:[#allocation4 + $0xa0] sm:$0xff]
    %v131 = vld [vmem:[#allocation4 + $0xa8] sm:$0xff]
    %v132 = vld [vmem:[#allocation4 + $0xb0] sm:$0xff]
    %v133 = vld [vmem:[#allocation4 + $0xb8] sm:$0xff]
    %v134 = vld [vmem:[#allocation4 + $0xc0] sm:$0xff]
    %v135 = vld [vmem:[#allocation4 + $0xc8] sm:$0xff]
    %v136 = vld [vmem:[#allocation4 + $0xd0] sm:$0xff]
    %v137 = vld [vmem:[#allocation4 + $0xd8] sm:$0xff]
    %v138 = vld [vmem:[#allocation4 + $0xe0] sm:$0xff]
    %v139 = vld [vmem:[#allocation4 + $0xe8] sm:$0xff]
    %v140 = vld [vmem:[#allocation4 + $0xf0] sm:$0xff]
    %v141 = vld [vmem:[#allocation4 + $0xf8] sm:$0xff]
    %v142 = vld [vmem:[#allocation4 + $0x100] sm:$0xff]
    %v143 = vld [vmem:[#allocation4 + $0x108] sm:$0xff]
    %v144 = vld [vmem:[#allocation4 + $0x110] sm:$0xff]
    %v145 = vld [vmem:[#allocation4 + $0x118] sm:$0xff]
    %v146 = vld [vmem:[#allocation4 + $0x120] sm:$0xff]
    %v147 = vld [vmem:[#allocation4 + $0x128] sm:$0xff]
    %v148 = vld [vmem:[#allocation4 + $0x130] sm:$0xff]
    %v149 = vld [vmem:[#allocation4 + $0x138] sm:$0xff]
    %v150 = vld [vmem:[#allocation4 + $0x140] sm:$0xff]
    %v151 = vld [vmem:[#allocation4 + $0x148] sm:$0xff]
    %v152 = vld [vmem:[#allocation4 + $0x150] sm:$0xff]
    %v153 = vld [vmem:[#allocation4 + $0x158] sm:$0xff]
    %v154 = vld [vmem:[#allocation4 + $0x160] sm:$0xff]
    %v155 = vld [vmem:[#allocation4 + $0x168] sm:$0xff]
    %v156 = vld [vmem:[#allocation4 + $0x170] sm:$0xff]
    %v157 = vld [vmem:[#allocation4 + $0x178] sm:$0xff]
    %v158 = vld [vmem:[#allocation4 + $0x180] sm:$0xff]
    %v159 = vld [vmem:[#allocation4 + $0x188] sm:$0xff]
    %v160 = vld [vmem:[#allocation4 + $0x190] sm:$0xff]
    %v161 = vld [vmem:[#allocation4 + $0x198] sm:$0xff]
    %v162 = vld [vmem:[#allocation4 + $0x1a0] sm:$0xff]
    %v163 = vld [vmem:[#allocation4 + $0x1a8] sm:$0xff]
    %v164 = vld [vmem:[#allocation4 + $0x1b0] sm:$0xff]
    %v165 = vld [vmem:[#allocation4 + $0x1b8] sm:$0xff]
    %v166 = vld [vmem:[#allocation4 + $0x1c0] sm:$0xff]
    %v167 = vld [vmem:[#allocation4 + $0x1c8] sm:$0xff]
    %v168 = vld [vmem:[#allocation4 + $0x1d0] sm:$0xff]
    %v169 = vld [vmem:[#allocation4 + $0x1d8] sm:$0xff]
    %v170 = vld [vmem:[#allocation4 + $0x1e0] sm:$0xff]
    %v171 = vld [vmem:[#allocation4 + $0x1e8] sm:$0xff]
    %v172 = vld [vmem:[#allocation4 + $0x1f0] sm:$0xff]
    %v173 = vld [vmem:[#allocation4 + $0x1f8] sm:$0xff]
    %v174 = vld [vmem:[#allocation4 + $0x200] sm:$0xff]
    %v175 = vld [vmem:[#allocation4 + $0x208] sm:$0xff]
    %v176 = vld [vmem:[#allocation4 + $0x210] sm:$0xff]
    %v177 = vld [vmem:[#allocation4 + $0x218] sm:$0xff]
    %v178 = vld [vmem:[#allocation4 + $0x220] sm:$0xff]
    %v179 = vld [vmem:[#allocation4 + $0x228] sm:$0xff]
    %v180 = vld [vmem:[#allocation4 + $0x230] sm:$0xff]
    %v181 = vld [vmem:[#allocation4 + $0x238] sm:$0xff]
    %v182 = vld [vmem:[#allocation4 + $0x240] sm:$0xff]
    %v183 = vld [vmem:[#allocation4 + $0x248] sm:$0xff]
    %v184 = vld [vmem:[#allocation4 + $0x250] sm:$0xff]
    %v185 = vld [vmem:[#allocation4 + $0x258] sm:$0xff]
    %v186 = vld [vmem:[#allocation4 + $0x260] sm:$0xff]
    %v187 = vld [vmem:[#allocation4 + $0x268] sm:$0xff]
    %v188 = vld [vmem:[#allocation4 + $0x270] sm:$0xff]
    %v189 = vld [vmem:[#allocation4 + $0x278] sm:$0xff]
    %v190 = vld [vmem:[#allocation4 + $0x280] sm:$0xff]
    %v191 = vld [vmem:[#allocation4 + $0x288] sm:$0xff]
    %v192 = vld [vmem:[#allocation4 + $0x290] sm:$0xff]
    %v193 = vld [vmem:[#allocation4 + $0x298] sm:$0xff]
    %v194 = vld [vmem:[#allocation4 + $0x2a0] sm:$0xff]
    %v195 = vld [vmem:[#allocation4 + $0x2a8] sm:$0xff]
    %v196 = vld [vmem:[#allocation4 + $0x2b0] sm:$0xff]
    %v197 = vld [vmem:[#allocation4 + $0x2b8] sm:$0xff]
    %v198 = vld [vmem:[#allocation4 + $0x2c0] sm:$0xff]
    %v199 = vld [vmem:[#allocation4 + $0x2c8] sm:$0xff]
    %v200 = vld [vmem:[#allocation4 + $0x2d0] sm:$0xff]
    %v201 = vld [vmem:[#allocation4 + $0x2d8] sm:$0xff]
    %v202 = vld [vmem:[#allocation4 + $0x2e0] sm:$0xff]
    %v203 = vld [vmem:[#allocation4 + $0x2e8] sm:$0xff]
    %v204 = vld [vmem:[#allocation4 + $0x2f0] sm:$0xff]
    %v205 = vld [vmem:[#allocation4 + $0x2f8] sm:$0xff]
    %v206 = vld [vmem:[#allocation4 + $0x300] sm:$0xff]
    %v207 = vld [vmem:[#allocation4 + $0x308] sm:$0xff]
    %v208 = vld [vmem:[#allocation4 + $0x310] sm:$0xff]
    %v209 = vld [vmem:[#allocation4 + $0x318] sm:$0xff]
    %v210 = vld [vmem:[#allocation4 + $0x320] sm:$0xff]
    %v211 = vld [vmem:[#allocation4 + $0x328] sm:$0xff]
    %v212 = vld [vmem:[#allocation4 + $0x330] sm:$0xff]
    %v213 = vld [vmem:[#allocation4 + $0x338] sm:$0xff]
    %v214 = vld [vmem:[#allocation4 + $0x340] sm:$0xff]
    %v215 = vld [vmem:[#allocation4 + $0x348] sm:$0xff]
    %v216 = vld [vmem:[#allocation4 + $0x350] sm:$0xff]
    %v217 = vld [vmem:[#allocation4 + $0x358] sm:$0xff]
    %v218 = vld [vmem:[#allocation4 + $0x360] sm:$0xff]
    %v219 = vld [vmem:[#allocation4 + $0x368] sm:$0xff]
    %v220 = vld [vmem:[#allocation4 + $0x370] sm:$0xff]
    %v221 = vld [vmem:[#allocation4 + $0x378] sm:$0xff]
    %v222 = vld [vmem:[#allocation4 + $0x380] sm:$0xff]
    %v223 = vld [vmem:[#allocation4 + $0x388] sm:$0xff]
    %v224 = vld [vmem:[#allocation4 + $0x390] sm:$0xff]
    %v225 = vld [vmem:[#allocation4 + $0x398] sm:$0xff]
    %v226 = vld [vmem:[#allocation4 + $0x3a0] sm:$0xff]
    %v227 = vld [vmem:[#allocation4 + $0x3a8] sm:$0xff]
    %v228 = vld [vmem:[#allocation4 + $0x3b0] sm:$0xff]
    %v229 = vld [vmem:[#allocation4 + $0x3b8] sm:$0xff]
    %v230 = vld [vmem:[#allocation4 + $0x3c0] sm:$0xff]
    %v231 = vld [vmem:[#allocation4 + $0x3c8] sm:$0xff]
    %v232 = vld [vmem:[#allocation4 + $0x3d0] sm:$0xff]
    %v233 = vld [vmem:[#allocation4 + $0x3d8] sm:$0xff]
    %v234 = vld [vmem:[#allocation4 + $0x3e0] sm:$0xff]
    %v235 = vld [vmem:[#allocation4 + $0x3e8] sm:$0xff]
    %v236 = vld [vmem:[#allocation4 + $0x3f0] sm:$0xff]
    %v237 = vld [vmem:[#allocation4 + $0x3f8] sm:$0xff]
    %v238 = vld [vmem:[#allocation4 + $0x400] sm:$0xff]
    %v239 = vld [vmem:[#allocation4 + $0x408] sm:$0xff]
    %v240 = vld [vmem:[#allocation4 + $0x410] sm:$0xff]
    %v241 = vld [vmem:[#allocation4 + $0x418] sm:$0xff]
    %v242 = vld [vmem:[#allocation4 + $0x420] sm:$0xff]
    %v243 = vld [vmem:[#allocation4 + $0x428] sm:$0xff]
    %v244 = vld [vmem:[#allocation4 + $0x430] sm:$0xff]
    %v245 = vld [vmem:[#allocation4 + $0x438] sm:$0xff]
    %v246 = vld [vmem:[#allocation4 + $0x440] sm:$0xff]
    %v247 = vld [vmem:[#allocation4 + $0x448] sm:$0xff]
    %v248 = vld [vmem:[#allocation4 + $0x450] sm:$0xff]
    %v249 = vld [vmem:[#allocation4 + $0x458] sm:$0xff]
    %v250 = vld [vmem:[#allocation4 + $0x460] sm:$0xff]
    %v251 = vld [vmem:[#allocation4 + $0x468] sm:$0xff]
    %v252 = vld [vmem:[#allocation4 + $0x470] sm:$0xff]
    %v253 = vld [vmem:[#allocation4 + $0x478] sm:$0xff]
    %v254 = vld [vmem:[#allocation4 + $0x480] sm:$0xff]
    %v255 = vld [vmem:[#allocation4 + $0x488] sm:$0xff]
    %v256 = vld [vmem:[#allocation4 + $0x490] sm:$0xff]
    %v257 = vld [vmem:[#allocation4 + $0x498] sm:$0xff]
    %v258 = vld [vmem:[#allocation4 + $0x4a0] sm:$0xff]
    %v259 = vld [vmem:[#allocation4 + $0x4a8] sm:$0xff]
    %v260 = vld [vmem:[#allocation4 + $0x4b0] sm:$0xff]
    %v261 = vld [vmem:[#allocation4 + $0x4b8] sm:$0xff]
    %v262 = vld [vmem:[#allocation4 + $0x4c0] sm:$0xff]
    %v263 = vld [vmem:[#allocation4 + $0x4c8] sm:$0xff]
    %v264 = vld [vmem:[#allocation4 + $0x4d0] sm:$0xff]
    %v265 = vld [vmem:[#allocation4 + $0x4d8] sm:$0xff]
    %v266 = vld [vmem:[#allocation4 + $0x4e0] sm:$0xff]
    %v267 = vld [vmem:[#allocation4 + $0x4e8] sm:$0xff]
    %v268 = vld [vmem:[#allocation4 + $0x4f0] sm:$0xff]
    %v269 = vld [vmem:[#allocation4 + $0x4f8] sm:$0xff]
    %v270 = vld [vmem:[#allocation4 + $0x500] sm:$0xff]
    %v271 = vld [vmem:[#allocation4 + $0x508] sm:$0xff]
    %v272 = vld [vmem:[#allocation4 + $0x510] sm:$0xff]
    %v273 = vld [vmem:[#allocation4 + $0x518] sm:$0xff]
    %v274 = vld [vmem:[#allocation4 + $0x520] sm:$0xff]
    %v275 = vld [vmem:[#allocation4 + $0x528] sm:$0xff]
    %v276 = vld [vmem:[#allocation4 + $0x530] sm:$0xff]
    %v277 = vld [vmem:[#allocation4 + $0x538] sm:$0xff]
    %v278 = vld [vmem:[#allocation4 + $0x540] sm:$0xff]
    %v279 = vld [vmem:[#allocation4 + $0x548] sm:$0xff]
    %v280 = vld [vmem:[#allocation4 + $0x550] sm:$0xff]
    %v281 = vld [vmem:[#allocation4 + $0x558] sm:$0xff]
    %v282 = vld [vmem:[#allocation4 + $0x560] sm:$0xff]
    %v283 = vld [vmem:[#allocation4 + $0x568] sm:$0xff]
    %v284 = vld [vmem:[#allocation4 + $0x570] sm:$0xff]
    %v285 = vld [vmem:[#allocation4 + $0x578] sm:$0xff]
    %v286 = vld [vmem:[#allocation4 + $0x580] sm:$0xff]
    %v287 = vld [vmem:[#allocation4 + $0x588] sm:$0xff]
    %v288 = vld [vmem:[#allocation4 + $0x590] sm:$0xff]
    %v289 = vld [vmem:[#allocation4 + $0x598] sm:$0xff]
    %v290 = vld [vmem:[#allocation4 + $0x5a0] sm:$0xff]
    %v291 = vld [vmem:[#allocation4 + $0x5a8] sm:$0xff]
    %v292 = vld [vmem:[#allocation4 + $0x5b0] sm:$0xff]
    %v293 = vld [vmem:[#allocation4 + $0x5b8] sm:$0xff]
    %v294 = vld [vmem:[#allocation4 + $0x5c0] sm:$0xff]
    %v295 = vld [vmem:[#allocation4 + $0x5c8] sm:$0xff]
    %v296 = vld [vmem:[#allocation4 + $0x5d0] sm:$0xff]
    %v297 = vld [vmem:[#allocation4 + $0x5d8] sm:$0xff]
    %v298 = vld [vmem:[#allocation4 + $0x5e0] sm:$0xff]
    %v299 = vld [vmem:[#allocation4 + $0x5e8] sm:$0xff]
    %v300 = vld [vmem:[#allocation4 + $0x5f0] sm:$0xff]
    %v301 = vld [vmem:[#allocation4 + $0x5f8] sm:$0xff]
    %v302 = vld [vmem:[#allocation4 + $0x600] sm:$0xff]
    %v303 = vld [vmem:[#allocation4 + $0x608] sm:$0xff]
    %v304 = vld [vmem:[#allocation4 + $0x610] sm:$0xff]
    %v305 = vld [vmem:[#allocation4 + $0x618] sm:$0xff]
    %v306 = vld [vmem:[#allocation4 + $0x620] sm:$0xff]
    %v307 = vld [vmem:[#allocation4 + $0x628] sm:$0xff]
    %v308 = vld [vmem:[#allocation4 + $0x630] sm:$0xff]
    %v309 = vld [vmem:[#allocation4 + $0x638] sm:$0xff]
    %v310 = vld [vmem:[#allocation4 + $0x640] sm:$0xff]
    %v311 = vld [vmem:[#allocation4 + $0x648] sm:$0xff]
    %v312 = vld [vmem:[#allocation4 + $0x650] sm:$0xff]
    %v313 = vld [vmem:[#allocation4 + $0x658] sm:$0xff]
    %v314 = vld [vmem:[#allocation4 + $0x660] sm:$0xff]
    %v315 = vld [vmem:[#allocation4 + $0x668] sm:$0xff]
    %v316 = vld [vmem:[#allocation4 + $0x670] sm:$0xff]
    %v317 = vld [vmem:[#allocation4 + $0x678] sm:$0xff]
    %v318 = vld [vmem:[#allocation4 + $0x680] sm:$0xff]
    %v319 = vld [vmem:[#allocation4 + $0x688] sm:$0xff]
    %v320 = vld [vmem:[#allocation4 + $0x690] sm:$0xff]
    %v321 = vld [vmem:[#allocation4 + $0x698] sm:$0xff]
    %v322 = vld [vmem:[#allocation4 + $0x6a0] sm:$0xff]
    %v323 = vld [vmem:[#allocation4 + $0x6a8] sm:$0xff]
    %v324 = vld [vmem:[#allocation4 + $0x6b0] sm:$0xff]
    %v325 = vld [vmem:[#allocation4 + $0x6b8] sm:$0xff]
    %v326 = vld [vmem:[#allocation4 + $0x6c0] sm:$0xff]
    %v327 = vld [vmem:[#allocation4 + $0x6c8] sm:$0xff]
    %v328 = vld [vmem:[#allocation4 + $0x6d0] sm:$0xff]
    %v329 = vld [vmem:[#allocation4 + $0x6d8] sm:$0xff]
    %v330 = vld [vmem:[#allocation4 + $0x6e0] sm:$0xff]
    %v331 = vld [vmem:[#allocation4 + $0x6e8] sm:$0xff]
    %v332 = vld [vmem:[#allocation4 + $0x6f0] sm:$0xff]
    %v333 = vld [vmem:[#allocation4 + $0x6f8] sm:$0xff]
    %v334 = vld [vmem:[#allocation4 + $0x700] sm:$0xff]
    %v335 = vld [vmem:[#allocation4 + $0x708] sm:$0xff]
    %v336 = vld [vmem:[#allocation4 + $0x710] sm:$0xff]
    %v337 = vld [vmem:[#allocation4 + $0x718] sm:$0xff]
    %v338 = vld [vmem:[#allocation4 + $0x720] sm:$0xff]
    %v339 = vld [vmem:[#allocation4 + $0x728] sm:$0xff]
    %v340 = vld [vmem:[#allocation4 + $0x730] sm:$0xff]
    %v341 = vld [vmem:[#allocation4 + $0x738] sm:$0xff]
    %v342 = vld [vmem:[#allocation4 + $0x740] sm:$0xff]
    %v343 = vld [vmem:[#allocation4 + $0x748] sm:$0xff]
    %v344 = vld [vmem:[#allocation4 + $0x750] sm:$0xff]
    %v345 = vld [vmem:[#allocation4 + $0x758] sm:$0xff]
    %v346 = vld [vmem:[#allocation4 + $0x760] sm:$0xff]
    %v347 = vld [vmem:[#allocation4 + $0x768] sm:$0xff]
    %v348 = vld [vmem:[#allocation4 + $0x770] sm:$0xff]
    %v349 = vld [vmem:[#allocation4 + $0x778] sm:$0xff]
    %v350 = vld [vmem:[#allocation4 + $0x780] sm:$0xff]
    %v351 = vld [vmem:[#allocation4 + $0x788] sm:$0xff]
    %v352 = vld [vmem:[#allocation4 + $0x790] sm:$0xff]
    %v353 = vld [vmem:[#allocation4 + $0x798] sm:$0xff]
    %v354 = vld [vmem:[#allocation4 + $0x7a0] sm:$0xff]
    %v355 = vld [vmem:[#allocation4 + $0x7a8] sm:$0xff]
    %v356 = vld [vmem:[#allocation4 + $0x7b0] sm:$0xff]
    %v357 = vld [vmem:[#allocation4 + $0x7b8] sm:$0xff]
    %v358 = vld [vmem:[#allocation4 + $0x7c0] sm:$0xff]
    %v359 = vld [vmem:[#allocation4 + $0x7c8] sm:$0xff]
    %v360 = vld [vmem:[#allocation4 + $0x7d0] sm:$0xff]
    %v361 = vld [vmem:[#allocation4 + $0x7d8] sm:$0xff]
    %v362 = vld [vmem:[#allocation4 + $0x7e0] sm:$0xff]
    %v363 = vld [vmem:[#allocation4 + $0x7e8] sm:$0xff]
    %v364 = vld [vmem:[#allocation4 + $0x7f0] sm:$0xff]
    %v365 = vld [vmem:[#allocation4 + $0x7f8] sm:$0xff]
    %v366 = vld [vmem:[#allocation4 + $0x800] sm:$0xff]
    %v367 = vld [vmem:[#allocation4 + $0x808] sm:$0xff]
    %v368 = vld [vmem:[#allocation4 + $0x810] sm:$0xff]
    %v369 = vld [vmem:[#allocation4 + $0x818] sm:$0xff]
    %v370 = vld [vmem:[#allocation4 + $0x820] sm:$0xff]
    %v371 = vld [vmem:[#allocation4 + $0x828] sm:$0xff]
    %v372 = vld [vmem:[#allocation4 + $0x830] sm:$0xff]
    %v373 = vld [vmem:[#allocation4 + $0x838] sm:$0xff]
    %v374 = vld [vmem:[#allocation4 + $0x840] sm:$0xff]
    %v375 = vld [vmem:[#allocation4 + $0x848] sm:$0xff]
    %v376 = vld [vmem:[#allocation4 + $0x850] sm:$0xff]
    %v377 = vld [vmem:[#allocation4 + $0x858] sm:$0xff]
    %v378 = vld [vmem:[#allocation4 + $0x860] sm:$0xff]
    %v379 = vld [vmem:[#allocation4 + $0x868] sm:$0xff]
    %v380 = vld [vmem:[#allocation4 + $0x870] sm:$0xff]
    %v381 = vld [vmem:[#allocation4 + $0x878] sm:$0xff]
    %v382 = vld [vmem:[#allocation4 + $0x880] sm:$0xff]
    %v383 = vld [vmem:[#allocation4 + $0x888] sm:$0xff]
    %v384 = vld [vmem:[#allocation4 + $0x890] sm:$0xff]
    %v385 = vld [vmem:[#allocation4 + $0x898] sm:$0xff]
    %v386 = vld [vmem:[#allocation4 + $0x8a0] sm:$0xff]
    %v387 = vld [vmem:[#allocation4 + $0x8a8] sm:$0xff]
    %v388 = vld [vmem:[#allocation4 + $0x8b0] sm:$0xff]
    %v389 = vld [vmem:[#allocation4 + $0x8b8] sm:$0xff]
    %v390 = vld [vmem:[#allocation4 + $0x8c0] sm:$0xff]
    %v391 = vld [vmem:[#allocation4 + $0x8c8] sm:$0xff]
    %v392 = vld [vmem:[#allocation4 + $0x8d0] sm:$0xff]
    %v393 = vld [vmem:[#allocation4 + $0x8d8] sm:$0xff]
    %v394 = vld [vmem:[#allocation4 + $0x8e0] sm:$0xff]
    %v395 = vld [vmem:[#allocation4 + $0x8e8] sm:$0xff]
    %v396 = vld [vmem:[#allocation4 + $0x8f0] sm:$0xff]
    %v397 = vld [vmem:[#allocation4 + $0x8f8] sm:$0xff]
    %v398 = vld [vmem:[#allocation4 + $0x900] sm:$0xff]
    %v399 = vld [vmem:[#allocation4 + $0x908] sm:$0xff]
    %v400 = vld [vmem:[#allocation4 + $0x910] sm:$0xff]
    %v401 = vld [vmem:[#allocation4 + $0x918] sm:$0xff]
    %v402 = vld [vmem:[#allocation4 + $0x920] sm:$0xff]
    %v403 = vld [vmem:[#allocation4 + $0x928] sm:$0xff]
    %v404 = vld [vmem:[#allocation4 + $0x930] sm:$0xff]
    %v405 = vld [vmem:[#allocation4 + $0x938] sm:$0xff]
    %v406 = vld [vmem:[#allocation4 + $0x940] sm:$0xff]
    %v407 = vld [vmem:[#allocation4 + $0x948] sm:$0xff]
    %v408 = vld [vmem:[#allocation4 + $0x950] sm:$0xff]
    %v409 = vld [vmem:[#allocation4 + $0x958] sm:$0xff]
    %v410 = vld [vmem:[#allocation4 + $0x960] sm:$0xff]
    %v411 = vld [vmem:[#allocation4 + $0x968] sm:$0xff]
    %v412 = vld [vmem:[#allocation4 + $0x970] sm:$0xff]
    %v413 = vld [vmem:[#allocation4 + $0x978] sm:$0xff]
    %v414 = vld [vmem:[#allocation4 + $0x980] sm:$0xff]
    %v415 = vld [vmem:[#allocation4 + $0x988] sm:$0xff]
    %v416 = vld [vmem:[#allocation4 + $0x990] sm:$0xff]
    %v417 = vld [vmem:[#allocation4 + $0x998] sm:$0xff]
    %v418 = vld [vmem:[#allocation4 + $0x9a0] sm:$0xff]
    %v419 = vld [vmem:[#allocation4 + $0x9a8] sm:$0xff]
    %v420 = vld [vmem:[#allocation4 + $0x9b0] sm:$0xff]
    %v421 = vld [vmem:[#allocation4 + $0x9b8] sm:$0xff]
    %v422 = vld [vmem:[#allocation4 + $0x9c0] sm:$0xff]
    %v423 = vld [vmem:[#allocation4 + $0x9c8] sm:$0xff]
    %v424 = vld [vmem:[#allocation4 + $0x9d0] sm:$0xff]
    %v425 = vld [vmem:[#allocation4 + $0x9d8] sm:$0xff]
    %v426 = vld [vmem:[#allocation4 + $0x9e0] sm:$0xff]
    %v427 = vld [vmem:[#allocation4 + $0x9e8] sm:$0xff]
    %v428 = vld [vmem:[#allocation4 + $0x9f0] sm:$0xff]
    %v429 = vld [vmem:[#allocation4 + $0x9f8] sm:$0xff]
    %v430 = vld [vmem:[#allocation4 + $0xa00] sm:$0xff]
    %v431 = vld [vmem:[#allocation4 + $0xa08] sm:$0xff]
    %v432 = vld [vmem:[#allocation4 + $0xa10] sm:$0xff]
    %v433 = vld [vmem:[#allocation4 + $0xa18] sm:$0xff]
    %v434 = vld [vmem:[#allocation4 + $0xa20] sm:$0xff]
    %v435 = vld [vmem:[#allocation4 + $0xa28] sm:$0xff]
    %v436 = vld [vmem:[#allocation4 + $0xa30] sm:$0xff]
    %v437 = vld [vmem:[#allocation4 + $0xa38] sm:$0xff]
    %v438 = vld [vmem:[#allocation4 + $0xa40] sm:$0xff]
    %v439 = vld [vmem:[#allocation4 + $0xa48] sm:$0xff]
    %v440 = vld [vmem:[#allocation4 + $0xa50] sm:$0xff]
    %v441 = vld [vmem:[#allocation4 + $0xa58] sm:$0xff]
    %v442 = vld [vmem:[#allocation4 + $0xa60] sm:$0xff]
    %v443 = vld [vmem:[#allocation4 + $0xa68] sm:$0xff]
    %v444 = vld [vmem:[#allocation4 + $0xa70] sm:$0xff]
    %v445 = vld [vmem:[#allocation4 + $0xa78] sm:$0xff]
    %v446 = vld [vmem:[#allocation4 + $0xa80] sm:$0xff]
    %v447 = vld [vmem:[#allocation4 + $0xa88] sm:$0xff]
    %v448 = vld [vmem:[#allocation4 + $0xa90] sm:$0xff]
    %v449 = vld [vmem:[#allocation4 + $0xa98] sm:$0xff]
    %v450 = vld [vmem:[#allocation4 + $0xaa0] sm:$0xff]
    %v451 = vld [vmem:[#allocation4 + $0xaa8] sm:$0xff]
    %v452 = vld [vmem:[#allocation4 + $0xab0] sm:$0xff]
    %v453 = vld [vmem:[#allocation4 + $0xab8] sm:$0xff]
    %v454 = vld [vmem:[#allocation4 + $0xac0] sm:$0xff]
    %v455 = vld [vmem:[#allocation4 + $0xac8] sm:$0xff]
    %v456 = vld [vmem:[#allocation4 + $0xad0] sm:$0xff]
    %v457 = vld [vmem:[#allocation4 + $0xad8] sm:$0xff]
    %v458 = vld [vmem:[#allocation4 + $0xae0] sm:$0xff]
    %v459 = vld [vmem:[#allocation4 + $0xae8] sm:$0xff]
    %v460 = vld [vmem:[#allocation4 + $0xaf0] sm:$0xff]
    %v461 = vld [vmem:[#allocation4 + $0xaf8] sm:$0xff]
    %v462 = vld [vmem:[#allocation4 + $0xb00] sm:$0xff]
    %v463 = vld [vmem:[#allocation4 + $0xb08] sm:$0xff]
    %v464 = vld [vmem:[#allocation4 + $0xb10] sm:$0xff]
    %v465 = vld [vmem:[#allocation4 + $0xb18] sm:$0xff]
    %v466 = vld [vmem:[#allocation4 + $0xb20] sm:$0xff]
    %v467 = vld [vmem:[#allocation4 + $0xb28] sm:$0xff]
    %v468 = vld [vmem:[#allocation4 + $0xb30] sm:$0xff]
    %v469 = vld [vmem:[#allocation4 + $0xb38] sm:$0xff]
    %v470 = vld [vmem:[#allocation4 + $0xb40] sm:$0xff]
    %v471 = vld [vmem:[#allocation4 + $0xb48] sm:$0xff]
    %v472 = vld [vmem:[#allocation4 + $0xb50] sm:$0xff]
    %v473 = vld [vmem:[#allocation4 + $0xb58] sm:$0xff]
    %v474 = vld [vmem:[#allocation4 + $0xb60] sm:$0xff]
    %v475 = vld [vmem:[#allocation4 + $0xb68] sm:$0xff]
    %v476 = vld [vmem:[#allocation4 + $0xb70] sm:$0xff]
    %v477 = vld [vmem:[#allocation4 + $0xb78] sm:$0xff]
    %v478 = vld [vmem:[#allocation4 + $0xb80] sm:$0xff]
    %v479 = vld [vmem:[#allocation4 + $0xb88] sm:$0xff]
    %v480 = vld [vmem:[#allocation4 + $0xb90] sm:$0xff]
    %v481 = vld [vmem:[#allocation4 + $0xb98] sm:$0xff]
    %v482 = vld [vmem:[#allocation4 + $0xba0] sm:$0xff]
    %v483 = vld [vmem:[#allocation4 + $0xba8] sm:$0xff]
    %v484 = vld [vmem:[#allocation4 + $0xbb0] sm:$0xff]
    %v485 = vld [vmem:[#allocation4 + $0xbb8] sm:$0xff]
    %v486 = vld [vmem:[#allocation4 + $0xbc0] sm:$0xff]
    %v487 = vld [vmem:[#allocation4 + $0xbc8] sm:$0xff]
    %v488 = vld [vmem:[#allocation4 + $0xbd0] sm:$0xff]
    %v489 = vld [vmem:[#allocation4 + $0xbd8] sm:$0xff]
    %v490 = vld [vmem:[#allocation4 + $0xbe0] sm:$0xff]
    %v491 = vld [vmem:[#allocation4 + $0xbe8] sm:$0xff]
    %v492 = vld [vmem:[#allocation4 + $0xbf0] sm:$0xff]
    %v493 = vld [vmem:[#allocation4 + $0xbf8] sm:$0xff]
    %v494 = vld [vmem:[#allocation4 + $0xc00] sm:$0xff]
    %v495 = vld [vmem:[#allocation4 + $0xc08] sm:$0xff]
    %v496 = vld [vmem:[#allocation4 + $0xc10] sm:$0xff]
    %v497 = vld [vmem:[#allocation4 + $0xc18] sm:$0xff]
    %v498 = vld [vmem:[#allocation4 + $0xc20] sm:$0xff]
    %v499 = vld [vmem:[#allocation4 + $0xc28] sm:$0xff]
    %v500 = vld [vmem:[#allocation4 + $0xc30] sm:$0xff]
    %v501 = vld [vmem:[#allocation4 + $0xc38] sm:$0xff]
    %v502 = vld [vmem:[#allocation4 + $0xc40] sm:$0xff]
    %v503 = vld [vmem:[#allocation4 + $0xc48] sm:$0xff]
    %v504 = vld [vmem:[#allocation4 + $0xc50] sm:$0xff]
    %v505 = vld [vmem:[#allocation4 + $0xc58] sm:$0xff]
    %v506 = vld [vmem:[#allocation4 + $0xc60] sm:$0xff]
    %v507 = vld [vmem:[#allocation4 + $0xc68] sm:$0xff]
    %v508 = vld [vmem:[#allocation4 + $0xc70] sm:$0xff]
    %v509 = vld [vmem:[#allocation4 + $0xc78] sm:$0xff]
    %v510 = vld [vmem:[#allocation4 + $0xc80] sm:$0xff]
    %v511 = vld [vmem:[#allocation4 + $0xc88] sm:$0xff]
    %v512 = vld [vmem:[#allocation4 + $0xc90] sm:$0xff]
    %v513 = vld [vmem:[#allocation4 + $0xc98] sm:$0xff]
    %v514 = vld [vmem:[#allocation4 + $0xca0] sm:$0xff]
    %v515 = vld [vmem:[#allocation4 + $0xca8] sm:$0xff]
    %v516 = vld [vmem:[#allocation4 + $0xcb0] sm:$0xff]
    %v517 = vld [vmem:[#allocation4 + $0xcb8] sm:$0xff]
    %v518 = vld [vmem:[#allocation4 + $0xcc0] sm:$0xff]
    %v519 = vld [vmem:[#allocation4 + $0xcc8] sm:$0xff]
    %v520 = vld [vmem:[#allocation4 + $0xcd0] sm:$0xff]
    %v521 = vld [vmem:[#allocation4 + $0xcd8] sm:$0xff]
    %v522 = vld [vmem:[#allocation4 + $0xce0] sm:$0xff]
    %v523 = vld [vmem:[#allocation4 + $0xce8] sm:$0xff]
    %v524 = vld [vmem:[#allocation4 + $0xcf0] sm:$0xff]
    %v525 = vld [vmem:[#allocation4 + $0xcf8] sm:$0xff]
    %v526 = vld [vmem:[#allocation4 + $0xd00] sm:$0xff]
    %v527 = vld [vmem:[#allocation4 + $0xd08] sm:$0xff]
    %v528 = vld [vmem:[#allocation4 + $0xd10] sm:$0xff]
    %v529 = vld [vmem:[#allocation4 + $0xd18] sm:$0xff]
    %v530 = vld [vmem:[#allocation4 + $0xd20] sm:$0xff]
    %v531 = vld [vmem:[#allocation4 + $0xd28] sm:$0xff]
    %v532 = vld [vmem:[#allocation4 + $0xd30] sm:$0xff]
    %v533 = vld [vmem:[#allocation4 + $0xd38] sm:$0xff]
    %v534 = vld [vmem:[#allocation4 + $0xd40] sm:$0xff]
    %v535 = vld [vmem:[#allocation4 + $0xd48] sm:$0xff]
    %v536 = vld [vmem:[#allocation4 + $0xd50] sm:$0xff]
    %v537 = vld [vmem:[#allocation4 + $0xd58] sm:$0xff]
    %v538 = vld [vmem:[#allocation4 + $0xd60] sm:$0xff]
    %v539 = vld [vmem:[#allocation4 + $0xd68] sm:$0xff]
    %v540 = vld [vmem:[#allocation4 + $0xd70] sm:$0xff]
    %v541 = vld [vmem:[#allocation4 + $0xd78] sm:$0xff]
    %v542 = vld [vmem:[#allocation4 + $0xd80] sm:$0xff]
    %v543 = vld [vmem:[#allocation4 + $0xd88] sm:$0xff]
    %v544 = vld [vmem:[#allocation4 + $0xd90] sm:$0xff]
    %v545 = vld [vmem:[#allocation4 + $0xd98] sm:$0xff]
    %v546 = vld [vmem:[#allocation4 + $0xda0] sm:$0xff]
    %v547 = vld [vmem:[#allocation4 + $0xda8] sm:$0xff]
    %v548 = vld [vmem:[#allocation4 + $0xdb0] sm:$0xff]
    %v549 = vld [vmem:[#allocation4 + $0xdb8] sm:$0xff]
    %v550 = vld [vmem:[#allocation4 + $0xdc0] sm:$0xff]
    %v551 = vld [vmem:[#allocation4 + $0xdc8] sm:$0xff]
    %v552 = vld [vmem:[#allocation4 + $0xdd0] sm:$0xff]
    %v553 = vld [vmem:[#allocation4 + $0xdd8] sm:$0xff]
    %v554 = vld [vmem:[#allocation4 + $0xde0] sm:$0xff]
    %v555 = vld [vmem:[#allocation4 + $0xde8] sm:$0xff]
    %v556 = vld [vmem:[#allocation4 + $0xdf0] sm:$0xff]
    %v557 = vld [vmem:[#allocation4 + $0xdf8] sm:$0xff]
    %v558 = vld [vmem:[#allocation4 + $0xe00] sm:$0xff]
    %v559 = vld [vmem:[#allocation4 + $0xe08] sm:$0xff]
    %v560 = vld [vmem:[#allocation4 + $0xe10] sm:$0xff]
    %v561 = vld [vmem:[#allocation4 + $0xe18] sm:$0xff]
    %v562 = vld [vmem:[#allocation4 + $0xe20] sm:$0xff]
    %v563 = vld [vmem:[#allocation4 + $0xe28] sm:$0xff]
    %v564 = vld [vmem:[#allocation4 + $0xe30] sm:$0xff]
    %v565 = vld [vmem:[#allocation4 + $0xe38] sm:$0xff]
    %v566 = vld [vmem:[#allocation4 + $0xe40] sm:$0xff]
    %v567 = vld [vmem:[#allocation4 + $0xe48] sm:$0xff]
    %v568 = vld [vmem:[#allocation4 + $0xe50] sm:$0xff]
    %v569 = vld [vmem:[#allocation4 + $0xe58] sm:$0xff]
    %v570 = vld [vmem:[#allocation4 + $0xe60] sm:$0xff]
    %v571 = vld [vmem:[#allocation4 + $0xe68] sm:$0xff]
    %v572 = vld [vmem:[#allocation4 + $0xe70] sm:$0xff]
    %v573 = vld [vmem:[#allocation4 + $0xe78] sm:$0xff]
    %v574 = vld [vmem:[#allocation4 + $0xe80] sm:$0xff]
    %v575 = vld [vmem:[#allocation4 + $0xe88] sm:$0xff]
    %v576 = vld [vmem:[#allocation4 + $0xe90] sm:$0xff]
    %v577 = vld [vmem:[#allocation4 + $0xe98] sm:$0xff]
    %v578 = vld [vmem:[#allocation4 + $0xea0] sm:$0xff]
    %v579 = vld [vmem:[#allocation4 + $0xea8] sm:$0xff]
    %v580 = vld [vmem:[#allocation4 + $0xeb0] sm:$0xff]
    %v581 = vld [vmem:[#allocation4 + $0xeb8] sm:$0xff]
    %v582 = vld [vmem:[#allocation4 + $0xec0] sm:$0xff]
    %v583 = vld [vmem:[#allocation4 + $0xec8] sm:$0xff]
    %v584 = vld [vmem:[#allocation4 + $0xed0] sm:$0xff]
    %v585 = vld [vmem:[#allocation4 + $0xed8] sm:$0xff]
    %v586 = vld [vmem:[#allocation4 + $0xee0] sm:$0xff]
    %v587 = vld [vmem:[#allocation4 + $0xee8] sm:$0xff]
    %v588 = vld [vmem:[#allocation4 + $0xef0] sm:$0xff]
    %v589 = vld [vmem:[#allocation4 + $0xef8] sm:$0xff]
    %v590 = vld [vmem:[#allocation4 + $0xf00] sm:$0xff]
    %v591 = vld [vmem:[#allocation4 + $0xf08] sm:$0xff]
    %v592 = vld [vmem:[#allocation4 + $0xf10] sm:$0xff]
    %v593 = vld [vmem:[#allocation4 + $0xf18] sm:$0xff]
    %v594 = vld [vmem:[#allocation4 + $0xf20] sm:$0xff]
    %v595 = vld [vmem:[#allocation4 + $0xf28] sm:$0xff]
    %v596 = vld [vmem:[#allocation4 + $0xf30] sm:$0xff]
    %v597 = vld [vmem:[#allocation4 + $0xf38] sm:$0xff]
    %v598 = vld [vmem:[#allocation4 + $0xf40] sm:$0xff]
    %v599 = vld [vmem:[#allocation4 + $0xf48] sm:$0xff]
    %v600 = vld [vmem:[#allocation4 + $0xf50] sm:$0xff]
    %v601 = vld [vmem:[#allocation4 + $0xf58] sm:$0xff]
    %v602 = vld [vmem:[#allocation4 + $0xf60] sm:$0xff]
    %v603 = vld [vmem:[#allocation4 + $0xf68] sm:$0xff]
    %v604 = vld [vmem:[#allocation4 + $0xf70] sm:$0xff]
    %v605 = vld [vmem:[#allocation4 + $0xf78] sm:$0xff]
    %v606 = vld [vmem:[#allocation4 + $0xf80] sm:$0xff]
    %v607 = vld [vmem:[#allocation4 + $0xf88] sm:$0xff]
    %v608 = vld [vmem:[#allocation4 + $0xf90] sm:$0xff]
    %v609 = vld [vmem:[#allocation4 + $0xf98] sm:$0xff]
    %v610 = vld [vmem:[#allocation4 + $0xfa0] sm:$0xff]
    %v611 = vld [vmem:[#allocation4 + $0xfa8] sm:$0xff]
    %v612 = vld [vmem:[#allocation4 + $0xfb0] sm:$0xff]
    %v613 = vld [vmem:[#allocation4 + $0xfb8] sm:$0xff]
    %v614 = vld [vmem:[#allocation4 + $0xfc0] sm:$0xff]
    %v615 = vld [vmem:[#allocation4 + $0xfc8] sm:$0xff]
    %v616 = vld [vmem:[#allocation4 + $0xfd0] sm:$0xff]
    %v617 = vld [vmem:[#allocation4 + $0xfd8] sm:$0xff]
    %v618 = vld [vmem:[#allocation4 + $0xfe0] sm:$0xff]
    %v619 = vld [vmem:[#allocation4 + $0xfe8] sm:$0xff]
    %v620 = vld [vmem:[#allocation4 + $0xff0] sm:$0xff]
    %v621 = vld [vmem:[#allocation4 + $0xff8] sm:$0xff]
    %v1134 = vunpack.c.l.b16 %v110
    %v1135 = vunpack.c.h.b16 %v110
    %v1136 = vunpack.c.l.b16 %v111
    %v1137 = vunpack.c.h.b16 %v111
    %v1138 = vunpack.c.l.b16 %v112
    %v1139 = vunpack.c.h.b16 %v112
    %v1140 = vunpack.c.l.b16 %v113
    %v1141 = vunpack.c.h.b16 %v113
    %v1142 = vunpack.c.l.b16 %v114
    %v1143 = vunpack.c.h.b16 %v114
    %v1144 = vunpack.c.l.b16 %v115
    %v1145 = vunpack.c.h.b16 %v115
    %v1146 = vunpack.c.l.b16 %v116
    %v1147 = vunpack.c.h.b16 %v116
    %v1148 = vunpack.c.l.b16 %v117
    %v1149 = vunpack.c.h.b16 %v117
    %v1150 = vunpack.c.l.b16 %v118
    %v1151 = vunpack.c.h.b16 %v118
    %v1152 = vunpack.c.l.b16 %v119
    %v1153 = vunpack.c.h.b16 %v119
    %v1154 = vunpack.c.l.b16 %v120
    %v1155 = vunpack.c.h.b16 %v120
    %v1156 = vunpack.c.l.b16 %v121
    %v1157 = vunpack.c.h.b16 %v121
    %v1158 = vunpack.c.l.b16 %v122
    %v1159 = vunpack.c.h.b16 %v122
    %v1160 = vunpack.c.l.b16 %v123
    %v1161 = vunpack.c.h.b16 %v123
    %v1162 = vunpack.c.l.b16 %v124
    %v1163 = vunpack.c.h.b16 %v124
    %v1164 = vunpack.c.l.b16 %v125
    %v1165 = vunpack.c.h.b16 %v125
    %v1166 = vunpack.c.l.b16 %v126
    %v1167 = vunpack.c.h.b16 %v126
    %v1168 = vunpack.c.l.b16 %v127
    %v1169 = vunpack.c.h.b16 %v127
    %v1170 = vunpack.c.l.b16 %v128
    %v1171 = vunpack.c.h.b16 %v128
    %v1172 = vunpack.c.l.b16 %v129
    %v1173 = vunpack.c.h.b16 %v129
    %v1174 = vunpack.c.l.b16 %v130
    %v1175 = vunpack.c.h.b16 %v130
    %v1176 = vunpack.c.l.b16 %v131
    %v1177 = vunpack.c.h.b16 %v131
    %v1178 = vunpack.c.l.b16 %v132
    %v1179 = vunpack.c.h.b16 %v132
    %v1180 = vunpack.c.l.b16 %v133
    %v1181 = vunpack.c.h.b16 %v133
    %v1182 = vunpack.c.l.b16 %v134
    %v1183 = vunpack.c.h.b16 %v134
    %v1184 = vunpack.c.l.b16 %v135
    %v1185 = vunpack.c.h.b16 %v135
    %v1186 = vunpack.c.l.b16 %v136
    %v1187 = vunpack.c.h.b16 %v136
    %v1188 = vunpack.c.l.b16 %v137
    %v1189 = vunpack.c.h.b16 %v137
    %v1190 = vunpack.c.l.b16 %v138
    %v1191 = vunpack.c.h.b16 %v138
    %v1192 = vunpack.c.l.b16 %v139
    %v1193 = vunpack.c.h.b16 %v139
    %v1194 = vunpack.c.l.b16 %v140
    %v1195 = vunpack.c.h.b16 %v140
    %v1196 = vunpack.c.l.b16 %v141
    %v1197 = vunpack.c.h.b16 %v141
    %v1198 = vunpack.c.l.b16 %v142
    %v1199 = vunpack.c.h.b16 %v142
    %v1200 = vunpack.c.l.b16 %v143
    %v1201 = vunpack.c.h.b16 %v143
    %v1202 = vunpack.c.l.b16 %v144
    %v1203 = vunpack.c.h.b16 %v144
    %v1204 = vunpack.c.l.b16 %v145
    %v1205 = vunpack.c.h.b16 %v145
    %v1206 = vunpack.c.l.b16 %v146
    %v1207 = vunpack.c.h.b16 %v146
    %v1208 = vunpack.c.l.b16 %v147
    %v1209 = vunpack.c.h.b16 %v147
    %v1210 = vunpack.c.l.b16 %v148
    %v1211 = vunpack.c.h.b16 %v148
    %v1212 = vunpack.c.l.b16 %v149
    %v1213 = vunpack.c.h.b16 %v149
    %v1214 = vunpack.c.l.b16 %v150
    %v1215 = vunpack.c.h.b16 %v150
    %v1216 = vunpack.c.l.b16 %v151
    %v1217 = vunpack.c.h.b16 %v151
    %v1218 = vunpack.c.l.b16 %v152
    %v1219 = vunpack.c.h.b16 %v152
    %v1220 = vunpack.c.l.b16 %v153
    %v1221 = vunpack.c.h.b16 %v153
    %v1222 = vunpack.c.l.b16 %v154
    %v1223 = vunpack.c.h.b16 %v154
    %v1224 = vunpack.c.l.b16 %v155
    %v1225 = vunpack.c.h.b16 %v155
    %v1226 = vunpack.c.l.b16 %v156
    %v1227 = vunpack.c.h.b16 %v156
    %v1228 = vunpack.c.l.b16 %v157
    %v1229 = vunpack.c.h.b16 %v157
    %v1230 = vunpack.c.l.b16 %v158
    %v1231 = vunpack.c.h.b16 %v158
    %v1232 = vunpack.c.l.b16 %v159
    %v1233 = vunpack.c.h.b16 %v159
    %v1234 = vunpack.c.l.b16 %v160
    %v1235 = vunpack.c.h.b16 %v160
    %v1236 = vunpack.c.l.b16 %v161
    %v1237 = vunpack.c.h.b16 %v161
    %v1238 = vunpack.c.l.b16 %v162
    %v1239 = vunpack.c.h.b16 %v162
    %v1240 = vunpack.c.l.b16 %v163
    %v1241 = vunpack.c.h.b16 %v163
    %v1242 = vunpack.c.l.b16 %v164
    %v1243 = vunpack.c.h.b16 %v164
    %v1244 = vunpack.c.l.b16 %v165
    %v1245 = vunpack.c.h.b16 %v165
    %v1246 = vunpack.c.l.b16 %v166
    %v1247 = vunpack.c.h.b16 %v166
    %v1248 = vunpack.c.l.b16 %v167
    %v1249 = vunpack.c.h.b16 %v167
    %v1250 = vunpack.c.l.b16 %v168
    %v1251 = vunpack.c.h.b16 %v168
    %v1252 = vunpack.c.l.b16 %v169
    %v1253 = vunpack.c.h.b16 %v169
    %v1254 = vunpack.c.l.b16 %v170
    %v1255 = vunpack.c.h.b16 %v170
    %v1256 = vunpack.c.l.b16 %v171
    %v1257 = vunpack.c.h.b16 %v171
    %v1258 = vunpack.c.l.b16 %v172
    %v1259 = vunpack.c.h.b16 %v172
    %v1260 = vunpack.c.l.b16 %v173
    %v1261 = vunpack.c.h.b16 %v173
    %v1262 = vunpack.c.l.b16 %v174
    %v1263 = vunpack.c.h.b16 %v174
    %v1264 = vunpack.c.l.b16 %v175
    %v1265 = vunpack.c.h.b16 %v175
    %v1266 = vunpack.c.l.b16 %v176
    %v1267 = vunpack.c.h.b16 %v176
    %v1268 = vunpack.c.l.b16 %v177
    %v1269 = vunpack.c.h.b16 %v177
    %v1270 = vunpack.c.l.b16 %v178
    %v1271 = vunpack.c.h.b16 %v178
    %v1272 = vunpack.c.l.b16 %v179
    %v1273 = vunpack.c.h.b16 %v179
    %v1274 = vunpack.c.l.b16 %v180
    %v1275 = vunpack.c.h.b16 %v180
    %v1276 = vunpack.c.l.b16 %v181
    %v1277 = vunpack.c.h.b16 %v181
    %v1278 = vunpack.c.l.b16 %v182
    %v1279 = vunpack.c.h.b16 %v182
    %v1280 = vunpack.c.l.b16 %v183
    %v1281 = vunpack.c.h.b16 %v183
    %v1282 = vunpack.c.l.b16 %v184
    %v1283 = vunpack.c.h.b16 %v184
    %v1284 = vunpack.c.l.b16 %v185
    %v1285 = vunpack.c.h.b16 %v185
    %v1286 = vunpack.c.l.b16 %v186
    %v1287 = vunpack.c.h.b16 %v186
    %v1288 = vunpack.c.l.b16 %v187
    %v1289 = vunpack.c.h.b16 %v187
    %v1290 = vunpack.c.l.b16 %v188
    %v1291 = vunpack.c.h.b16 %v188
    %v1292 = vunpack.c.l.b16 %v189
    %v1293 = vunpack.c.h.b16 %v189
    %v1294 = vunpack.c.l.b16 %v190
    %v1295 = vunpack.c.h.b16 %v190
    %v1296 = vunpack.c.l.b16 %v191
    %v1297 = vunpack.c.h.b16 %v191
    %v1298 = vunpack.c.l.b16 %v192
    %v1299 = vunpack.c.h.b16 %v192
    %v1300 = vunpack.c.l.b16 %v193
    %v1301 = vunpack.c.h.b16 %v193
    %v1302 = vunpack.c.l.b16 %v194
    %v1303 = vunpack.c.h.b16 %v194
    %v1304 = vunpack.c.l.b16 %v195
    %v1305 = vunpack.c.h.b16 %v195
    %v1306 = vunpack.c.l.b16 %v196
    %v1307 = vunpack.c.h.b16 %v196
    %v1308 = vunpack.c.l.b16 %v197
    %v1309 = vunpack.c.h.b16 %v197
    %v1310 = vunpack.c.l.b16 %v198
    %v1311 = vunpack.c.h.b16 %v198
    %v1312 = vunpack.c.l.b16 %v199
    %v1313 = vunpack.c.h.b16 %v199
    %v1314 = vunpack.c.l.b16 %v200
    %v1315 = vunpack.c.h.b16 %v200
    %v1316 = vunpack.c.l.b16 %v201
    %v1317 = vunpack.c.h.b16 %v201
    %v1318 = vunpack.c.l.b16 %v202
    %v1319 = vunpack.c.h.b16 %v202
    %v1320 = vunpack.c.l.b16 %v203
    %v1321 = vunpack.c.h.b16 %v203
    %v1322 = vunpack.c.l.b16 %v204
    %v1323 = vunpack.c.h.b16 %v204
    %v1324 = vunpack.c.l.b16 %v205
    %v1325 = vunpack.c.h.b16 %v205
    %v1326 = vunpack.c.l.b16 %v206
    %v1327 = vunpack.c.h.b16 %v206
    %v1328 = vunpack.c.l.b16 %v207
    %v1329 = vunpack.c.h.b16 %v207
    %v1330 = vunpack.c.l.b16 %v208
    %v1331 = vunpack.c.h.b16 %v208
    %v1332 = vunpack.c.l.b16 %v209
    %v1333 = vunpack.c.h.b16 %v209
    %v1334 = vunpack.c.l.b16 %v210
    %v1335 = vunpack.c.h.b16 %v210
    %v1336 = vunpack.c.l.b16 %v211
    %v1337 = vunpack.c.h.b16 %v211
    %v1338 = vunpack.c.l.b16 %v212
    %v1339 = vunpack.c.h.b16 %v212
    %v1340 = vunpack.c.l.b16 %v213
    %v1341 = vunpack.c.h.b16 %v213
    %v1342 = vunpack.c.l.b16 %v214
    %v1343 = vunpack.c.h.b16 %v214
    %v1344 = vunpack.c.l.b16 %v215
    %v1345 = vunpack.c.h.b16 %v215
    %v1346 = vunpack.c.l.b16 %v216
    %v1347 = vunpack.c.h.b16 %v216
    %v1348 = vunpack.c.l.b16 %v217
    %v1349 = vunpack.c.h.b16 %v217
    %v1350 = vunpack.c.l.b16 %v218
    %v1351 = vunpack.c.h.b16 %v218
    %v1352 = vunpack.c.l.b16 %v219
    %v1353 = vunpack.c.h.b16 %v219
    %v1354 = vunpack.c.l.b16 %v220
    %v1355 = vunpack.c.h.b16 %v220
    %v1356 = vunpack.c.l.b16 %v221
    %v1357 = vunpack.c.h.b16 %v221
    %v1358 = vunpack.c.l.b16 %v222
    %v1359 = vunpack.c.h.b16 %v222
    %v1360 = vunpack.c.l.b16 %v223
    %v1361 = vunpack.c.h.b16 %v223
    %v1362 = vunpack.c.l.b16 %v224
    %v1363 = vunpack.c.h.b16 %v224
    %v1364 = vunpack.c.l.b16 %v225
    %v1365 = vunpack.c.h.b16 %v225
    %v1366 = vunpack.c.l.b16 %v226
    %v1367 = vunpack.c.h.b16 %v226
    %v1368 = vunpack.c.l.b16 %v227
    %v1369 = vunpack.c.h.b16 %v227
    %v1370 = vunpack.c.l.b16 %v228
    %v1371 = vunpack.c.h.b16 %v228
    %v1372 = vunpack.c.l.b16 %v229
    %v1373 = vunpack.c.h.b16 %v229
    %v1374 = vunpack.c.l.b16 %v230
    %v1375 = vunpack.c.h.b16 %v230
    %v1376 = vunpack.c.l.b16 %v231
    %v1377 = vunpack.c.h.b16 %v231
    %v1378 = vunpack.c.l.b16 %v232
    %v1379 = vunpack.c.h.b16 %v232
    %v1380 = vunpack.c.l.b16 %v233
    %v1381 = vunpack.c.h.b16 %v233
    %v1382 = vunpack.c.l.b16 %v234
    %v1383 = vunpack.c.h.b16 %v234
    %v1384 = vunpack.c.l.b16 %v235
    %v1385 = vunpack.c.h.b16 %v235
    %v1386 = vunpack.c.l.b16 %v236
    %v1387 = vunpack.c.h.b16 %v236
    %v1388 = vunpack.c.l.b16 %v237
    %v1389 = vunpack.c.h.b16 %v237
    %v1390 = vunpack.c.l.b16 %v238
    %v1391 = vunpack.c.h.b16 %v238
    %v1392 = vunpack.c.l.b16 %v239
    %v1393 = vunpack.c.h.b16 %v239
    %v1394 = vunpack.c.l.b16 %v240
    %v1395 = vunpack.c.h.b16 %v240
    %v1396 = vunpack.c.l.b16 %v241
    %v1397 = vunpack.c.h.b16 %v241
    %v1398 = vunpack.c.l.b16 %v242
    %v1399 = vunpack.c.h.b16 %v242
    %v1400 = vunpack.c.l.b16 %v243
    %v1401 = vunpack.c.h.b16 %v243
    %v1402 = vunpack.c.l.b16 %v244
    %v1403 = vunpack.c.h.b16 %v244
    %v1404 = vunpack.c.l.b16 %v245
    %v1405 = vunpack.c.h.b16 %v245
    %v1406 = vunpack.c.l.b16 %v246
    %v1407 = vunpack.c.h.b16 %v246
    %v1408 = vunpack.c.l.b16 %v247
    %v1409 = vunpack.c.h.b16 %v247
    %v1410 = vunpack.c.l.b16 %v248
    %v1411 = vunpack.c.h.b16 %v248
    %v1412 = vunpack.c.l.b16 %v249
    %v1413 = vunpack.c.h.b16 %v249
    %v1414 = vunpack.c.l.b16 %v250
    %v1415 = vunpack.c.h.b16 %v250
    %v1416 = vunpack.c.l.b16 %v251
    %v1417 = vunpack.c.h.b16 %v251
    %v1418 = vunpack.c.l.b16 %v252
    %v1419 = vunpack.c.h.b16 %v252
    %v1420 = vunpack.c.l.b16 %v253
    %v1421 = vunpack.c.h.b16 %v253
    %v1422 = vunpack.c.l.b16 %v254
    %v1423 = vunpack.c.h.b16 %v254
    %v1424 = vunpack.c.l.b16 %v255
    %v1425 = vunpack.c.h.b16 %v255
    %v1426 = vunpack.c.l.b16 %v256
    %v1427 = vunpack.c.h.b16 %v256
    %v1428 = vunpack.c.l.b16 %v257
    %v1429 = vunpack.c.h.b16 %v257
    %v1430 = vunpack.c.l.b16 %v258
    %v1431 = vunpack.c.h.b16 %v258
    %v1432 = vunpack.c.l.b16 %v259
    %v1433 = vunpack.c.h.b16 %v259
    %v1434 = vunpack.c.l.b16 %v260
    %v1435 = vunpack.c.h.b16 %v260
    %v1436 = vunpack.c.l.b16 %v261
    %v1437 = vunpack.c.h.b16 %v261
    %v1438 = vunpack.c.l.b16 %v262
    %v1439 = vunpack.c.h.b16 %v262
    %v1440 = vunpack.c.l.b16 %v263
    %v1441 = vunpack.c.h.b16 %v263
    %v1442 = vunpack.c.l.b16 %v264
    %v1443 = vunpack.c.h.b16 %v264
    %v1444 = vunpack.c.l.b16 %v265
    %v1445 = vunpack.c.h.b16 %v265
    %v1446 = vunpack.c.l.b16 %v266
    %v1447 = vunpack.c.h.b16 %v266
    %v1448 = vunpack.c.l.b16 %v267
    %v1449 = vunpack.c.h.b16 %v267
    %v1450 = vunpack.c.l.b16 %v268
    %v1451 = vunpack.c.h.b16 %v268
    %v1452 = vunpack.c.l.b16 %v269
    %v1453 = vunpack.c.h.b16 %v269
    %v1454 = vunpack.c.l.b16 %v270
    %v1455 = vunpack.c.h.b16 %v270
    %v1456 = vunpack.c.l.b16 %v271
    %v1457 = vunpack.c.h.b16 %v271
    %v1458 = vunpack.c.l.b16 %v272
    %v1459 = vunpack.c.h.b16 %v272
    %v1460 = vunpack.c.l.b16 %v273
    %v1461 = vunpack.c.h.b16 %v273
    %v1462 = vunpack.c.l.b16 %v274
    %v1463 = vunpack.c.h.b16 %v274
    %v1464 = vunpack.c.l.b16 %v275
    %v1465 = vunpack.c.h.b16 %v275
    %v1466 = vunpack.c.l.b16 %v276
    %v1467 = vunpack.c.h.b16 %v276
    %v1468 = vunpack.c.l.b16 %v277
    %v1469 = vunpack.c.h.b16 %v277
    %v1470 = vunpack.c.l.b16 %v278
    %v1471 = vunpack.c.h.b16 %v278
    %v1472 = vunpack.c.l.b16 %v279
    %v1473 = vunpack.c.h.b16 %v279
    %v1474 = vunpack.c.l.b16 %v280
    %v1475 = vunpack.c.h.b16 %v280
    %v1476 = vunpack.c.l.b16 %v281
    %v1477 = vunpack.c.h.b16 %v281
    %v1478 = vunpack.c.l.b16 %v282
    %v1479 = vunpack.c.h.b16 %v282
    %v1480 = vunpack.c.l.b16 %v283
    %v1481 = vunpack.c.h.b16 %v283
    %v1482 = vunpack.c.l.b16 %v284
    %v1483 = vunpack.c.h.b16 %v284
    %v1484 = vunpack.c.l.b16 %v285
    %v1485 = vunpack.c.h.b16 %v285
    %v1486 = vunpack.c.l.b16 %v286
    %v1487 = vunpack.c.h.b16 %v286
    %v1488 = vunpack.c.l.b16 %v287
    %v1489 = vunpack.c.h.b16 %v287
    %v1490 = vunpack.c.l.b16 %v288
    %v1491 = vunpack.c.h.b16 %v288
    %v1492 = vunpack.c.l.b16 %v289
    %v1493 = vunpack.c.h.b16 %v289
    %v1494 = vunpack.c.l.b16 %v290
    %v1495 = vunpack.c.h.b16 %v290
    %v1496 = vunpack.c.l.b16 %v291
    %v1497 = vunpack.c.h.b16 %v291
    %v1498 = vunpack.c.l.b16 %v292
    %v1499 = vunpack.c.h.b16 %v292
    %v1500 = vunpack.c.l.b16 %v293
    %v1501 = vunpack.c.h.b16 %v293
    %v1502 = vunpack.c.l.b16 %v294
    %v1503 = vunpack.c.h.b16 %v294
    %v1504 = vunpack.c.l.b16 %v295
    %v1505 = vunpack.c.h.b16 %v295
    %v1506 = vunpack.c.l.b16 %v296
    %v1507 = vunpack.c.h.b16 %v296
    %v1508 = vunpack.c.l.b16 %v297
    %v1509 = vunpack.c.h.b16 %v297
    %v1510 = vunpack.c.l.b16 %v298
    %v1511 = vunpack.c.h.b16 %v298
    %v1512 = vunpack.c.l.b16 %v299
    %v1513 = vunpack.c.h.b16 %v299
    %v1514 = vunpack.c.l.b16 %v300
    %v1515 = vunpack.c.h.b16 %v300
    %v1516 = vunpack.c.l.b16 %v301
    %v1517 = vunpack.c.h.b16 %v301
    %v1518 = vunpack.c.l.b16 %v302
    %v1519 = vunpack.c.h.b16 %v302
    %v1520 = vunpack.c.l.b16 %v303
    %v1521 = vunpack.c.h.b16 %v303
    %v1522 = vunpack.c.l.b16 %v304
    %v1523 = vunpack.c.h.b16 %v304
    %v1524 = vunpack.c.l.b16 %v305
    %v1525 = vunpack.c.h.b16 %v305
    %v1526 = vunpack.c.l.b16 %v306
    %v1527 = vunpack.c.h.b16 %v306
    %v1528 = vunpack.c.l.b16 %v307
    %v1529 = vunpack.c.h.b16 %v307
    %v1530 = vunpack.c.l.b16 %v308
    %v1531 = vunpack.c.h.b16 %v308
    %v1532 = vunpack.c.l.b16 %v309
    %v1533 = vunpack.c.h.b16 %v309
    %v1534 = vunpack.c.l.b16 %v310
    %v1535 = vunpack.c.h.b16 %v310
    %v1536 = vunpack.c.l.b16 %v311
    %v1537 = vunpack.c.h.b16 %v311
    %v1538 = vunpack.c.l.b16 %v312
    %v1539 = vunpack.c.h.b16 %v312
    %v1540 = vunpack.c.l.b16 %v313
    %v1541 = vunpack.c.h.b16 %v313
    %v1542 = vunpack.c.l.b16 %v314
    %v1543 = vunpack.c.h.b16 %v314
    %v1544 = vunpack.c.l.b16 %v315
    %v1545 = vunpack.c.h.b16 %v315
    %v1546 = vunpack.c.l.b16 %v316
    %v1547 = vunpack.c.h.b16 %v316
    %v1548 = vunpack.c.l.b16 %v317
    %v1549 = vunpack.c.h.b16 %v317
    %v1550 = vunpack.c.l.b16 %v318
    %v1551 = vunpack.c.h.b16 %v318
    %v1552 = vunpack.c.l.b16 %v319
    %v1553 = vunpack.c.h.b16 %v319
    %v1554 = vunpack.c.l.b16 %v320
    %v1555 = vunpack.c.h.b16 %v320
    %v1556 = vunpack.c.l.b16 %v321
    %v1557 = vunpack.c.h.b16 %v321
    %v1558 = vunpack.c.l.b16 %v322
    %v1559 = vunpack.c.h.b16 %v322
    %v1560 = vunpack.c.l.b16 %v323
    %v1561 = vunpack.c.h.b16 %v323
    %v1562 = vunpack.c.l.b16 %v324
    %v1563 = vunpack.c.h.b16 %v324
    %v1564 = vunpack.c.l.b16 %v325
    %v1565 = vunpack.c.h.b16 %v325
    %v1566 = vunpack.c.l.b16 %v326
    %v1567 = vunpack.c.h.b16 %v326
    %v1568 = vunpack.c.l.b16 %v327
    %v1569 = vunpack.c.h.b16 %v327
    %v1570 = vunpack.c.l.b16 %v328
    %v1571 = vunpack.c.h.b16 %v328
    %v1572 = vunpack.c.l.b16 %v329
    %v1573 = vunpack.c.h.b16 %v329
    %v1574 = vunpack.c.l.b16 %v330
    %v1575 = vunpack.c.h.b16 %v330
    %v1576 = vunpack.c.l.b16 %v331
    %v1577 = vunpack.c.h.b16 %v331
    %v1578 = vunpack.c.l.b16 %v332
    %v1579 = vunpack.c.h.b16 %v332
    %v1580 = vunpack.c.l.b16 %v333
    %v1581 = vunpack.c.h.b16 %v333
    %v1582 = vunpack.c.l.b16 %v334
    %v1583 = vunpack.c.h.b16 %v334
    %v1584 = vunpack.c.l.b16 %v335
    %v1585 = vunpack.c.h.b16 %v335
    %v1586 = vunpack.c.l.b16 %v336
    %v1587 = vunpack.c.h.b16 %v336
    %v1588 = vunpack.c.l.b16 %v337
    %v1589 = vunpack.c.h.b16 %v337
    %v1590 = vunpack.c.l.b16 %v338
    %v1591 = vunpack.c.h.b16 %v338
    %v1592 = vunpack.c.l.b16 %v339
    %v1593 = vunpack.c.h.b16 %v339
    %v1594 = vunpack.c.l.b16 %v340
    %v1595 = vunpack.c.h.b16 %v340
    %v1596 = vunpack.c.l.b16 %v341
    %v1597 = vunpack.c.h.b16 %v341
    %v1598 = vunpack.c.l.b16 %v342
    %v1599 = vunpack.c.h.b16 %v342
    %v1600 = vunpack.c.l.b16 %v343
    %v1601 = vunpack.c.h.b16 %v343
    %v1602 = vunpack.c.l.b16 %v344
    %v1603 = vunpack.c.h.b16 %v344
    %v1604 = vunpack.c.l.b16 %v345
    %v1605 = vunpack.c.h.b16 %v345
    %v1606 = vunpack.c.l.b16 %v346
    %v1607 = vunpack.c.h.b16 %v346
    %v1608 = vunpack.c.l.b16 %v347
    %v1609 = vunpack.c.h.b16 %v347
    %v1610 = vunpack.c.l.b16 %v348
    %v1611 = vunpack.c.h.b16 %v348
    %v1612 = vunpack.c.l.b16 %v349
    %v1613 = vunpack.c.h.b16 %v349
    %v1614 = vunpack.c.l.b16 %v350
    %v1615 = vunpack.c.h.b16 %v350
    %v1616 = vunpack.c.l.b16 %v351
    %v1617 = vunpack.c.h.b16 %v351
    %v1618 = vunpack.c.l.b16 %v352
    %v1619 = vunpack.c.h.b16 %v352
    %v1620 = vunpack.c.l.b16 %v353
    %v1621 = vunpack.c.h.b16 %v353
    %v1622 = vunpack.c.l.b16 %v354
    %v1623 = vunpack.c.h.b16 %v354
    %v1624 = vunpack.c.l.b16 %v355
    %v1625 = vunpack.c.h.b16 %v355
    %v1626 = vunpack.c.l.b16 %v356
    %v1627 = vunpack.c.h.b16 %v356
    %v1628 = vunpack.c.l.b16 %v357
    %v1629 = vunpack.c.h.b16 %v357
    %v1630 = vunpack.c.l.b16 %v358
    %v1631 = vunpack.c.h.b16 %v358
    %v1632 = vunpack.c.l.b16 %v359
    %v1633 = vunpack.c.h.b16 %v359
    %v1634 = vunpack.c.l.b16 %v360
    %v1635 = vunpack.c.h.b16 %v360
    %v1636 = vunpack.c.l.b16 %v361
    %v1637 = vunpack.c.h.b16 %v361
    %v1638 = vunpack.c.l.b16 %v362
    %v1639 = vunpack.c.h.b16 %v362
    %v1640 = vunpack.c.l.b16 %v363
    %v1641 = vunpack.c.h.b16 %v363
    %v1642 = vunpack.c.l.b16 %v364
    %v1643 = vunpack.c.h.b16 %v364
    %v1644 = vunpack.c.l.b16 %v365
    %v1645 = vunpack.c.h.b16 %v365
    %v1646 = vunpack.c.l.b16 %v366
    %v1647 = vunpack.c.h.b16 %v366
    %v1648 = vunpack.c.l.b16 %v367
    %v1649 = vunpack.c.h.b16 %v367
    %v1650 = vunpack.c.l.b16 %v368
    %v1651 = vunpack.c.h.b16 %v368
    %v1652 = vunpack.c.l.b16 %v369
    %v1653 = vunpack.c.h.b16 %v369
    %v1654 = vunpack.c.l.b16 %v370
    %v1655 = vunpack.c.h.b16 %v370
    %v1656 = vunpack.c.l.b16 %v371
    %v1657 = vunpack.c.h.b16 %v371
    %v1658 = vunpack.c.l.b16 %v372
    %v1659 = vunpack.c.h.b16 %v372
    %v1660 = vunpack.c.l.b16 %v373
    %v1661 = vunpack.c.h.b16 %v373
    %v1662 = vunpack.c.l.b16 %v374
    %v1663 = vunpack.c.h.b16 %v374
    %v1664 = vunpack.c.l.b16 %v375
    %v1665 = vunpack.c.h.b16 %v375
    %v1666 = vunpack.c.l.b16 %v376
    %v1667 = vunpack.c.h.b16 %v376
    %v1668 = vunpack.c.l.b16 %v377
    %v1669 = vunpack.c.h.b16 %v377
    %v1670 = vunpack.c.l.b16 %v378
    %v1671 = vunpack.c.h.b16 %v378
    %v1672 = vunpack.c.l.b16 %v379
    %v1673 = vunpack.c.h.b16 %v379
    %v1674 = vunpack.c.l.b16 %v380
    %v1675 = vunpack.c.h.b16 %v380
    %v1676 = vunpack.c.l.b16 %v381
    %v1677 = vunpack.c.h.b16 %v381
    %v1678 = vunpack.c.l.b16 %v382
    %v1679 = vunpack.c.h.b16 %v382
    %v1680 = vunpack.c.l.b16 %v383
    %v1681 = vunpack.c.h.b16 %v383
    %v1682 = vunpack.c.l.b16 %v384
    %v1683 = vunpack.c.h.b16 %v384
    %v1684 = vunpack.c.l.b16 %v385
    %v1685 = vunpack.c.h.b16 %v385
    %v1686 = vunpack.c.l.b16 %v386
    %v1687 = vunpack.c.h.b16 %v386
    %v1688 = vunpack.c.l.b16 %v387
    %v1689 = vunpack.c.h.b16 %v387
    %v1690 = vunpack.c.l.b16 %v388
    %v1691 = vunpack.c.h.b16 %v388
    %v1692 = vunpack.c.l.b16 %v389
    %v1693 = vunpack.c.h.b16 %v389
    %v1694 = vunpack.c.l.b16 %v390
    %v1695 = vunpack.c.h.b16 %v390
    %v1696 = vunpack.c.l.b16 %v391
    %v1697 = vunpack.c.h.b16 %v391
    %v1698 = vunpack.c.l.b16 %v392
    %v1699 = vunpack.c.h.b16 %v392
    %v1700 = vunpack.c.l.b16 %v393
    %v1701 = vunpack.c.h.b16 %v393
    %v1702 = vunpack.c.l.b16 %v394
    %v1703 = vunpack.c.h.b16 %v394
    %v1704 = vunpack.c.l.b16 %v395
    %v1705 = vunpack.c.h.b16 %v395
    %v1706 = vunpack.c.l.b16 %v396
    %v1707 = vunpack.c.h.b16 %v396
    %v1708 = vunpack.c.l.b16 %v397
    %v1709 = vunpack.c.h.b16 %v397
    %v1710 = vunpack.c.l.b16 %v398
    %v1711 = vunpack.c.h.b16 %v398
    %v1712 = vunpack.c.l.b16 %v399
    %v1713 = vunpack.c.h.b16 %v399
    %v1714 = vunpack.c.l.b16 %v400
    %v1715 = vunpack.c.h.b16 %v400
    %v1716 = vunpack.c.l.b16 %v401
    %v1717 = vunpack.c.h.b16 %v401
    %v1718 = vunpack.c.l.b16 %v402
    %v1719 = vunpack.c.h.b16 %v402
    %v1720 = vunpack.c.l.b16 %v403
    %v1721 = vunpack.c.h.b16 %v403
    %v1722 = vunpack.c.l.b16 %v404
    %v1723 = vunpack.c.h.b16 %v404
    %v1724 = vunpack.c.l.b16 %v405
    %v1725 = vunpack.c.h.b16 %v405
    %v1726 = vunpack.c.l.b16 %v406
    %v1727 = vunpack.c.h.b16 %v406
    %v1728 = vunpack.c.l.b16 %v407
    %v1729 = vunpack.c.h.b16 %v407
    %v1730 = vunpack.c.l.b16 %v408
    %v1731 = vunpack.c.h.b16 %v408
    %v1732 = vunpack.c.l.b16 %v409
    %v1733 = vunpack.c.h.b16 %v409
    %v1734 = vunpack.c.l.b16 %v410
    %v1735 = vunpack.c.h.b16 %v410
    %v1736 = vunpack.c.l.b16 %v411
    %v1737 = vunpack.c.h.b16 %v411
    %v1738 = vunpack.c.l.b16 %v412
    %v1739 = vunpack.c.h.b16 %v412
    %v1740 = vunpack.c.l.b16 %v413
    %v1741 = vunpack.c.h.b16 %v413
    %v1742 = vunpack.c.l.b16 %v414
    %v1743 = vunpack.c.h.b16 %v414
    %v1744 = vunpack.c.l.b16 %v415
    %v1745 = vunpack.c.h.b16 %v415
    %v1746 = vunpack.c.l.b16 %v416
    %v1747 = vunpack.c.h.b16 %v416
    %v1748 = vunpack.c.l.b16 %v417
    %v1749 = vunpack.c.h.b16 %v417
    %v1750 = vunpack.c.l.b16 %v418
    %v1751 = vunpack.c.h.b16 %v418
    %v1752 = vunpack.c.l.b16 %v419
    %v1753 = vunpack.c.h.b16 %v419
    %v1754 = vunpack.c.l.b16 %v420
    %v1755 = vunpack.c.h.b16 %v420
    %v1756 = vunpack.c.l.b16 %v421
    %v1757 = vunpack.c.h.b16 %v421
    %v1758 = vunpack.c.l.b16 %v422
    %v1759 = vunpack.c.h.b16 %v422
    %v1760 = vunpack.c.l.b16 %v423
    %v1761 = vunpack.c.h.b16 %v423
    %v1762 = vunpack.c.l.b16 %v424
    %v1763 = vunpack.c.h.b16 %v424
    %v1764 = vunpack.c.l.b16 %v425
    %v1765 = vunpack.c.h.b16 %v425
    %v1766 = vunpack.c.l.b16 %v426
    %v1767 = vunpack.c.h.b16 %v426
    %v1768 = vunpack.c.l.b16 %v427
    %v1769 = vunpack.c.h.b16 %v427
    %v1770 = vunpack.c.l.b16 %v428
    %v1771 = vunpack.c.h.b16 %v428
    %v1772 = vunpack.c.l.b16 %v429
    %v1773 = vunpack.c.h.b16 %v429
    %v1774 = vunpack.c.l.b16 %v430
    %v1775 = vunpack.c.h.b16 %v430
    %v1776 = vunpack.c.l.b16 %v431
    %v1777 = vunpack.c.h.b16 %v431
    %v1778 = vunpack.c.l.b16 %v432
    %v1779 = vunpack.c.h.b16 %v432
    %v1780 = vunpack.c.l.b16 %v433
    %v1781 = vunpack.c.h.b16 %v433
    %v1782 = vunpack.c.l.b16 %v434
    %v1783 = vunpack.c.h.b16 %v434
    %v1784 = vunpack.c.l.b16 %v435
    %v1785 = vunpack.c.h.b16 %v435
    %v1786 = vunpack.c.l.b16 %v436
    %v1787 = vunpack.c.h.b16 %v436
    %v1788 = vunpack.c.l.b16 %v437
    %v1789 = vunpack.c.h.b16 %v437
    %v1790 = vunpack.c.l.b16 %v438
    %v1791 = vunpack.c.h.b16 %v438
    %v1792 = vunpack.c.l.b16 %v439
    %v1793 = vunpack.c.h.b16 %v439
    %v1794 = vunpack.c.l.b16 %v440
    %v1795 = vunpack.c.h.b16 %v440
    %v1796 = vunpack.c.l.b16 %v441
    %v1797 = vunpack.c.h.b16 %v441
    %v1798 = vunpack.c.l.b16 %v442
    %v1799 = vunpack.c.h.b16 %v442
    %v1800 = vunpack.c.l.b16 %v443
    %v1801 = vunpack.c.h.b16 %v443
    %v1802 = vunpack.c.l.b16 %v444
    %v1803 = vunpack.c.h.b16 %v444
    %v1804 = vunpack.c.l.b16 %v445
    %v1805 = vunpack.c.h.b16 %v445
    %v1806 = vunpack.c.l.b16 %v446
    %v1807 = vunpack.c.h.b16 %v446
    %v1808 = vunpack.c.l.b16 %v447
    %v1809 = vunpack.c.h.b16 %v447
    %v1810 = vunpack.c.l.b16 %v448
    %v1811 = vunpack.c.h.b16 %v448
    %v1812 = vunpack.c.l.b16 %v449
    %v1813 = vunpack.c.h.b16 %v449
    %v1814 = vunpack.c.l.b16 %v450
    %v1815 = vunpack.c.h.b16 %v450
    %v1816 = vunpack.c.l.b16 %v451
    %v1817 = vunpack.c.h.b16 %v451
    %v1818 = vunpack.c.l.b16 %v452
    %v1819 = vunpack.c.h.b16 %v452
    %v1820 = vunpack.c.l.b16 %v453
    %v1821 = vunpack.c.h.b16 %v453
    %v1822 = vunpack.c.l.b16 %v454
    %v1823 = vunpack.c.h.b16 %v454
    %v1824 = vunpack.c.l.b16 %v455
    %v1825 = vunpack.c.h.b16 %v455
    %v1826 = vunpack.c.l.b16 %v456
    %v1827 = vunpack.c.h.b16 %v456
    %v1828 = vunpack.c.l.b16 %v457
    %v1829 = vunpack.c.h.b16 %v457
    %v1830 = vunpack.c.l.b16 %v458
    %v1831 = vunpack.c.h.b16 %v458
    %v1832 = vunpack.c.l.b16 %v459
    %v1833 = vunpack.c.h.b16 %v459
    %v1834 = vunpack.c.l.b16 %v460
    %v1835 = vunpack.c.h.b16 %v460
    %v1836 = vunpack.c.l.b16 %v461
    %v1837 = vunpack.c.h.b16 %v461
    %v1838 = vunpack.c.l.b16 %v462
    %v1839 = vunpack.c.h.b16 %v462
    %v1840 = vunpack.c.l.b16 %v463
    %v1841 = vunpack.c.h.b16 %v463
    %v1842 = vunpack.c.l.b16 %v464
    %v1843 = vunpack.c.h.b16 %v464
    %v1844 = vunpack.c.l.b16 %v465
    %v1845 = vunpack.c.h.b16 %v465
    %v1846 = vunpack.c.l.b16 %v466
    %v1847 = vunpack.c.h.b16 %v466
    %v1848 = vunpack.c.l.b16 %v467
    %v1849 = vunpack.c.h.b16 %v467
    %v1850 = vunpack.c.l.b16 %v468
    %v1851 = vunpack.c.h.b16 %v468
    %v1852 = vunpack.c.l.b16 %v469
    %v1853 = vunpack.c.h.b16 %v469
    %v1854 = vunpack.c.l.b16 %v470
    %v1855 = vunpack.c.h.b16 %v470
    %v1856 = vunpack.c.l.b16 %v471
    %v1857 = vunpack.c.h.b16 %v471
    %v1858 = vunpack.c.l.b16 %v472
    %v1859 = vunpack.c.h.b16 %v472
    %v1860 = vunpack.c.l.b16 %v473
    %v1861 = vunpack.c.h.b16 %v473
    %v1862 = vunpack.c.l.b16 %v474
    %v1863 = vunpack.c.h.b16 %v474
    %v1864 = vunpack.c.l.b16 %v475
    %v1865 = vunpack.c.h.b16 %v475
    %v1866 = vunpack.c.l.b16 %v476
    %v1867 = vunpack.c.h.b16 %v476
    %v1868 = vunpack.c.l.b16 %v477
    %v1869 = vunpack.c.h.b16 %v477
    %v1870 = vunpack.c.l.b16 %v478
    %v1871 = vunpack.c.h.b16 %v478
    %v1872 = vunpack.c.l.b16 %v479
    %v1873 = vunpack.c.h.b16 %v479
    %v1874 = vunpack.c.l.b16 %v480
    %v1875 = vunpack.c.h.b16 %v480
    %v1876 = vunpack.c.l.b16 %v481
    %v1877 = vunpack.c.h.b16 %v481
    %v1878 = vunpack.c.l.b16 %v482
    %v1879 = vunpack.c.h.b16 %v482
    %v1880 = vunpack.c.l.b16 %v483
    %v1881 = vunpack.c.h.b16 %v483
    %v1882 = vunpack.c.l.b16 %v484
    %v1883 = vunpack.c.h.b16 %v484
    %v1884 = vunpack.c.l.b16 %v485
    %v1885 = vunpack.c.h.b16 %v485
    %v1886 = vunpack.c.l.b16 %v486
    %v1887 = vunpack.c.h.b16 %v486
    %v1888 = vunpack.c.l.b16 %v487
    %v1889 = vunpack.c.h.b16 %v487
    %v1890 = vunpack.c.l.b16 %v488
    %v1891 = vunpack.c.h.b16 %v488
    %v1892 = vunpack.c.l.b16 %v489
    %v1893 = vunpack.c.h.b16 %v489
    %v1894 = vunpack.c.l.b16 %v490
    %v1895 = vunpack.c.h.b16 %v490
    %v1896 = vunpack.c.l.b16 %v491
    %v1897 = vunpack.c.h.b16 %v491
    %v1898 = vunpack.c.l.b16 %v492
    %v1899 = vunpack.c.h.b16 %v492
    %v1900 = vunpack.c.l.b16 %v493
    %v1901 = vunpack.c.h.b16 %v493
    %v1902 = vunpack.c.l.b16 %v494
    %v1903 = vunpack.c.h.b16 %v494
    %v1904 = vunpack.c.l.b16 %v495
    %v1905 = vunpack.c.h.b16 %v495
    %v1906 = vunpack.c.l.b16 %v496
    %v1907 = vunpack.c.h.b16 %v496
    %v1908 = vunpack.c.l.b16 %v497
    %v1909 = vunpack.c.h.b16 %v497
    %v1910 = vunpack.c.l.b16 %v498
    %v1911 = vunpack.c.h.b16 %v498
    %v1912 = vunpack.c.l.b16 %v499
    %v1913 = vunpack.c.h.b16 %v499
    %v1914 = vunpack.c.l.b16 %v500
    %v1915 = vunpack.c.h.b16 %v500
    %v1916 = vunpack.c.l.b16 %v501
    %v1917 = vunpack.c.h.b16 %v501
    %v1918 = vunpack.c.l.b16 %v502
    %v1919 = vunpack.c.h.b16 %v502
    %v1920 = vunpack.c.l.b16 %v503
    %v1921 = vunpack.c.h.b16 %v503
    %v1922 = vunpack.c.l.b16 %v504
    %v1923 = vunpack.c.h.b16 %v504
    %v1924 = vunpack.c.l.b16 %v505
    %v1925 = vunpack.c.h.b16 %v505
    %v1926 = vunpack.c.l.b16 %v506
    %v1927 = vunpack.c.h.b16 %v506
    %v1928 = vunpack.c.l.b16 %v507
    %v1929 = vunpack.c.h.b16 %v507
    %v1930 = vunpack.c.l.b16 %v508
    %v1931 = vunpack.c.h.b16 %v508
    %v1932 = vunpack.c.l.b16 %v509
    %v1933 = vunpack.c.h.b16 %v509
    %v1934 = vunpack.c.l.b16 %v510
    %v1935 = vunpack.c.h.b16 %v510
    %v1936 = vunpack.c.l.b16 %v511
    %v1937 = vunpack.c.h.b16 %v511
    %v1938 = vunpack.c.l.b16 %v512
    %v1939 = vunpack.c.h.b16 %v512
    %v1940 = vunpack.c.l.b16 %v513
    %v1941 = vunpack.c.h.b16 %v513
    %v1942 = vunpack.c.l.b16 %v514
    %v1943 = vunpack.c.h.b16 %v514
    %v1944 = vunpack.c.l.b16 %v515
    %v1945 = vunpack.c.h.b16 %v515
    %v1946 = vunpack.c.l.b16 %v516
    %v1947 = vunpack.c.h.b16 %v516
    %v1948 = vunpack.c.l.b16 %v517
    %v1949 = vunpack.c.h.b16 %v517
    %v1950 = vunpack.c.l.b16 %v518
    %v1951 = vunpack.c.h.b16 %v518
    %v1952 = vunpack.c.l.b16 %v519
    %v1953 = vunpack.c.h.b16 %v519
    %v1954 = vunpack.c.l.b16 %v520
    %v1955 = vunpack.c.h.b16 %v520
    %v1956 = vunpack.c.l.b16 %v521
    %v1957 = vunpack.c.h.b16 %v521
    %v1958 = vunpack.c.l.b16 %v522
    %v1959 = vunpack.c.h.b16 %v522
    %v1960 = vunpack.c.l.b16 %v523
    %v1961 = vunpack.c.h.b16 %v523
    %v1962 = vunpack.c.l.b16 %v524
    %v1963 = vunpack.c.h.b16 %v524
    %v1964 = vunpack.c.l.b16 %v525
    %v1965 = vunpack.c.h.b16 %v525
    %v1966 = vunpack.c.l.b16 %v526
    %v1967 = vunpack.c.h.b16 %v526
    %v1968 = vunpack.c.l.b16 %v527
    %v1969 = vunpack.c.h.b16 %v527
    %v1970 = vunpack.c.l.b16 %v528
    %v1971 = vunpack.c.h.b16 %v528
    %v1972 = vunpack.c.l.b16 %v529
    %v1973 = vunpack.c.h.b16 %v529
    %v1974 = vunpack.c.l.b16 %v530
    %v1975 = vunpack.c.h.b16 %v530
    %v1976 = vunpack.c.l.b16 %v531
    %v1977 = vunpack.c.h.b16 %v531
    %v1978 = vunpack.c.l.b16 %v532
    %v1979 = vunpack.c.h.b16 %v532
    %v1980 = vunpack.c.l.b16 %v533
    %v1981 = vunpack.c.h.b16 %v533
    %v1982 = vunpack.c.l.b16 %v534
    %v1983 = vunpack.c.h.b16 %v534
    %v1984 = vunpack.c.l.b16 %v535
    %v1985 = vunpack.c.h.b16 %v535
    %v1986 = vunpack.c.l.b16 %v536
    %v1987 = vunpack.c.h.b16 %v536
    %v1988 = vunpack.c.l.b16 %v537
    %v1989 = vunpack.c.h.b16 %v537
    %v1990 = vunpack.c.l.b16 %v538
    %v1991 = vunpack.c.h.b16 %v538
    %v1992 = vunpack.c.l.b16 %v539
    %v1993 = vunpack.c.h.b16 %v539
    %v1994 = vunpack.c.l.b16 %v540
    %v1995 = vunpack.c.h.b16 %v540
    %v1996 = vunpack.c.l.b16 %v541
    %v1997 = vunpack.c.h.b16 %v541
    %v1998 = vunpack.c.l.b16 %v542
    %v1999 = vunpack.c.h.b16 %v542
    %v2000 = vunpack.c.l.b16 %v543
    %v2001 = vunpack.c.h.b16 %v543
    %v2002 = vunpack.c.l.b16 %v544
    %v2003 = vunpack.c.h.b16 %v544
    %v2004 = vunpack.c.l.b16 %v545
    %v2005 = vunpack.c.h.b16 %v545
    %v2006 = vunpack.c.l.b16 %v546
    %v2007 = vunpack.c.h.b16 %v546
    %v2008 = vunpack.c.l.b16 %v547
    %v2009 = vunpack.c.h.b16 %v547
    %v2010 = vunpack.c.l.b16 %v548
    %v2011 = vunpack.c.h.b16 %v548
    %v2012 = vunpack.c.l.b16 %v549
    %v2013 = vunpack.c.h.b16 %v549
    %v2014 = vunpack.c.l.b16 %v550
    %v2015 = vunpack.c.h.b16 %v550
    %v2016 = vunpack.c.l.b16 %v551
    %v2017 = vunpack.c.h.b16 %v551
    %v2018 = vunpack.c.l.b16 %v552
    %v2019 = vunpack.c.h.b16 %v552
    %v2020 = vunpack.c.l.b16 %v553
    %v2021 = vunpack.c.h.b16 %v553
    %v2022 = vunpack.c.l.b16 %v554
    %v2023 = vunpack.c.h.b16 %v554
    %v2024 = vunpack.c.l.b16 %v555
    %v2025 = vunpack.c.h.b16 %v555
    %v2026 = vunpack.c.l.b16 %v556
    %v2027 = vunpack.c.h.b16 %v556
    %v2028 = vunpack.c.l.b16 %v557
    %v2029 = vunpack.c.h.b16 %v557
    %v2030 = vunpack.c.l.b16 %v558
    %v2031 = vunpack.c.h.b16 %v558
    %v2032 = vunpack.c.l.b16 %v559
    %v2033 = vunpack.c.h.b16 %v559
    %v2034 = vunpack.c.l.b16 %v560
    %v2035 = vunpack.c.h.b16 %v560
    %v2036 = vunpack.c.l.b16 %v561
    %v2037 = vunpack.c.h.b16 %v561
    %v2038 = vunpack.c.l.b16 %v562
    %v2039 = vunpack.c.h.b16 %v562
    %v2040 = vunpack.c.l.b16 %v563
    %v2041 = vunpack.c.h.b16 %v563
    %v2042 = vunpack.c.l.b16 %v564
    %v2043 = vunpack.c.h.b16 %v564
    %v2044 = vunpack.c.l.b16 %v565
    %v2045 = vunpack.c.h.b16 %v565
    %v2046 = vunpack.c.l.b16 %v566
    %v2047 = vunpack.c.h.b16 %v566
    %v2048 = vunpack.c.l.b16 %v567
    %v2049 = vunpack.c.h.b16 %v567
    %v2050 = vunpack.c.l.b16 %v568
    %v2051 = vunpack.c.h.b16 %v568
    %v2052 = vunpack.c.l.b16 %v569
    %v2053 = vunpack.c.h.b16 %v569
    %v2054 = vunpack.c.l.b16 %v570
    %v2055 = vunpack.c.h.b16 %v570
    %v2056 = vunpack.c.l.b16 %v571
    %v2057 = vunpack.c.h.b16 %v571
    %v2058 = vunpack.c.l.b16 %v572
    %v2059 = vunpack.c.h.b16 %v572
    %v2060 = vunpack.c.l.b16 %v573
    %v2061 = vunpack.c.h.b16 %v573
    %v2062 = vunpack.c.l.b16 %v574
    %v2063 = vunpack.c.h.b16 %v574
    %v2064 = vunpack.c.l.b16 %v575
    %v2065 = vunpack.c.h.b16 %v575
    %v2066 = vunpack.c.l.b16 %v576
    %v2067 = vunpack.c.h.b16 %v576
    %v2068 = vunpack.c.l.b16 %v577
    %v2069 = vunpack.c.h.b16 %v577
    %v2070 = vunpack.c.l.b16 %v578
    %v2071 = vunpack.c.h.b16 %v578
    %v2072 = vunpack.c.l.b16 %v579
    %v2073 = vunpack.c.h.b16 %v579
    %v2074 = vunpack.c.l.b16 %v580
    %v2075 = vunpack.c.h.b16 %v580
    %v2076 = vunpack.c.l.b16 %v581
    %v2077 = vunpack.c.h.b16 %v581
    %v2078 = vunpack.c.l.b16 %v582
    %v2079 = vunpack.c.h.b16 %v582
    %v2080 = vunpack.c.l.b16 %v583
    %v2081 = vunpack.c.h.b16 %v583
    %v2082 = vunpack.c.l.b16 %v584
    %v2083 = vunpack.c.h.b16 %v584
    %v2084 = vunpack.c.l.b16 %v585
    %v2085 = vunpack.c.h.b16 %v585
    %v2086 = vunpack.c.l.b16 %v586
    %v2087 = vunpack.c.h.b16 %v586
    %v2088 = vunpack.c.l.b16 %v587
    %v2089 = vunpack.c.h.b16 %v587
    %v2090 = vunpack.c.l.b16 %v588
    %v2091 = vunpack.c.h.b16 %v588
    %v2092 = vunpack.c.l.b16 %v589
    %v2093 = vunpack.c.h.b16 %v589
    %v2094 = vunpack.c.l.b16 %v590
    %v2095 = vunpack.c.h.b16 %v590
    %v2096 = vunpack.c.l.b16 %v591
    %v2097 = vunpack.c.h.b16 %v591
    %v2098 = vunpack.c.l.b16 %v592
    %v2099 = vunpack.c.h.b16 %v592
    %v2100 = vunpack.c.l.b16 %v593
    %v2101 = vunpack.c.h.b16 %v593
    %v2102 = vunpack.c.l.b16 %v594
    %v2103 = vunpack.c.h.b16 %v594
    %v2104 = vunpack.c.l.b16 %v595
    %v2105 = vunpack.c.h.b16 %v595
    %v2106 = vunpack.c.l.b16 %v596
    %v2107 = vunpack.c.h.b16 %v596
    %v2108 = vunpack.c.l.b16 %v597
    %v2109 = vunpack.c.h.b16 %v597
    %v2110 = vunpack.c.l.b16 %v598
    %v2111 = vunpack.c.h.b16 %v598
    %v2112 = vunpack.c.l.b16 %v599
    %v2113 = vunpack.c.h.b16 %v599
    %v2114 = vunpack.c.l.b16 %v600
    %v2115 = vunpack.c.h.b16 %v600
    %v2116 = vunpack.c.l.b16 %v601
    %v2117 = vunpack.c.h.b16 %v601
    %v2118 = vunpack.c.l.b16 %v602
    %v2119 = vunpack.c.h.b16 %v602
    %v2120 = vunpack.c.l.b16 %v603
    %v2121 = vunpack.c.h.b16 %v603
    %v2122 = vunpack.c.l.b16 %v604
    %v2123 = vunpack.c.h.b16 %v604
    %v2124 = vunpack.c.l.b16 %v605
    %v2125 = vunpack.c.h.b16 %v605
    %v2126 = vunpack.c.l.b16 %v606
    %v2127 = vunpack.c.h.b16 %v606
    %v2128 = vunpack.c.l.b16 %v607
    %v2129 = vunpack.c.h.b16 %v607
    %v2130 = vunpack.c.l.b16 %v608
    %v2131 = vunpack.c.h.b16 %v608
    %v2132 = vunpack.c.l.b16 %v609
    %v2133 = vunpack.c.h.b16 %v609
    %v2134 = vunpack.c.l.b16 %v610
    %v2135 = vunpack.c.h.b16 %v610
    %v2136 = vunpack.c.l.b16 %v611
    %v2137 = vunpack.c.h.b16 %v611
    %v2138 = vunpack.c.l.b16 %v612
    %v2139 = vunpack.c.h.b16 %v612
    %v2140 = vunpack.c.l.b16 %v613
    %v2141 = vunpack.c.h.b16 %v613
    %v2142 = vunpack.c.l.b16 %v614
    %v2143 = vunpack.c.h.b16 %v614
    %v2144 = vunpack.c.l.b16 %v615
    %v2145 = vunpack.c.h.b16 %v615
    %v2146 = vunpack.c.l.b16 %v616
    %v2147 = vunpack.c.h.b16 %v616
    %v2148 = vunpack.c.l.b16 %v617
    %v2149 = vunpack.c.h.b16 %v617
    %v2150 = vunpack.c.l.b16 %v618
    %v2151 = vunpack.c.h.b16 %v618
    %v2152 = vunpack.c.l.b16 %v619
    %v2153 = vunpack.c.h.b16 %v619
    %v2154 = vunpack.c.l.b16 %v620
    %v2155 = vunpack.c.h.b16 %v620
    %v2156 = vunpack.c.l.b16 %v621
    %v2157 = vunpack.c.h.b16 %v621
    %v2158 = vpack.c.b16 %v1142, %v1134
    %v2159 = vpack.c.b16 %v1143, %v1135
    %v2160 = vpack.c.b16 %v1144, %v1136
    %v2161 = vpack.c.b16 %v1145, %v1137
    %v2162 = vpack.c.b16 %v1146, %v1138
    %v2163 = vpack.c.b16 %v1147, %v1139
    %v2164 = vpack.c.b16 %v1148, %v1140
    %v2165 = vpack.c.b16 %v1149, %v1141
    %v2166 = vpack.c.b16 %v1158, %v1150
    %v2167 = vpack.c.b16 %v1159, %v1151
    %v2168 = vpack.c.b16 %v1160, %v1152
    %v2169 = vpack.c.b16 %v1161, %v1153
    %v2170 = vpack.c.b16 %v1162, %v1154
    %v2171 = vpack.c.b16 %v1163, %v1155
    %v2172 = vpack.c.b16 %v1164, %v1156
    %v2173 = vpack.c.b16 %v1165, %v1157
    %v2174 = vpack.c.b16 %v1174, %v1166
    %v2175 = vpack.c.b16 %v1175, %v1167
    %v2176 = vpack.c.b16 %v1176, %v1168
    %v2177 = vpack.c.b16 %v1177, %v1169
    %v2178 = vpack.c.b16 %v1178, %v1170
    %v2179 = vpack.c.b16 %v1179, %v1171
    %v2180 = vpack.c.b16 %v1180, %v1172
    %v2181 = vpack.c.b16 %v1181, %v1173
    %v2182 = vpack.c.b16 %v1190, %v1182
    %v2183 = vpack.c.b16 %v1191, %v1183
    %v2184 = vpack.c.b16 %v1192, %v1184
    %v2185 = vpack.c.b16 %v1193, %v1185
    %v2186 = vpack.c.b16 %v1194, %v1186
    %v2187 = vpack.c.b16 %v1195, %v1187
    %v2188 = vpack.c.b16 %v1196, %v1188
    %v2189 = vpack.c.b16 %v1197, %v1189
    %v2190 = vpack.c.b16 %v1206, %v1198
    %v2191 = vpack.c.b16 %v1207, %v1199
    %v2192 = vpack.c.b16 %v1208, %v1200
    %v2193 = vpack.c.b16 %v1209, %v1201
    %v2194 = vpack.c.b16 %v1210, %v1202
    %v2195 = vpack.c.b16 %v1211, %v1203
    %v2196 = vpack.c.b16 %v1212, %v1204
    %v2197 = vpack.c.b16 %v1213, %v1205
    %v2198 = vpack.c.b16 %v1222, %v1214
    %v2199 = vpack.c.b16 %v1223, %v1215
    %v2200 = vpack.c.b16 %v1224, %v1216
    %v2201 = vpack.c.b16 %v1225, %v1217
    %v2202 = vpack.c.b16 %v1226, %v1218
    %v2203 = vpack.c.b16 %v1227, %v1219
    %v2204 = vpack.c.b16 %v1228, %v1220
    %v2205 = vpack.c.b16 %v1229, %v1221
    %v2206 = vpack.c.b16 %v1238, %v1230
    %v2207 = vpack.c.b16 %v1239, %v1231
    %v2208 = vpack.c.b16 %v1240, %v1232
    %v2209 = vpack.c.b16 %v1241, %v1233
    %v2210 = vpack.c.b16 %v1242, %v1234
    %v2211 = vpack.c.b16 %v1243, %v1235
    %v2212 = vpack.c.b16 %v1244, %v1236
    %v2213 = vpack.c.b16 %v1245, %v1237
    %v2214 = vpack.c.b16 %v1254, %v1246
    %v2215 = vpack.c.b16 %v1255, %v1247
    %v2216 = vpack.c.b16 %v1256, %v1248
    %v2217 = vpack.c.b16 %v1257, %v1249
    %v2218 = vpack.c.b16 %v1258, %v1250
    %v2219 = vpack.c.b16 %v1259, %v1251
    %v2220 = vpack.c.b16 %v1260, %v1252
    %v2221 = vpack.c.b16 %v1261, %v1253
    %v2222 = vpack.c.b16 %v1270, %v1262
    %v2223 = vpack.c.b16 %v1271, %v1263
    %v2224 = vpack.c.b16 %v1272, %v1264
    %v2225 = vpack.c.b16 %v1273, %v1265
    %v2226 = vpack.c.b16 %v1274, %v1266
    %v2227 = vpack.c.b16 %v1275, %v1267
    %v2228 = vpack.c.b16 %v1276, %v1268
    %v2229 = vpack.c.b16 %v1277, %v1269
    %v2230 = vpack.c.b16 %v1286, %v1278
    %v2231 = vpack.c.b16 %v1287, %v1279
    %v2232 = vpack.c.b16 %v1288, %v1280
    %v2233 = vpack.c.b16 %v1289, %v1281
    %v2234 = vpack.c.b16 %v1290, %v1282
    %v2235 = vpack.c.b16 %v1291, %v1283
    %v2236 = vpack.c.b16 %v1292, %v1284
    %v2237 = vpack.c.b16 %v1293, %v1285
    %v2238 = vpack.c.b16 %v1302, %v1294
    %v2239 = vpack.c.b16 %v1303, %v1295
    %v2240 = vpack.c.b16 %v1304, %v1296
    %v2241 = vpack.c.b16 %v1305, %v1297
    %v2242 = vpack.c.b16 %v1306, %v1298
    %v2243 = vpack.c.b16 %v1307, %v1299
    %v2244 = vpack.c.b16 %v1308, %v1300
    %v2245 = vpack.c.b16 %v1309, %v1301
    %v2246 = vpack.c.b16 %v1318, %v1310
    %v2247 = vpack.c.b16 %v1319, %v1311
    %v2248 = vpack.c.b16 %v1320, %v1312
    %v2249 = vpack.c.b16 %v1321, %v1313
    %v2250 = vpack.c.b16 %v1322, %v1314
    %v2251 = vpack.c.b16 %v1323, %v1315
    %v2252 = vpack.c.b16 %v1324, %v1316
    %v2253 = vpack.c.b16 %v1325, %v1317
    %v2254 = vpack.c.b16 %v1334, %v1326
    %v2255 = vpack.c.b16 %v1335, %v1327
    %v2256 = vpack.c.b16 %v1336, %v1328
    %v2257 = vpack.c.b16 %v1337, %v1329
    %v2258 = vpack.c.b16 %v1338, %v1330
    %v2259 = vpack.c.b16 %v1339, %v1331
    %v2260 = vpack.c.b16 %v1340, %v1332
    %v2261 = vpack.c.b16 %v1341, %v1333
    %v2262 = vpack.c.b16 %v1350, %v1342
    %v2263 = vpack.c.b16 %v1351, %v1343
    %v2264 = vpack.c.b16 %v1352, %v1344
    %v2265 = vpack.c.b16 %v1353, %v1345
    %v2266 = vpack.c.b16 %v1354, %v1346
    %v2267 = vpack.c.b16 %v1355, %v1347
    %v2268 = vpack.c.b16 %v1356, %v1348
    %v2269 = vpack.c.b16 %v1357, %v1349
    %v2270 = vpack.c.b16 %v1366, %v1358
    %v2271 = vpack.c.b16 %v1367, %v1359
    %v2272 = vpack.c.b16 %v1368, %v1360
    %v2273 = vpack.c.b16 %v1369, %v1361
    %v2274 = vpack.c.b16 %v1370, %v1362
    %v2275 = vpack.c.b16 %v1371, %v1363
    %v2276 = vpack.c.b16 %v1372, %v1364
    %v2277 = vpack.c.b16 %v1373, %v1365
    %v2278 = vpack.c.b16 %v1382, %v1374
    %v2279 = vpack.c.b16 %v1383, %v1375
    %v2280 = vpack.c.b16 %v1384, %v1376
    %v2281 = vpack.c.b16 %v1385, %v1377
    %v2282 = vpack.c.b16 %v1386, %v1378
    %v2283 = vpack.c.b16 %v1387, %v1379
    %v2284 = vpack.c.b16 %v1388, %v1380
    %v2285 = vpack.c.b16 %v1389, %v1381
    %v2286 = vpack.c.b16 %v1398, %v1390
    %v2287 = vpack.c.b16 %v1399, %v1391
    %v2288 = vpack.c.b16 %v1400, %v1392
    %v2289 = vpack.c.b16 %v1401, %v1393
    %v2290 = vpack.c.b16 %v1402, %v1394
    %v2291 = vpack.c.b16 %v1403, %v1395
    %v2292 = vpack.c.b16 %v1404, %v1396
    %v2293 = vpack.c.b16 %v1405, %v1397
    %v2294 = vpack.c.b16 %v1414, %v1406
    %v2295 = vpack.c.b16 %v1415, %v1407
    %v2296 = vpack.c.b16 %v1416, %v1408
    %v2297 = vpack.c.b16 %v1417, %v1409
    %v2298 = vpack.c.b16 %v1418, %v1410
    %v2299 = vpack.c.b16 %v1419, %v1411
    %v2300 = vpack.c.b16 %v1420, %v1412
    %v2301 = vpack.c.b16 %v1421, %v1413
    %v2302 = vpack.c.b16 %v1430, %v1422
    %v2303 = vpack.c.b16 %v1431, %v1423
    %v2304 = vpack.c.b16 %v1432, %v1424
    %v2305 = vpack.c.b16 %v1433, %v1425
    %v2306 = vpack.c.b16 %v1434, %v1426
    %v2307 = vpack.c.b16 %v1435, %v1427
    %v2308 = vpack.c.b16 %v1436, %v1428
    %v2309 = vpack.c.b16 %v1437, %v1429
    %v2310 = vpack.c.b16 %v1446, %v1438
    %v2311 = vpack.c.b16 %v1447, %v1439
    %v2312 = vpack.c.b16 %v1448, %v1440
    %v2313 = vpack.c.b16 %v1449, %v1441
    %v2314 = vpack.c.b16 %v1450, %v1442
    %v2315 = vpack.c.b16 %v1451, %v1443
    %v2316 = vpack.c.b16 %v1452, %v1444
    %v2317 = vpack.c.b16 %v1453, %v1445
    %v2318 = vpack.c.b16 %v1462, %v1454
    %v2319 = vpack.c.b16 %v1463, %v1455
    %v2320 = vpack.c.b16 %v1464, %v1456
    %v2321 = vpack.c.b16 %v1465, %v1457
    %v2322 = vpack.c.b16 %v1466, %v1458
    %v2323 = vpack.c.b16 %v1467, %v1459
    %v2324 = vpack.c.b16 %v1468, %v1460
    %v2325 = vpack.c.b16 %v1469, %v1461
    %v2326 = vpack.c.b16 %v1478, %v1470
    %v2327 = vpack.c.b16 %v1479, %v1471
    %v2328 = vpack.c.b16 %v1480, %v1472
    %v2329 = vpack.c.b16 %v1481, %v1473
    %v2330 = vpack.c.b16 %v1482, %v1474
    %v2331 = vpack.c.b16 %v1483, %v1475
    %v2332 = vpack.c.b16 %v1484, %v1476
    %v2333 = vpack.c.b16 %v1485, %v1477
    %v2334 = vpack.c.b16 %v1494, %v1486
    %v2335 = vpack.c.b16 %v1495, %v1487
    %v2336 = vpack.c.b16 %v1496, %v1488
    %v2337 = vpack.c.b16 %v1497, %v1489
    %v2338 = vpack.c.b16 %v1498, %v1490
    %v2339 = vpack.c.b16 %v1499, %v1491
    %v2340 = vpack.c.b16 %v1500, %v1492
    %v2341 = vpack.c.b16 %v1501, %v1493
    %v2342 = vpack.c.b16 %v1510, %v1502
    %v2343 = vpack.c.b16 %v1511, %v1503
    %v2344 = vpack.c.b16 %v1512, %v1504
    %v2345 = vpack.c.b16 %v1513, %v1505
    %v2346 = vpack.c.b16 %v1514, %v1506
    %v2347 = vpack.c.b16 %v1515, %v1507
    %v2348 = vpack.c.b16 %v1516, %v1508
    %v2349 = vpack.c.b16 %v1517, %v1509
    %v2350 = vpack.c.b16 %v1526, %v1518
    %v2351 = vpack.c.b16 %v1527, %v1519
    %v2352 = vpack.c.b16 %v1528, %v1520
    %v2353 = vpack.c.b16 %v1529, %v1521
    %v2354 = vpack.c.b16 %v1530, %v1522
    %v2355 = vpack.c.b16 %v1531, %v1523
    %v2356 = vpack.c.b16 %v1532, %v1524
    %v2357 = vpack.c.b16 %v1533, %v1525
    %v2358 = vpack.c.b16 %v1542, %v1534
    %v2359 = vpack.c.b16 %v1543, %v1535
    %v2360 = vpack.c.b16 %v1544, %v1536
    %v2361 = vpack.c.b16 %v1545, %v1537
    %v2362 = vpack.c.b16 %v1546, %v1538
    %v2363 = vpack.c.b16 %v1547, %v1539
    %v2364 = vpack.c.b16 %v1548, %v1540
    %v2365 = vpack.c.b16 %v1549, %v1541
    %v2366 = vpack.c.b16 %v1558, %v1550
    %v2367 = vpack.c.b16 %v1559, %v1551
    %v2368 = vpack.c.b16 %v1560, %v1552
    %v2369 = vpack.c.b16 %v1561, %v1553
    %v2370 = vpack.c.b16 %v1562, %v1554
    %v2371 = vpack.c.b16 %v1563, %v1555
    %v2372 = vpack.c.b16 %v1564, %v1556
    %v2373 = vpack.c.b16 %v1565, %v1557
    %v2374 = vpack.c.b16 %v1574, %v1566
    %v2375 = vpack.c.b16 %v1575, %v1567
    %v2376 = vpack.c.b16 %v1576, %v1568
    %v2377 = vpack.c.b16 %v1577, %v1569
    %v2378 = vpack.c.b16 %v1578, %v1570
    %v2379 = vpack.c.b16 %v1579, %v1571
    %v2380 = vpack.c.b16 %v1580, %v1572
    %v2381 = vpack.c.b16 %v1581, %v1573
    %v2382 = vpack.c.b16 %v1590, %v1582
    %v2383 = vpack.c.b16 %v1591, %v1583
    %v2384 = vpack.c.b16 %v1592, %v1584
    %v2385 = vpack.c.b16 %v1593, %v1585
    %v2386 = vpack.c.b16 %v1594, %v1586
    %v2387 = vpack.c.b16 %v1595, %v1587
    %v2388 = vpack.c.b16 %v1596, %v1588
    %v2389 = vpack.c.b16 %v1597, %v1589
    %v2390 = vpack.c.b16 %v1606, %v1598
    %v2391 = vpack.c.b16 %v1607, %v1599
    %v2392 = vpack.c.b16 %v1608, %v1600
    %v2393 = vpack.c.b16 %v1609, %v1601
    %v2394 = vpack.c.b16 %v1610, %v1602
    %v2395 = vpack.c.b16 %v1611, %v1603
    %v2396 = vpack.c.b16 %v1612, %v1604
    %v2397 = vpack.c.b16 %v1613, %v1605
    %v2398 = vpack.c.b16 %v1622, %v1614
    %v2399 = vpack.c.b16 %v1623, %v1615
    %v2400 = vpack.c.b16 %v1624, %v1616
    %v2401 = vpack.c.b16 %v1625, %v1617
    %v2402 = vpack.c.b16 %v1626, %v1618
    %v2403 = vpack.c.b16 %v1627, %v1619
    %v2404 = vpack.c.b16 %v1628, %v1620
    %v2405 = vpack.c.b16 %v1629, %v1621
    %v2406 = vpack.c.b16 %v1638, %v1630
    %v2407 = vpack.c.b16 %v1639, %v1631
    %v2408 = vpack.c.b16 %v1640, %v1632
    %v2409 = vpack.c.b16 %v1641, %v1633
    %v2410 = vpack.c.b16 %v1642, %v1634
    %v2411 = vpack.c.b16 %v1643, %v1635
    %v2412 = vpack.c.b16 %v1644, %v1636
    %v2413 = vpack.c.b16 %v1645, %v1637
    %v2414 = vpack.c.b16 %v1654, %v1646
    %v2415 = vpack.c.b16 %v1655, %v1647
    %v2416 = vpack.c.b16 %v1656, %v1648
    %v2417 = vpack.c.b16 %v1657, %v1649
    %v2418 = vpack.c.b16 %v1658, %v1650
    %v2419 = vpack.c.b16 %v1659, %v1651
    %v2420 = vpack.c.b16 %v1660, %v1652
    %v2421 = vpack.c.b16 %v1661, %v1653
    %v2422 = vpack.c.b16 %v1670, %v1662
    %v2423 = vpack.c.b16 %v1671, %v1663
    %v2424 = vpack.c.b16 %v1672, %v1664
    %v2425 = vpack.c.b16 %v1673, %v1665
    %v2426 = vpack.c.b16 %v1674, %v1666
    %v2427 = vpack.c.b16 %v1675, %v1667
    %v2428 = vpack.c.b16 %v1676, %v1668
    %v2429 = vpack.c.b16 %v1677, %v1669
    %v2430 = vpack.c.b16 %v1686, %v1678
    %v2431 = vpack.c.b16 %v1687, %v1679
    %v2432 = vpack.c.b16 %v1688, %v1680
    %v2433 = vpack.c.b16 %v1689, %v1681
    %v2434 = vpack.c.b16 %v1690, %v1682
    %v2435 = vpack.c.b16 %v1691, %v1683
    %v2436 = vpack.c.b16 %v1692, %v1684
    %v2437 = vpack.c.b16 %v1693, %v1685
    %v2438 = vpack.c.b16 %v1702, %v1694
    %v2439 = vpack.c.b16 %v1703, %v1695
    %v2440 = vpack.c.b16 %v1704, %v1696
    %v2441 = vpack.c.b16 %v1705, %v1697
    %v2442 = vpack.c.b16 %v1706, %v1698
    %v2443 = vpack.c.b16 %v1707, %v1699
    %v2444 = vpack.c.b16 %v1708, %v1700
    %v2445 = vpack.c.b16 %v1709, %v1701
    %v2446 = vpack.c.b16 %v1718, %v1710
    %v2447 = vpack.c.b16 %v1719, %v1711
    %v2448 = vpack.c.b16 %v1720, %v1712
    %v2449 = vpack.c.b16 %v1721, %v1713
    %v2450 = vpack.c.b16 %v1722, %v1714
    %v2451 = vpack.c.b16 %v1723, %v1715
    %v2452 = vpack.c.b16 %v1724, %v1716
    %v2453 = vpack.c.b16 %v1725, %v1717
    %v2454 = vpack.c.b16 %v1734, %v1726
    %v2455 = vpack.c.b16 %v1735, %v1727
    %v2456 = vpack.c.b16 %v1736, %v1728
    %v2457 = vpack.c.b16 %v1737, %v1729
    %v2458 = vpack.c.b16 %v1738, %v1730
    %v2459 = vpack.c.b16 %v1739, %v1731
    %v2460 = vpack.c.b16 %v1740, %v1732
    %v2461 = vpack.c.b16 %v1741, %v1733
    %v2462 = vpack.c.b16 %v1750, %v1742
    %v2463 = vpack.c.b16 %v1751, %v1743
    %v2464 = vpack.c.b16 %v1752, %v1744
    %v2465 = vpack.c.b16 %v1753, %v1745
    %v2466 = vpack.c.b16 %v1754, %v1746
    %v2467 = vpack.c.b16 %v1755, %v1747
    %v2468 = vpack.c.b16 %v1756, %v1748
    %v2469 = vpack.c.b16 %v1757, %v1749
    %v2470 = vpack.c.b16 %v1766, %v1758
    %v2471 = vpack.c.b16 %v1767, %v1759
    %v2472 = vpack.c.b16 %v1768, %v1760
    %v2473 = vpack.c.b16 %v1769, %v1761
    %v2474 = vpack.c.b16 %v1770, %v1762
    %v2475 = vpack.c.b16 %v1771, %v1763
    %v2476 = vpack.c.b16 %v1772, %v1764
    %v2477 = vpack.c.b16 %v1773, %v1765
    %v2478 = vpack.c.b16 %v1782, %v1774
    %v2479 = vpack.c.b16 %v1783, %v1775
    %v2480 = vpack.c.b16 %v1784, %v1776
    %v2481 = vpack.c.b16 %v1785, %v1777
    %v2482 = vpack.c.b16 %v1786, %v1778
    %v2483 = vpack.c.b16 %v1787, %v1779
    %v2484 = vpack.c.b16 %v1788, %v1780
    %v2485 = vpack.c.b16 %v1789, %v1781
    %v2486 = vpack.c.b16 %v1798, %v1790
    %v2487 = vpack.c.b16 %v1799, %v1791
    %v2488 = vpack.c.b16 %v1800, %v1792
    %v2489 = vpack.c.b16 %v1801, %v1793
    %v2490 = vpack.c.b16 %v1802, %v1794
    %v2491 = vpack.c.b16 %v1803, %v1795
    %v2492 = vpack.c.b16 %v1804, %v1796
    %v2493 = vpack.c.b16 %v1805, %v1797
    %v2494 = vpack.c.b16 %v1814, %v1806
    %v2495 = vpack.c.b16 %v1815, %v1807
    %v2496 = vpack.c.b16 %v1816, %v1808
    %v2497 = vpack.c.b16 %v1817, %v1809
    %v2498 = vpack.c.b16 %v1818, %v1810
    %v2499 = vpack.c.b16 %v1819, %v1811
    %v2500 = vpack.c.b16 %v1820, %v1812
    %v2501 = vpack.c.b16 %v1821, %v1813
    %v2502 = vpack.c.b16 %v1830, %v1822
    %v2503 = vpack.c.b16 %v1831, %v1823
    %v2504 = vpack.c.b16 %v1832, %v1824
    %v2505 = vpack.c.b16 %v1833, %v1825
    %v2506 = vpack.c.b16 %v1834, %v1826
    %v2507 = vpack.c.b16 %v1835, %v1827
    %v2508 = vpack.c.b16 %v1836, %v1828
    %v2509 = vpack.c.b16 %v1837, %v1829
    %v2510 = vpack.c.b16 %v1846, %v1838
    %v2511 = vpack.c.b16 %v1847, %v1839
    %v2512 = vpack.c.b16 %v1848, %v1840
    %v2513 = vpack.c.b16 %v1849, %v1841
    %v2514 = vpack.c.b16 %v1850, %v1842
    %v2515 = vpack.c.b16 %v1851, %v1843
    %v2516 = vpack.c.b16 %v1852, %v1844
    %v2517 = vpack.c.b16 %v1853, %v1845
    %v2518 = vpack.c.b16 %v1862, %v1854
    %v2519 = vpack.c.b16 %v1863, %v1855
    %v2520 = vpack.c.b16 %v1864, %v1856
    %v2521 = vpack.c.b16 %v1865, %v1857
    %v2522 = vpack.c.b16 %v1866, %v1858
    %v2523 = vpack.c.b16 %v1867, %v1859
    %v2524 = vpack.c.b16 %v1868, %v1860
    %v2525 = vpack.c.b16 %v1869, %v1861
    %v2526 = vpack.c.b16 %v1878, %v1870
    %v2527 = vpack.c.b16 %v1879, %v1871
    %v2528 = vpack.c.b16 %v1880, %v1872
    %v2529 = vpack.c.b16 %v1881, %v1873
    %v2530 = vpack.c.b16 %v1882, %v1874
    %v2531 = vpack.c.b16 %v1883, %v1875
    %v2532 = vpack.c.b16 %v1884, %v1876
    %v2533 = vpack.c.b16 %v1885, %v1877
    %v2534 = vpack.c.b16 %v1894, %v1886
    %v2535 = vpack.c.b16 %v1895, %v1887
    %v2536 = vpack.c.b16 %v1896, %v1888
    %v2537 = vpack.c.b16 %v1897, %v1889
    %v2538 = vpack.c.b16 %v1898, %v1890
    %v2539 = vpack.c.b16 %v1899, %v1891
    %v2540 = vpack.c.b16 %v1900, %v1892
    %v2541 = vpack.c.b16 %v1901, %v1893
    %v2542 = vpack.c.b16 %v1910, %v1902
    %v2543 = vpack.c.b16 %v1911, %v1903
    %v2544 = vpack.c.b16 %v1912, %v1904
    %v2545 = vpack.c.b16 %v1913, %v1905
    %v2546 = vpack.c.b16 %v1914, %v1906
    %v2547 = vpack.c.b16 %v1915, %v1907
    %v2548 = vpack.c.b16 %v1916, %v1908
    %v2549 = vpack.c.b16 %v1917, %v1909
    %v2550 = vpack.c.b16 %v1926, %v1918
    %v2551 = vpack.c.b16 %v1927, %v1919
    %v2552 = vpack.c.b16 %v1928, %v1920
    %v2553 = vpack.c.b16 %v1929, %v1921
    %v2554 = vpack.c.b16 %v1930, %v1922
    %v2555 = vpack.c.b16 %v1931, %v1923
    %v2556 = vpack.c.b16 %v1932, %v1924
    %v2557 = vpack.c.b16 %v1933, %v1925
    %v2558 = vpack.c.b16 %v1942, %v1934
    %v2559 = vpack.c.b16 %v1943, %v1935
    %v2560 = vpack.c.b16 %v1944, %v1936
    %v2561 = vpack.c.b16 %v1945, %v1937
    %v2562 = vpack.c.b16 %v1946, %v1938
    %v2563 = vpack.c.b16 %v1947, %v1939
    %v2564 = vpack.c.b16 %v1948, %v1940
    %v2565 = vpack.c.b16 %v1949, %v1941
    %v2566 = vpack.c.b16 %v1958, %v1950
    %v2567 = vpack.c.b16 %v1959, %v1951
    %v2568 = vpack.c.b16 %v1960, %v1952
    %v2569 = vpack.c.b16 %v1961, %v1953
    %v2570 = vpack.c.b16 %v1962, %v1954
    %v2571 = vpack.c.b16 %v1963, %v1955
    %v2572 = vpack.c.b16 %v1964, %v1956
    %v2573 = vpack.c.b16 %v1965, %v1957
    %v2574 = vpack.c.b16 %v1974, %v1966
    %v2575 = vpack.c.b16 %v1975, %v1967
    %v2576 = vpack.c.b16 %v1976, %v1968
    %v2577 = vpack.c.b16 %v1977, %v1969
    %v2578 = vpack.c.b16 %v1978, %v1970
    %v2579 = vpack.c.b16 %v1979, %v1971
    %v2580 = vpack.c.b16 %v1980, %v1972
    %v2581 = vpack.c.b16 %v1981, %v1973
    %v2582 = vpack.c.b16 %v1990, %v1982
    %v2583 = vpack.c.b16 %v1991, %v1983
    %v2584 = vpack.c.b16 %v1992, %v1984
    %v2585 = vpack.c.b16 %v1993, %v1985
    %v2586 = vpack.c.b16 %v1994, %v1986
    %v2587 = vpack.c.b16 %v1995, %v1987
    %v2588 = vpack.c.b16 %v1996, %v1988
    %v2589 = vpack.c.b16 %v1997, %v1989
    %v2590 = vpack.c.b16 %v2006, %v1998
    %v2591 = vpack.c.b16 %v2007, %v1999
    %v2592 = vpack.c.b16 %v2008, %v2000
    %v2593 = vpack.c.b16 %v2009, %v2001
    %v2594 = vpack.c.b16 %v2010, %v2002
    %v2595 = vpack.c.b16 %v2011, %v2003
    %v2596 = vpack.c.b16 %v2012, %v2004
    %v2597 = vpack.c.b16 %v2013, %v2005
    %v2598 = vpack.c.b16 %v2022, %v2014
    %v2599 = vpack.c.b16 %v2023, %v2015
    %v2600 = vpack.c.b16 %v2024, %v2016
    %v2601 = vpack.c.b16 %v2025, %v2017
    %v2602 = vpack.c.b16 %v2026, %v2018
    %v2603 = vpack.c.b16 %v2027, %v2019
    %v2604 = vpack.c.b16 %v2028, %v2020
    %v2605 = vpack.c.b16 %v2029, %v2021
    %v2606 = vpack.c.b16 %v2038, %v2030
    %v2607 = vpack.c.b16 %v2039, %v2031
    %v2608 = vpack.c.b16 %v2040, %v2032
    %v2609 = vpack.c.b16 %v2041, %v2033
    %v2610 = vpack.c.b16 %v2042, %v2034
    %v2611 = vpack.c.b16 %v2043, %v2035
    %v2612 = vpack.c.b16 %v2044, %v2036
    %v2613 = vpack.c.b16 %v2045, %v2037
    %v2614 = vpack.c.b16 %v2054, %v2046
    %v2615 = vpack.c.b16 %v2055, %v2047
    %v2616 = vpack.c.b16 %v2056, %v2048
    %v2617 = vpack.c.b16 %v2057, %v2049
    %v2618 = vpack.c.b16 %v2058, %v2050
    %v2619 = vpack.c.b16 %v2059, %v2051
    %v2620 = vpack.c.b16 %v2060, %v2052
    %v2621 = vpack.c.b16 %v2061, %v2053
    %v2622 = vpack.c.b16 %v2070, %v2062
    %v2623 = vpack.c.b16 %v2071, %v2063
    %v2624 = vpack.c.b16 %v2072, %v2064
    %v2625 = vpack.c.b16 %v2073, %v2065
    %v2626 = vpack.c.b16 %v2074, %v2066
    %v2627 = vpack.c.b16 %v2075, %v2067
    %v2628 = vpack.c.b16 %v2076, %v2068
    %v2629 = vpack.c.b16 %v2077, %v2069
    %v2630 = vpack.c.b16 %v2086, %v2078
    %v2631 = vpack.c.b16 %v2087, %v2079
    %v2632 = vpack.c.b16 %v2088, %v2080
    %v2633 = vpack.c.b16 %v2089, %v2081
    %v2634 = vpack.c.b16 %v2090, %v2082
    %v2635 = vpack.c.b16 %v2091, %v2083
    %v2636 = vpack.c.b16 %v2092, %v2084
    %v2637 = vpack.c.b16 %v2093, %v2085
    %v2638 = vpack.c.b16 %v2102, %v2094
    %v2639 = vpack.c.b16 %v2103, %v2095
    %v2640 = vpack.c.b16 %v2104, %v2096
    %v2641 = vpack.c.b16 %v2105, %v2097
    %v2642 = vpack.c.b16 %v2106, %v2098
    %v2643 = vpack.c.b16 %v2107, %v2099
    %v2644 = vpack.c.b16 %v2108, %v2100
    %v2645 = vpack.c.b16 %v2109, %v2101
    %v2646 = vpack.c.b16 %v2118, %v2110
    %v2647 = vpack.c.b16 %v2119, %v2111
    %v2648 = vpack.c.b16 %v2120, %v2112
    %v2649 = vpack.c.b16 %v2121, %v2113
    %v2650 = vpack.c.b16 %v2122, %v2114
    %v2651 = vpack.c.b16 %v2123, %v2115
    %v2652 = vpack.c.b16 %v2124, %v2116
    %v2653 = vpack.c.b16 %v2125, %v2117
    %v2654 = vpack.c.b16 %v2134, %v2126
    %v2655 = vpack.c.b16 %v2135, %v2127
    %v2656 = vpack.c.b16 %v2136, %v2128
    %v2657 = vpack.c.b16 %v2137, %v2129
    %v2658 = vpack.c.b16 %v2138, %v2130
    %v2659 = vpack.c.b16 %v2139, %v2131
    %v2660 = vpack.c.b16 %v2140, %v2132
    %v2661 = vpack.c.b16 %v2141, %v2133
    %v2662 = vpack.c.b16 %v2150, %v2142
    %v2663 = vpack.c.b16 %v2151, %v2143
    %v2664 = vpack.c.b16 %v2152, %v2144
    %v2665 = vpack.c.b16 %v2153, %v2145
    %v2666 = vpack.c.b16 %v2154, %v2146
    %v2667 = vpack.c.b16 %v2155, %v2147
    %v2668 = vpack.c.b16 %v2156, %v2148
    %v2669 = vpack.c.b16 %v2157, %v2149
    %3182 = vmatpush.bf16.msra.mxu0 %v2214
    %3183 = vmatpush.bf16.msra.mxu0 %v2206
    %3184 = vmatpush.bf16.msra.mxu0 %v2198
    %3185 = vmatpush.bf16.msra.mxu0 %v2190
    %3186 = vmatpush.bf16.msra.mxu0 %v2182
    %3187 = vmatpush.bf16.msra.mxu0 %v2174
    %3188 = vmatpush.bf16.msra.mxu0 %v2166
    %3189 = vmatpush.bf16.msra.mxu0 %v2158
    %3190 = vmatmul.bf16.gmra.mxu0 %v102
    %v3191 = vpop.f32.mrf.mxu0
    %v3192 = vadd.f32 0.0, %v3191
    %v3193 = vpop.f32.mrf.mxu0
    %3194 = vdwg.mxu0
    %3195 = vmatpush.bf16.msra.mxu0 %v2278
    %3196 = vmatpush.bf16.msra.mxu0 %v2270
    %3197 = vmatpush.bf16.msra.mxu0 %v2262
    %3198 = vmatpush.bf16.msra.mxu0 %v2254
    %3199 = vmatpush.bf16.msra.mxu0 %v2246
    %3200 = vmatpush.bf16.msra.mxu0 %v2238
    %3201 = vmatpush.bf16.msra.mxu0 %v2230
    %3202 = vmatpush.bf16.msra.mxu0 %v2222
    %3203 = vmatmul.bf16.gmra.mxu0 %v103
    %v3204 = vpop.f32.mrf.mxu0
    %v3205 = vadd.f32 %v3192, %v3204
    %v3206 = vpop.f32.mrf.mxu0
    %3207 = vdwg.mxu0
    %3208 = vmatpush.bf16.msra.mxu0 %v2342
    %3209 = vmatpush.bf16.msra.mxu0 %v2334
    %3210 = vmatpush.bf16.msra.mxu0 %v2326
    %3211 = vmatpush.bf16.msra.mxu0 %v2318
    %3212 = vmatpush.bf16.msra.mxu0 %v2310
    %3213 = vmatpush.bf16.msra.mxu0 %v2302
    %3214 = vmatpush.bf16.msra.mxu0 %v2294
    %3215 = vmatpush.bf16.msra.mxu0 %v2286
    %3216 = vmatmul.bf16.gmra.mxu0 %v104
    %v3217 = vpop.f32.mrf.mxu0
    %v3218 = vadd.f32 %v3205, %v3217
    %v3219 = vpop.f32.mrf.mxu0
    %3220 = vdwg.mxu0
    %3221 = vmatpush.bf16.msra.mxu0 %v2406
    %3222 = vmatpush.bf16.msra.mxu0 %v2398
    %3223 = vmatpush.bf16.msra.mxu0 %v2390
    %3224 = vmatpush.bf16.msra.mxu0 %v2382
    %3225 = vmatpush.bf16.msra.mxu0 %v2374
    %3226 = vmatpush.bf16.msra.mxu0 %v2366
    %3227 = vmatpush.bf16.msra.mxu0 %v2358
    %3228 = vmatpush.bf16.msra.mxu0 %v2350
    %3229 = vmatmul.bf16.gmra.mxu0 %v105
    %v3230 = vpop.f32.mrf.mxu0
    %v3231 = vadd.f32 %v3218, %v3230
    %v3232 = vpop.f32.mrf.mxu0
    %3233 = vdwg.mxu0
    %3234 = vmatpush.bf16.msra.mxu0 %v2470
    %3235 = vmatpush.bf16.msra.mxu0 %v2462
    %3236 = vmatpush.bf16.msra.mxu0 %v2454
    %3237 = vmatpush.bf16.msra.mxu0 %v2446
    %3238 = vmatpush.bf16.msra.mxu0 %v2438
    %3239 = vmatpush.bf16.msra.mxu0 %v2430
    %3240 = vmatpush.bf16.msra.mxu0 %v2422
    %3241 = vmatpush.bf16.msra.mxu0 %v2414
    %3242 = vmatmul.bf16.gmra.mxu0 %v106
    %v3243 = vpop.f32.mrf.mxu0
    %v3244 = vadd.f32 %v3231, %v3243
    %v3245 = vpop.f32.mrf.mxu0
    %3246 = vdwg.mxu0
    %3247 = vmatpush.bf16.msra.mxu0 %v2534
    %3248 = vmatpush.bf16.msra.mxu0 %v2526
    %3249 = vmatpush.bf16.msra.mxu0 %v2518
    %3250 = vmatpush.bf16.msra.mxu0 %v2510
    %3251 = vmatpush.bf16.msra.mxu0 %v2502
    %3252 = vmatpush.bf16.msra.mxu0 %v2494
    %3253 = vmatpush.bf16.msra.mxu0 %v2486
    %3254 = vmatpush.bf16.msra.mxu0 %v2478
    %3255 = vmatmul.bf16.gmra.mxu0 %v107
    %v3256 = vpop.f32.mrf.mxu0
    %v3257 = vadd.f32 %v3244, %v3256
    %v3258 = vpop.f32.mrf.mxu0
    %3259 = vdwg.mxu0
    %3260 = vmatpush.bf16.msra.mxu0 %v2598
    %3261 = vmatpush.bf16.msra.mxu0 %v2590
    %3262 = vmatpush.bf16.msra.mxu0 %v2582
    %3263 = vmatpush.bf16.msra.mxu0 %v2574
    %3264 = vmatpush.bf16.msra.mxu0 %v2566
    %3265 = vmatpush.bf16.msra.mxu0 %v2558
    %3266 = vmatpush.bf16.msra.mxu0 %v2550
    %3267 = vmatpush.bf16.msra.mxu0 %v2542
    %3268 = vmatmul.bf16.gmra.mxu0 %v108
    %v3269 = vpop.f32.mrf.mxu0
    %v3270 = vadd.f32 %v3257, %v3269
    %v3271 = vpop.f32.mrf.mxu0
    %3272 = vdwg.mxu0
    %3273 = vmatpush.bf16.msra.mxu0 %v2662
    %3274 = vmatpush.bf16.msra.mxu0 %v2654
    %3275 = vmatpush.bf16.msra.mxu0 %v2646
    %3276 = vmatpush.bf16.msra.mxu0 %v2638
    %3277 = vmatpush.bf16.msra.mxu0 %v2630
    %3278 = vmatpush.bf16.msra.mxu0 %v2622
    %3279 = vmatpush.bf16.msra.mxu0 %v2614
    %3280 = vmatpush.bf16.msra.mxu0 %v2606
    %3281 = vmatmul.bf16.gmra.mxu0 %v109
    %v3282 = vpop.f32.mrf.mxu0
    %v3283 = vadd.f32 %v3270, %v3282
    %v3284 = vpop.f32.mrf.mxu0
    %3285 = vdwg.mxu0
    %3286 = vmatpush.bf16.msra.mxu0 %v2215
    %3287 = vmatpush.bf16.msra.mxu0 %v2207
    %3288 = vmatpush.bf16.msra.mxu0 %v2199
    %3289 = vmatpush.bf16.msra.mxu0 %v2191
    %3290 = vmatpush.bf16.msra.mxu0 %v2183
    %3291 = vmatpush.bf16.msra.mxu0 %v2175
    %3292 = vmatpush.bf16.msra.mxu0 %v2167
    %3293 = vmatpush.bf16.msra.mxu0 %v2159
    %3294 = vmatmul.bf16.gmra.mxu0 %v102
    %v3295 = vpop.f32.mrf.mxu0
    %v3296 = vadd.f32 0.0, %v3295
    %v3297 = vpop.f32.mrf.mxu0
    %3298 = vdwg.mxu0
    %3299 = vmatpush.bf16.msra.mxu0 %v2279
    %3300 = vmatpush.bf16.msra.mxu0 %v2271
    %3301 = vmatpush.bf16.msra.mxu0 %v2263
    %3302 = vmatpush.bf16.msra.mxu0 %v2255
    %3303 = vmatpush.bf16.msra.mxu0 %v2247
    %3304 = vmatpush.bf16.msra.mxu0 %v2239
    %3305 = vmatpush.bf16.msra.mxu0 %v2231
    %3306 = vmatpush.bf16.msra.mxu0 %v2223
    %3307 = vmatmul.bf16.gmra.mxu0 %v103
    %v3308 = vpop.f32.mrf.mxu0
    %v3309 = vadd.f32 %v3296, %v3308
    %v3310 = vpop.f32.mrf.mxu0
    %3311 = vdwg.mxu0
    %3312 = vmatpush.bf16.msra.mxu0 %v2343
    %3313 = vmatpush.bf16.msra.mxu0 %v2335
    %3314 = vmatpush.bf16.msra.mxu0 %v2327
    %3315 = vmatpush.bf16.msra.mxu0 %v2319
    %3316 = vmatpush.bf16.msra.mxu0 %v2311
    %3317 = vmatpush.bf16.msra.mxu0 %v2303
    %3318 = vmatpush.bf16.msra.mxu0 %v2295
    %3319 = vmatpush.bf16.msra.mxu0 %v2287
    %3320 = vmatmul.bf16.gmra.mxu0 %v104
    %v3321 = vpop.f32.mrf.mxu0
    %v3322 = vadd.f32 %v3309, %v3321
    %v3323 = vpop.f32.mrf.mxu0
    %3324 = vdwg.mxu0
    %3325 = vmatpush.bf16.msra.mxu0 %v2407
    %3326 = vmatpush.bf16.msra.mxu0 %v2399
    %3327 = vmatpush.bf16.msra.mxu0 %v2391
    %3328 = vmatpush.bf16.msra.mxu0 %v2383
    %3329 = vmatpush.bf16.msra.mxu0 %v2375
    %3330 = vmatpush.bf16.msra.mxu0 %v2367
    %3331 = vmatpush.bf16.msra.mxu0 %v2359
    %3332 = vmatpush.bf16.msra.mxu0 %v2351
    %3333 = vmatmul.bf16.gmra.mxu0 %v105
    %v3334 = vpop.f32.mrf.mxu0
    %v3335 = vadd.f32 %v3322, %v3334
    %v3336 = vpop.f32.mrf.mxu0
    %3337 = vdwg.mxu0
    %3338 = vmatpush.bf16.msra.mxu0 %v2471
    %3339 = vmatpush.bf16.msra.mxu0 %v2463
    %3340 = vmatpush.bf16.msra.mxu0 %v2455
    %3341 = vmatpush.bf16.msra.mxu0 %v2447
    %3342 = vmatpush.bf16.msra.mxu0 %v2439
    %3343 = vmatpush.bf16.msra.mxu0 %v2431
    %3344 = vmatpush.bf16.msra.mxu0 %v2423
    %3345 = vmatpush.bf16.msra.mxu0 %v2415
    %3346 = vmatmul.bf16.gmra.mxu0 %v106
    %v3347 = vpop.f32.mrf.mxu0
    %v3348 = vadd.f32 %v3335, %v3347
    %v3349 = vpop.f32.mrf.mxu0
    %3350 = vdwg.mxu0
    %3351 = vmatpush.bf16.msra.mxu0 %v2535
    %3352 = vmatpush.bf16.msra.mxu0 %v2527
    %3353 = vmatpush.bf16.msra.mxu0 %v2519
    %3354 = vmatpush.bf16.msra.mxu0 %v2511
    %3355 = vmatpush.bf16.msra.mxu0 %v2503
    %3356 = vmatpush.bf16.msra.mxu0 %v2495
    %3357 = vmatpush.bf16.msra.mxu0 %v2487
    %3358 = vmatpush.bf16.msra.mxu0 %v2479
    %3359 = vmatmul.bf16.gmra.mxu0 %v107
    %v3360 = vpop.f32.mrf.mxu0
    %v3361 = vadd.f32 %v3348, %v3360
    %v3362 = vpop.f32.mrf.mxu0
    %3363 = vdwg.mxu0
    %3364 = vmatpush.bf16.msra.mxu0 %v2599
    %3365 = vmatpush.bf16.msra.mxu0 %v2591
    %3366 = vmatpush.bf16.msra.mxu0 %v2583
    %3367 = vmatpush.bf16.msra.mxu0 %v2575
    %3368 = vmatpush.bf16.msra.mxu0 %v2567
    %3369 = vmatpush.bf16.msra.mxu0 %v2559
    %3370 = vmatpush.bf16.msra.mxu0 %v2551
    %3371 = vmatpush.bf16.msra.mxu0 %v2543
    %3372 = vmatmul.bf16.gmra.mxu0 %v108
    %v3373 = vpop.f32.mrf.mxu0
    %v3374 = vadd.f32 %v3361, %v3373
    %v3375 = vpop.f32.mrf.mxu0
    %3376 = vdwg.mxu0
    %3377 = vmatpush.bf16.msra.mxu0 %v2663
    %3378 = vmatpush.bf16.msra.mxu0 %v2655
    %3379 = vmatpush.bf16.msra.mxu0 %v2647
    %3380 = vmatpush.bf16.msra.mxu0 %v2639
    %3381 = vmatpush.bf16.msra.mxu0 %v2631
    %3382 = vmatpush.bf16.msra.mxu0 %v2623
    %3383 = vmatpush.bf16.msra.mxu0 %v2615
    %3384 = vmatpush.bf16.msra.mxu0 %v2607
    %3385 = vmatmul.bf16.gmra.mxu0 %v109
    %v3386 = vpop.f32.mrf.mxu0
    %v3387 = vadd.f32 %v3374, %v3386
    %v3388 = vpop.f32.mrf.mxu0
    %3389 = vdwg.mxu0
    %3390 = vmatpush.bf16.msra.mxu0 %v2216
    %3391 = vmatpush.bf16.msra.mxu0 %v2208
    %3392 = vmatpush.bf16.msra.mxu0 %v2200
    %3393 = vmatpush.bf16.msra.mxu0 %v2192
    %3394 = vmatpush.bf16.msra.mxu0 %v2184
    %3395 = vmatpush.bf16.msra.mxu0 %v2176
    %3396 = vmatpush.bf16.msra.mxu0 %v2168
    %3397 = vmatpush.bf16.msra.mxu0 %v2160
    %3398 = vmatmul.bf16.gmra.mxu0 %v102
    %v3399 = vpop.f32.mrf.mxu0
    %v3400 = vadd.f32 0.0, %v3399
    %v3401 = vpop.f32.mrf.mxu0
    %3402 = vdwg.mxu0
    %3403 = vmatpush.bf16.msra.mxu0 %v2280
    %3404 = vmatpush.bf16.msra.mxu0 %v2272
    %3405 = vmatpush.bf16.msra.mxu0 %v2264
    %3406 = vmatpush.bf16.msra.mxu0 %v2256
    %3407 = vmatpush.bf16.msra.mxu0 %v2248
    %3408 = vmatpush.bf16.msra.mxu0 %v2240
    %3409 = vmatpush.bf16.msra.mxu0 %v2232
    %3410 = vmatpush.bf16.msra.mxu0 %v2224
    %3411 = vmatmul.bf16.gmra.mxu0 %v103
    %v3412 = vpop.f32.mrf.mxu0
    %v3413 = vadd.f32 %v3400, %v3412
    %v3414 = vpop.f32.mrf.mxu0
    %3415 = vdwg.mxu0
    %3416 = vmatpush.bf16.msra.mxu0 %v2344
    %3417 = vmatpush.bf16.msra.mxu0 %v2336
    %3418 = vmatpush.bf16.msra.mxu0 %v2328
    %3419 = vmatpush.bf16.msra.mxu0 %v2320
    %3420 = vmatpush.bf16.msra.mxu0 %v2312
    %3421 = vmatpush.bf16.msra.mxu0 %v2304
    %3422 = vmatpush.bf16.msra.mxu0 %v2296
    %3423 = vmatpush.bf16.msra.mxu0 %v2288
    %3424 = vmatmul.bf16.gmra.mxu0 %v104
    %v3425 = vpop.f32.mrf.mxu0
    %v3426 = vadd.f32 %v3413, %v3425
    %v3427 = vpop.f32.mrf.mxu0
    %3428 = vdwg.mxu0
    %3429 = vmatpush.bf16.msra.mxu0 %v2408
    %3430 = vmatpush.bf16.msra.mxu0 %v2400
    %3431 = vmatpush.bf16.msra.mxu0 %v2392
    %3432 = vmatpush.bf16.msra.mxu0 %v2384
    %3433 = vmatpush.bf16.msra.mxu0 %v2376
    %3434 = vmatpush.bf16.msra.mxu0 %v2368
    %3435 = vmatpush.bf16.msra.mxu0 %v2360
    %3436 = vmatpush.bf16.msra.mxu0 %v2352
    %3437 = vmatmul.bf16.gmra.mxu0 %v105
    %v3438 = vpop.f32.mrf.mxu0
    %v3439 = vadd.f32 %v3426, %v3438
    %v3440 = vpop.f32.mrf.mxu0
    %3441 = vdwg.mxu0
    %3442 = vmatpush.bf16.msra.mxu0 %v2472
    %3443 = vmatpush.bf16.msra.mxu0 %v2464
    %3444 = vmatpush.bf16.msra.mxu0 %v2456
    %3445 = vmatpush.bf16.msra.mxu0 %v2448
    %3446 = vmatpush.bf16.msra.mxu0 %v2440
    %3447 = vmatpush.bf16.msra.mxu0 %v2432
    %3448 = vmatpush.bf16.msra.mxu0 %v2424
    %3449 = vmatpush.bf16.msra.mxu0 %v2416
    %3450 = vmatmul.bf16.gmra.mxu0 %v106
    %v3451 = vpop.f32.mrf.mxu0
    %v3452 = vadd.f32 %v3439, %v3451
    %v3453 = vpop.f32.mrf.mxu0
    %3454 = vdwg.mxu0
    %3455 = vmatpush.bf16.msra.mxu0 %v2536
    %3456 = vmatpush.bf16.msra.mxu0 %v2528
    %3457 = vmatpush.bf16.msra.mxu0 %v2520
    %3458 = vmatpush.bf16.msra.mxu0 %v2512
    %3459 = vmatpush.bf16.msra.mxu0 %v2504
    %3460 = vmatpush.bf16.msra.mxu0 %v2496
    %3461 = vmatpush.bf16.msra.mxu0 %v2488
    %3462 = vmatpush.bf16.msra.mxu0 %v2480
    %3463 = vmatmul.bf16.gmra.mxu0 %v107
    %v3464 = vpop.f32.mrf.mxu0
    %v3465 = vadd.f32 %v3452, %v3464
    %v3466 = vpop.f32.mrf.mxu0
    %3467 = vdwg.mxu0
    %3468 = vmatpush.bf16.msra.mxu0 %v2600
    %3469 = vmatpush.bf16.msra.mxu0 %v2592
    %3470 = vmatpush.bf16.msra.mxu0 %v2584
    %3471 = vmatpush.bf16.msra.mxu0 %v2576
    %3472 = vmatpush.bf16.msra.mxu0 %v2568
    %3473 = vmatpush.bf16.msra.mxu0 %v2560
    %3474 = vmatpush.bf16.msra.mxu0 %v2552
    %3475 = vmatpush.bf16.msra.mxu0 %v2544
    %3476 = vmatmul.bf16.gmra.mxu0 %v108
    %v3477 = vpop.f32.mrf.mxu0
    %v3478 = vadd.f32 %v3465, %v3477
    %v3479 = vpop.f32.mrf.mxu0
    %3480 = vdwg.mxu0
    %3481 = vmatpush.bf16.msra.mxu0 %v2664
    %3482 = vmatpush.bf16.msra.mxu0 %v2656
    %3483 = vmatpush.bf16.msra.mxu0 %v2648
    %3484 = vmatpush.bf16.msra.mxu0 %v2640
    %3485 = vmatpush.bf16.msra.mxu0 %v2632
    %3486 = vmatpush.bf16.msra.mxu0 %v2624
    %3487 = vmatpush.bf16.msra.mxu0 %v2616
    %3488 = vmatpush.bf16.msra.mxu0 %v2608
    %3489 = vmatmul.bf16.gmra.mxu0 %v109
    %v3490 = vpop.f32.mrf.mxu0
    %v3491 = vadd.f32 %v3478, %v3490
    %v3492 = vpop.f32.mrf.mxu0
    %3493 = vdwg.mxu0
    %3494 = vmatpush.bf16.msra.mxu0 %v2217
    %3495 = vmatpush.bf16.msra.mxu0 %v2209
    %3496 = vmatpush.bf16.msra.mxu0 %v2201
    %3497 = vmatpush.bf16.msra.mxu0 %v2193
    %3498 = vmatpush.bf16.msra.mxu0 %v2185
    %3499 = vmatpush.bf16.msra.mxu0 %v2177
    %3500 = vmatpush.bf16.msra.mxu0 %v2169
    %3501 = vmatpush.bf16.msra.mxu0 %v2161
    %3502 = vmatmul.bf16.gmra.mxu0 %v102
    %v3503 = vpop.f32.mrf.mxu0
    %v3504 = vadd.f32 0.0, %v3503
    %v3505 = vpop.f32.mrf.mxu0
    %3506 = vdwg.mxu0
    %3507 = vmatpush.bf16.msra.mxu0 %v2281
    %3508 = vmatpush.bf16.msra.mxu0 %v2273
    %3509 = vmatpush.bf16.msra.mxu0 %v2265
    %3510 = vmatpush.bf16.msra.mxu0 %v2257
    %3511 = vmatpush.bf16.msra.mxu0 %v2249
    %3512 = vmatpush.bf16.msra.mxu0 %v2241
    %3513 = vmatpush.bf16.msra.mxu0 %v2233
    %3514 = vmatpush.bf16.msra.mxu0 %v2225
    %3515 = vmatmul.bf16.gmra.mxu0 %v103
    %v3516 = vpop.f32.mrf.mxu0
    %v3517 = vadd.f32 %v3504, %v3516
    %v3518 = vpop.f32.mrf.mxu0
    %3519 = vdwg.mxu0
    %3520 = vmatpush.bf16.msra.mxu0 %v2345
    %3521 = vmatpush.bf16.msra.mxu0 %v2337
    %3522 = vmatpush.bf16.msra.mxu0 %v2329
    %3523 = vmatpush.bf16.msra.mxu0 %v2321
    %3524 = vmatpush.bf16.msra.mxu0 %v2313
    %3525 = vmatpush.bf16.msra.mxu0 %v2305
    %3526 = vmatpush.bf16.msra.mxu0 %v2297
    %3527 = vmatpush.bf16.msra.mxu0 %v2289
    %3528 = vmatmul.bf16.gmra.mxu0 %v104
    %v3529 = vpop.f32.mrf.mxu0
    %v3530 = vadd.f32 %v3517, %v3529
    %v3531 = vpop.f32.mrf.mxu0
    %3532 = vdwg.mxu0
    %3533 = vmatpush.bf16.msra.mxu0 %v2409
    %3534 = vmatpush.bf16.msra.mxu0 %v2401
    %3535 = vmatpush.bf16.msra.mxu0 %v2393
    %3536 = vmatpush.bf16.msra.mxu0 %v2385
    %3537 = vmatpush.bf16.msra.mxu0 %v2377
    %3538 = vmatpush.bf16.msra.mxu0 %v2369
    %3539 = vmatpush.bf16.msra.mxu0 %v2361
    %3540 = vmatpush.bf16.msra.mxu0 %v2353
    %3541 = vmatmul.bf16.gmra.mxu0 %v105
    %v3542 = vpop.f32.mrf.mxu0
    %v3543 = vadd.f32 %v3530, %v3542
    %v3544 = vpop.f32.mrf.mxu0
    %3545 = vdwg.mxu0
    %3546 = vmatpush.bf16.msra.mxu0 %v2473
    %3547 = vmatpush.bf16.msra.mxu0 %v2465
    %3548 = vmatpush.bf16.msra.mxu0 %v2457
    %3549 = vmatpush.bf16.msra.mxu0 %v2449
    %3550 = vmatpush.bf16.msra.mxu0 %v2441
    %3551 = vmatpush.bf16.msra.mxu0 %v2433
    %3552 = vmatpush.bf16.msra.mxu0 %v2425
    %3553 = vmatpush.bf16.msra.mxu0 %v2417
    %3554 = vmatmul.bf16.gmra.mxu0 %v106
    %v3555 = vpop.f32.mrf.mxu0
    %v3556 = vadd.f32 %v3543, %v3555
    %v3557 = vpop.f32.mrf.mxu0
    %3558 = vdwg.mxu0
    %3559 = vmatpush.bf16.msra.mxu0 %v2537
    %3560 = vmatpush.bf16.msra.mxu0 %v2529
    %3561 = vmatpush.bf16.msra.mxu0 %v2521
    %3562 = vmatpush.bf16.msra.mxu0 %v2513
    %3563 = vmatpush.bf16.msra.mxu0 %v2505
    %3564 = vmatpush.bf16.msra.mxu0 %v2497
    %3565 = vmatpush.bf16.msra.mxu0 %v2489
    %3566 = vmatpush.bf16.msra.mxu0 %v2481
    %3567 = vmatmul.bf16.gmra.mxu0 %v107
    %v3568 = vpop.f32.mrf.mxu0
    %v3569 = vadd.f32 %v3556, %v3568
    %v3570 = vpop.f32.mrf.mxu0
    %3571 = vdwg.mxu0
    %3572 = vmatpush.bf16.msra.mxu0 %v2601
    %3573 = vmatpush.bf16.msra.mxu0 %v2593
    %3574 = vmatpush.bf16.msra.mxu0 %v2585
    %3575 = vmatpush.bf16.msra.mxu0 %v2577
    %3576 = vmatpush.bf16.msra.mxu0 %v2569
    %3577 = vmatpush.bf16.msra.mxu0 %v2561
    %3578 = vmatpush.bf16.msra.mxu0 %v2553
    %3579 = vmatpush.bf16.msra.mxu0 %v2545
    %3580 = vmatmul.bf16.gmra.mxu0 %v108
    %v3581 = vpop.f32.mrf.mxu0
    %v3582 = vadd.f32 %v3569, %v3581
    %v3583 = vpop.f32.mrf.mxu0
    %3584 = vdwg.mxu0
    %3585 = vmatpush.bf16.msra.mxu0 %v2665
    %3586 = vmatpush.bf16.msra.mxu0 %v2657
    %3587 = vmatpush.bf16.msra.mxu0 %v2649
    %3588 = vmatpush.bf16.msra.mxu0 %v2641
    %3589 = vmatpush.bf16.msra.mxu0 %v2633
    %3590 = vmatpush.bf16.msra.mxu0 %v2625
    %3591 = vmatpush.bf16.msra.mxu0 %v2617
    %3592 = vmatpush.bf16.msra.mxu0 %v2609
    %3593 = vmatmul.bf16.gmra.mxu0 %v109
    %v3594 = vpop.f32.mrf.mxu0
    %v3595 = vadd.f32 %v3582, %v3594
    %v3596 = vpop.f32.mrf.mxu0
    %3597 = vdwg.mxu0
    %3598 = vmatpush.bf16.msra.mxu0 %v2218
    %3599 = vmatpush.bf16.msra.mxu0 %v2210
    %3600 = vmatpush.bf16.msra.mxu0 %v2202
    %3601 = vmatpush.bf16.msra.mxu0 %v2194
    %3602 = vmatpush.bf16.msra.mxu0 %v2186
    %3603 = vmatpush.bf16.msra.mxu0 %v2178
    %3604 = vmatpush.bf16.msra.mxu0 %v2170
    %3605 = vmatpush.bf16.msra.mxu0 %v2162
    %3606 = vmatmul.bf16.gmra.mxu0 %v102
    %v3607 = vpop.f32.mrf.mxu0
    %v3608 = vadd.f32 0.0, %v3607
    %v3609 = vpop.f32.mrf.mxu0
    %3610 = vdwg.mxu0
    %3611 = vmatpush.bf16.msra.mxu0 %v2282
    %3612 = vmatpush.bf16.msra.mxu0 %v2274
    %3613 = vmatpush.bf16.msra.mxu0 %v2266
    %3614 = vmatpush.bf16.msra.mxu0 %v2258
    %3615 = vmatpush.bf16.msra.mxu0 %v2250
    %3616 = vmatpush.bf16.msra.mxu0 %v2242
    %3617 = vmatpush.bf16.msra.mxu0 %v2234
    %3618 = vmatpush.bf16.msra.mxu0 %v2226
    %3619 = vmatmul.bf16.gmra.mxu0 %v103
    %v3620 = vpop.f32.mrf.mxu0
    %v3621 = vadd.f32 %v3608, %v3620
    %v3622 = vpop.f32.mrf.mxu0
    %3623 = vdwg.mxu0
    %3624 = vmatpush.bf16.msra.mxu0 %v2346
    %3625 = vmatpush.bf16.msra.mxu0 %v2338
    %3626 = vmatpush.bf16.msra.mxu0 %v2330
    %3627 = vmatpush.bf16.msra.mxu0 %v2322
    %3628 = vmatpush.bf16.msra.mxu0 %v2314
    %3629 = vmatpush.bf16.msra.mxu0 %v2306
    %3630 = vmatpush.bf16.msra.mxu0 %v2298
    %3631 = vmatpush.bf16.msra.mxu0 %v2290
    %3632 = vmatmul.bf16.gmra.mxu0 %v104
    %v3633 = vpop.f32.mrf.mxu0
    %v3634 = vadd.f32 %v3621, %v3633
    %v3635 = vpop.f32.mrf.mxu0
    %3636 = vdwg.mxu0
    %3637 = vmatpush.bf16.msra.mxu0 %v2410
    %3638 = vmatpush.bf16.msra.mxu0 %v2402
    %3639 = vmatpush.bf16.msra.mxu0 %v2394
    %3640 = vmatpush.bf16.msra.mxu0 %v2386
    %3641 = vmatpush.bf16.msra.mxu0 %v2378
    %3642 = vmatpush.bf16.msra.mxu0 %v2370
    %3643 = vmatpush.bf16.msra.mxu0 %v2362
    %3644 = vmatpush.bf16.msra.mxu0 %v2354
    %3645 = vmatmul.bf16.gmra.mxu0 %v105
    %v3646 = vpop.f32.mrf.mxu0
    %v3647 = vadd.f32 %v3634, %v3646
    %v3648 = vpop.f32.mrf.mxu0
    %3649 = vdwg.mxu0
    %3650 = vmatpush.bf16.msra.mxu0 %v2474
    %3651 = vmatpush.bf16.msra.mxu0 %v2466
    %3652 = vmatpush.bf16.msra.mxu0 %v2458
    %3653 = vmatpush.bf16.msra.mxu0 %v2450
    %3654 = vmatpush.bf16.msra.mxu0 %v2442
    %3655 = vmatpush.bf16.msra.mxu0 %v2434
    %3656 = vmatpush.bf16.msra.mxu0 %v2426
    %3657 = vmatpush.bf16.msra.mxu0 %v2418
    %3658 = vmatmul.bf16.gmra.mxu0 %v106
    %v3659 = vpop.f32.mrf.mxu0
    %v3660 = vadd.f32 %v3647, %v3659
    %v3661 = vpop.f32.mrf.mxu0
    %3662 = vdwg.mxu0
    %3663 = vmatpush.bf16.msra.mxu0 %v2538
    %3664 = vmatpush.bf16.msra.mxu0 %v2530
    %3665 = vmatpush.bf16.msra.mxu0 %v2522
    %3666 = vmatpush.bf16.msra.mxu0 %v2514
    %3667 = vmatpush.bf16.msra.mxu0 %v2506
    %3668 = vmatpush.bf16.msra.mxu0 %v2498
    %3669 = vmatpush.bf16.msra.mxu0 %v2490
    %3670 = vmatpush.bf16.msra.mxu0 %v2482
    %3671 = vmatmul.bf16.gmra.mxu0 %v107
    %v3672 = vpop.f32.mrf.mxu0
    %v3673 = vadd.f32 %v3660, %v3672
    %v3674 = vpop.f32.mrf.mxu0
    %3675 = vdwg.mxu0
    %3676 = vmatpush.bf16.msra.mxu0 %v2602
    %3677 = vmatpush.bf16.msra.mxu0 %v2594
    %3678 = vmatpush.bf16.msra.mxu0 %v2586
    %3679 = vmatpush.bf16.msra.mxu0 %v2578
    %3680 = vmatpush.bf16.msra.mxu0 %v2570
    %3681 = vmatpush.bf16.msra.mxu0 %v2562
    %3682 = vmatpush.bf16.msra.mxu0 %v2554
    %3683 = vmatpush.bf16.msra.mxu0 %v2546
    %3684 = vmatmul.bf16.gmra.mxu0 %v108
    %v3685 = vpop.f32.mrf.mxu0
    %v3686 = vadd.f32 %v3673, %v3685
    %v3687 = vpop.f32.mrf.mxu0
    %3688 = vdwg.mxu0
    %3689 = vmatpush.bf16.msra.mxu0 %v2666
    %3690 = vmatpush.bf16.msra.mxu0 %v2658
    %3691 = vmatpush.bf16.msra.mxu0 %v2650
    %3692 = vmatpush.bf16.msra.mxu0 %v2642
    %3693 = vmatpush.bf16.msra.mxu0 %v2634
    %3694 = vmatpush.bf16.msra.mxu0 %v2626
    %3695 = vmatpush.bf16.msra.mxu0 %v2618
    %3696 = vmatpush.bf16.msra.mxu0 %v2610
    %3697 = vmatmul.bf16.gmra.mxu0 %v109
    %v3698 = vpop.f32.mrf.mxu0
    %v3699 = vadd.f32 %v3686, %v3698
    %v3700 = vpop.f32.mrf.mxu0
    %3701 = vdwg.mxu0
    %3702 = vmatpush.bf16.msra.mxu0 %v2219
    %3703 = vmatpush.bf16.msra.mxu0 %v2211
    %3704 = vmatpush.bf16.msra.mxu0 %v2203
    %3705 = vmatpush.bf16.msra.mxu0 %v2195
    %3706 = vmatpush.bf16.msra.mxu0 %v2187
    %3707 = vmatpush.bf16.msra.mxu0 %v2179
    %3708 = vmatpush.bf16.msra.mxu0 %v2171
    %3709 = vmatpush.bf16.msra.mxu0 %v2163
    %3710 = vmatmul.bf16.gmra.mxu0 %v102
    %v3711 = vpop.f32.mrf.mxu0
    %v3712 = vadd.f32 0.0, %v3711
    %v3713 = vpop.f32.mrf.mxu0
    %3714 = vdwg.mxu0
    %3715 = vmatpush.bf16.msra.mxu0 %v2283
    %3716 = vmatpush.bf16.msra.mxu0 %v2275
    %3717 = vmatpush.bf16.msra.mxu0 %v2267
    %3718 = vmatpush.bf16.msra.mxu0 %v2259
    %3719 = vmatpush.bf16.msra.mxu0 %v2251
    %3720 = vmatpush.bf16.msra.mxu0 %v2243
    %3721 = vmatpush.bf16.msra.mxu0 %v2235
    %3722 = vmatpush.bf16.msra.mxu0 %v2227
    %3723 = vmatmul.bf16.gmra.mxu0 %v103
    %v3724 = vpop.f32.mrf.mxu0
    %v3725 = vadd.f32 %v3712, %v3724
    %v3726 = vpop.f32.mrf.mxu0
    %3727 = vdwg.mxu0
    %3728 = vmatpush.bf16.msra.mxu0 %v2347
    %3729 = vmatpush.bf16.msra.mxu0 %v2339
    %3730 = vmatpush.bf16.msra.mxu0 %v2331
    %3731 = vmatpush.bf16.msra.mxu0 %v2323
    %3732 = vmatpush.bf16.msra.mxu0 %v2315
    %3733 = vmatpush.bf16.msra.mxu0 %v2307
    %3734 = vmatpush.bf16.msra.mxu0 %v2299
    %3735 = vmatpush.bf16.msra.mxu0 %v2291
    %3736 = vmatmul.bf16.gmra.mxu0 %v104
    %v3737 = vpop.f32.mrf.mxu0
    %v3738 = vadd.f32 %v3725, %v3737
    %v3739 = vpop.f32.mrf.mxu0
    %3740 = vdwg.mxu0
    %3741 = vmatpush.bf16.msra.mxu0 %v2411
    %3742 = vmatpush.bf16.msra.mxu0 %v2403
    %3743 = vmatpush.bf16.msra.mxu0 %v2395
    %3744 = vmatpush.bf16.msra.mxu0 %v2387
    %3745 = vmatpush.bf16.msra.mxu0 %v2379
    %3746 = vmatpush.bf16.msra.mxu0 %v2371
    %3747 = vmatpush.bf16.msra.mxu0 %v2363
    %3748 = vmatpush.bf16.msra.mxu0 %v2355
    %3749 = vmatmul.bf16.gmra.mxu0 %v105
    %v3750 = vpop.f32.mrf.mxu0
    %v3751 = vadd.f32 %v3738, %v3750
    %v3752 = vpop.f32.mrf.mxu0
    %3753 = vdwg.mxu0
    %3754 = vmatpush.bf16.msra.mxu0 %v2475
    %3755 = vmatpush.bf16.msra.mxu0 %v2467
    %3756 = vmatpush.bf16.msra.mxu0 %v2459
    %3757 = vmatpush.bf16.msra.mxu0 %v2451
    %3758 = vmatpush.bf16.msra.mxu0 %v2443
    %3759 = vmatpush.bf16.msra.mxu0 %v2435
    %3760 = vmatpush.bf16.msra.mxu0 %v2427
    %3761 = vmatpush.bf16.msra.mxu0 %v2419
    %3762 = vmatmul.bf16.gmra.mxu0 %v106
    %v3763 = vpop.f32.mrf.mxu0
    %v3764 = vadd.f32 %v3751, %v3763
    %v3765 = vpop.f32.mrf.mxu0
    %3766 = vdwg.mxu0
    %3767 = vmatpush.bf16.msra.mxu0 %v2539
    %3768 = vmatpush.bf16.msra.mxu0 %v2531
    %3769 = vmatpush.bf16.msra.mxu0 %v2523
    %3770 = vmatpush.bf16.msra.mxu0 %v2515
    %3771 = vmatpush.bf16.msra.mxu0 %v2507
    %3772 = vmatpush.bf16.msra.mxu0 %v2499
    %3773 = vmatpush.bf16.msra.mxu0 %v2491
    %3774 = vmatpush.bf16.msra.mxu0 %v2483
    %3775 = vmatmul.bf16.gmra.mxu0 %v107
    %v3776 = vpop.f32.mrf.mxu0
    %v3777 = vadd.f32 %v3764, %v3776
    %v3778 = vpop.f32.mrf.mxu0
    %3779 = vdwg.mxu0
    %3780 = vmatpush.bf16.msra.mxu0 %v2603
    %3781 = vmatpush.bf16.msra.mxu0 %v2595
    %3782 = vmatpush.bf16.msra.mxu0 %v2587
    %3783 = vmatpush.bf16.msra.mxu0 %v2579
    %3784 = vmatpush.bf16.msra.mxu0 %v2571
    %3785 = vmatpush.bf16.msra.mxu0 %v2563
    %3786 = vmatpush.bf16.msra.mxu0 %v2555
    %3787 = vmatpush.bf16.msra.mxu0 %v2547
    %3788 = vmatmul.bf16.gmra.mxu0 %v108
    %v3789 = vpop.f32.mrf.mxu0
    %v3790 = vadd.f32 %v3777, %v3789
    %v3791 = vpop.f32.mrf.mxu0
    %3792 = vdwg.mxu0
    %3793 = vmatpush.bf16.msra.mxu0 %v2667
    %3794 = vmatpush.bf16.msra.mxu0 %v2659
    %3795 = vmatpush.bf16.msra.mxu0 %v2651
    %3796 = vmatpush.bf16.msra.mxu0 %v2643
    %3797 = vmatpush.bf16.msra.mxu0 %v2635
    %3798 = vmatpush.bf16.msra.mxu0 %v2627
    %3799 = vmatpush.bf16.msra.mxu0 %v2619
    %3800 = vmatpush.bf16.msra.mxu0 %v2611
    %3801 = vmatmul.bf16.gmra.mxu0 %v109
    %v3802 = vpop.f32.mrf.mxu0
    %v3803 = vadd.f32 %v3790, %v3802
    %v3804 = vpop.f32.mrf.mxu0
    %3805 = vdwg.mxu0
    %3806 = vmatpush.bf16.msra.mxu0 %v2220
    %3807 = vmatpush.bf16.msra.mxu0 %v2212
    %3808 = vmatpush.bf16.msra.mxu0 %v2204
    %3809 = vmatpush.bf16.msra.mxu0 %v2196
    %3810 = vmatpush.bf16.msra.mxu0 %v2188
    %3811 = vmatpush.bf16.msra.mxu0 %v2180
    %3812 = vmatpush.bf16.msra.mxu0 %v2172
    %3813 = vmatpush.bf16.msra.mxu0 %v2164
    %3814 = vmatmul.bf16.gmra.mxu0 %v102
    %v3815 = vpop.f32.mrf.mxu0
    %v3816 = vadd.f32 0.0, %v3815
    %v3817 = vpop.f32.mrf.mxu0
    %3818 = vdwg.mxu0
    %3819 = vmatpush.bf16.msra.mxu0 %v2284
    %3820 = vmatpush.bf16.msra.mxu0 %v2276
    %3821 = vmatpush.bf16.msra.mxu0 %v2268
    %3822 = vmatpush.bf16.msra.mxu0 %v2260
    %3823 = vmatpush.bf16.msra.mxu0 %v2252
    %3824 = vmatpush.bf16.msra.mxu0 %v2244
    %3825 = vmatpush.bf16.msra.mxu0 %v2236
    %3826 = vmatpush.bf16.msra.mxu0 %v2228
    %3827 = vmatmul.bf16.gmra.mxu0 %v103
    %v3828 = vpop.f32.mrf.mxu0
    %v3829 = vadd.f32 %v3816, %v3828
    %v3830 = vpop.f32.mrf.mxu0
    %3831 = vdwg.mxu0
    %3832 = vmatpush.bf16.msra.mxu0 %v2348
    %3833 = vmatpush.bf16.msra.mxu0 %v2340
    %3834 = vmatpush.bf16.msra.mxu0 %v2332
    %3835 = vmatpush.bf16.msra.mxu0 %v2324
    %3836 = vmatpush.bf16.msra.mxu0 %v2316
    %3837 = vmatpush.bf16.msra.mxu0 %v2308
    %3838 = vmatpush.bf16.msra.mxu0 %v2300
    %3839 = vmatpush.bf16.msra.mxu0 %v2292
    %3840 = vmatmul.bf16.gmra.mxu0 %v104
    %v3841 = vpop.f32.mrf.mxu0
    %v3842 = vadd.f32 %v3829, %v3841
    %v3843 = vpop.f32.mrf.mxu0
    %3844 = vdwg.mxu0
    %3845 = vmatpush.bf16.msra.mxu0 %v2412
    %3846 = vmatpush.bf16.msra.mxu0 %v2404
    %3847 = vmatpush.bf16.msra.mxu0 %v2396
    %3848 = vmatpush.bf16.msra.mxu0 %v2388
    %3849 = vmatpush.bf16.msra.mxu0 %v2380
    %3850 = vmatpush.bf16.msra.mxu0 %v2372
    %3851 = vmatpush.bf16.msra.mxu0 %v2364
    %3852 = vmatpush.bf16.msra.mxu0 %v2356
    %3853 = vmatmul.bf16.gmra.mxu0 %v105
    %v3854 = vpop.f32.mrf.mxu0
    %v3855 = vadd.f32 %v3842, %v3854
    %v3856 = vpop.f32.mrf.mxu0
    %3857 = vdwg.mxu0
    %3858 = vmatpush.bf16.msra.mxu0 %v2476
    %3859 = vmatpush.bf16.msra.mxu0 %v2468
    %3860 = vmatpush.bf16.msra.mxu0 %v2460
    %3861 = vmatpush.bf16.msra.mxu0 %v2452
    %3862 = vmatpush.bf16.msra.mxu0 %v2444
    %3863 = vmatpush.bf16.msra.mxu0 %v2436
    %3864 = vmatpush.bf16.msra.mxu0 %v2428
    %3865 = vmatpush.bf16.msra.mxu0 %v2420
    %3866 = vmatmul.bf16.gmra.mxu0 %v106
    %v3867 = vpop.f32.mrf.mxu0
    %v3868 = vadd.f32 %v3855, %v3867
    %v3869 = vpop.f32.mrf.mxu0
    %3870 = vdwg.mxu0
    %3871 = vmatpush.bf16.msra.mxu0 %v2540
    %3872 = vmatpush.bf16.msra.mxu0 %v2532
    %3873 = vmatpush.bf16.msra.mxu0 %v2524
    %3874 = vmatpush.bf16.msra.mxu0 %v2516
    %3875 = vmatpush.bf16.msra.mxu0 %v2508
    %3876 = vmatpush.bf16.msra.mxu0 %v2500
    %3877 = vmatpush.bf16.msra.mxu0 %v2492
    %3878 = vmatpush.bf16.msra.mxu0 %v2484
    %3879 = vmatmul.bf16.gmra.mxu0 %v107
    %v3880 = vpop.f32.mrf.mxu0
    %v3881 = vadd.f32 %v3868, %v3880
    %v3882 = vpop.f32.mrf.mxu0
    %3883 = vdwg.mxu0
    %3884 = vmatpush.bf16.msra.mxu0 %v2604
    %3885 = vmatpush.bf16.msra.mxu0 %v2596
    %3886 = vmatpush.bf16.msra.mxu0 %v2588
    %3887 = vmatpush.bf16.msra.mxu0 %v2580
    %3888 = vmatpush.bf16.msra.mxu0 %v2572
    %3889 = vmatpush.bf16.msra.mxu0 %v2564
    %3890 = vmatpush.bf16.msra.mxu0 %v2556
    %3891 = vmatpush.bf16.msra.mxu0 %v2548
    %3892 = vmatmul.bf16.gmra.mxu0 %v108
    %v3893 = vpop.f32.mrf.mxu0
    %v3894 = vadd.f32 %v3881, %v3893
    %v3895 = vpop.f32.mrf.mxu0
    %3896 = vdwg.mxu0
    %3897 = vmatpush.bf16.msra.mxu0 %v2668
    %3898 = vmatpush.bf16.msra.mxu0 %v2660
    %3899 = vmatpush.bf16.msra.mxu0 %v2652
    %3900 = vmatpush.bf16.msra.mxu0 %v2644
    %3901 = vmatpush.bf16.msra.mxu0 %v2636
    %3902 = vmatpush.bf16.msra.mxu0 %v2628
    %3903 = vmatpush.bf16.msra.mxu0 %v2620
    %3904 = vmatpush.bf16.msra.mxu0 %v2612
    %3905 = vmatmul.bf16.gmra.mxu0 %v109
    %v3906 = vpop.f32.mrf.mxu0
    %v3907 = vadd.f32 %v3894, %v3906
    %v3908 = vpop.f32.mrf.mxu0
    %3909 = vdwg.mxu0
    %3910 = vmatpush.bf16.msra.mxu0 %v2221
    %3911 = vmatpush.bf16.msra.mxu0 %v2213
    %3912 = vmatpush.bf16.msra.mxu0 %v2205
    %3913 = vmatpush.bf16.msra.mxu0 %v2197
    %3914 = vmatpush.bf16.msra.mxu0 %v2189
    %3915 = vmatpush.bf16.msra.mxu0 %v2181
    %3916 = vmatpush.bf16.msra.mxu0 %v2173
    %3917 = vmatpush.bf16.msra.mxu0 %v2165
    %3918 = vmatmul.bf16.gmra.mxu0 %v102
    %v3919 = vpop.f32.mrf.mxu0
    %v3920 = vadd.f32 0.0, %v3919
    %v3921 = vpop.f32.mrf.mxu0
    %3922 = vdwg.mxu0
    %3923 = vmatpush.bf16.msra.mxu0 %v2285
    %3924 = vmatpush.bf16.msra.mxu0 %v2277
    %3925 = vmatpush.bf16.msra.mxu0 %v2269
    %3926 = vmatpush.bf16.msra.mxu0 %v2261
    %3927 = vmatpush.bf16.msra.mxu0 %v2253
    %3928 = vmatpush.bf16.msra.mxu0 %v2245
    %3929 = vmatpush.bf16.msra.mxu0 %v2237
    %3930 = vmatpush.bf16.msra.mxu0 %v2229
    %3931 = vmatmul.bf16.gmra.mxu0 %v103
    %v3932 = vpop.f32.mrf.mxu0
    %v3933 = vadd.f32 %v3920, %v3932
    %v3934 = vpop.f32.mrf.mxu0
    %3935 = vdwg.mxu0
    %3936 = vmatpush.bf16.msra.mxu0 %v2349
    %3937 = vmatpush.bf16.msra.mxu0 %v2341
    %3938 = vmatpush.bf16.msra.mxu0 %v2333
    %3939 = vmatpush.bf16.msra.mxu0 %v2325
    %3940 = vmatpush.bf16.msra.mxu0 %v2317
    %3941 = vmatpush.bf16.msra.mxu0 %v2309
    %3942 = vmatpush.bf16.msra.mxu0 %v2301
    %3943 = vmatpush.bf16.msra.mxu0 %v2293
    %3944 = vmatmul.bf16.gmra.mxu0 %v104
    %v3945 = vpop.f32.mrf.mxu0
    %v3946 = vadd.f32 %v3933, %v3945
    %v3947 = vpop.f32.mrf.mxu0
    %3948 = vdwg.mxu0
    %3949 = vmatpush.bf16.msra.mxu0 %v2413
    %3950 = vmatpush.bf16.msra.mxu0 %v2405
    %3951 = vmatpush.bf16.msra.mxu0 %v2397
    %3952 = vmatpush.bf16.msra.mxu0 %v2389
    %3953 = vmatpush.bf16.msra.mxu0 %v2381
    %3954 = vmatpush.bf16.msra.mxu0 %v2373
    %3955 = vmatpush.bf16.msra.mxu0 %v2365
    %3956 = vmatpush.bf16.msra.mxu0 %v2357
    %3957 = vmatmul.bf16.gmra.mxu0 %v105
    %v3958 = vpop.f32.mrf.mxu0
    %v3959 = vadd.f32 %v3946, %v3958
    %v3960 = vpop.f32.mrf.mxu0
    %3961 = vdwg.mxu0
    %3962 = vmatpush.bf16.msra.mxu0 %v2477
    %3963 = vmatpush.bf16.msra.mxu0 %v2469
    %3964 = vmatpush.bf16.msra.mxu0 %v2461
    %3965 = vmatpush.bf16.msra.mxu0 %v2453
    %3966 = vmatpush.bf16.msra.mxu0 %v2445
    %3967 = vmatpush.bf16.msra.mxu0 %v2437
    %3968 = vmatpush.bf16.msra.mxu0 %v2429
    %3969 = vmatpush.bf16.msra.mxu0 %v2421
    %3970 = vmatmul.bf16.gmra.mxu0 %v106
    %v3971 = vpop.f32.mrf.mxu0
    %v3972 = vadd.f32 %v3959, %v3971
    %v3973 = vpop.f32.mrf.mxu0
    %3974 = vdwg.mxu0
    %3975 = vmatpush.bf16.msra.mxu0 %v2541
    %3976 = vmatpush.bf16.msra.mxu0 %v2533
    %3977 = vmatpush.bf16.msra.mxu0 %v2525
    %3978 = vmatpush.bf16.msra.mxu0 %v2517
    %3979 = vmatpush.bf16.msra.mxu0 %v2509
    %3980 = vmatpush.bf16.msra.mxu0 %v2501
    %3981 = vmatpush.bf16.msra.mxu0 %v2493
    %3982 = vmatpush.bf16.msra.mxu0 %v2485
    %3983 = vmatmul.bf16.gmra.mxu0 %v107
    %v3984 = vpop.f32.mrf.mxu0
    %v3985 = vadd.f32 %v3972, %v3984
    %v3986 = vpop.f32.mrf.mxu0
    %3987 = vdwg.mxu0
    %3988 = vmatpush.bf16.msra.mxu0 %v2605
    %3989 = vmatpush.bf16.msra.mxu0 %v2597
    %3990 = vmatpush.bf16.msra.mxu0 %v2589
    %3991 = vmatpush.bf16.msra.mxu0 %v2581
    %3992 = vmatpush.bf16.msra.mxu0 %v2573
    %3993 = vmatpush.bf16.msra.mxu0 %v2565
    %3994 = vmatpush.bf16.msra.mxu0 %v2557
    %3995 = vmatpush.bf16.msra.mxu0 %v2549
    %3996 = vmatmul.bf16.gmra.mxu0 %v108
    %v3997 = vpop.f32.mrf.mxu0
    %v3998 = vadd.f32 %v3985, %v3997
    %v3999 = vpop.f32.mrf.mxu0
    %4000 = vdwg.mxu0
    %4001 = vmatpush.bf16.msra.mxu0 %v2669
    %4002 = vmatpush.bf16.msra.mxu0 %v2661
    %4003 = vmatpush.bf16.msra.mxu0 %v2653
    %4004 = vmatpush.bf16.msra.mxu0 %v2645
    %4005 = vmatpush.bf16.msra.mxu0 %v2637
    %4006 = vmatpush.bf16.msra.mxu0 %v2629
    %4007 = vmatpush.bf16.msra.mxu0 %v2621
    %4008 = vmatpush.bf16.msra.mxu0 %v2613
    %4009 = vmatmul.bf16.gmra.mxu0 %v109
    %v4010 = vpop.f32.mrf.mxu0
    %v4011 = vadd.f32 %v3998, %v4010
    %v4012 = vpop.f32.mrf.mxu0
    %4013 = vdwg.mxu0
    %v4014 = vmul.f32 %v3283, 0.2
    %v4015 = vmul.f32 %v3387, 0.2
    %v4016 = vmul.f32 %v3491, 0.2
    %v4017 = vmul.f32 %v3595, 0.2
    %v4018 = vmul.f32 %v3699, 0.2
    %v4019 = vmul.f32 %v3803, 0.2
    %v4020 = vmul.f32 %v3907, 0.2
    %v4021 = vmul.f32 %v4011, 0.2
    %v4022 = vmax.f32 %v3283, %v4014
    %v4023 = vmax.f32 %v3387, %v4015
    %v4024 = vmax.f32 %v3491, %v4016
    %v4025 = vmax.f32 %v3595, %v4017
    %v4026 = vmax.f32 %v3699, %v4018
    %v4027 = vmax.f32 %v3803, %v4019
    %v4028 = vmax.f32 %v3907, %v4020
    %v4029 = vmax.f32 %v4011, %v4021
    %v4030 = vpack.c.bf16 %v4022, %v4022
    %v4031 = vpack.c.bf16 %v4023, %v4023
    %v4032 = vpack.c.bf16 %v4024, %v4024
    %v4033 = vpack.c.bf16 %v4025, %v4025
    %v4034 = vpack.c.bf16 %v4026, %v4026
    %v4035 = vpack.c.bf16 %v4027, %v4027
    %v4036 = vpack.c.bf16 %v4028, %v4028
    %v4037 = vpack.c.bf16 %v4029, %v4029
    %v4038 = vld [vmem:[#allocation6] sm:$0xff]
    %v4039 = vld [vmem:[#allocation6 + $0x8] sm:$0xff]
    %v4040 = vld [vmem:[#allocation6 + $0x10] sm:$0xff]
    %v4041 = vld [vmem:[#allocation6 + $0x18] sm:$0xff]
    %v4042 = vld [vmem:[#allocation6 + $0x20] sm:$0xff]
    %v4043 = vld [vmem:[#allocation6 + $0x28] sm:$0xff]
    %v4044 = vld [vmem:[#allocation6 + $0x30] sm:$0xff]
    %v4045 = vld [vmem:[#allocation6 + $0x38] sm:$0xff]
    %v4046 = vld [vmem:[#allocation6 + $0x40] sm:$0xff]
    %v4047 = vld [vmem:[#allocation6 + $0x48] sm:$0xff]
    %v4048 = vld [vmem:[#allocation6 + $0x50] sm:$0xff]
    %v4049 = vld [vmem:[#allocation6 + $0x58] sm:$0xff]
    %v4050 = vld [vmem:[#allocation6 + $0x60] sm:$0xff]
    %v4051 = vld [vmem:[#allocation6 + $0x68] sm:$0xff]
    %v4052 = vld [vmem:[#allocation6 + $0x70] sm:$0xff]
    %v4053 = vld [vmem:[#allocation6 + $0x78] sm:$0xff]
    %v4054 = vld [vmem:[#allocation6 + $0x80] sm:$0xff]
    %v4055 = vld [vmem:[#allocation6 + $0x88] sm:$0xff]
    %v4056 = vld [vmem:[#allocation6 + $0x90] sm:$0xff]
    %v4057 = vld [vmem:[#allocation6 + $0x98] sm:$0xff]
    %v4058 = vld [vmem:[#allocation6 + $0xa0] sm:$0xff]
    %v4059 = vld [vmem:[#allocation6 + $0xa8] sm:$0xff]
    %v4060 = vld [vmem:[#allocation6 + $0xb0] sm:$0xff]
    %v4061 = vld [vmem:[#allocation6 + $0xb8] sm:$0xff]
    %v4062 = vld [vmem:[#allocation6 + $0xc0] sm:$0xff]
    %v4063 = vld [vmem:[#allocation6 + $0xc8] sm:$0xff]
    %v4064 = vld [vmem:[#allocation6 + $0xd0] sm:$0xff]
    %v4065 = vld [vmem:[#allocation6 + $0xd8] sm:$0xff]
    %v4066 = vld [vmem:[#allocation6 + $0xe0] sm:$0xff]
    %v4067 = vld [vmem:[#allocation6 + $0xe8] sm:$0xff]
    %v4068 = vld [vmem:[#allocation6 + $0xf0] sm:$0xff]
    %v4069 = vld [vmem:[#allocation6 + $0xf8] sm:$0xff]
    %v4070 = vld [vmem:[#allocation6 + $0x100] sm:$0xff]
    %v4071 = vld [vmem:[#allocation6 + $0x108] sm:$0xff]
    %v4072 = vld [vmem:[#allocation6 + $0x110] sm:$0xff]
    %v4073 = vld [vmem:[#allocation6 + $0x118] sm:$0xff]
    %v4074 = vld [vmem:[#allocation6 + $0x120] sm:$0xff]
    %v4075 = vld [vmem:[#allocation6 + $0x128] sm:$0xff]
    %v4076 = vld [vmem:[#allocation6 + $0x130] sm:$0xff]
    %v4077 = vld [vmem:[#allocation6 + $0x138] sm:$0xff]
    %v4078 = vld [vmem:[#allocation6 + $0x140] sm:$0xff]
    %v4079 = vld [vmem:[#allocation6 + $0x148] sm:$0xff]
    %v4080 = vld [vmem:[#allocation6 + $0x150] sm:$0xff]
    %v4081 = vld [vmem:[#allocation6 + $0x158] sm:$0xff]
    %v4082 = vld [vmem:[#allocation6 + $0x160] sm:$0xff]
    %v4083 = vld [vmem:[#allocation6 + $0x168] sm:$0xff]
    %v4084 = vld [vmem:[#allocation6 + $0x170] sm:$0xff]
    %v4085 = vld [vmem:[#allocation6 + $0x178] sm:$0xff]
    %v4086 = vld [vmem:[#allocation6 + $0x180] sm:$0xff]
    %v4087 = vld [vmem:[#allocation6 + $0x188] sm:$0xff]
    %v4088 = vld [vmem:[#allocation6 + $0x190] sm:$0xff]
    %v4089 = vld [vmem:[#allocation6 + $0x198] sm:$0xff]
    %v4090 = vld [vmem:[#allocation6 + $0x1a0] sm:$0xff]
    %v4091 = vld [vmem:[#allocation6 + $0x1a8] sm:$0xff]
    %v4092 = vld [vmem:[#allocation6 + $0x1b0] sm:$0xff]
    %v4093 = vld [vmem:[#allocation6 + $0x1b8] sm:$0xff]
    %v4094 = vld [vmem:[#allocation6 + $0x1c0] sm:$0xff]
    %v4095 = vld [vmem:[#allocation6 + $0x1c8] sm:$0xff]
    %v4096 = vld [vmem:[#allocation6 + $0x1d0] sm:$0xff]
    %v4097 = vld [vmem:[#allocation6 + $0x1d8] sm:$0xff]
    %v4098 = vld [vmem:[#allocation6 + $0x1e0] sm:$0xff]
    %v4099 = vld [vmem:[#allocation6 + $0x1e8] sm:$0xff]
    %v4100 = vld [vmem:[#allocation6 + $0x1f0] sm:$0xff]
    %v4101 = vld [vmem:[#allocation6 + $0x1f8] sm:$0xff]
    %v4102 = vld [vmem:[#allocation6 + $0x200] sm:$0xff]
    %v4103 = vld [vmem:[#allocation6 + $0x208] sm:$0xff]
    %v4104 = vld [vmem:[#allocation6 + $0x210] sm:$0xff]
    %v4105 = vld [vmem:[#allocation6 + $0x218] sm:$0xff]
    %v4106 = vld [vmem:[#allocation6 + $0x220] sm:$0xff]
    %v4107 = vld [vmem:[#allocation6 + $0x228] sm:$0xff]
    %v4108 = vld [vmem:[#allocation6 + $0x230] sm:$0xff]
    %v4109 = vld [vmem:[#allocation6 + $0x238] sm:$0xff]
    %v4110 = vld [vmem:[#allocation6 + $0x240] sm:$0xff]
    %v4111 = vld [vmem:[#allocation6 + $0x248] sm:$0xff]
    %v4112 = vld [vmem:[#allocation6 + $0x250] sm:$0xff]
    %v4113 = vld [vmem:[#allocation6 + $0x258] sm:$0xff]
    %v4114 = vld [vmem:[#allocation6 + $0x260] sm:$0xff]
    %v4115 = vld [vmem:[#allocation6 + $0x268] sm:$0xff]
    %v4116 = vld [vmem:[#allocation6 + $0x270] sm:$0xff]
    %v4117 = vld [vmem:[#allocation6 + $0x278] sm:$0xff]
    %v4118 = vld [vmem:[#allocation6 + $0x280] sm:$0xff]
    %v4119 = vld [vmem:[#allocation6 + $0x288] sm:$0xff]
    %v4120 = vld [vmem:[#allocation6 + $0x290] sm:$0xff]
    %v4121 = vld [vmem:[#allocation6 + $0x298] sm:$0xff]
    %v4122 = vld [vmem:[#allocation6 + $0x2a0] sm:$0xff]
    %v4123 = vld [vmem:[#allocation6 + $0x2a8] sm:$0xff]
    %v4124 = vld [vmem:[#allocation6 + $0x2b0] sm:$0xff]
    %v4125 = vld [vmem:[#allocation6 + $0x2b8] sm:$0xff]
    %v4126 = vld [vmem:[#allocation6 + $0x2c0] sm:$0xff]
    %v4127 = vld [vmem:[#allocation6 + $0x2c8] sm:$0xff]
    %v4128 = vld [vmem:[#allocation6 + $0x2d0] sm:$0xff]
    %v4129 = vld [vmem:[#allocation6 + $0x2d8] sm:$0xff]
    %v4130 = vld [vmem:[#allocation6 + $0x2e0] sm:$0xff]
    %v4131 = vld [vmem:[#allocation6 + $0x2e8] sm:$0xff]
    %v4132 = vld [vmem:[#allocation6 + $0x2f0] sm:$0xff]
    %v4133 = vld [vmem:[#allocation6 + $0x2f8] sm:$0xff]
    %v4134 = vld [vmem:[#allocation6 + $0x300] sm:$0xff]
    %v4135 = vld [vmem:[#allocation6 + $0x308] sm:$0xff]
    %v4136 = vld [vmem:[#allocation6 + $0x310] sm:$0xff]
    %v4137 = vld [vmem:[#allocation6 + $0x318] sm:$0xff]
    %v4138 = vld [vmem:[#allocation6 + $0x320] sm:$0xff]
    %v4139 = vld [vmem:[#allocation6 + $0x328] sm:$0xff]
    %v4140 = vld [vmem:[#allocation6 + $0x330] sm:$0xff]
    %v4141 = vld [vmem:[#allocation6 + $0x338] sm:$0xff]
    %v4142 = vld [vmem:[#allocation6 + $0x340] sm:$0xff]
    %v4143 = vld [vmem:[#allocation6 + $0x348] sm:$0xff]
    %v4144 = vld [vmem:[#allocation6 + $0x350] sm:$0xff]
    %v4145 = vld [vmem:[#allocation6 + $0x358] sm:$0xff]
    %v4146 = vld [vmem:[#allocation6 + $0x360] sm:$0xff]
    %v4147 = vld [vmem:[#allocation6 + $0x368] sm:$0xff]
    %v4148 = vld [vmem:[#allocation6 + $0x370] sm:$0xff]
    %v4149 = vld [vmem:[#allocation6 + $0x378] sm:$0xff]
    %v4150 = vld [vmem:[#allocation6 + $0x380] sm:$0xff]
    %v4151 = vld [vmem:[#allocation6 + $0x388] sm:$0xff]
    %v4152 = vld [vmem:[#allocation6 + $0x390] sm:$0xff]
    %v4153 = vld [vmem:[#allocation6 + $0x398] sm:$0xff]
    %v4154 = vld [vmem:[#allocation6 + $0x3a0] sm:$0xff]
    %v4155 = vld [vmem:[#allocation6 + $0x3a8] sm:$0xff]
    %v4156 = vld [vmem:[#allocation6 + $0x3b0] sm:$0xff]
    %v4157 = vld [vmem:[#allocation6 + $0x3b8] sm:$0xff]
    %v4158 = vld [vmem:[#allocation6 + $0x3c0] sm:$0xff]
    %v4159 = vld [vmem:[#allocation6 + $0x3c8] sm:$0xff]
    %v4160 = vld [vmem:[#allocation6 + $0x3d0] sm:$0xff]
    %v4161 = vld [vmem:[#allocation6 + $0x3d8] sm:$0xff]
    %v4162 = vld [vmem:[#allocation6 + $0x3e0] sm:$0xff]
    %v4163 = vld [vmem:[#allocation6 + $0x3e8] sm:$0xff]
    %v4164 = vld [vmem:[#allocation6 + $0x3f0] sm:$0xff]
    %v4165 = vld [vmem:[#allocation6 + $0x3f8] sm:$0xff]
    %v4166 = vld [vmem:[#allocation6 + $0x400] sm:$0xff]
    %v4167 = vld [vmem:[#allocation6 + $0x408] sm:$0xff]
    %v4168 = vld [vmem:[#allocation6 + $0x410] sm:$0xff]
    %v4169 = vld [vmem:[#allocation6 + $0x418] sm:$0xff]
    %v4170 = vld [vmem:[#allocation6 + $0x420] sm:$0xff]
    %v4171 = vld [vmem:[#allocation6 + $0x428] sm:$0xff]
    %v4172 = vld [vmem:[#allocation6 + $0x430] sm:$0xff]
    %v4173 = vld [vmem:[#allocation6 + $0x438] sm:$0xff]
    %v4174 = vld [vmem:[#allocation6 + $0x440] sm:$0xff]
    %v4175 = vld [vmem:[#allocation6 + $0x448] sm:$0xff]
    %v4176 = vld [vmem:[#allocation6 + $0x450] sm:$0xff]
    %v4177 = vld [vmem:[#allocation6 + $0x458] sm:$0xff]
    %v4178 = vld [vmem:[#allocation6 + $0x460] sm:$0xff]
    %v4179 = vld [vmem:[#allocation6 + $0x468] sm:$0xff]
    %v4180 = vld [vmem:[#allocation6 + $0x470] sm:$0xff]
    %v4181 = vld [vmem:[#allocation6 + $0x478] sm:$0xff]
    %v4182 = vld [vmem:[#allocation6 + $0x480] sm:$0xff]
    %v4183 = vld [vmem:[#allocation6 + $0x488] sm:$0xff]
    %v4184 = vld [vmem:[#allocation6 + $0x490] sm:$0xff]
    %v4185 = vld [vmem:[#allocation6 + $0x498] sm:$0xff]
    %v4186 = vld [vmem:[#allocation6 + $0x4a0] sm:$0xff]
    %v4187 = vld [vmem:[#allocation6 + $0x4a8] sm:$0xff]
    %v4188 = vld [vmem:[#allocation6 + $0x4b0] sm:$0xff]
    %v4189 = vld [vmem:[#allocation6 + $0x4b8] sm:$0xff]
    %v4190 = vld [vmem:[#allocation6 + $0x4c0] sm:$0xff]
    %v4191 = vld [vmem:[#allocation6 + $0x4c8] sm:$0xff]
    %v4192 = vld [vmem:[#allocation6 + $0x4d0] sm:$0xff]
    %v4193 = vld [vmem:[#allocation6 + $0x4d8] sm:$0xff]
    %v4194 = vld [vmem:[#allocation6 + $0x4e0] sm:$0xff]
    %v4195 = vld [vmem:[#allocation6 + $0x4e8] sm:$0xff]
    %v4196 = vld [vmem:[#allocation6 + $0x4f0] sm:$0xff]
    %v4197 = vld [vmem:[#allocation6 + $0x4f8] sm:$0xff]
    %v4198 = vld [vmem:[#allocation6 + $0x500] sm:$0xff]
    %v4199 = vld [vmem:[#allocation6 + $0x508] sm:$0xff]
    %v4200 = vld [vmem:[#allocation6 + $0x510] sm:$0xff]
    %v4201 = vld [vmem:[#allocation6 + $0x518] sm:$0xff]
    %v4202 = vld [vmem:[#allocation6 + $0x520] sm:$0xff]
    %v4203 = vld [vmem:[#allocation6 + $0x528] sm:$0xff]
    %v4204 = vld [vmem:[#allocation6 + $0x530] sm:$0xff]
    %v4205 = vld [vmem:[#allocation6 + $0x538] sm:$0xff]
    %v4206 = vld [vmem:[#allocation6 + $0x540] sm:$0xff]
    %v4207 = vld [vmem:[#allocation6 + $0x548] sm:$0xff]
    %v4208 = vld [vmem:[#allocation6 + $0x550] sm:$0xff]
    %v4209 = vld [vmem:[#allocation6 + $0x558] sm:$0xff]
    %v4210 = vld [vmem:[#allocation6 + $0x560] sm:$0xff]
    %v4211 = vld [vmem:[#allocation6 + $0x568] sm:$0xff]
    %v4212 = vld [vmem:[#allocation6 + $0x570] sm:$0xff]
    %v4213 = vld [vmem:[#allocation6 + $0x578] sm:$0xff]
    %v4214 = vld [vmem:[#allocation6 + $0x580] sm:$0xff]
    %v4215 = vld [vmem:[#allocation6 + $0x588] sm:$0xff]
    %v4216 = vld [vmem:[#allocation6 + $0x590] sm:$0xff]
    %v4217 = vld [vmem:[#allocation6 + $0x598] sm:$0xff]
    %v4218 = vld [vmem:[#allocation6 + $0x5a0] sm:$0xff]
    %v4219 = vld [vmem:[#allocation6 + $0x5a8] sm:$0xff]
    %v4220 = vld [vmem:[#allocation6 + $0x5b0] sm:$0xff]
    %v4221 = vld [vmem:[#allocation6 + $0x5b8] sm:$0xff]
    %v4222 = vld [vmem:[#allocation6 + $0x5c0] sm:$0xff]
    %v4223 = vld [vmem:[#allocation6 + $0x5c8] sm:$0xff]
    %v4224 = vld [vmem:[#allocation6 + $0x5d0] sm:$0xff]
    %v4225 = vld [vmem:[#allocation6 + $0x5d8] sm:$0xff]
    %v4226 = vld [vmem:[#allocation6 + $0x5e0] sm:$0xff]
    %v4227 = vld [vmem:[#allocation6 + $0x5e8] sm:$0xff]
    %v4228 = vld [vmem:[#allocation6 + $0x5f0] sm:$0xff]
    %v4229 = vld [vmem:[#allocation6 + $0x5f8] sm:$0xff]
    %v4230 = vld [vmem:[#allocation6 + $0x600] sm:$0xff]
    %v4231 = vld [vmem:[#allocation6 + $0x608] sm:$0xff]
    %v4232 = vld [vmem:[#allocation6 + $0x610] sm:$0xff]
    %v4233 = vld [vmem:[#allocation6 + $0x618] sm:$0xff]
    %v4234 = vld [vmem:[#allocation6 + $0x620] sm:$0xff]
    %v4235 = vld [vmem:[#allocation6 + $0x628] sm:$0xff]
    %v4236 = vld [vmem:[#allocation6 + $0x630] sm:$0xff]
    %v4237 = vld [vmem:[#allocation6 + $0x638] sm:$0xff]
    %v4238 = vld [vmem:[#allocation6 + $0x640] sm:$0xff]
    %v4239 = vld [vmem:[#allocation6 + $0x648] sm:$0xff]
    %v4240 = vld [vmem:[#allocation6 + $0x650] sm:$0xff]
    %v4241 = vld [vmem:[#allocation6 + $0x658] sm:$0xff]
    %v4242 = vld [vmem:[#allocation6 + $0x660] sm:$0xff]
    %v4243 = vld [vmem:[#allocation6 + $0x668] sm:$0xff]
    %v4244 = vld [vmem:[#allocation6 + $0x670] sm:$0xff]
    %v4245 = vld [vmem:[#allocation6 + $0x678] sm:$0xff]
    %v4246 = vld [vmem:[#allocation6 + $0x680] sm:$0xff]
    %v4247 = vld [vmem:[#allocation6 + $0x688] sm:$0xff]
    %v4248 = vld [vmem:[#allocation6 + $0x690] sm:$0xff]
    %v4249 = vld [vmem:[#allocation6 + $0x698] sm:$0xff]
    %v4250 = vld [vmem:[#allocation6 + $0x6a0] sm:$0xff]
    %v4251 = vld [vmem:[#allocation6 + $0x6a8] sm:$0xff]
    %v4252 = vld [vmem:[#allocation6 + $0x6b0] sm:$0xff]
    %v4253 = vld [vmem:[#allocation6 + $0x6b8] sm:$0xff]
    %v4254 = vld [vmem:[#allocation6 + $0x6c0] sm:$0xff]
    %v4255 = vld [vmem:[#allocation6 + $0x6c8] sm:$0xff]
    %v4256 = vld [vmem:[#allocation6 + $0x6d0] sm:$0xff]
    %v4257 = vld [vmem:[#allocation6 + $0x6d8] sm:$0xff]
    %v4258 = vld [vmem:[#allocation6 + $0x6e0] sm:$0xff]
    %v4259 = vld [vmem:[#allocation6 + $0x6e8] sm:$0xff]
    %v4260 = vld [vmem:[#allocation6 + $0x6f0] sm:$0xff]
    %v4261 = vld [vmem:[#allocation6 + $0x6f8] sm:$0xff]
    %v4262 = vld [vmem:[#allocation6 + $0x700] sm:$0xff]
    %v4263 = vld [vmem:[#allocation6 + $0x708] sm:$0xff]
    %v4264 = vld [vmem:[#allocation6 + $0x710] sm:$0xff]
    %v4265 = vld [vmem:[#allocation6 + $0x718] sm:$0xff]
    %v4266 = vld [vmem:[#allocation6 + $0x720] sm:$0xff]
    %v4267 = vld [vmem:[#allocation6 + $0x728] sm:$0xff]
    %v4268 = vld [vmem:[#allocation6 + $0x730] sm:$0xff]
    %v4269 = vld [vmem:[#allocation6 + $0x738] sm:$0xff]
    %v4270 = vld [vmem:[#allocation6 + $0x740] sm:$0xff]
    %v4271 = vld [vmem:[#allocation6 + $0x748] sm:$0xff]
    %v4272 = vld [vmem:[#allocation6 + $0x750] sm:$0xff]
    %v4273 = vld [vmem:[#allocation6 + $0x758] sm:$0xff]
    %v4274 = vld [vmem:[#allocation6 + $0x760] sm:$0xff]
    %v4275 = vld [vmem:[#allocation6 + $0x768] sm:$0xff]
    %v4276 = vld [vmem:[#allocation6 + $0x770] sm:$0xff]
    %v4277 = vld [vmem:[#allocation6 + $0x778] sm:$0xff]
    %v4278 = vld [vmem:[#allocation6 + $0x780] sm:$0xff]
    %v4279 = vld [vmem:[#allocation6 + $0x788] sm:$0xff]
    %v4280 = vld [vmem:[#allocation6 + $0x790] sm:$0xff]
    %v4281 = vld [vmem:[#allocation6 + $0x798] sm:$0xff]
    %v4282 = vld [vmem:[#allocation6 + $0x7a0] sm:$0xff]
    %v4283 = vld [vmem:[#allocation6 + $0x7a8] sm:$0xff]
    %v4284 = vld [vmem:[#allocation6 + $0x7b0] sm:$0xff]
    %v4285 = vld [vmem:[#allocation6 + $0x7b8] sm:$0xff]
    %v4286 = vld [vmem:[#allocation6 + $0x7c0] sm:$0xff]
    %v4287 = vld [vmem:[#allocation6 + $0x7c8] sm:$0xff]
    %v4288 = vld [vmem:[#allocation6 + $0x7d0] sm:$0xff]
    %v4289 = vld [vmem:[#allocation6 + $0x7d8] sm:$0xff]
    %v4290 = vld [vmem:[#allocation6 + $0x7e0] sm:$0xff]
    %v4291 = vld [vmem:[#allocation6 + $0x7e8] sm:$0xff]
    %v4292 = vld [vmem:[#allocation6 + $0x7f0] sm:$0xff]
    %v4293 = vld [vmem:[#allocation6 + $0x7f8] sm:$0xff]
    %v4550 = vunpack.c.l.b16 %v4038
    %v4551 = vunpack.c.h.b16 %v4038
    %v4552 = vunpack.c.l.b16 %v4039
    %v4553 = vunpack.c.h.b16 %v4039
    %v4554 = vunpack.c.l.b16 %v4040
    %v4555 = vunpack.c.h.b16 %v4040
    %v4556 = vunpack.c.l.b16 %v4041
    %v4557 = vunpack.c.h.b16 %v4041
    %v4558 = vunpack.c.l.b16 %v4042
    %v4559 = vunpack.c.h.b16 %v4042
    %v4560 = vunpack.c.l.b16 %v4043
    %v4561 = vunpack.c.h.b16 %v4043
    %v4562 = vunpack.c.l.b16 %v4044
    %v4563 = vunpack.c.h.b16 %v4044
    %v4564 = vunpack.c.l.b16 %v4045
    %v4565 = vunpack.c.h.b16 %v4045
    %v4566 = vunpack.c.l.b16 %v4046
    %v4567 = vunpack.c.h.b16 %v4046
    %v4568 = vunpack.c.l.b16 %v4047
    %v4569 = vunpack.c.h.b16 %v4047
    %v4570 = vunpack.c.l.b16 %v4048
    %v4571 = vunpack.c.h.b16 %v4048
    %v4572 = vunpack.c.l.b16 %v4049
    %v4573 = vunpack.c.h.b16 %v4049
    %v4574 = vunpack.c.l.b16 %v4050
    %v4575 = vunpack.c.h.b16 %v4050
    %v4576 = vunpack.c.l.b16 %v4051
    %v4577 = vunpack.c.h.b16 %v4051
    %v4578 = vunpack.c.l.b16 %v4052
    %v4579 = vunpack.c.h.b16 %v4052
    %v4580 = vunpack.c.l.b16 %v4053
    %v4581 = vunpack.c.h.b16 %v4053
    %v4582 = vunpack.c.l.b16 %v4054
    %v4583 = vunpack.c.h.b16 %v4054
    %v4584 = vunpack.c.l.b16 %v4055
    %v4585 = vunpack.c.h.b16 %v4055
    %v4586 = vunpack.c.l.b16 %v4056
    %v4587 = vunpack.c.h.b16 %v4056
    %v4588 = vunpack.c.l.b16 %v4057
    %v4589 = vunpack.c.h.b16 %v4057
    %v4590 = vunpack.c.l.b16 %v4058
    %v4591 = vunpack.c.h.b16 %v4058
    %v4592 = vunpack.c.l.b16 %v4059
    %v4593 = vunpack.c.h.b16 %v4059
    %v4594 = vunpack.c.l.b16 %v4060
    %v4595 = vunpack.c.h.b16 %v4060
    %v4596 = vunpack.c.l.b16 %v4061
    %v4597 = vunpack.c.h.b16 %v4061
    %v4598 = vunpack.c.l.b16 %v4062
    %v4599 = vunpack.c.h.b16 %v4062
    %v4600 = vunpack.c.l.b16 %v4063
    %v4601 = vunpack.c.h.b16 %v4063
    %v4602 = vunpack.c.l.b16 %v4064
    %v4603 = vunpack.c.h.b16 %v4064
    %v4604 = vunpack.c.l.b16 %v4065
    %v4605 = vunpack.c.h.b16 %v4065
    %v4606 = vunpack.c.l.b16 %v4066
    %v4607 = vunpack.c.h.b16 %v4066
    %v4608 = vunpack.c.l.b16 %v4067
    %v4609 = vunpack.c.h.b16 %v4067
    %v4610 = vunpack.c.l.b16 %v4068
    %v4611 = vunpack.c.h.b16 %v4068
    %v4612 = vunpack.c.l.b16 %v4069
    %v4613 = vunpack.c.h.b16 %v4069
    %v4614 = vunpack.c.l.b16 %v4070
    %v4615 = vunpack.c.h.b16 %v4070
    %v4616 = vunpack.c.l.b16 %v4071
    %v4617 = vunpack.c.h.b16 %v4071
    %v4618 = vunpack.c.l.b16 %v4072
    %v4619 = vunpack.c.h.b16 %v4072
    %v4620 = vunpack.c.l.b16 %v4073
    %v4621 = vunpack.c.h.b16 %v4073
    %v4622 = vunpack.c.l.b16 %v4074
    %v4623 = vunpack.c.h.b16 %v4074
    %v4624 = vunpack.c.l.b16 %v4075
    %v4625 = vunpack.c.h.b16 %v4075
    %v4626 = vunpack.c.l.b16 %v4076
    %v4627 = vunpack.c.h.b16 %v4076
    %v4628 = vunpack.c.l.b16 %v4077
    %v4629 = vunpack.c.h.b16 %v4077
    %v4630 = vunpack.c.l.b16 %v4078
    %v4631 = vunpack.c.h.b16 %v4078
    %v4632 = vunpack.c.l.b16 %v4079
    %v4633 = vunpack.c.h.b16 %v4079
    %v4634 = vunpack.c.l.b16 %v4080
    %v4635 = vunpack.c.h.b16 %v4080
    %v4636 = vunpack.c.l.b16 %v4081
    %v4637 = vunpack.c.h.b16 %v4081
    %v4638 = vunpack.c.l.b16 %v4082
    %v4639 = vunpack.c.h.b16 %v4082
    %v4640 = vunpack.c.l.b16 %v4083
    %v4641 = vunpack.c.h.b16 %v4083
    %v4642 = vunpack.c.l.b16 %v4084
    %v4643 = vunpack.c.h.b16 %v4084
    %v4644 = vunpack.c.l.b16 %v4085
    %v4645 = vunpack.c.h.b16 %v4085
    %v4646 = vunpack.c.l.b16 %v4086
    %v4647 = vunpack.c.h.b16 %v4086
    %v4648 = vunpack.c.l.b16 %v4087
    %v4649 = vunpack.c.h.b16 %v4087
    %v4650 = vunpack.c.l.b16 %v4088
    %v4651 = vunpack.c.h.b16 %v4088
    %v4652 = vunpack.c.l.b16 %v4089
    %v4653 = vunpack.c.h.b16 %v4089
    %v4654 = vunpack.c.l.b16 %v4090
    %v4655 = vunpack.c.h.b16 %v4090
    %v4656 = vunpack.c.l.b16 %v4091
    %v4657 = vunpack.c.h.b16 %v4091
    %v4658 = vunpack.c.l.b16 %v4092
    %v4659 = vunpack.c.h.b16 %v4092
    %v4660 = vunpack.c.l.b16 %v4093
    %v4661 = vunpack.c.h.b16 %v4093
    %v4662 = vunpack.c.l.b16 %v4094
    %v4663 = vunpack.c.h.b16 %v4094
    %v4664 = vunpack.c.l.b16 %v4095
    %v4665 = vunpack.c.h.b16 %v4095
    %v4666 = vunpack.c.l.b16 %v4096
    %v4667 = vunpack.c.h.b16 %v4096
    %v4668 = vunpack.c.l.b16 %v4097
    %v4669 = vunpack.c.h.b16 %v4097
    %v4670 = vunpack.c.l.b16 %v4098
    %v4671 = vunpack.c.h.b16 %v4098
    %v4672 = vunpack.c.l.b16 %v4099
    %v4673 = vunpack.c.h.b16 %v4099
    %v4674 = vunpack.c.l.b16 %v4100
    %v4675 = vunpack.c.h.b16 %v4100
    %v4676 = vunpack.c.l.b16 %v4101
    %v4677 = vunpack.c.h.b16 %v4101
    %v4678 = vunpack.c.l.b16 %v4102
    %v4679 = vunpack.c.h.b16 %v4102
    %v4680 = vunpack.c.l.b16 %v4103
    %v4681 = vunpack.c.h.b16 %v4103
    %v4682 = vunpack.c.l.b16 %v4104
    %v4683 = vunpack.c.h.b16 %v4104
    %v4684 = vunpack.c.l.b16 %v4105
    %v4685 = vunpack.c.h.b16 %v4105
    %v4686 = vunpack.c.l.b16 %v4106
    %v4687 = vunpack.c.h.b16 %v4106
    %v4688 = vunpack.c.l.b16 %v4107
    %v4689 = vunpack.c.h.b16 %v4107
    %v4690 = vunpack.c.l.b16 %v4108
    %v4691 = vunpack.c.h.b16 %v4108
    %v4692 = vunpack.c.l.b16 %v4109
    %v4693 = vunpack.c.h.b16 %v4109
    %v4694 = vunpack.c.l.b16 %v4110
    %v4695 = vunpack.c.h.b16 %v4110
    %v4696 = vunpack.c.l.b16 %v4111
    %v4697 = vunpack.c.h.b16 %v4111
    %v4698 = vunpack.c.l.b16 %v4112
    %v4699 = vunpack.c.h.b16 %v4112
    %v4700 = vunpack.c.l.b16 %v4113
    %v4701 = vunpack.c.h.b16 %v4113
    %v4702 = vunpack.c.l.b16 %v4114
    %v4703 = vunpack.c.h.b16 %v4114
    %v4704 = vunpack.c.l.b16 %v4115
    %v4705 = vunpack.c.h.b16 %v4115
    %v4706 = vunpack.c.l.b16 %v4116
    %v4707 = vunpack.c.h.b16 %v4116
    %v4708 = vunpack.c.l.b16 %v4117
    %v4709 = vunpack.c.h.b16 %v4117
    %v4710 = vunpack.c.l.b16 %v4118
    %v4711 = vunpack.c.h.b16 %v4118
    %v4712 = vunpack.c.l.b16 %v4119
    %v4713 = vunpack.c.h.b16 %v4119
    %v4714 = vunpack.c.l.b16 %v4120
    %v4715 = vunpack.c.h.b16 %v4120
    %v4716 = vunpack.c.l.b16 %v4121
    %v4717 = vunpack.c.h.b16 %v4121
    %v4718 = vunpack.c.l.b16 %v4122
    %v4719 = vunpack.c.h.b16 %v4122
    %v4720 = vunpack.c.l.b16 %v4123
    %v4721 = vunpack.c.h.b16 %v4123
    %v4722 = vunpack.c.l.b16 %v4124
    %v4723 = vunpack.c.h.b16 %v4124
    %v4724 = vunpack.c.l.b16 %v4125
    %v4725 = vunpack.c.h.b16 %v4125
    %v4726 = vunpack.c.l.b16 %v4126
    %v4727 = vunpack.c.h.b16 %v4126
    %v4728 = vunpack.c.l.b16 %v4127
    %v4729 = vunpack.c.h.b16 %v4127
    %v4730 = vunpack.c.l.b16 %v4128
    %v4731 = vunpack.c.h.b16 %v4128
    %v4732 = vunpack.c.l.b16 %v4129
    %v4733 = vunpack.c.h.b16 %v4129
    %v4734 = vunpack.c.l.b16 %v4130
    %v4735 = vunpack.c.h.b16 %v4130
    %v4736 = vunpack.c.l.b16 %v4131
    %v4737 = vunpack.c.h.b16 %v4131
    %v4738 = vunpack.c.l.b16 %v4132
    %v4739 = vunpack.c.h.b16 %v4132
    %v4740 = vunpack.c.l.b16 %v4133
    %v4741 = vunpack.c.h.b16 %v4133
    %v4742 = vunpack.c.l.b16 %v4134
    %v4743 = vunpack.c.h.b16 %v4134
    %v4744 = vunpack.c.l.b16 %v4135
    %v4745 = vunpack.c.h.b16 %v4135
    %v4746 = vunpack.c.l.b16 %v4136
    %v4747 = vunpack.c.h.b16 %v4136
    %v4748 = vunpack.c.l.b16 %v4137
    %v4749 = vunpack.c.h.b16 %v4137
    %v4750 = vunpack.c.l.b16 %v4138
    %v4751 = vunpack.c.h.b16 %v4138
    %v4752 = vunpack.c.l.b16 %v4139
    %v4753 = vunpack.c.h.b16 %v4139
    %v4754 = vunpack.c.l.b16 %v4140
    %v4755 = vunpack.c.h.b16 %v4140
    %v4756 = vunpack.c.l.b16 %v4141
    %v4757 = vunpack.c.h.b16 %v4141
    %v4758 = vunpack.c.l.b16 %v4142
    %v4759 = vunpack.c.h.b16 %v4142
    %v4760 = vunpack.c.l.b16 %v4143
    %v4761 = vunpack.c.h.b16 %v4143
    %v4762 = vunpack.c.l.b16 %v4144
    %v4763 = vunpack.c.h.b16 %v4144
    %v4764 = vunpack.c.l.b16 %v4145
    %v4765 = vunpack.c.h.b16 %v4145
    %v4766 = vunpack.c.l.b16 %v4146
    %v4767 = vunpack.c.h.b16 %v4146
    %v4768 = vunpack.c.l.b16 %v4147
    %v4769 = vunpack.c.h.b16 %v4147
    %v4770 = vunpack.c.l.b16 %v4148
    %v4771 = vunpack.c.h.b16 %v4148
    %v4772 = vunpack.c.l.b16 %v4149
    %v4773 = vunpack.c.h.b16 %v4149
    %v4774 = vunpack.c.l.b16 %v4150
    %v4775 = vunpack.c.h.b16 %v4150
    %v4776 = vunpack.c.l.b16 %v4151
    %v4777 = vunpack.c.h.b16 %v4151
    %v4778 = vunpack.c.l.b16 %v4152
    %v4779 = vunpack.c.h.b16 %v4152
    %v4780 = vunpack.c.l.b16 %v4153
    %v4781 = vunpack.c.h.b16 %v4153
    %v4782 = vunpack.c.l.b16 %v4154
    %v4783 = vunpack.c.h.b16 %v4154
    %v4784 = vunpack.c.l.b16 %v4155
    %v4785 = vunpack.c.h.b16 %v4155
    %v4786 = vunpack.c.l.b16 %v4156
    %v4787 = vunpack.c.h.b16 %v4156
    %v4788 = vunpack.c.l.b16 %v4157
    %v4789 = vunpack.c.h.b16 %v4157
    %v4790 = vunpack.c.l.b16 %v4158
    %v4791 = vunpack.c.h.b16 %v4158
    %v4792 = vunpack.c.l.b16 %v4159
    %v4793 = vunpack.c.h.b16 %v4159
    %v4794 = vunpack.c.l.b16 %v4160
    %v4795 = vunpack.c.h.b16 %v4160
    %v4796 = vunpack.c.l.b16 %v4161
    %v4797 = vunpack.c.h.b16 %v4161
    %v4798 = vunpack.c.l.b16 %v4162
    %v4799 = vunpack.c.h.b16 %v4162
    %v4800 = vunpack.c.l.b16 %v4163
    %v4801 = vunpack.c.h.b16 %v4163
    %v4802 = vunpack.c.l.b16 %v4164
    %v4803 = vunpack.c.h.b16 %v4164
    %v4804 = vunpack.c.l.b16 %v4165
    %v4805 = vunpack.c.h.b16 %v4165
    %v4806 = vunpack.c.l.b16 %v4166
    %v4807 = vunpack.c.h.b16 %v4166
    %v4808 = vunpack.c.l.b16 %v4167
    %v4809 = vunpack.c.h.b16 %v4167
    %v4810 = vunpack.c.l.b16 %v4168
    %v4811 = vunpack.c.h.b16 %v4168
    %v4812 = vunpack.c.l.b16 %v4169
    %v4813 = vunpack.c.h.b16 %v4169
    %v4814 = vunpack.c.l.b16 %v4170
    %v4815 = vunpack.c.h.b16 %v4170
    %v4816 = vunpack.c.l.b16 %v4171
    %v4817 = vunpack.c.h.b16 %v4171
    %v4818 = vunpack.c.l.b16 %v4172
    %v4819 = vunpack.c.h.b16 %v4172
    %v4820 = vunpack.c.l.b16 %v4173
    %v4821 = vunpack.c.h.b16 %v4173
    %v4822 = vunpack.c.l.b16 %v4174
    %v4823 = vunpack.c.h.b16 %v4174
    %v4824 = vunpack.c.l.b16 %v4175
    %v4825 = vunpack.c.h.b16 %v4175
    %v4826 = vunpack.c.l.b16 %v4176
    %v4827 = vunpack.c.h.b16 %v4176
    %v4828 = vunpack.c.l.b16 %v4177
    %v4829 = vunpack.c.h.b16 %v4177
    %v4830 = vunpack.c.l.b16 %v4178
    %v4831 = vunpack.c.h.b16 %v4178
    %v4832 = vunpack.c.l.b16 %v4179
    %v4833 = vunpack.c.h.b16 %v4179
    %v4834 = vunpack.c.l.b16 %v4180
    %v4835 = vunpack.c.h.b16 %v4180
    %v4836 = vunpack.c.l.b16 %v4181
    %v4837 = vunpack.c.h.b16 %v4181
    %v4838 = vunpack.c.l.b16 %v4182
    %v4839 = vunpack.c.h.b16 %v4182
    %v4840 = vunpack.c.l.b16 %v4183
    %v4841 = vunpack.c.h.b16 %v4183
    %v4842 = vunpack.c.l.b16 %v4184
    %v4843 = vunpack.c.h.b16 %v4184
    %v4844 = vunpack.c.l.b16 %v4185
    %v4845 = vunpack.c.h.b16 %v4185
    %v4846 = vunpack.c.l.b16 %v4186
    %v4847 = vunpack.c.h.b16 %v4186
    %v4848 = vunpack.c.l.b16 %v4187
    %v4849 = vunpack.c.h.b16 %v4187
    %v4850 = vunpack.c.l.b16 %v4188
    %v4851 = vunpack.c.h.b16 %v4188
    %v4852 = vunpack.c.l.b16 %v4189
    %v4853 = vunpack.c.h.b16 %v4189
    %v4854 = vunpack.c.l.b16 %v4190
    %v4855 = vunpack.c.h.b16 %v4190
    %v4856 = vunpack.c.l.b16 %v4191
    %v4857 = vunpack.c.h.b16 %v4191
    %v4858 = vunpack.c.l.b16 %v4192
    %v4859 = vunpack.c.h.b16 %v4192
    %v4860 = vunpack.c.l.b16 %v4193
    %v4861 = vunpack.c.h.b16 %v4193
    %v4862 = vunpack.c.l.b16 %v4194
    %v4863 = vunpack.c.h.b16 %v4194
    %v4864 = vunpack.c.l.b16 %v4195
    %v4865 = vunpack.c.h.b16 %v4195
    %v4866 = vunpack.c.l.b16 %v4196
    %v4867 = vunpack.c.h.b16 %v4196
    %v4868 = vunpack.c.l.b16 %v4197
    %v4869 = vunpack.c.h.b16 %v4197
    %v4870 = vunpack.c.l.b16 %v4198
    %v4871 = vunpack.c.h.b16 %v4198
    %v4872 = vunpack.c.l.b16 %v4199
    %v4873 = vunpack.c.h.b16 %v4199
    %v4874 = vunpack.c.l.b16 %v4200
    %v4875 = vunpack.c.h.b16 %v4200
    %v4876 = vunpack.c.l.b16 %v4201
    %v4877 = vunpack.c.h.b16 %v4201
    %v4878 = vunpack.c.l.b16 %v4202
    %v4879 = vunpack.c.h.b16 %v4202
    %v4880 = vunpack.c.l.b16 %v4203
    %v4881 = vunpack.c.h.b16 %v4203
    %v4882 = vunpack.c.l.b16 %v4204
    %v4883 = vunpack.c.h.b16 %v4204
    %v4884 = vunpack.c.l.b16 %v4205
    %v4885 = vunpack.c.h.b16 %v4205
    %v4886 = vunpack.c.l.b16 %v4206
    %v4887 = vunpack.c.h.b16 %v4206
    %v4888 = vunpack.c.l.b16 %v4207
    %v4889 = vunpack.c.h.b16 %v4207
    %v4890 = vunpack.c.l.b16 %v4208
    %v4891 = vunpack.c.h.b16 %v4208
    %v4892 = vunpack.c.l.b16 %v4209
    %v4893 = vunpack.c.h.b16 %v4209
    %v4894 = vunpack.c.l.b16 %v4210
    %v4895 = vunpack.c.h.b16 %v4210
    %v4896 = vunpack.c.l.b16 %v4211
    %v4897 = vunpack.c.h.b16 %v4211
    %v4898 = vunpack.c.l.b16 %v4212
    %v4899 = vunpack.c.h.b16 %v4212
    %v4900 = vunpack.c.l.b16 %v4213
    %v4901 = vunpack.c.h.b16 %v4213
    %v4902 = vunpack.c.l.b16 %v4214
    %v4903 = vunpack.c.h.b16 %v4214
    %v4904 = vunpack.c.l.b16 %v4215
    %v4905 = vunpack.c.h.b16 %v4215
    %v4906 = vunpack.c.l.b16 %v4216
    %v4907 = vunpack.c.h.b16 %v4216
    %v4908 = vunpack.c.l.b16 %v4217
    %v4909 = vunpack.c.h.b16 %v4217
    %v4910 = vunpack.c.l.b16 %v4218
    %v4911 = vunpack.c.h.b16 %v4218
    %v4912 = vunpack.c.l.b16 %v4219
    %v4913 = vunpack.c.h.b16 %v4219
    %v4914 = vunpack.c.l.b16 %v4220
    %v4915 = vunpack.c.h.b16 %v4220
    %v4916 = vunpack.c.l.b16 %v4221
    %v4917 = vunpack.c.h.b16 %v4221
    %v4918 = vunpack.c.l.b16 %v4222
    %v4919 = vunpack.c.h.b16 %v4222
    %v4920 = vunpack.c.l.b16 %v4223
    %v4921 = vunpack.c.h.b16 %v4223
    %v4922 = vunpack.c.l.b16 %v4224
    %v4923 = vunpack.c.h.b16 %v4224
    %v4924 = vunpack.c.l.b16 %v4225
    %v4925 = vunpack.c.h.b16 %v4225
    %v4926 = vunpack.c.l.b16 %v4226
    %v4927 = vunpack.c.h.b16 %v4226
    %v4928 = vunpack.c.l.b16 %v4227
    %v4929 = vunpack.c.h.b16 %v4227
    %v4930 = vunpack.c.l.b16 %v4228
    %v4931 = vunpack.c.h.b16 %v4228
    %v4932 = vunpack.c.l.b16 %v4229
    %v4933 = vunpack.c.h.b16 %v4229
    %v4934 = vunpack.c.l.b16 %v4230
    %v4935 = vunpack.c.h.b16 %v4230
    %v4936 = vunpack.c.l.b16 %v4231
    %v4937 = vunpack.c.h.b16 %v4231
    %v4938 = vunpack.c.l.b16 %v4232
    %v4939 = vunpack.c.h.b16 %v4232
    %v4940 = vunpack.c.l.b16 %v4233
    %v4941 = vunpack.c.h.b16 %v4233
    %v4942 = vunpack.c.l.b16 %v4234
    %v4943 = vunpack.c.h.b16 %v4234
    %v4944 = vunpack.c.l.b16 %v4235
    %v4945 = vunpack.c.h.b16 %v4235
    %v4946 = vunpack.c.l.b16 %v4236
    %v4947 = vunpack.c.h.b16 %v4236
    %v4948 = vunpack.c.l.b16 %v4237
    %v4949 = vunpack.c.h.b16 %v4237
    %v4950 = vunpack.c.l.b16 %v4238
    %v4951 = vunpack.c.h.b16 %v4238
    %v4952 = vunpack.c.l.b16 %v4239
    %v4953 = vunpack.c.h.b16 %v4239
    %v4954 = vunpack.c.l.b16 %v4240
    %v4955 = vunpack.c.h.b16 %v4240
    %v4956 = vunpack.c.l.b16 %v4241
    %v4957 = vunpack.c.h.b16 %v4241
    %v4958 = vunpack.c.l.b16 %v4242
    %v4959 = vunpack.c.h.b16 %v4242
    %v4960 = vunpack.c.l.b16 %v4243
    %v4961 = vunpack.c.h.b16 %v4243
    %v4962 = vunpack.c.l.b16 %v4244
    %v4963 = vunpack.c.h.b16 %v4244
    %v4964 = vunpack.c.l.b16 %v4245
    %v4965 = vunpack.c.h.b16 %v4245
    %v4966 = vunpack.c.l.b16 %v4246
    %v4967 = vunpack.c.h.b16 %v4246
    %v4968 = vunpack.c.l.b16 %v4247
    %v4969 = vunpack.c.h.b16 %v4247
    %v4970 = vunpack.c.l.b16 %v4248
    %v4971 = vunpack.c.h.b16 %v4248
    %v4972 = vunpack.c.l.b16 %v4249
    %v4973 = vunpack.c.h.b16 %v4249
    %v4974 = vunpack.c.l.b16 %v4250
    %v4975 = vunpack.c.h.b16 %v4250
    %v4976 = vunpack.c.l.b16 %v4251
    %v4977 = vunpack.c.h.b16 %v4251
    %v4978 = vunpack.c.l.b16 %v4252
    %v4979 = vunpack.c.h.b16 %v4252
    %v4980 = vunpack.c.l.b16 %v4253
    %v4981 = vunpack.c.h.b16 %v4253
    %v4982 = vunpack.c.l.b16 %v4254
    %v4983 = vunpack.c.h.b16 %v4254
    %v4984 = vunpack.c.l.b16 %v4255
    %v4985 = vunpack.c.h.b16 %v4255
    %v4986 = vunpack.c.l.b16 %v4256
    %v4987 = vunpack.c.h.b16 %v4256
    %v4988 = vunpack.c.l.b16 %v4257
    %v4989 = vunpack.c.h.b16 %v4257
    %v4990 = vunpack.c.l.b16 %v4258
    %v4991 = vunpack.c.h.b16 %v4258
    %v4992 = vunpack.c.l.b16 %v4259
    %v4993 = vunpack.c.h.b16 %v4259
    %v4994 = vunpack.c.l.b16 %v4260
    %v4995 = vunpack.c.h.b16 %v4260
    %v4996 = vunpack.c.l.b16 %v4261
    %v4997 = vunpack.c.h.b16 %v4261
    %v4998 = vunpack.c.l.b16 %v4262
    %v4999 = vunpack.c.h.b16 %v4262
    %v5000 = vunpack.c.l.b16 %v4263
    %v5001 = vunpack.c.h.b16 %v4263
    %v5002 = vunpack.c.l.b16 %v4264
    %v5003 = vunpack.c.h.b16 %v4264
    %v5004 = vunpack.c.l.b16 %v4265
    %v5005 = vunpack.c.h.b16 %v4265
    %v5006 = vunpack.c.l.b16 %v4266
    %v5007 = vunpack.c.h.b16 %v4266
    %v5008 = vunpack.c.l.b16 %v4267
    %v5009 = vunpack.c.h.b16 %v4267
    %v5010 = vunpack.c.l.b16 %v4268
    %v5011 = vunpack.c.h.b16 %v4268
    %v5012 = vunpack.c.l.b16 %v4269
    %v5013 = vunpack.c.h.b16 %v4269
    %v5014 = vunpack.c.l.b16 %v4270
    %v5015 = vunpack.c.h.b16 %v4270
    %v5016 = vunpack.c.l.b16 %v4271
    %v5017 = vunpack.c.h.b16 %v4271
    %v5018 = vunpack.c.l.b16 %v4272
    %v5019 = vunpack.c.h.b16 %v4272
    %v5020 = vunpack.c.l.b16 %v4273
    %v5021 = vunpack.c.h.b16 %v4273
    %v5022 = vunpack.c.l.b16 %v4274
    %v5023 = vunpack.c.h.b16 %v4274
    %v5024 = vunpack.c.l.b16 %v4275
    %v5025 = vunpack.c.h.b16 %v4275
    %v5026 = vunpack.c.l.b16 %v4276
    %v5027 = vunpack.c.h.b16 %v4276
    %v5028 = vunpack.c.l.b16 %v4277
    %v5029 = vunpack.c.h.b16 %v4277
    %v5030 = vunpack.c.l.b16 %v4278
    %v5031 = vunpack.c.h.b16 %v4278
    %v5032 = vunpack.c.l.b16 %v4279
    %v5033 = vunpack.c.h.b16 %v4279
    %v5034 = vunpack.c.l.b16 %v4280
    %v5035 = vunpack.c.h.b16 %v4280
    %v5036 = vunpack.c.l.b16 %v4281
    %v5037 = vunpack.c.h.b16 %v4281
    %v5038 = vunpack.c.l.b16 %v4282
    %v5039 = vunpack.c.h.b16 %v4282
    %v5040 = vunpack.c.l.b16 %v4283
    %v5041 = vunpack.c.h.b16 %v4283
    %v5042 = vunpack.c.l.b16 %v4284
    %v5043 = vunpack.c.h.b16 %v4284
    %v5044 = vunpack.c.l.b16 %v4285
    %v5045 = vunpack.c.h.b16 %v4285
    %v5046 = vunpack.c.l.b16 %v4286
    %v5047 = vunpack.c.h.b16 %v4286
    %v5048 = vunpack.c.l.b16 %v4287
    %v5049 = vunpack.c.h.b16 %v4287
    %v5050 = vunpack.c.l.b16 %v4288
    %v5051 = vunpack.c.h.b16 %v4288
    %v5052 = vunpack.c.l.b16 %v4289
    %v5053 = vunpack.c.h.b16 %v4289
    %v5054 = vunpack.c.l.b16 %v4290
    %v5055 = vunpack.c.h.b16 %v4290
    %v5056 = vunpack.c.l.b16 %v4291
    %v5057 = vunpack.c.h.b16 %v4291
    %v5058 = vunpack.c.l.b16 %v4292
    %v5059 = vunpack.c.h.b16 %v4292
    %v5060 = vunpack.c.l.b16 %v4293
    %v5061 = vunpack.c.h.b16 %v4293
    %v5062 = vpack.c.b16 %v4554, %v4550
    %v5063 = vpack.c.b16 %v4555, %v4551
    %v5064 = vpack.c.b16 %v4556, %v4552
    %v5065 = vpack.c.b16 %v4557, %v4553
    %v5066 = vpack.c.b16 %v4562, %v4558
    %v5067 = vpack.c.b16 %v4563, %v4559
    %v5068 = vpack.c.b16 %v4564, %v4560
    %v5069 = vpack.c.b16 %v4565, %v4561
    %v5070 = vpack.c.b16 %v4570, %v4566
    %v5071 = vpack.c.b16 %v4571, %v4567
    %v5072 = vpack.c.b16 %v4572, %v4568
    %v5073 = vpack.c.b16 %v4573, %v4569
    %v5074 = vpack.c.b16 %v4578, %v4574
    %v5075 = vpack.c.b16 %v4579, %v4575
    %v5076 = vpack.c.b16 %v4580, %v4576
    %v5077 = vpack.c.b16 %v4581, %v4577
    %v5078 = vpack.c.b16 %v4586, %v4582
    %v5079 = vpack.c.b16 %v4587, %v4583
    %v5080 = vpack.c.b16 %v4588, %v4584
    %v5081 = vpack.c.b16 %v4589, %v4585
    %v5082 = vpack.c.b16 %v4594, %v4590
    %v5083 = vpack.c.b16 %v4595, %v4591
    %v5084 = vpack.c.b16 %v4596, %v4592
    %v5085 = vpack.c.b16 %v4597, %v4593
    %v5086 = vpack.c.b16 %v4602, %v4598
    %v5087 = vpack.c.b16 %v4603, %v4599
    %v5088 = vpack.c.b16 %v4604, %v4600
    %v5089 = vpack.c.b16 %v4605, %v4601
    %v5090 = vpack.c.b16 %v4610, %v4606
    %v5091 = vpack.c.b16 %v4611, %v4607
    %v5092 = vpack.c.b16 %v4612, %v4608
    %v5093 = vpack.c.b16 %v4613, %v4609
    %v5094 = vpack.c.b16 %v4618, %v4614
    %v5095 = vpack.c.b16 %v4619, %v4615
    %v5096 = vpack.c.b16 %v4620, %v4616
    %v5097 = vpack.c.b16 %v4621, %v4617
    %v5098 = vpack.c.b16 %v4626, %v4622
    %v5099 = vpack.c.b16 %v4627, %v4623
    %v5100 = vpack.c.b16 %v4628, %v4624
    %v5101 = vpack.c.b16 %v4629, %v4625
    %v5102 = vpack.c.b16 %v4634, %v4630
    %v5103 = vpack.c.b16 %v4635, %v4631
    %v5104 = vpack.c.b16 %v4636, %v4632
    %v5105 = vpack.c.b16 %v4637, %v4633
    %v5106 = vpack.c.b16 %v4642, %v4638
    %v5107 = vpack.c.b16 %v4643, %v4639
    %v5108 = vpack.c.b16 %v4644, %v4640
    %v5109 = vpack.c.b16 %v4645, %v4641
    %v5110 = vpack.c.b16 %v4650, %v4646
    %v5111 = vpack.c.b16 %v4651, %v4647
    %v5112 = vpack.c.b16 %v4652, %v4648
    %v5113 = vpack.c.b16 %v4653, %v4649
    %v5114 = vpack.c.b16 %v4658, %v4654
    %v5115 = vpack.c.b16 %v4659, %v4655
    %v5116 = vpack.c.b16 %v4660, %v4656
    %v5117 = vpack.c.b16 %v4661, %v4657
    %v5118 = vpack.c.b16 %v4666, %v4662
    %v5119 = vpack.c.b16 %v4667, %v4663
    %v5120 = vpack.c.b16 %v4668, %v4664
    %v5121 = vpack.c.b16 %v4669, %v4665
    %v5122 = vpack.c.b16 %v4674, %v4670
    %v5123 = vpack.c.b16 %v4675, %v4671
    %v5124 = vpack.c.b16 %v4676, %v4672
    %v5125 = vpack.c.b16 %v4677, %v4673
    %v5126 = vpack.c.b16 %v4682, %v4678
    %v5127 = vpack.c.b16 %v4683, %v4679
    %v5128 = vpack.c.b16 %v4684, %v4680
    %v5129 = vpack.c.b16 %v4685, %v4681
    %v5130 = vpack.c.b16 %v4690, %v4686
    %v5131 = vpack.c.b16 %v4691, %v4687
    %v5132 = vpack.c.b16 %v4692, %v4688
    %v5133 = vpack.c.b16 %v4693, %v4689
    %v5134 = vpack.c.b16 %v4698, %v4694
    %v5135 = vpack.c.b16 %v4699, %v4695
    %v5136 = vpack.c.b16 %v4700, %v4696
    %v5137 = vpack.c.b16 %v4701, %v4697
    %v5138 = vpack.c.b16 %v4706, %v4702
    %v5139 = vpack.c.b16 %v4707, %v4703
    %v5140 = vpack.c.b16 %v4708, %v4704
    %v5141 = vpack.c.b16 %v4709, %v4705
    %v5142 = vpack.c.b16 %v4714, %v4710
    %v5143 = vpack.c.b16 %v4715, %v4711
    %v5144 = vpack.c.b16 %v4716, %v4712
    %v5145 = vpack.c.b16 %v4717, %v4713
    %v5146 = vpack.c.b16 %v4722, %v4718
    %v5147 = vpack.c.b16 %v4723, %v4719
    %v5148 = vpack.c.b16 %v4724, %v4720
    %v5149 = vpack.c.b16 %v4725, %v4721
    %v5150 = vpack.c.b16 %v4730, %v4726
    %v5151 = vpack.c.b16 %v4731, %v4727
    %v5152 = vpack.c.b16 %v4732, %v4728
    %v5153 = vpack.c.b16 %v4733, %v4729
    %v5154 = vpack.c.b16 %v4738, %v4734
    %v5155 = vpack.c.b16 %v4739, %v4735
    %v5156 = vpack.c.b16 %v4740, %v4736
    %v5157 = vpack.c.b16 %v4741, %v4737
    %v5158 = vpack.c.b16 %v4746, %v4742
    %v5159 = vpack.c.b16 %v4747, %v4743
    %v5160 = vpack.c.b16 %v4748, %v4744
    %v5161 = vpack.c.b16 %v4749, %v4745
    %v5162 = vpack.c.b16 %v4754, %v4750
    %v5163 = vpack.c.b16 %v4755, %v4751
    %v5164 = vpack.c.b16 %v4756, %v4752
    %v5165 = vpack.c.b16 %v4757, %v4753
    %v5166 = vpack.c.b16 %v4762, %v4758
    %v5167 = vpack.c.b16 %v4763, %v4759
    %v5168 = vpack.c.b16 %v4764, %v4760
    %v5169 = vpack.c.b16 %v4765, %v4761
    %v5170 = vpack.c.b16 %v4770, %v4766
    %v5171 = vpack.c.b16 %v4771, %v4767
    %v5172 = vpack.c.b16 %v4772, %v4768
    %v5173 = vpack.c.b16 %v4773, %v4769
    %v5174 = vpack.c.b16 %v4778, %v4774
    %v5175 = vpack.c.b16 %v4779, %v4775
    %v5176 = vpack.c.b16 %v4780, %v4776
    %v5177 = vpack.c.b16 %v4781, %v4777
    %v5178 = vpack.c.b16 %v4786, %v4782
    %v5179 = vpack.c.b16 %v4787, %v4783
    %v5180 = vpack.c.b16 %v4788, %v4784
    %v5181 = vpack.c.b16 %v4789, %v4785
    %v5182 = vpack.c.b16 %v4794, %v4790
    %v5183 = vpack.c.b16 %v4795, %v4791
    %v5184 = vpack.c.b16 %v4796, %v4792
    %v5185 = vpack.c.b16 %v4797, %v4793
    %v5186 = vpack.c.b16 %v4802, %v4798
    %v5187 = vpack.c.b16 %v4803, %v4799
    %v5188 = vpack.c.b16 %v4804, %v4800
    %v5189 = vpack.c.b16 %v4805, %v4801
    %v5190 = vpack.c.b16 %v4810, %v4806
    %v5191 = vpack.c.b16 %v4811, %v4807
    %v5192 = vpack.c.b16 %v4812, %v4808
    %v5193 = vpack.c.b16 %v4813, %v4809
    %v5194 = vpack.c.b16 %v4818, %v4814
    %v5195 = vpack.c.b16 %v4819, %v4815
    %v5196 = vpack.c.b16 %v4820, %v4816
    %v5197 = vpack.c.b16 %v4821, %v4817
    %v5198 = vpack.c.b16 %v4826, %v4822
    %v5199 = vpack.c.b16 %v4827, %v4823
    %v5200 = vpack.c.b16 %v4828, %v4824
    %v5201 = vpack.c.b16 %v4829, %v4825
    %v5202 = vpack.c.b16 %v4834, %v4830
    %v5203 = vpack.c.b16 %v4835, %v4831
    %v5204 = vpack.c.b16 %v4836, %v4832
    %v5205 = vpack.c.b16 %v4837, %v4833
    %v5206 = vpack.c.b16 %v4842, %v4838
    %v5207 = vpack.c.b16 %v4843, %v4839
    %v5208 = vpack.c.b16 %v4844, %v4840
    %v5209 = vpack.c.b16 %v4845, %v4841
    %v5210 = vpack.c.b16 %v4850, %v4846
    %v5211 = vpack.c.b16 %v4851, %v4847
    %v5212 = vpack.c.b16 %v4852, %v4848
    %v5213 = vpack.c.b16 %v4853, %v4849
    %v5214 = vpack.c.b16 %v4858, %v4854
    %v5215 = vpack.c.b16 %v4859, %v4855
    %v5216 = vpack.c.b16 %v4860, %v4856
    %v5217 = vpack.c.b16 %v4861, %v4857
    %v5218 = vpack.c.b16 %v4866, %v4862
    %v5219 = vpack.c.b16 %v4867, %v4863
    %v5220 = vpack.c.b16 %v4868, %v4864
    %v5221 = vpack.c.b16 %v4869, %v4865
    %v5222 = vpack.c.b16 %v4874, %v4870
    %v5223 = vpack.c.b16 %v4875, %v4871
    %v5224 = vpack.c.b16 %v4876, %v4872
    %v5225 = vpack.c.b16 %v4877, %v4873
    %v5226 = vpack.c.b16 %v4882, %v4878
    %v5227 = vpack.c.b16 %v4883, %v4879
    %v5228 = vpack.c.b16 %v4884, %v4880
    %v5229 = vpack.c.b16 %v4885, %v4881
    %v5230 = vpack.c.b16 %v4890, %v4886
    %v5231 = vpack.c.b16 %v4891, %v4887
    %v5232 = vpack.c.b16 %v4892, %v4888
    %v5233 = vpack.c.b16 %v4893, %v4889
    %v5234 = vpack.c.b16 %v4898, %v4894
    %v5235 = vpack.c.b16 %v4899, %v4895
    %v5236 = vpack.c.b16 %v4900, %v4896
    %v5237 = vpack.c.b16 %v4901, %v4897
    %v5238 = vpack.c.b16 %v4906, %v4902
    %v5239 = vpack.c.b16 %v4907, %v4903
    %v5240 = vpack.c.b16 %v4908, %v4904
    %v5241 = vpack.c.b16 %v4909, %v4905
    %v5242 = vpack.c.b16 %v4914, %v4910
    %v5243 = vpack.c.b16 %v4915, %v4911
    %v5244 = vpack.c.b16 %v4916, %v4912
    %v5245 = vpack.c.b16 %v4917, %v4913
    %v5246 = vpack.c.b16 %v4922, %v4918
    %v5247 = vpack.c.b16 %v4923, %v4919
    %v5248 = vpack.c.b16 %v4924, %v4920
    %v5249 = vpack.c.b16 %v4925, %v4921
    %v5250 = vpack.c.b16 %v4930, %v4926
    %v5251 = vpack.c.b16 %v4931, %v4927
    %v5252 = vpack.c.b16 %v4932, %v4928
    %v5253 = vpack.c.b16 %v4933, %v4929
    %v5254 = vpack.c.b16 %v4938, %v4934
    %v5255 = vpack.c.b16 %v4939, %v4935
    %v5256 = vpack.c.b16 %v4940, %v4936
    %v5257 = vpack.c.b16 %v4941, %v4937
    %v5258 = vpack.c.b16 %v4946, %v4942
    %v5259 = vpack.c.b16 %v4947, %v4943
    %v5260 = vpack.c.b16 %v4948, %v4944
    %v5261 = vpack.c.b16 %v4949, %v4945
    %v5262 = vpack.c.b16 %v4954, %v4950
    %v5263 = vpack.c.b16 %v4955, %v4951
    %v5264 = vpack.c.b16 %v4956, %v4952
    %v5265 = vpack.c.b16 %v4957, %v4953
    %v5266 = vpack.c.b16 %v4962, %v4958
    %v5267 = vpack.c.b16 %v4963, %v4959
    %v5268 = vpack.c.b16 %v4964, %v4960
    %v5269 = vpack.c.b16 %v4965, %v4961
    %v5270 = vpack.c.b16 %v4970, %v4966
    %v5271 = vpack.c.b16 %v4971, %v4967
    %v5272 = vpack.c.b16 %v4972, %v4968
    %v5273 = vpack.c.b16 %v4973, %v4969
    %v5274 = vpack.c.b16 %v4978, %v4974
    %v5275 = vpack.c.b16 %v4979, %v4975
    %v5276 = vpack.c.b16 %v4980, %v4976
    %v5277 = vpack.c.b16 %v4981, %v4977
    %v5278 = vpack.c.b16 %v4986, %v4982
    %v5279 = vpack.c.b16 %v4987, %v4983
    %v5280 = vpack.c.b16 %v4988, %v4984
    %v5281 = vpack.c.b16 %v4989, %v4985
    %v5282 = vpack.c.b16 %v4994, %v4990
    %v5283 = vpack.c.b16 %v4995, %v4991
    %v5284 = vpack.c.b16 %v4996, %v4992
    %v5285 = vpack.c.b16 %v4997, %v4993
    %v5286 = vpack.c.b16 %v5002, %v4998
    %v5287 = vpack.c.b16 %v5003, %v4999
    %v5288 = vpack.c.b16 %v5004, %v5000
    %v5289 = vpack.c.b16 %v5005, %v5001
    %v5290 = vpack.c.b16 %v5010, %v5006
    %v5291 = vpack.c.b16 %v5011, %v5007
    %v5292 = vpack.c.b16 %v5012, %v5008
    %v5293 = vpack.c.b16 %v5013, %v5009
    %v5294 = vpack.c.b16 %v5018, %v5014
    %v5295 = vpack.c.b16 %v5019, %v5015
    %v5296 = vpack.c.b16 %v5020, %v5016
    %v5297 = vpack.c.b16 %v5021, %v5017
    %v5298 = vpack.c.b16 %v5026, %v5022
    %v5299 = vpack.c.b16 %v5027, %v5023
    %v5300 = vpack.c.b16 %v5028, %v5024
    %v5301 = vpack.c.b16 %v5029, %v5025
    %v5302 = vpack.c.b16 %v5034, %v5030
    %v5303 = vpack.c.b16 %v5035, %v5031
    %v5304 = vpack.c.b16 %v5036, %v5032
    %v5305 = vpack.c.b16 %v5037, %v5033
    %v5306 = vpack.c.b16 %v5042, %v5038
    %v5307 = vpack.c.b16 %v5043, %v5039
    %v5308 = vpack.c.b16 %v5044, %v5040
    %v5309 = vpack.c.b16 %v5045, %v5041
    %v5310 = vpack.c.b16 %v5050, %v5046
    %v5311 = vpack.c.b16 %v5051, %v5047
    %v5312 = vpack.c.b16 %v5052, %v5048
    %v5313 = vpack.c.b16 %v5053, %v5049
    %v5314 = vpack.c.b16 %v5058, %v5054
    %v5315 = vpack.c.b16 %v5059, %v5055
    %v5316 = vpack.c.b16 %v5060, %v5056
    %v5317 = vpack.c.b16 %v5061, %v5057
    %5574 = vmatpush.bf16.msra.mxu0 %v5090
    %5575 = vmatpush.bf16.msra.mxu0 %v5086
    %5576 = vmatpush.bf16.msra.mxu0 %v5082
    %5577 = vmatpush.bf16.msra.mxu0 %v5078
    %5578 = vmatpush.bf16.msra.mxu0 %v5074
    %5579 = vmatpush.bf16.msra.mxu0 %v5070
    %5580 = vmatpush.bf16.msra.mxu0 %v5066
    %5581 = vmatpush.bf16.msra.mxu0 %v5062
    %5582 = vmatmul.bf16.gmra.mxu0 %v4030
    %v5583 = vpop.f32.mrf.mxu0
    %v5584 = vadd.f32 0.0, %v5583
    %v5585 = vpop.f32.mrf.mxu0
    %5586 = vdwg.mxu0
    %5587 = vmatpush.bf16.msra.mxu0 %v5122
    %5588 = vmatpush.bf16.msra.mxu0 %v5118
    %5589 = vmatpush.bf16.msra.mxu0 %v5114
    %5590 = vmatpush.bf16.msra.mxu0 %v5110
    %5591 = vmatpush.bf16.msra.mxu0 %v5106
    %5592 = vmatpush.bf16.msra.mxu0 %v5102
    %5593 = vmatpush.bf16.msra.mxu0 %v5098
    %5594 = vmatpush.bf16.msra.mxu0 %v5094
    %5595 = vmatmul.bf16.gmra.mxu0 %v4031
    %v5596 = vpop.f32.mrf.mxu0
    %v5597 = vadd.f32 %v5584, %v5596
    %v5598 = vpop.f32.mrf.mxu0
    %5599 = vdwg.mxu0
    %5600 = vmatpush.bf16.msra.mxu0 %v5154
    %5601 = vmatpush.bf16.msra.mxu0 %v5150
    %5602 = vmatpush.bf16.msra.mxu0 %v5146
    %5603 = vmatpush.bf16.msra.mxu0 %v5142
    %5604 = vmatpush.bf16.msra.mxu0 %v5138
    %5605 = vmatpush.bf16.msra.mxu0 %v5134
    %5606 = vmatpush.bf16.msra.mxu0 %v5130
    %5607 = vmatpush.bf16.msra.mxu0 %v5126
    %5608 = vmatmul.bf16.gmra.mxu0 %v4032
    %v5609 = vpop.f32.mrf.mxu0
    %v5610 = vadd.f32 %v5597, %v5609
    %v5611 = vpop.f32.mrf.mxu0
    %5612 = vdwg.mxu0
    %5613 = vmatpush.bf16.msra.mxu0 %v5186
    %5614 = vmatpush.bf16.msra.mxu0 %v5182
    %5615 = vmatpush.bf16.msra.mxu0 %v5178
    %5616 = vmatpush.bf16.msra.mxu0 %v5174
    %5617 = vmatpush.bf16.msra.mxu0 %v5170
    %5618 = vmatpush.bf16.msra.mxu0 %v5166
    %5619 = vmatpush.bf16.msra.mxu0 %v5162
    %5620 = vmatpush.bf16.msra.mxu0 %v5158
    %5621 = vmatmul.bf16.gmra.mxu0 %v4033
    %v5622 = vpop.f32.mrf.mxu0
    %v5623 = vadd.f32 %v5610, %v5622
    %v5624 = vpop.f32.mrf.mxu0
    %5625 = vdwg.mxu0
    %5626 = vmatpush.bf16.msra.mxu0 %v5218
    %5627 = vmatpush.bf16.msra.mxu0 %v5214
    %5628 = vmatpush.bf16.msra.mxu0 %v5210
    %5629 = vmatpush.bf16.msra.mxu0 %v5206
    %5630 = vmatpush.bf16.msra.mxu0 %v5202
    %5631 = vmatpush.bf16.msra.mxu0 %v5198
    %5632 = vmatpush.bf16.msra.mxu0 %v5194
    %5633 = vmatpush.bf16.msra.mxu0 %v5190
    %5634 = vmatmul.bf16.gmra.mxu0 %v4034
    %v5635 = vpop.f32.mrf.mxu0
    %v5636 = vadd.f32 %v5623, %v5635
    %v5637 = vpop.f32.mrf.mxu0
    %5638 = vdwg.mxu0
    %5639 = vmatpush.bf16.msra.mxu0 %v5250
    %5640 = vmatpush.bf16.msra.mxu0 %v5246
    %5641 = vmatpush.bf16.msra.mxu0 %v5242
    %5642 = vmatpush.bf16.msra.mxu0 %v5238
    %5643 = vmatpush.bf16.msra.mxu0 %v5234
    %5644 = vmatpush.bf16.msra.mxu0 %v5230
    %5645 = vmatpush.bf16.msra.mxu0 %v5226
    %5646 = vmatpush.bf16.msra.mxu0 %v5222
    %5647 = vmatmul.bf16.gmra.mxu0 %v4035
    %v5648 = vpop.f32.mrf.mxu0
    %v5649 = vadd.f32 %v5636, %v5648
    %v5650 = vpop.f32.mrf.mxu0
    %5651 = vdwg.mxu0
    %5652 = vmatpush.bf16.msra.mxu0 %v5282
    %5653 = vmatpush.bf16.msra.mxu0 %v5278
    %5654 = vmatpush.bf16.msra.mxu0 %v5274
    %5655 = vmatpush.bf16.msra.mxu0 %v5270
    %5656 = vmatpush.bf16.msra.mxu0 %v5266
    %5657 = vmatpush.bf16.msra.mxu0 %v5262
    %5658 = vmatpush.bf16.msra.mxu0 %v5258
    %5659 = vmatpush.bf16.msra.mxu0 %v5254
    %5660 = vmatmul.bf16.gmra.mxu0 %v4036
    %v5661 = vpop.f32.mrf.mxu0
    %v5662 = vadd.f32 %v5649, %v5661
    %v5663 = vpop.f32.mrf.mxu0
    %5664 = vdwg.mxu0
    %5665 = vmatpush.bf16.msra.mxu0 %v5314
    %5666 = vmatpush.bf16.msra.mxu0 %v5310
    %5667 = vmatpush.bf16.msra.mxu0 %v5306
    %5668 = vmatpush.bf16.msra.mxu0 %v5302
    %5669 = vmatpush.bf16.msra.mxu0 %v5298
    %5670 = vmatpush.bf16.msra.mxu0 %v5294
    %5671 = vmatpush.bf16.msra.mxu0 %v5290
    %5672 = vmatpush.bf16.msra.mxu0 %v5286
    %5673 = vmatmul.bf16.gmra.mxu0 %v4037
    %v5674 = vpop.f32.mrf.mxu0
    %v5675 = vadd.f32 %v5662, %v5674
    %v5676 = vpop.f32.mrf.mxu0
    %5677 = vdwg.mxu0
    %5678 = vmatpush.bf16.msra.mxu0 %v5091
    %5679 = vmatpush.bf16.msra.mxu0 %v5087
    %5680 = vmatpush.bf16.msra.mxu0 %v5083
    %5681 = vmatpush.bf16.msra.mxu0 %v5079
    %5682 = vmatpush.bf16.msra.mxu0 %v5075
    %5683 = vmatpush.bf16.msra.mxu0 %v5071
    %5684 = vmatpush.bf16.msra.mxu0 %v5067
    %5685 = vmatpush.bf16.msra.mxu0 %v5063
    %5686 = vmatmul.bf16.gmra.mxu0 %v4030
    %v5687 = vpop.f32.mrf.mxu0
    %v5688 = vadd.f32 0.0, %v5687
    %v5689 = vpop.f32.mrf.mxu0
    %5690 = vdwg.mxu0
    %5691 = vmatpush.bf16.msra.mxu0 %v5123
    %5692 = vmatpush.bf16.msra.mxu0 %v5119
    %5693 = vmatpush.bf16.msra.mxu0 %v5115
    %5694 = vmatpush.bf16.msra.mxu0 %v5111
    %5695 = vmatpush.bf16.msra.mxu0 %v5107
    %5696 = vmatpush.bf16.msra.mxu0 %v5103
    %5697 = vmatpush.bf16.msra.mxu0 %v5099
    %5698 = vmatpush.bf16.msra.mxu0 %v5095
    %5699 = vmatmul.bf16.gmra.mxu0 %v4031
    %v5700 = vpop.f32.mrf.mxu0
    %v5701 = vadd.f32 %v5688, %v5700
    %v5702 = vpop.f32.mrf.mxu0
    %5703 = vdwg.mxu0
    %5704 = vmatpush.bf16.msra.mxu0 %v5155
    %5705 = vmatpush.bf16.msra.mxu0 %v5151
    %5706 = vmatpush.bf16.msra.mxu0 %v5147
    %5707 = vmatpush.bf16.msra.mxu0 %v5143
    %5708 = vmatpush.bf16.msra.mxu0 %v5139
    %5709 = vmatpush.bf16.msra.mxu0 %v5135
    %5710 = vmatpush.bf16.msra.mxu0 %v5131
    %5711 = vmatpush.bf16.msra.mxu0 %v5127
    %5712 = vmatmul.bf16.gmra.mxu0 %v4032
    %v5713 = vpop.f32.mrf.mxu0
    %v5714 = vadd.f32 %v5701, %v5713
    %v5715 = vpop.f32.mrf.mxu0
    %5716 = vdwg.mxu0
    %5717 = vmatpush.bf16.msra.mxu0 %v5187
    %5718 = vmatpush.bf16.msra.mxu0 %v5183
    %5719 = vmatpush.bf16.msra.mxu0 %v5179
    %5720 = vmatpush.bf16.msra.mxu0 %v5175
    %5721 = vmatpush.bf16.msra.mxu0 %v5171
    %5722 = vmatpush.bf16.msra.mxu0 %v5167
    %5723 = vmatpush.bf16.msra.mxu0 %v5163
    %5724 = vmatpush.bf16.msra.mxu0 %v5159
    %5725 = vmatmul.bf16.gmra.mxu0 %v4033
    %v5726 = vpop.f32.mrf.mxu0
    %v5727 = vadd.f32 %v5714, %v5726
    %v5728 = vpop.f32.mrf.mxu0
    %5729 = vdwg.mxu0
    %5730 = vmatpush.bf16.msra.mxu0 %v5219
    %5731 = vmatpush.bf16.msra.mxu0 %v5215
    %5732 = vmatpush.bf16.msra.mxu0 %v5211
    %5733 = vmatpush.bf16.msra.mxu0 %v5207
    %5734 = vmatpush.bf16.msra.mxu0 %v5203
    %5735 = vmatpush.bf16.msra.mxu0 %v5199
    %5736 = vmatpush.bf16.msra.mxu0 %v5195
    %5737 = vmatpush.bf16.msra.mxu0 %v5191
    %5738 = vmatmul.bf16.gmra.mxu0 %v4034
    %v5739 = vpop.f32.mrf.mxu0
    %v5740 = vadd.f32 %v5727, %v5739
    %v5741 = vpop.f32.mrf.mxu0
    %5742 = vdwg.mxu0
    %5743 = vmatpush.bf16.msra.mxu0 %v5251
    %5744 = vmatpush.bf16.msra.mxu0 %v5247
    %5745 = vmatpush.bf16.msra.mxu0 %v5243
    %5746 = vmatpush.bf16.msra.mxu0 %v5239
    %5747 = vmatpush.bf16.msra.mxu0 %v5235
    %5748 = vmatpush.bf16.msra.mxu0 %v5231
    %5749 = vmatpush.bf16.msra.mxu0 %v5227
    %5750 = vmatpush.bf16.msra.mxu0 %v5223
    %5751 = vmatmul.bf16.gmra.mxu0 %v4035
    %v5752 = vpop.f32.mrf.mxu0
    %v5753 = vadd.f32 %v5740, %v5752
    %v5754 = vpop.f32.mrf.mxu0
    %5755 = vdwg.mxu0
    %5756 = vmatpush.bf16.msra.mxu0 %v5283
    %5757 = vmatpush.bf16.msra.mxu0 %v5279
    %5758 = vmatpush.bf16.msra.mxu0 %v5275
    %5759 = vmatpush.bf16.msra.mxu0 %v5271
    %5760 = vmatpush.bf16.msra.mxu0 %v5267
    %5761 = vmatpush.bf16.msra.mxu0 %v5263
    %5762 = vmatpush.bf16.msra.mxu0 %v5259
    %5763 = vmatpush.bf16.msra.mxu0 %v5255
    %5764 = vmatmul.bf16.gmra.mxu0 %v4036
    %v5765 = vpop.f32.mrf.mxu0
    %v5766 = vadd.f32 %v5753, %v5765
    %v5767 = vpop.f32.mrf.mxu0
    %5768 = vdwg.mxu0
    %5769 = vmatpush.bf16.msra.mxu0 %v5315
    %5770 = vmatpush.bf16.msra.mxu0 %v5311
    %5771 = vmatpush.bf16.msra.mxu0 %v5307
    %5772 = vmatpush.bf16.msra.mxu0 %v5303
    %5773 = vmatpush.bf16.msra.mxu0 %v5299
    %5774 = vmatpush.bf16.msra.mxu0 %v5295
    %5775 = vmatpush.bf16.msra.mxu0 %v5291
    %5776 = vmatpush.bf16.msra.mxu0 %v5287
    %5777 = vmatmul.bf16.gmra.mxu0 %v4037
    %v5778 = vpop.f32.mrf.mxu0
    %v5779 = vadd.f32 %v5766, %v5778
    %v5780 = vpop.f32.mrf.mxu0
    %5781 = vdwg.mxu0
    %5782 = vmatpush.bf16.msra.mxu0 %v5092
    %5783 = vmatpush.bf16.msra.mxu0 %v5088
    %5784 = vmatpush.bf16.msra.mxu0 %v5084
    %5785 = vmatpush.bf16.msra.mxu0 %v5080
    %5786 = vmatpush.bf16.msra.mxu0 %v5076
    %5787 = vmatpush.bf16.msra.mxu0 %v5072
    %5788 = vmatpush.bf16.msra.mxu0 %v5068
    %5789 = vmatpush.bf16.msra.mxu0 %v5064
    %5790 = vmatmul.bf16.gmra.mxu0 %v4030
    %v5791 = vpop.f32.mrf.mxu0
    %v5792 = vadd.f32 0.0, %v5791
    %v5793 = vpop.f32.mrf.mxu0
    %5794 = vdwg.mxu0
    %5795 = vmatpush.bf16.msra.mxu0 %v5124
    %5796 = vmatpush.bf16.msra.mxu0 %v5120
    %5797 = vmatpush.bf16.msra.mxu0 %v5116
    %5798 = vmatpush.bf16.msra.mxu0 %v5112
    %5799 = vmatpush.bf16.msra.mxu0 %v5108
    %5800 = vmatpush.bf16.msra.mxu0 %v5104
    %5801 = vmatpush.bf16.msra.mxu0 %v5100
    %5802 = vmatpush.bf16.msra.mxu0 %v5096
    %5803 = vmatmul.bf16.gmra.mxu0 %v4031
    %v5804 = vpop.f32.mrf.mxu0
    %v5805 = vadd.f32 %v5792, %v5804
    %v5806 = vpop.f32.mrf.mxu0
    %5807 = vdwg.mxu0
    %5808 = vmatpush.bf16.msra.mxu0 %v5156
    %5809 = vmatpush.bf16.msra.mxu0 %v5152
    %5810 = vmatpush.bf16.msra.mxu0 %v5148
    %5811 = vmatpush.bf16.msra.mxu0 %v5144
    %5812 = vmatpush.bf16.msra.mxu0 %v5140
    %5813 = vmatpush.bf16.msra.mxu0 %v5136
    %5814 = vmatpush.bf16.msra.mxu0 %v5132
    %5815 = vmatpush.bf16.msra.mxu0 %v5128
    %5816 = vmatmul.bf16.gmra.mxu0 %v4032
    %v5817 = vpop.f32.mrf.mxu0
    %v5818 = vadd.f32 %v5805, %v5817
    %v5819 = vpop.f32.mrf.mxu0
    %5820 = vdwg.mxu0
    %5821 = vmatpush.bf16.msra.mxu0 %v5188
    %5822 = vmatpush.bf16.msra.mxu0 %v5184
    %5823 = vmatpush.bf16.msra.mxu0 %v5180
    %5824 = vmatpush.bf16.msra.mxu0 %v5176
    %5825 = vmatpush.bf16.msra.mxu0 %v5172
    %5826 = vmatpush.bf16.msra.mxu0 %v5168
    %5827 = vmatpush.bf16.msra.mxu0 %v5164
    %5828 = vmatpush.bf16.msra.mxu0 %v5160
    %5829 = vmatmul.bf16.gmra.mxu0 %v4033
    %v5830 = vpop.f32.mrf.mxu0
    %v5831 = vadd.f32 %v5818, %v5830
    %v5832 = vpop.f32.mrf.mxu0
    %5833 = vdwg.mxu0
    %5834 = vmatpush.bf16.msra.mxu0 %v5220
    %5835 = vmatpush.bf16.msra.mxu0 %v5216
    %5836 = vmatpush.bf16.msra.mxu0 %v5212
    %5837 = vmatpush.bf16.msra.mxu0 %v5208
    %5838 = vmatpush.bf16.msra.mxu0 %v5204
    %5839 = vmatpush.bf16.msra.mxu0 %v5200
    %5840 = vmatpush.bf16.msra.mxu0 %v5196
    %5841 = vmatpush.bf16.msra.mxu0 %v5192
    %5842 = vmatmul.bf16.gmra.mxu0 %v4034
    %v5843 = vpop.f32.mrf.mxu0
    %v5844 = vadd.f32 %v5831, %v5843
    %v5845 = vpop.f32.mrf.mxu0
    %5846 = vdwg.mxu0
    %5847 = vmatpush.bf16.msra.mxu0 %v5252
    %5848 = vmatpush.bf16.msra.mxu0 %v5248
    %5849 = vmatpush.bf16.msra.mxu0 %v5244
    %5850 = vmatpush.bf16.msra.mxu0 %v5240
    %5851 = vmatpush.bf16.msra.mxu0 %v5236
    %5852 = vmatpush.bf16.msra.mxu0 %v5232
    %5853 = vmatpush.bf16.msra.mxu0 %v5228
    %5854 = vmatpush.bf16.msra.mxu0 %v5224
    %5855 = vmatmul.bf16.gmra.mxu0 %v4035
    %v5856 = vpop.f32.mrf.mxu0
    %v5857 = vadd.f32 %v5844, %v5856
    %v5858 = vpop.f32.mrf.mxu0
    %5859 = vdwg.mxu0
    %5860 = vmatpush.bf16.msra.mxu0 %v5284
    %5861 = vmatpush.bf16.msra.mxu0 %v5280
    %5862 = vmatpush.bf16.msra.mxu0 %v5276
    %5863 = vmatpush.bf16.msra.mxu0 %v5272
    %5864 = vmatpush.bf16.msra.mxu0 %v5268
    %5865 = vmatpush.bf16.msra.mxu0 %v5264
    %5866 = vmatpush.bf16.msra.mxu0 %v5260
    %5867 = vmatpush.bf16.msra.mxu0 %v5256
    %5868 = vmatmul.bf16.gmra.mxu0 %v4036
    %v5869 = vpop.f32.mrf.mxu0
    %v5870 = vadd.f32 %v5857, %v5869
    %v5871 = vpop.f32.mrf.mxu0
    %5872 = vdwg.mxu0
    %5873 = vmatpush.bf16.msra.mxu0 %v5316
    %5874 = vmatpush.bf16.msra.mxu0 %v5312
    %5875 = vmatpush.bf16.msra.mxu0 %v5308
    %5876 = vmatpush.bf16.msra.mxu0 %v5304
    %5877 = vmatpush.bf16.msra.mxu0 %v5300
    %5878 = vmatpush.bf16.msra.mxu0 %v5296
    %5879 = vmatpush.bf16.msra.mxu0 %v5292
    %5880 = vmatpush.bf16.msra.mxu0 %v5288
    %5881 = vmatmul.bf16.gmra.mxu0 %v4037
    %v5882 = vpop.f32.mrf.mxu0
    %v5883 = vadd.f32 %v5870, %v5882
    %v5884 = vpop.f32.mrf.mxu0
    %5885 = vdwg.mxu0
    %5886 = vmatpush.bf16.msra.mxu0 %v5093
    %5887 = vmatpush.bf16.msra.mxu0 %v5089
    %5888 = vmatpush.bf16.msra.mxu0 %v5085
    %5889 = vmatpush.bf16.msra.mxu0 %v5081
    %5890 = vmatpush.bf16.msra.mxu0 %v5077
    %5891 = vmatpush.bf16.msra.mxu0 %v5073
    %5892 = vmatpush.bf16.msra.mxu0 %v5069
    %5893 = vmatpush.bf16.msra.mxu0 %v5065
    %5894 = vmatmul.bf16.gmra.mxu0 %v4030
    %v5895 = vpop.f32.mrf.mxu0
    %v5896 = vadd.f32 0.0, %v5895
    %v5897 = vpop.f32.mrf.mxu0
    %5898 = vdwg.mxu0
    %5899 = vmatpush.bf16.msra.mxu0 %v5125
    %5900 = vmatpush.bf16.msra.mxu0 %v5121
    %5901 = vmatpush.bf16.msra.mxu0 %v5117
    %5902 = vmatpush.bf16.msra.mxu0 %v5113
    %5903 = vmatpush.bf16.msra.mxu0 %v5109
    %5904 = vmatpush.bf16.msra.mxu0 %v5105
    %5905 = vmatpush.bf16.msra.mxu0 %v5101
    %5906 = vmatpush.bf16.msra.mxu0 %v5097
    %5907 = vmatmul.bf16.gmra.mxu0 %v4031
    %v5908 = vpop.f32.mrf.mxu0
    %v5909 = vadd.f32 %v5896, %v5908
    %v5910 = vpop.f32.mrf.mxu0
    %5911 = vdwg.mxu0
    %5912 = vmatpush.bf16.msra.mxu0 %v5157
    %5913 = vmatpush.bf16.msra.mxu0 %v5153
    %5914 = vmatpush.bf16.msra.mxu0 %v5149
    %5915 = vmatpush.bf16.msra.mxu0 %v5145
    %5916 = vmatpush.bf16.msra.mxu0 %v5141
    %5917 = vmatpush.bf16.msra.mxu0 %v5137
    %5918 = vmatpush.bf16.msra.mxu0 %v5133
    %5919 = vmatpush.bf16.msra.mxu0 %v5129
    %5920 = vmatmul.bf16.gmra.mxu0 %v4032
    %v5921 = vpop.f32.mrf.mxu0
    %v5922 = vadd.f32 %v5909, %v5921
    %v5923 = vpop.f32.mrf.mxu0
    %5924 = vdwg.mxu0
    %5925 = vmatpush.bf16.msra.mxu0 %v5189
    %5926 = vmatpush.bf16.msra.mxu0 %v5185
    %5927 = vmatpush.bf16.msra.mxu0 %v5181
    %5928 = vmatpush.bf16.msra.mxu0 %v5177
    %5929 = vmatpush.bf16.msra.mxu0 %v5173
    %5930 = vmatpush.bf16.msra.mxu0 %v5169
    %5931 = vmatpush.bf16.msra.mxu0 %v5165
    %5932 = vmatpush.bf16.msra.mxu0 %v5161
    %5933 = vmatmul.bf16.gmra.mxu0 %v4033
    %v5934 = vpop.f32.mrf.mxu0
    %v5935 = vadd.f32 %v5922, %v5934
    %v5936 = vpop.f32.mrf.mxu0
    %5937 = vdwg.mxu0
    %5938 = vmatpush.bf16.msra.mxu0 %v5221
    %5939 = vmatpush.bf16.msra.mxu0 %v5217
    %5940 = vmatpush.bf16.msra.mxu0 %v5213
    %5941 = vmatpush.bf16.msra.mxu0 %v5209
    %5942 = vmatpush.bf16.msra.mxu0 %v5205
    %5943 = vmatpush.bf16.msra.mxu0 %v5201
    %5944 = vmatpush.bf16.msra.mxu0 %v5197
    %5945 = vmatpush.bf16.msra.mxu0 %v5193
    %5946 = vmatmul.bf16.gmra.mxu0 %v4034
    %v5947 = vpop.f32.mrf.mxu0
    %v5948 = vadd.f32 %v5935, %v5947
    %v5949 = vpop.f32.mrf.mxu0
    %5950 = vdwg.mxu0
    %5951 = vmatpush.bf16.msra.mxu0 %v5253
    %5952 = vmatpush.bf16.msra.mxu0 %v5249
    %5953 = vmatpush.bf16.msra.mxu0 %v5245
    %5954 = vmatpush.bf16.msra.mxu0 %v5241
    %5955 = vmatpush.bf16.msra.mxu0 %v5237
    %5956 = vmatpush.bf16.msra.mxu0 %v5233
    %5957 = vmatpush.bf16.msra.mxu0 %v5229
    %5958 = vmatpush.bf16.msra.mxu0 %v5225
    %5959 = vmatmul.bf16.gmra.mxu0 %v4035
    %v5960 = vpop.f32.mrf.mxu0
    %v5961 = vadd.f32 %v5948, %v5960
    %v5962 = vpop.f32.mrf.mxu0
    %5963 = vdwg.mxu0
    %5964 = vmatpush.bf16.msra.mxu0 %v5285
    %5965 = vmatpush.bf16.msra.mxu0 %v5281
    %5966 = vmatpush.bf16.msra.mxu0 %v5277
    %5967 = vmatpush.bf16.msra.mxu0 %v5273
    %5968 = vmatpush.bf16.msra.mxu0 %v5269
    %5969 = vmatpush.bf16.msra.mxu0 %v5265
    %5970 = vmatpush.bf16.msra.mxu0 %v5261
    %5971 = vmatpush.bf16.msra.mxu0 %v5257
    %5972 = vmatmul.bf16.gmra.mxu0 %v4036
    %v5973 = vpop.f32.mrf.mxu0
    %v5974 = vadd.f32 %v5961, %v5973
    %v5975 = vpop.f32.mrf.mxu0
    %5976 = vdwg.mxu0
    %5977 = vmatpush.bf16.msra.mxu0 %v5317
    %5978 = vmatpush.bf16.msra.mxu0 %v5313
    %5979 = vmatpush.bf16.msra.mxu0 %v5309
    %5980 = vmatpush.bf16.msra.mxu0 %v5305
    %5981 = vmatpush.bf16.msra.mxu0 %v5301
    %5982 = vmatpush.bf16.msra.mxu0 %v5297
    %5983 = vmatpush.bf16.msra.mxu0 %v5293
    %5984 = vmatpush.bf16.msra.mxu0 %v5289
    %5985 = vmatmul.bf16.gmra.mxu0 %v4037
    %v5986 = vpop.f32.mrf.mxu0
    %v5987 = vadd.f32 %v5974, %v5986
    %v5988 = vpop.f32.mrf.mxu0
    %5989 = vdwg.mxu0
    %v5990 = vmul.f32 %v5675, 0.2
    %v5991 = vmul.f32 %v5779, 0.2
    %v5992 = vmul.f32 %v5883, 0.2
    %v5993 = vmul.f32 %v5987, 0.2
    %v5994 = vmax.f32 %v5675, %v5990
    %v5995 = vmax.f32 %v5779, %v5991
    %v5996 = vmax.f32 %v5883, %v5992
    %v5997 = vmax.f32 %v5987, %v5993
    %v5998 = vpack.c.bf16 %v5994, %v5994
    %v5999 = vpack.c.bf16 %v5995, %v5995
    %v6000 = vpack.c.bf16 %v5996, %v5996
    %v6001 = vpack.c.bf16 %v5997, %v5997
    %v6002 = vld [vmem:[#allocation7] sm:$0xff]
    %v6003 = vld [vmem:[#allocation7 + $0x8] sm:$0xff]
    %v6004 = vld [vmem:[#allocation7 + $0x10] sm:$0xff]
    %v6005 = vld [vmem:[#allocation7 + $0x18] sm:$0xff]
    %v6006 = vld [vmem:[#allocation7 + $0x20] sm:$0xff]
    %v6007 = vld [vmem:[#allocation7 + $0x28] sm:$0xff]
    %v6008 = vld [vmem:[#allocation7 + $0x30] sm:$0xff]
    %v6009 = vld [vmem:[#allocation7 + $0x38] sm:$0xff]
    %v6010 = vld [vmem:[#allocation7 + $0x40] sm:$0xff]
    %v6011 = vld [vmem:[#allocation7 + $0x48] sm:$0xff]
    %v6012 = vld [vmem:[#allocation7 + $0x50] sm:$0xff]
    %v6013 = vld [vmem:[#allocation7 + $0x58] sm:$0xff]
    %v6014 = vld [vmem:[#allocation7 + $0x60] sm:$0xff]
    %v6015 = vld [vmem:[#allocation7 + $0x68] sm:$0xff]
    %v6016 = vld [vmem:[#allocation7 + $0x70] sm:$0xff]
    %v6017 = vld [vmem:[#allocation7 + $0x78] sm:$0xff]
    %v6018 = vld [vmem:[#allocation7 + $0x80] sm:$0xff]
    %v6019 = vld [vmem:[#allocation7 + $0x88] sm:$0xff]
    %v6020 = vld [vmem:[#allocation7 + $0x90] sm:$0xff]
    %v6021 = vld [vmem:[#allocation7 + $0x98] sm:$0xff]
    %v6022 = vld [vmem:[#allocation7 + $0xa0] sm:$0xff]
    %v6023 = vld [vmem:[#allocation7 + $0xa8] sm:$0xff]
    %v6024 = vld [vmem:[#allocation7 + $0xb0] sm:$0xff]
    %v6025 = vld [vmem:[#allocation7 + $0xb8] sm:$0xff]
    %v6026 = vld [vmem:[#allocation7 + $0xc0] sm:$0xff]
    %v6027 = vld [vmem:[#allocation7 + $0xc8] sm:$0xff]
    %v6028 = vld [vmem:[#allocation7 + $0xd0] sm:$0xff]
    %v6029 = vld [vmem:[#allocation7 + $0xd8] sm:$0xff]
    %v6030 = vld [vmem:[#allocation7 + $0xe0] sm:$0xff]
    %v6031 = vld [vmem:[#allocation7 + $0xe8] sm:$0xff]
    %v6032 = vld [vmem:[#allocation7 + $0xf0] sm:$0xff]
    %v6033 = vld [vmem:[#allocation7 + $0xf8] sm:$0xff]
    %v6034 = vld [vmem:[#allocation7 + $0x100] sm:$0xff]
    %v6035 = vld [vmem:[#allocation7 + $0x108] sm:$0xff]
    %v6036 = vld [vmem:[#allocation7 + $0x110] sm:$0xff]
    %v6037 = vld [vmem:[#allocation7 + $0x118] sm:$0xff]
    %v6038 = vld [vmem:[#allocation7 + $0x120] sm:$0xff]
    %v6039 = vld [vmem:[#allocation7 + $0x128] sm:$0xff]
    %v6040 = vld [vmem:[#allocation7 + $0x130] sm:$0xff]
    %v6041 = vld [vmem:[#allocation7 + $0x138] sm:$0xff]
    %v6042 = vld [vmem:[#allocation7 + $0x140] sm:$0xff]
    %v6043 = vld [vmem:[#allocation7 + $0x148] sm:$0xff]
    %v6044 = vld [vmem:[#allocation7 + $0x150] sm:$0xff]
    %v6045 = vld [vmem:[#allocation7 + $0x158] sm:$0xff]
    %v6046 = vld [vmem:[#allocation7 + $0x160] sm:$0xff]
    %v6047 = vld [vmem:[#allocation7 + $0x168] sm:$0xff]
    %v6048 = vld [vmem:[#allocation7 + $0x170] sm:$0xff]
    %v6049 = vld [vmem:[#allocation7 + $0x178] sm:$0xff]
    %v6050 = vld [vmem:[#allocation7 + $0x180] sm:$0xff]
    %v6051 = vld [vmem:[#allocation7 + $0x188] sm:$0xff]
    %v6052 = vld [vmem:[#allocation7 + $0x190] sm:$0xff]
    %v6053 = vld [vmem:[#allocation7 + $0x198] sm:$0xff]
    %v6054 = vld [vmem:[#allocation7 + $0x1a0] sm:$0xff]
    %v6055 = vld [vmem:[#allocation7 + $0x1a8] sm:$0xff]
    %v6056 = vld [vmem:[#allocation7 + $0x1b0] sm:$0xff]
    %v6057 = vld [vmem:[#allocation7 + $0x1b8] sm:$0xff]
    %v6058 = vld [vmem:[#allocation7 + $0x1c0] sm:$0xff]
    %v6059 = vld [vmem:[#allocation7 + $0x1c8] sm:$0xff]
    %v6060 = vld [vmem:[#allocation7 + $0x1d0] sm:$0xff]
    %v6061 = vld [vmem:[#allocation7 + $0x1d8] sm:$0xff]
    %v6062 = vld [vmem:[#allocation7 + $0x1e0] sm:$0xff]
    %v6063 = vld [vmem:[#allocation7 + $0x1e8] sm:$0xff]
    %v6064 = vld [vmem:[#allocation7 + $0x1f0] sm:$0xff]
    %v6065 = vld [vmem:[#allocation7 + $0x1f8] sm:$0xff]
    %v6130 = vunpack.c.l.b16 %v6002
    %v6131 = vunpack.c.h.b16 %v6002
    %v6132 = vunpack.c.l.b16 %v6003
    %v6133 = vunpack.c.h.b16 %v6003
    %v6134 = vunpack.c.l.b16 %v6004
    %v6135 = vunpack.c.h.b16 %v6004
    %v6136 = vunpack.c.l.b16 %v6005
    %v6137 = vunpack.c.h.b16 %v6005
    %v6138 = vunpack.c.l.b16 %v6006
    %v6139 = vunpack.c.h.b16 %v6006
    %v6140 = vunpack.c.l.b16 %v6007
    %v6141 = vunpack.c.h.b16 %v6007
    %v6142 = vunpack.c.l.b16 %v6008
    %v6143 = vunpack.c.h.b16 %v6008
    %v6144 = vunpack.c.l.b16 %v6009
    %v6145 = vunpack.c.h.b16 %v6009
    %v6146 = vunpack.c.l.b16 %v6010
    %v6147 = vunpack.c.h.b16 %v6010
    %v6148 = vunpack.c.l.b16 %v6011
    %v6149 = vunpack.c.h.b16 %v6011
    %v6150 = vunpack.c.l.b16 %v6012
    %v6151 = vunpack.c.h.b16 %v6012
    %v6152 = vunpack.c.l.b16 %v6013
    %v6153 = vunpack.c.h.b16 %v6013
    %v6154 = vunpack.c.l.b16 %v6014
    %v6155 = vunpack.c.h.b16 %v6014
    %v6156 = vunpack.c.l.b16 %v6015
    %v6157 = vunpack.c.h.b16 %v6015
    %v6158 = vunpack.c.l.b16 %v6016
    %v6159 = vunpack.c.h.b16 %v6016
    %v6160 = vunpack.c.l.b16 %v6017
    %v6161 = vunpack.c.h.b16 %v6017
    %v6162 = vunpack.c.l.b16 %v6018
    %v6163 = vunpack.c.h.b16 %v6018
    %v6164 = vunpack.c.l.b16 %v6019
    %v6165 = vunpack.c.h.b16 %v6019
    %v6166 = vunpack.c.l.b16 %v6020
    %v6167 = vunpack.c.h.b16 %v6020
    %v6168 = vunpack.c.l.b16 %v6021
    %v6169 = vunpack.c.h.b16 %v6021
    %v6170 = vunpack.c.l.b16 %v6022
    %v6171 = vunpack.c.h.b16 %v6022
    %v6172 = vunpack.c.l.b16 %v6023
    %v6173 = vunpack.c.h.b16 %v6023
    %v6174 = vunpack.c.l.b16 %v6024
    %v6175 = vunpack.c.h.b16 %v6024
    %v6176 = vunpack.c.l.b16 %v6025
    %v6177 = vunpack.c.h.b16 %v6025
    %v6178 = vunpack.c.l.b16 %v6026
    %v6179 = vunpack.c.h.b16 %v6026
    %v6180 = vunpack.c.l.b16 %v6027
    %v6181 = vunpack.c.h.b16 %v6027
    %v6182 = vunpack.c.l.b16 %v6028
    %v6183 = vunpack.c.h.b16 %v6028
    %v6184 = vunpack.c.l.b16 %v6029
    %v6185 = vunpack.c.h.b16 %v6029
    %v6186 = vunpack.c.l.b16 %v6030
    %v6187 = vunpack.c.h.b16 %v6030
    %v6188 = vunpack.c.l.b16 %v6031
    %v6189 = vunpack.c.h.b16 %v6031
    %v6190 = vunpack.c.l.b16 %v6032
    %v6191 = vunpack.c.h.b16 %v6032
    %v6192 = vunpack.c.l.b16 %v6033
    %v6193 = vunpack.c.h.b16 %v6033
    %v6194 = vunpack.c.l.b16 %v6034
    %v6195 = vunpack.c.h.b16 %v6034
    %v6196 = vunpack.c.l.b16 %v6035
    %v6197 = vunpack.c.h.b16 %v6035
    %v6198 = vunpack.c.l.b16 %v6036
    %v6199 = vunpack.c.h.b16 %v6036
    %v6200 = vunpack.c.l.b16 %v6037
    %v6201 = vunpack.c.h.b16 %v6037
    %v6202 = vunpack.c.l.b16 %v6038
    %v6203 = vunpack.c.h.b16 %v6038
    %v6204 = vunpack.c.l.b16 %v6039
    %v6205 = vunpack.c.h.b16 %v6039
    %v6206 = vunpack.c.l.b16 %v6040
    %v6207 = vunpack.c.h.b16 %v6040
    %v6208 = vunpack.c.l.b16 %v6041
    %v6209 = vunpack.c.h.b16 %v6041
    %v6210 = vunpack.c.l.b16 %v6042
    %v6211 = vunpack.c.h.b16 %v6042
    %v6212 = vunpack.c.l.b16 %v6043
    %v6213 = vunpack.c.h.b16 %v6043
    %v6214 = vunpack.c.l.b16 %v6044
    %v6215 = vunpack.c.h.b16 %v6044
    %v6216 = vunpack.c.l.b16 %v6045
    %v6217 = vunpack.c.h.b16 %v6045
    %v6218 = vunpack.c.l.b16 %v6046
    %v6219 = vunpack.c.h.b16 %v6046
    %v6220 = vunpack.c.l.b16 %v6047
    %v6221 = vunpack.c.h.b16 %v6047
    %v6222 = vunpack.c.l.b16 %v6048
    %v6223 = vunpack.c.h.b16 %v6048
    %v6224 = vunpack.c.l.b16 %v6049
    %v6225 = vunpack.c.h.b16 %v6049
    %v6226 = vunpack.c.l.b16 %v6050
    %v6227 = vunpack.c.h.b16 %v6050
    %v6228 = vunpack.c.l.b16 %v6051
    %v6229 = vunpack.c.h.b16 %v6051
    %v6230 = vunpack.c.l.b16 %v6052
    %v6231 = vunpack.c.h.b16 %v6052
    %v6232 = vunpack.c.l.b16 %v6053
    %v6233 = vunpack.c.h.b16 %v6053
    %v6234 = vunpack.c.l.b16 %v6054
    %v6235 = vunpack.c.h.b16 %v6054
    %v6236 = vunpack.c.l.b16 %v6055
    %v6237 = vunpack.c.h.b16 %v6055
    %v6238 = vunpack.c.l.b16 %v6056
    %v6239 = vunpack.c.h.b16 %v6056
    %v6240 = vunpack.c.l.b16 %v6057
    %v6241 = vunpack.c.h.b16 %v6057
    %v6242 = vunpack.c.l.b16 %v6058
    %v6243 = vunpack.c.h.b16 %v6058
    %v6244 = vunpack.c.l.b16 %v6059
    %v6245 = vunpack.c.h.b16 %v6059
    %v6246 = vunpack.c.l.b16 %v6060
    %v6247 = vunpack.c.h.b16 %v6060
    %v6248 = vunpack.c.l.b16 %v6061
    %v6249 = vunpack.c.h.b16 %v6061
    %v6250 = vunpack.c.l.b16 %v6062
    %v6251 = vunpack.c.h.b16 %v6062
    %v6252 = vunpack.c.l.b16 %v6063
    %v6253 = vunpack.c.h.b16 %v6063
    %v6254 = vunpack.c.l.b16 %v6064
    %v6255 = vunpack.c.h.b16 %v6064
    %v6256 = vunpack.c.l.b16 %v6065
    %v6257 = vunpack.c.h.b16 %v6065
    %v6258 = vpack.c.b16 %v6132, %v6130
    %v6259 = vpack.c.b16 %v6133, %v6131
    %v6260 = vpack.c.b16 %v6136, %v6134
    %v6261 = vpack.c.b16 %v6137, %v6135
    %v6262 = vpack.c.b16 %v6140, %v6138
    %v6263 = vpack.c.b16 %v6141, %v6139
    %v6264 = vpack.c.b16 %v6144, %v6142
    %v6265 = vpack.c.b16 %v6145, %v6143
    %v6266 = vpack.c.b16 %v6148, %v6146
    %v6267 = vpack.c.b16 %v6149, %v6147
    %v6268 = vpack.c.b16 %v6152, %v6150
    %v6269 = vpack.c.b16 %v6153, %v6151
    %v6270 = vpack.c.b16 %v6156, %v6154
    %v6271 = vpack.c.b16 %v6157, %v6155
    %v6272 = vpack.c.b16 %v6160, %v6158
    %v6273 = vpack.c.b16 %v6161, %v6159
    %v6274 = vpack.c.b16 %v6164, %v6162
    %v6275 = vpack.c.b16 %v6165, %v6163
    %v6276 = vpack.c.b16 %v6168, %v6166
    %v6277 = vpack.c.b16 %v6169, %v6167
    %v6278 = vpack.c.b16 %v6172, %v6170
    %v6279 = vpack.c.b16 %v6173, %v6171
    %v6280 = vpack.c.b16 %v6176, %v6174
    %v6281 = vpack.c.b16 %v6177, %v6175
    %v6282 = vpack.c.b16 %v6180, %v6178
    %v6283 = vpack.c.b16 %v6181, %v6179
    %v6284 = vpack.c.b16 %v6184, %v6182
    %v6285 = vpack.c.b16 %v6185, %v6183
    %v6286 = vpack.c.b16 %v6188, %v6186
    %v6287 = vpack.c.b16 %v6189, %v6187
    %v6288 = vpack.c.b16 %v6192, %v6190
    %v6289 = vpack.c.b16 %v6193, %v6191
    %v6290 = vpack.c.b16 %v6196, %v6194
    %v6291 = vpack.c.b16 %v6197, %v6195
    %v6292 = vpack.c.b16 %v6200, %v6198
    %v6293 = vpack.c.b16 %v6201, %v6199
    %v6294 = vpack.c.b16 %v6204, %v6202
    %v6295 = vpack.c.b16 %v6205, %v6203
    %v6296 = vpack.c.b16 %v6208, %v6206
    %v6297 = vpack.c.b16 %v6209, %v6207
    %v6298 = vpack.c.b16 %v6212, %v6210
    %v6299 = vpack.c.b16 %v6213, %v6211
    %v6300 = vpack.c.b16 %v6216, %v6214
    %v6301 = vpack.c.b16 %v6217, %v6215
    %v6302 = vpack.c.b16 %v6220, %v6218
    %v6303 = vpack.c.b16 %v6221, %v6219
    %v6304 = vpack.c.b16 %v6224, %v6222
    %v6305 = vpack.c.b16 %v6225, %v6223
    %v6306 = vpack.c.b16 %v6228, %v6226
    %v6307 = vpack.c.b16 %v6229, %v6227
    %v6308 = vpack.c.b16 %v6232, %v6230
    %v6309 = vpack.c.b16 %v6233, %v6231
    %v6310 = vpack.c.b16 %v6236, %v6234
    %v6311 = vpack.c.b16 %v6237, %v6235
    %v6312 = vpack.c.b16 %v6240, %v6238
    %v6313 = vpack.c.b16 %v6241, %v6239
    %v6314 = vpack.c.b16 %v6244, %v6242
    %v6315 = vpack.c.b16 %v6245, %v6243
    %v6316 = vpack.c.b16 %v6248, %v6246
    %v6317 = vpack.c.b16 %v6249, %v6247
    %v6318 = vpack.c.b16 %v6252, %v6250
    %v6319 = vpack.c.b16 %v6253, %v6251
    %v6320 = vpack.c.b16 %v6256, %v6254
    %v6321 = vpack.c.b16 %v6257, %v6255
    %6386 = vmatpush.bf16.msra.mxu0 %v6272
    %6387 = vmatpush.bf16.msra.mxu0 %v6270
    %6388 = vmatpush.bf16.msra.mxu0 %v6268
    %6389 = vmatpush.bf16.msra.mxu0 %v6266
    %6390 = vmatpush.bf16.msra.mxu0 %v6264
    %6391 = vmatpush.bf16.msra.mxu0 %v6262
    %6392 = vmatpush.bf16.msra.mxu0 %v6260
    %6393 = vmatpush.bf16.msra.mxu0 %v6258
    %6394 = vmatmul.bf16.gmra.mxu0 %v5998
    %v6395 = vpop.f32.mrf.mxu0
    %v6396 = vadd.f32 0.0, %v6395
    %v6397 = vpop.f32.mrf.mxu0
    %6398 = vdwg.mxu0
    %6399 = vmatpush.bf16.msra.mxu0 %v6288
    %6400 = vmatpush.bf16.msra.mxu0 %v6286
    %6401 = vmatpush.bf16.msra.mxu0 %v6284
    %6402 = vmatpush.bf16.msra.mxu0 %v6282
    %6403 = vmatpush.bf16.msra.mxu0 %v6280
    %6404 = vmatpush.bf16.msra.mxu0 %v6278
    %6405 = vmatpush.bf16.msra.mxu0 %v6276
    %6406 = vmatpush.bf16.msra.mxu0 %v6274
    %6407 = vmatmul.bf16.gmra.mxu0 %v5999
    %v6408 = vpop.f32.mrf.mxu0
    %v6409 = vadd.f32 %v6396, %v6408
    %v6410 = vpop.f32.mrf.mxu0
    %6411 = vdwg.mxu0
    %6412 = vmatpush.bf16.msra.mxu0 %v6304
    %6413 = vmatpush.bf16.msra.mxu0 %v6302
    %6414 = vmatpush.bf16.msra.mxu0 %v6300
    %6415 = vmatpush.bf16.msra.mxu0 %v6298
    %6416 = vmatpush.bf16.msra.mxu0 %v6296
    %6417 = vmatpush.bf16.msra.mxu0 %v6294
    %6418 = vmatpush.bf16.msra.mxu0 %v6292
    %6419 = vmatpush.bf16.msra.mxu0 %v6290
    %6420 = vmatmul.bf16.gmra.mxu0 %v6000
    %v6421 = vpop.f32.mrf.mxu0
    %v6422 = vadd.f32 %v6409, %v6421
    %v6423 = vpop.f32.mrf.mxu0
    %6424 = vdwg.mxu0
    %6425 = vmatpush.bf16.msra.mxu0 %v6320
    %6426 = vmatpush.bf16.msra.mxu0 %v6318
    %6427 = vmatpush.bf16.msra.mxu0 %v6316
    %6428 = vmatpush.bf16.msra.mxu0 %v6314
    %6429 = vmatpush.bf16.msra.mxu0 %v6312
    %6430 = vmatpush.bf16.msra.mxu0 %v6310
    %6431 = vmatpush.bf16.msra.mxu0 %v6308
    %6432 = vmatpush.bf16.msra.mxu0 %v6306
    %6433 = vmatmul.bf16.gmra.mxu0 %v6001
    %v6434 = vpop.f32.mrf.mxu0
    %v6435 = vadd.f32 %v6422, %v6434
    %v6436 = vpop.f32.mrf.mxu0
    %6437 = vdwg.mxu0
    %6438 = vmatpush.bf16.msra.mxu0 %v6273
    %6439 = vmatpush.bf16.msra.mxu0 %v6271
    %6440 = vmatpush.bf16.msra.mxu0 %v6269
    %6441 = vmatpush.bf16.msra.mxu0 %v6267
    %6442 = vmatpush.bf16.msra.mxu0 %v6265
    %6443 = vmatpush.bf16.msra.mxu0 %v6263
    %6444 = vmatpush.bf16.msra.mxu0 %v6261
    %6445 = vmatpush.bf16.msra.mxu0 %v6259
    %6446 = vmatmul.bf16.gmra.mxu0 %v5998
    %v6447 = vpop.f32.mrf.mxu0
    %v6448 = vadd.f32 0.0, %v6447
    %v6449 = vpop.f32.mrf.mxu0
    %6450 = vdwg.mxu0
    %6451 = vmatpush.bf16.msra.mxu0 %v6289
    %6452 = vmatpush.bf16.msra.mxu0 %v6287
    %6453 = vmatpush.bf16.msra.mxu0 %v6285
    %6454 = vmatpush.bf16.msra.mxu0 %v6283
    %6455 = vmatpush.bf16.msra.mxu0 %v6281
    %6456 = vmatpush.bf16.msra.mxu0 %v6279
    %6457 = vmatpush.bf16.msra.mxu0 %v6277
    %6458 = vmatpush.bf16.msra.mxu0 %v6275
    %6459 = vmatmul.bf16.gmra.mxu0 %v5999
    %v6460 = vpop.f32.mrf.mxu0
    %v6461 = vadd.f32 %v6448, %v6460
    %v6462 = vpop.f32.mrf.mxu0
    %6463 = vdwg.mxu0
    %6464 = vmatpush.bf16.msra.mxu0 %v6305
    %6465 = vmatpush.bf16.msra.mxu0 %v6303
    %6466 = vmatpush.bf16.msra.mxu0 %v6301
    %6467 = vmatpush.bf16.msra.mxu0 %v6299
    %6468 = vmatpush.bf16.msra.mxu0 %v6297
    %6469 = vmatpush.bf16.msra.mxu0 %v6295
    %6470 = vmatpush.bf16.msra.mxu0 %v6293
    %6471 = vmatpush.bf16.msra.mxu0 %v6291
    %6472 = vmatmul.bf16.gmra.mxu0 %v6000
    %v6473 = vpop.f32.mrf.mxu0
    %v6474 = vadd.f32 %v6461, %v6473
    %v6475 = vpop.f32.mrf.mxu0
    %6476 = vdwg.mxu0
    %6477 = vmatpush.bf16.msra.mxu0 %v6321
    %6478 = vmatpush.bf16.msra.mxu0 %v6319
    %6479 = vmatpush.bf16.msra.mxu0 %v6317
    %6480 = vmatpush.bf16.msra.mxu0 %v6315
    %6481 = vmatpush.bf16.msra.mxu0 %v6313
    %6482 = vmatpush.bf16.msra.mxu0 %v6311
    %6483 = vmatpush.bf16.msra.mxu0 %v6309
    %6484 = vmatpush.bf16.msra.mxu0 %v6307
    %6485 = vmatmul.bf16.gmra.mxu0 %v6001
    %v6486 = vpop.f32.mrf.mxu0
    %v6487 = vadd.f32 %v6474, %v6486
    %v6488 = vpop.f32.mrf.mxu0
    %6489 = vdwg.mxu0
    %v6490 = vmul.f32 %v6435, 0.2
    %v6491 = vmul.f32 %v6487, 0.2
    %v6492 = vmax.f32 %v6435, %v6490
    %v6493 = vmax.f32 %v6487, %v6491
    %v6494 = vld [vmem:[#allocation9] sm:$0x3]
    %v6496 = vperm.slane %v6494, 0
    %v6497 = vperm.slane %v6494, 1
    %v6500 = vmul.f32 %v6492, %v6496
    %v6501 = vmul.f32 %v6493, %v6497
    %v6502 = vadd.f32 %v6500, %v6501
    %6503 = vadd.xlane.f32.xlu0 %v6502
    %v6504 = vpop.xlane.xlu0 %6503
    %v6505 = vsub.f32 0.0, %v6504
    %v6506 = vmul.f32 %v6505, 1.442695
    %v6507 = vpow.pop %v6506
    %v6508 = vadd.f32 %v6507, 1.0
    %v6509 = vrcp.pop %v6508
    %v6510 = vmul.f32 %v6508, %v6509
    %v6511 = vsub.f32 1.0, %v6510
    %v6512 = vmul.f32 %v6509, %v6511
    %v6513 = vadd.f32 %v6509, %v6512
    %vm6514 = vweird.f32 %v6508
    %vm6515 = vweird.f32 %v6509
    %vm6516 = vmor %vm6514, %vm6515
    %v6517 = vsel %vm6516, %v6509, %v6513
    %v6518 = vand.u32 2147483647, %v6508
    %vm6519 = vcmp.eq.f32.partialorder %v6518, 8.507059e+37
    %v6520 = vand.u32 %v6508, 2147483648
    %v6521 = vor.u32 1.1754944e-38, %v6520
    %v6522 = vsel %vm6519, %v6521, %v6517
    %v6523 = vmul.f32 1.0, %v6522
    %vm6524 = vcmask 7168
    %6525 = vst.msk [vmem:[%s5] sm:$0xff] %vm6524, %v6523
    // Predicated region
    $region42: #{tpu_custom_call.1} parent=1 // pred_check
      _
    $region43: #{tpu_custom_call.1} parent=1 // pred_check_branch
      %6527 = sbr.rel (0) target = $region45
    $region44: #{tpu_custom_call.1} parent=1 // pred_region
      _
    $region45: #{tpu_custom_call.1} parent=1 // pred_fallthru
      _
    // Predicated region
    $region46: #{tpu_custom_call.1} parent=1 // pred_check
      _
    $region47: #{tpu_custom_call.1} parent=1 // pred_check_branch
      %6529 = sbr.rel (0) target = $region49
    $region48: #{tpu_custom_call.1} parent=1 // pred_region
      _
    $region49: #{tpu_custom_call.1} parent=1 // pred_fallthru
      _
    %6530 = vsyncpa [#allocation3], 1
    %6531 = vsyncpa [#allocation5], 1
    %6532 = vsyncpa [#allocation8], 1

// kernel: tpu_custom_call.1
$region0: #{tpu_custom_call.1}
  #allocation0 [shape = 'u32[]', space=smem, size = 0x4, offset = 0x4, fixed_abs, tag = 'smem constant byte address 0x4 - core index']
  #allocation1 [shape = 'u32[72,128]{1,0:T(1,128)}', space=vmem, size = 0x9000, scoped, tag = 'internal scratch']
  %s0 = inlined_call_operand.hbm [shape: f32[8,1024], index: 0, kind: input, shape index: {}]
  %s1 = inlined_call_operand.hbm [shape: bf16[1024,1024], index: 1, kind: input, shape index: {}]
  %s2 = inlined_call_operand.hbm [shape: bf16[1024,512], index: 2, kind: input, shape index: {}]
  %s3 = inlined_call_operand.hbm [shape: bf16[512,256], index: 3, kind: input, shape index: {}]
  %s4 = inlined_call_operand.hbm [shape: f32[1,256], index: 4, kind: input, shape index: {}]
  %s5 = inlined_call_operand.vmem [shape: f32[8,1], index: 5, kind: output, shape index: {}]
  %s6 = sld [smem:[#allocation0]]
  $region50: #{tpu_custom_call.1} parent=0
    _
  %s8 = ssub.s32 1, %s6
  %s9 = scalar_select 0, %s8, %s6
  $region1: #{tpu_custom_call.1} parent=0
    #allocation2 [shape = 'u8[32768]{0}', space=vmem, size = 0x8000, scoped, tag = 'input window, operand 0, single buffered']
    #allocation3 [shape = 's32[1]{0}', space=sflag, size = 0x4, scoped, tag = 'scoped memory for tpu_custom_call.1']
    #allocation4 [shape = 'u8[2097152]{0}', space=vmem, size = 0x200000, scoped, tag = 'input window, operand 1, single buffered']
    #allocation5 [shape = 's32[1]{0}', space=sflag, size = 0x4, scoped, tag = 'scoped memory for tpu_custom_call.1']
    #allocation6 [shape = 'u8[1048576]{0}', space=vmem, size = 0x100000, scoped, tag = 'input window, operand 2, single buffered']
    #allocation7 [shape = 'u8[262144]{0}', space=vmem, size = 0x40000, scoped, tag = 'input window, operand 3, single buffered']
    #allocation8 [shape = 's32[1]{0}', space=sflag, size = 0x4, scoped, tag = 'scoped memory for tpu_custom_call.1']
    #allocation9 [shape = 'u8[1024]{0}', space=vmem, size = 0x400, scoped, tag = 'input window, operand 4, single buffered']
    %10 = vsyncpa [#allocation3], 0
    %11 = vsyncpa [#allocation5], 0
    %12 = vsyncpa [#allocation8], 0
    // Predicated region
    $region2: #{tpu_custom_call.1} parent=1 // pred_check
      _
    $region3: #{tpu_custom_call.1} parent=1 // pred_check_branch
      %14 = sbr.rel (0) target = $region5
    $region4: #{tpu_custom_call.1} parent=1 // pred_region
      %16 = vsyncadd [#allocation3], 0
      %s18 = sshll.u32 %s0, 4
      %s19 = int_to_ptr.hbm [resolvable:$true] %s18
      %s20 = sshll.u32 [#allocation2], 4
      %s21 = int_to_ptr.vmem [resolvable:$true] %s20
      %23 = dma.hbm_to_vmem [thread:$0]  %s19, 1024, %s21, [#allocation3]
    $region5: #{tpu_custom_call.1} parent=1 // pred_fallthru
      _
    // Predicated region
    $region6: #{tpu_custom_call.1} parent=1 // pred_check
      _
    $region7: #{tpu_custom_call.1} parent=1 // pred_check_branch
      %25 = sbr.rel (0) target = $region9
    $region8: #{tpu_custom_call.1} parent=1 // pred_region
      %27 = vsyncadd [#allocation5], 0
      %s28 = sshll.u32 %s1, 4
      %s29 = int_to_ptr.hbm [resolvable:$true] %s28
      %s30 = sshll.u32 [#allocation4], 4
      %s31 = int_to_ptr.vmem [resolvable:$true] %s30
      %36 = dma.hbm_to_vmem [thread:$0]  %s29, 65536, %s31, [#allocation5], 512, 512, 32
    $region9: #{tpu_custom_call.1} parent=1 // pred_fallthru
      _
    // Predicated region
    $region10: #{tpu_custom_call.1} parent=1 // pred_check
      _
    $region11: #{tpu_custom_call.1} parent=1 // pred_check_branch
      %38 = sbr.rel (0) target = $region13
    $region12: #{tpu_custom_call.1} parent=1 // pred_region
      %40 = vsyncadd [#allocation5], 0
      %s41 = sshll.u32 %s2, 4
      %s42 = int_to_ptr.hbm [resolvable:$true] %s41
      %s43 = sshll.u32 [#allocation6], 4
      %s44 = int_to_ptr.vmem [resolvable:$true] %s43
      %49 = dma.hbm_to_vmem [thread:$0]  %s42, 32768, %s44, [#allocation5], 256, 256, 16
    $region13: #{tpu_custom_call.1} parent=1 // pred_fallthru
      _
    // Predicated region
    $region14: #{tpu_custom_call.1} parent=1 // pred_check
      _
    $region15: #{tpu_custom_call.1} parent=1 // pred_check_branch
      %51 = sbr.rel (0) target = $region17
    $region16: #{tpu_custom_call.1} parent=1 // pred_region
      %53 = vsyncadd [#allocation8], 0
      %s54 = sshll.u32 %s3, 4
      %s55 = int_to_ptr.hbm [resolvable:$true] %s54
      %s56 = sshll.u32 [#allocation7], 4
      %s57 = int_to_ptr.vmem [resolvable:$true] %s56
      %62 = dma.hbm_to_vmem [thread:$0]  %s55, 8192, %s57, [#allocation8], 128, 128, 8
    $region17: #{tpu_custom_call.1} parent=1 // pred_fallthru
      _
    // Predicated region
    $region18: #{tpu_custom_call.1} parent=1 // pred_check
      _
    $region19: #{tpu_custom_call.1} parent=1 // pred_check_branch
      %64 = sbr.rel (0) target = $region21
    $region20: #{tpu_custom_call.1} parent=1 // pred_region
      %66 = vsyncadd [#allocation8], 0
      %s68 = sshll.u32 %s4, 4
      %s69 = int_to_ptr.hbm [resolvable:$true] %s68
      %s70 = sshll.u32 [#allocation9], 4
      %s71 = int_to_ptr.vmem [resolvable:$true] %s70
      %73 = dma.hbm_to_vmem [thread:$0]  %s69, 32, %s71, [#allocation8]
    $region21: #{tpu_custom_call.1} parent=1 // pred_fallthru
      _
    // Predicated region
    $region22: #{tpu_custom_call.1} parent=1 // pred_check
      _
    $region23: #{tpu_custom_call.1} parent=1 // pred_check_branch
      %75 = sbr.rel (0) target = $region25
    $region24: #{tpu_custom_call.1} parent=1 // pred_region
      %77 = dma.done [#allocation3], 1024
    $region25: #{tpu_custom_call.1} parent=1 // pred_fallthru
      _
    // Predicated region
    $region26: #{tpu_custom_call.1} parent=1 // pred_check
      _
    $region27: #{tpu_custom_call.1} parent=1 // pred_check_branch
      %79 = sbr.rel (0) target = $region29
    $region28: #{tpu_custom_call.1} parent=1 // pred_region
      %81 = dma.done [#allocation5], 65536
    $region29: #{tpu_custom_call.1} parent=1 // pred_fallthru
      _
    // Predicated region
    $region30: #{tpu_custom_call.1} parent=1 // pred_check
      _
    $region31: #{tpu_custom_call.1} parent=1 // pred_check_branch
      %83 = sbr.rel (0) target = $region33
    $region32: #{tpu_custom_call.1} parent=1 // pred_region
      %85 = dma.done [#allocation5], 32768
    $region33: #{tpu_custom_call.1} parent=1 // pred_fallthru
      _
    // Predicated region
    $region34: #{tpu_custom_call.1} parent=1 // pred_check
      _
    $region35: #{tpu_custom_call.1} parent=1 // pred_check_branch
      %87 = sbr.rel (0) target = $region37
    $region36: #{tpu_custom_call.1} parent=1 // pred_region
      %89 = dma.done [#allocation8], 8192
    $region37: #{tpu_custom_call.1} parent=1 // pred_fallthru
      _
    // Predicated region
    $region38: #{tpu_custom_call.1} parent=1 // pred_check
      _
    $region39: #{tpu_custom_call.1} parent=1 // pred_check_branch
      %91 = sbr.rel (0) target = $region41
    $region40: #{tpu_custom_call.1} parent=1 // pred_region
      %93 = dma.done [#allocation8], 32
    $region41: #{tpu_custom_call.1} parent=1 // pred_fallthru
      _
    %v94 = vld [vmem:[#allocation2] sm:$0xff]
    %v95 = vld [vmem:[#allocation2 + $0x8] sm:$0xff]
    %v96 = vld [vmem:[#allocation2 + $0x10] sm:$0xff]
    %v97 = vld [vmem:[#allocation2 + $0x18] sm:$0xff]
    %v98 = vld [vmem:[#allocation2 + $0x20] sm:$0xff]
    %v99 = vld [vmem:[#allocation2 + $0x28] sm:$0xff]
    %v100 = vld [vmem:[#allocation2 + $0x30] sm:$0xff]
    %v101 = vld [vmem:[#allocation2 + $0x38] sm:$0xff]
    %v102 = vpack.c.bf16 %v94, %v94
    %v103 = vpack.c.bf16 %v95, %v95
    %v104 = vpack.c.bf16 %v96, %v96
    %v105 = vpack.c.bf16 %v97, %v97
    %v106 = vpack.c.bf16 %v98, %v98
    %v107 = vpack.c.bf16 %v99, %v99
    %v108 = vpack.c.bf16 %v100, %v100
    %v109 = vpack.c.bf16 %v101, %v101
    %v110 = vld [vmem:[#allocation4] sm:$0xff]
    %v111 = vld [vmem:[#allocation4 + $0x8] sm:$0xff]
    %v112 = vld [vmem:[#allocation4 + $0x10] sm:$0xff]
    %v113 = vld [vmem:[#allocation4 + $0x18] sm:$0xff]
    %v114 = vld [vmem:[#allocation4 + $0x20] sm:$0xff]
    %v115 = vld [vmem:[#allocation4 + $0x28] sm:$0xff]
    %v116 = vld [vmem:[#allocation4 + $0x30] sm:$0xff]
    %v117 = vld [vmem:[#allocation4 + $0x38] sm:$0xff]
    %v118 = vld [vmem:[#allocation4 + $0x40] sm:$0xff]
    %v119 = vld [vmem:[#allocation4 + $0x48] sm:$0xff]
    %v120 = vld [vmem:[#allocation4 + $0x50] sm:$0xff]
    %v121 = vld [vmem:[#allocation4 + $0x58] sm:$0xff]
    %v122 = vld [vmem:[#allocation4 + $0x60] sm:$0xff]
    %v123 = vld [vmem:[#allocation4 + $0x68] sm:$0xff]
    %v124 = vld [vmem:[#allocation4 + $0x70] sm:$0xff]
    %v125 = vld [vmem:[#allocation4 + $0x78] sm:$0xff]
    %v126 = vld [vmem:[#allocation4 + $0x80] sm:$0xff]
    %v127 = vld [vmem:[#allocation4 + $0x88] sm:$0xff]
    %v128 = vld [vmem:[#allocation4 + $0x90] sm:$0xff]
    %v129 = vld [vmem:[#allocation4 + $0x98] sm:$0xff]
    %v130 = vld [vmem:[#allocation4 + $0xa0] sm:$0xff]
    %v131 = vld [vmem:[#allocation4 + $0xa8] sm:$0xff]
    %v132 = vld [vmem:[#allocation4 + $0xb0] sm:$0xff]
    %v133 = vld [vmem:[#allocation4 + $0xb8] sm:$0xff]
    %v134 = vld [vmem:[#allocation4 + $0xc0] sm:$0xff]
    %v135 = vld [vmem:[#allocation4 + $0xc8] sm:$0xff]
    %v136 = vld [vmem:[#allocation4 + $0xd0] sm:$0xff]
    %v137 = vld [vmem:[#allocation4 + $0xd8] sm:$0xff]
    %v138 = vld [vmem:[#allocation4 + $0xe0] sm:$0xff]
    %v139 = vld [vmem:[#allocation4 + $0xe8] sm:$0xff]
    %v140 = vld [vmem:[#allocation4 + $0xf0] sm:$0xff]
    %v141 = vld [vmem:[#allocation4 + $0xf8] sm:$0xff]
    %v142 = vld [vmem:[#allocation4 + $0x100] sm:$0xff]
    %v143 = vld [vmem:[#allocation4 + $0x108] sm:$0xff]
    %v144 = vld [vmem:[#allocation4 + $0x110] sm:$0xff]
    %v145 = vld [vmem:[#allocation4 + $0x118] sm:$0xff]
    %v146 = vld [vmem:[#allocation4 + $0x120] sm:$0xff]
    %v147 = vld [vmem:[#allocation4 + $0x128] sm:$0xff]
    %v148 = vld [vmem:[#allocation4 + $0x130] sm:$0xff]
    %v149 = vld [vmem:[#allocation4 + $0x138] sm:$0xff]
    %v150 = vld [vmem:[#allocation4 + $0x140] sm:$0xff]
    %v151 = vld [vmem:[#allocation4 + $0x148] sm:$0xff]
    %v152 = vld [vmem:[#allocation4 + $0x150] sm:$0xff]
    %v153 = vld [vmem:[#allocation4 + $0x158] sm:$0xff]
    %v154 = vld [vmem:[#allocation4 + $0x160] sm:$0xff]
    %v155 = vld [vmem:[#allocation4 + $0x168] sm:$0xff]
    %v156 = vld [vmem:[#allocation4 + $0x170] sm:$0xff]
    %v157 = vld [vmem:[#allocation4 + $0x178] sm:$0xff]
    %v158 = vld [vmem:[#allocation4 + $0x180] sm:$0xff]
    %v159 = vld [vmem:[#allocation4 + $0x188] sm:$0xff]
    %v160 = vld [vmem:[#allocation4 + $0x190] sm:$0xff]
    %v161 = vld [vmem:[#allocation4 + $0x198] sm:$0xff]
    %v162 = vld [vmem:[#allocation4 + $0x1a0] sm:$0xff]
    %v163 = vld [vmem:[#allocation4 + $0x1a8] sm:$0xff]
    %v164 = vld [vmem:[#allocation4 + $0x1b0] sm:$0xff]
    %v165 = vld [vmem:[#allocation4 + $0x1b8] sm:$0xff]
    %v166 = vld [vmem:[#allocation4 + $0x1c0] sm:$0xff]
    %v167 = vld [vmem:[#allocation4 + $0x1c8] sm:$0xff]
    %v168 = vld [vmem:[#allocation4 + $0x1d0] sm:$0xff]
    %v169 = vld [vmem:[#allocation4 + $0x1d8] sm:$0xff]
    %v170 = vld [vmem:[#allocation4 + $0x1e0] sm:$0xff]
    %v171 = vld [vmem:[#allocation4 + $0x1e8] sm:$0xff]
    %v172 = vld [vmem:[#allocation4 + $0x1f0] sm:$0xff]
    %v173 = vld [vmem:[#allocation4 + $0x1f8] sm:$0xff]
    %v174 = vld [vmem:[#allocation4 + $0x200] sm:$0xff]
    %v175 = vld [vmem:[#allocation4 + $0x208] sm:$0xff]
    %v176 = vld [vmem:[#allocation4 + $0x210] sm:$0xff]
    %v177 = vld [vmem:[#allocation4 + $0x218] sm:$0xff]
    %v178 = vld [vmem:[#allocation4 + $0x220] sm:$0xff]
    %v179 = vld [vmem:[#allocation4 + $0x228] sm:$0xff]
    %v180 = vld [vmem:[#allocation4 + $0x230] sm:$0xff]
    %v181 = vld [vmem:[#allocation4 + $0x238] sm:$0xff]
    %v182 = vld [vmem:[#allocation4 + $0x240] sm:$0xff]
    %v183 = vld [vmem:[#allocation4 + $0x248] sm:$0xff]
    %v184 = vld [vmem:[#allocation4 + $0x250] sm:$0xff]
    %v185 = vld [vmem:[#allocation4 + $0x258] sm:$0xff]
    %v186 = vld [vmem:[#allocation4 + $0x260] sm:$0xff]
    %v187 = vld [vmem:[#allocation4 + $0x268] sm:$0xff]
    %v188 = vld [vmem:[#allocation4 + $0x270] sm:$0xff]
    %v189 = vld [vmem:[#allocation4 + $0x278] sm:$0xff]
    %v190 = vld [vmem:[#allocation4 + $0x280] sm:$0xff]
    %v191 = vld [vmem:[#allocation4 + $0x288] sm:$0xff]
    %v192 = vld [vmem:[#allocation4 + $0x290] sm:$0xff]
    %v193 = vld [vmem:[#allocation4 + $0x298] sm:$0xff]
    %v194 = vld [vmem:[#allocation4 + $0x2a0] sm:$0xff]
    %v195 = vld [vmem:[#allocation4 + $0x2a8] sm:$0xff]
    %v196 = vld [vmem:[#allocation4 + $0x2b0] sm:$0xff]
    %v197 = vld [vmem:[#allocation4 + $0x2b8] sm:$0xff]
    %v198 = vld [vmem:[#allocation4 + $0x2c0] sm:$0xff]
    %v199 = vld [vmem:[#allocation4 + $0x2c8] sm:$0xff]
    %v200 = vld [vmem:[#allocation4 + $0x2d0] sm:$0xff]
    %v201 = vld [vmem:[#allocation4 + $0x2d8] sm:$0xff]
    %v202 = vld [vmem:[#allocation4 + $0x2e0] sm:$0xff]
    %v203 = vld [vmem:[#allocation4 + $0x2e8] sm:$0xff]
    %v204 = vld [vmem:[#allocation4 + $0x2f0] sm:$0xff]
    %v205 = vld [vmem:[#allocation4 + $0x2f8] sm:$0xff]
    %v206 = vld [vmem:[#allocation4 + $0x300] sm:$0xff]
    %v207 = vld [vmem:[#allocation4 + $0x308] sm:$0xff]
    %v208 = vld [vmem:[#allocation4 + $0x310] sm:$0xff]
    %v209 = vld [vmem:[#allocation4 + $0x318] sm:$0xff]
    %v210 = vld [vmem:[#allocation4 + $0x320] sm:$0xff]
    %v211 = vld [vmem:[#allocation4 + $0x328] sm:$0xff]
    %v212 = vld [vmem:[#allocation4 + $0x330] sm:$0xff]
    %v213 = vld [vmem:[#allocation4 + $0x338] sm:$0xff]
    %v214 = vld [vmem:[#allocation4 + $0x340] sm:$0xff]
    %v215 = vld [vmem:[#allocation4 + $0x348] sm:$0xff]
    %v216 = vld [vmem:[#allocation4 + $0x350] sm:$0xff]
    %v217 = vld [vmem:[#allocation4 + $0x358] sm:$0xff]
    %v218 = vld [vmem:[#allocation4 + $0x360] sm:$0xff]
    %v219 = vld [vmem:[#allocation4 + $0x368] sm:$0xff]
    %v220 = vld [vmem:[#allocation4 + $0x370] sm:$0xff]
    %v221 = vld [vmem:[#allocation4 + $0x378] sm:$0xff]
    %v222 = vld [vmem:[#allocation4 + $0x380] sm:$0xff]
    %v223 = vld [vmem:[#allocation4 + $0x388] sm:$0xff]
    %v224 = vld [vmem:[#allocation4 + $0x390] sm:$0xff]
    %v225 = vld [vmem:[#allocation4 + $0x398] sm:$0xff]
    %v226 = vld [vmem:[#allocation4 + $0x3a0] sm:$0xff]
    %v227 = vld [vmem:[#allocation4 + $0x3a8] sm:$0xff]
    %v228 = vld [vmem:[#allocation4 + $0x3b0] sm:$0xff]
    %v229 = vld [vmem:[#allocation4 + $0x3b8] sm:$0xff]
    %v230 = vld [vmem:[#allocation4 + $0x3c0] sm:$0xff]
    %v231 = vld [vmem:[#allocation4 + $0x3c8] sm:$0xff]
    %v232 = vld [vmem:[#allocation4 + $0x3d0] sm:$0xff]
    %v233 = vld [vmem:[#allocation4 + $0x3d8] sm:$0xff]
    %v234 = vld [vmem:[#allocation4 + $0x3e0] sm:$0xff]
    %v235 = vld [vmem:[#allocation4 + $0x3e8] sm:$0xff]
    %v236 = vld [vmem:[#allocation4 + $0x3f0] sm:$0xff]
    %v237 = vld [vmem:[#allocation4 + $0x3f8] sm:$0xff]
    %v238 = vld [vmem:[#allocation4 + $0x400] sm:$0xff]
    %v239 = vld [vmem:[#allocation4 + $0x408] sm:$0xff]
    %v240 = vld [vmem:[#allocation4 + $0x410] sm:$0xff]
    %v241 = vld [vmem:[#allocation4 + $0x418] sm:$0xff]
    %v242 = vld [vmem:[#allocation4 + $0x420] sm:$0xff]
    %v243 = vld [vmem:[#allocation4 + $0x428] sm:$0xff]
    %v244 = vld [vmem:[#allocation4 + $0x430] sm:$0xff]
    %v245 = vld [vmem:[#allocation4 + $0x438] sm:$0xff]
    %v246 = vld [vmem:[#allocation4 + $0x440] sm:$0xff]
    %v247 = vld [vmem:[#allocation4 + $0x448] sm:$0xff]
    %v248 = vld [vmem:[#allocation4 + $0x450] sm:$0xff]
    %v249 = vld [vmem:[#allocation4 + $0x458] sm:$0xff]
    %v250 = vld [vmem:[#allocation4 + $0x460] sm:$0xff]
    %v251 = vld [vmem:[#allocation4 + $0x468] sm:$0xff]
    %v252 = vld [vmem:[#allocation4 + $0x470] sm:$0xff]
    %v253 = vld [vmem:[#allocation4 + $0x478] sm:$0xff]
    %v254 = vld [vmem:[#allocation4 + $0x480] sm:$0xff]
    %v255 = vld [vmem:[#allocation4 + $0x488] sm:$0xff]
    %v256 = vld [vmem:[#allocation4 + $0x490] sm:$0xff]
    %v257 = vld [vmem:[#allocation4 + $0x498] sm:$0xff]
    %v258 = vld [vmem:[#allocation4 + $0x4a0] sm:$0xff]
    %v259 = vld [vmem:[#allocation4 + $0x4a8] sm:$0xff]
    %v260 = vld [vmem:[#allocation4 + $0x4b0] sm:$0xff]
    %v261 = vld [vmem:[#allocation4 + $0x4b8] sm:$0xff]
    %v262 = vld [vmem:[#allocation4 + $0x4c0] sm:$0xff]
    %v263 = vld [vmem:[#allocation4 + $0x4c8] sm:$0xff]
    %v264 = vld [vmem:[#allocation4 + $0x4d0] sm:$0xff]
    %v265 = vld [vmem:[#allocation4 + $0x4d8] sm:$0xff]
    %v266 = vld [vmem:[#allocation4 + $0x4e0] sm:$0xff]
    %v267 = vld [vmem:[#allocation4 + $0x4e8] sm:$0xff]
    %v268 = vld [vmem:[#allocation4 + $0x4f0] sm:$0xff]
    %v269 = vld [vmem:[#allocation4 + $0x4f8] sm:$0xff]
    %v270 = vld [vmem:[#allocation4 + $0x500] sm:$0xff]
    %v271 = vld [vmem:[#allocation4 + $0x508] sm:$0xff]
    %v272 = vld [vmem:[#allocation4 + $0x510] sm:$0xff]
    %v273 = vld [vmem:[#allocation4 + $0x518] sm:$0xff]
    %v274 = vld [vmem:[#allocation4 + $0x520] sm:$0xff]
    %v275 = vld [vmem:[#allocation4 + $0x528] sm:$0xff]
    %v276 = vld [vmem:[#allocation4 + $0x530] sm:$0xff]
    %v277 = vld [vmem:[#allocation4 + $0x538] sm:$0xff]
    %v278 = vld [vmem:[#allocation4 + $0x540] sm:$0xff]
    %v279 = vld [vmem:[#allocation4 + $0x548] sm:$0xff]
    %v280 = vld [vmem:[#allocation4 + $0x550] sm:$0xff]
    %v281 = vld [vmem:[#allocation4 + $0x558] sm:$0xff]
    %v282 = vld [vmem:[#allocation4 + $0x560] sm:$0xff]
    %v283 = vld [vmem:[#allocation4 + $0x568] sm:$0xff]
    %v284 = vld [vmem:[#allocation4 + $0x570] sm:$0xff]
    %v285 = vld [vmem:[#allocation4 + $0x578] sm:$0xff]
    %v286 = vld [vmem:[#allocation4 + $0x580] sm:$0xff]
    %v287 = vld [vmem:[#allocation4 + $0x588] sm:$0xff]
    %v288 = vld [vmem:[#allocation4 + $0x590] sm:$0xff]
    %v289 = vld [vmem:[#allocation4 + $0x598] sm:$0xff]
    %v290 = vld [vmem:[#allocation4 + $0x5a0] sm:$0xff]
    %v291 = vld [vmem:[#allocation4 + $0x5a8] sm:$0xff]
    %v292 = vld [vmem:[#allocation4 + $0x5b0] sm:$0xff]
    %v293 = vld [vmem:[#allocation4 + $0x5b8] sm:$0xff]
    %v294 = vld [vmem:[#allocation4 + $0x5c0] sm:$0xff]
    %v295 = vld [vmem:[#allocation4 + $0x5c8] sm:$0xff]
    %v296 = vld [vmem:[#allocation4 + $0x5d0] sm:$0xff]
    %v297 = vld [vmem:[#allocation4 + $0x5d8] sm:$0xff]
    %v298 = vld [vmem:[#allocation4 + $0x5e0] sm:$0xff]
    %v299 = vld [vmem:[#allocation4 + $0x5e8] sm:$0xff]
    %v300 = vld [vmem:[#allocation4 + $0x5f0] sm:$0xff]
    %v301 = vld [vmem:[#allocation4 + $0x5f8] sm:$0xff]
    %v302 = vld [vmem:[#allocation4 + $0x600] sm:$0xff]
    %v303 = vld [vmem:[#allocation4 + $0x608] sm:$0xff]
    %v304 = vld [vmem:[#allocation4 + $0x610] sm:$0xff]
    %v305 = vld [vmem:[#allocation4 + $0x618] sm:$0xff]
    %v306 = vld [vmem:[#allocation4 + $0x620] sm:$0xff]
    %v307 = vld [vmem:[#allocation4 + $0x628] sm:$0xff]
    %v308 = vld [vmem:[#allocation4 + $0x630] sm:$0xff]
    %v309 = vld [vmem:[#allocation4 + $0x638] sm:$0xff]
    %v310 = vld [vmem:[#allocation4 + $0x640] sm:$0xff]
    %v311 = vld [vmem:[#allocation4 + $0x648] sm:$0xff]
    %v312 = vld [vmem:[#allocation4 + $0x650] sm:$0xff]
    %v313 = vld [vmem:[#allocation4 + $0x658] sm:$0xff]
    %v314 = vld [vmem:[#allocation4 + $0x660] sm:$0xff]
    %v315 = vld [vmem:[#allocation4 + $0x668] sm:$0xff]
    %v316 = vld [vmem:[#allocation4 + $0x670] sm:$0xff]
    %v317 = vld [vmem:[#allocation4 + $0x678] sm:$0xff]
    %v318 = vld [vmem:[#allocation4 + $0x680] sm:$0xff]
    %v319 = vld [vmem:[#allocation4 + $0x688] sm:$0xff]
    %v320 = vld [vmem:[#allocation4 + $0x690] sm:$0xff]
    %v321 = vld [vmem:[#allocation4 + $0x698] sm:$0xff]
    %v322 = vld [vmem:[#allocation4 + $0x6a0] sm:$0xff]
    %v323 = vld [vmem:[#allocation4 + $0x6a8] sm:$0xff]
    %v324 = vld [vmem:[#allocation4 + $0x6b0] sm:$0xff]
    %v325 = vld [vmem:[#allocation4 + $0x6b8] sm:$0xff]
    %v326 = vld [vmem:[#allocation4 + $0x6c0] sm:$0xff]
    %v327 = vld [vmem:[#allocation4 + $0x6c8] sm:$0xff]
    %v328 = vld [vmem:[#allocation4 + $0x6d0] sm:$0xff]
    %v329 = vld [vmem:[#allocation4 + $0x6d8] sm:$0xff]
    %v330 = vld [vmem:[#allocation4 + $0x6e0] sm:$0xff]
    %v331 = vld [vmem:[#allocation4 + $0x6e8] sm:$0xff]
    %v332 = vld [vmem:[#allocation4 + $0x6f0] sm:$0xff]
    %v333 = vld [vmem:[#allocation4 + $0x6f8] sm:$0xff]
    %v334 = vld [vmem:[#allocation4 + $0x700] sm:$0xff]
    %v335 = vld [vmem:[#allocation4 + $0x708] sm:$0xff]
    %v336 = vld [vmem:[#allocation4 + $0x710] sm:$0xff]
    %v337 = vld [vmem:[#allocation4 + $0x718] sm:$0xff]
    %v338 = vld [vmem:[#allocation4 + $0x720] sm:$0xff]
    %v339 = vld [vmem:[#allocation4 + $0x728] sm:$0xff]
    %v340 = vld [vmem:[#allocation4 + $0x730] sm:$0xff]
    %v341 = vld [vmem:[#allocation4 + $0x738] sm:$0xff]
    %v342 = vld [vmem:[#allocation4 + $0x740] sm:$0xff]
    %v343 = vld [vmem:[#allocation4 + $0x748] sm:$0xff]
    %v344 = vld [vmem:[#allocation4 + $0x750] sm:$0xff]
    %v345 = vld [vmem:[#allocation4 + $0x758] sm:$0xff]
    %v346 = vld [vmem:[#allocation4 + $0x760] sm:$0xff]
    %v347 = vld [vmem:[#allocation4 + $0x768] sm:$0xff]
    %v348 = vld [vmem:[#allocation4 + $0x770] sm:$0xff]
    %v349 = vld [vmem:[#allocation4 + $0x778] sm:$0xff]
    %v350 = vld [vmem:[#allocation4 + $0x780] sm:$0xff]
    %v351 = vld [vmem:[#allocation4 + $0x788] sm:$0xff]
    %v352 = vld [vmem:[#allocation4 + $0x790] sm:$0xff]
    %v353 = vld [vmem:[#allocation4 + $0x798] sm:$0xff]
    %v354 = vld [vmem:[#allocation4 + $0x7a0] sm:$0xff]
    %v355 = vld [vmem:[#allocation4 + $0x7a8] sm:$0xff]
    %v356 = vld [vmem:[#allocation4 + $0x7b0] sm:$0xff]
    %v357 = vld [vmem:[#allocation4 + $0x7b8] sm:$0xff]
    %v358 = vld [vmem:[#allocation4 + $0x7c0] sm:$0xff]
    %v359 = vld [vmem:[#allocation4 + $0x7c8] sm:$0xff]
    %v360 = vld [vmem:[#allocation4 + $0x7d0] sm:$0xff]
    %v361 = vld [vmem:[#allocation4 + $0x7d8] sm:$0xff]
    %v362 = vld [vmem:[#allocation4 + $0x7e0] sm:$0xff]
    %v363 = vld [vmem:[#allocation4 + $0x7e8] sm:$0xff]
    %v364 = vld [vmem:[#allocation4 + $0x7f0] sm:$0xff]
    %v365 = vld [vmem:[#allocation4 + $0x7f8] sm:$0xff]
    %v366 = vld [vmem:[#allocation4 + $0x800] sm:$0xff]
    %v367 = vld [vmem:[#allocation4 + $0x808] sm:$0xff]
    %v368 = vld [vmem:[#allocation4 + $0x810] sm:$0xff]
    %v369 = vld [vmem:[#allocation4 + $0x818] sm:$0xff]
    %v370 = vld [vmem:[#allocation4 + $0x820] sm:$0xff]
    %v371 = vld [vmem:[#allocation4 + $0x828] sm:$0xff]
    %v372 = vld [vmem:[#allocation4 + $0x830] sm:$0xff]
    %v373 = vld [vmem:[#allocation4 + $0x838] sm:$0xff]
    %v374 = vld [vmem:[#allocation4 + $0x840] sm:$0xff]
    %v375 = vld [vmem:[#allocation4 + $0x848] sm:$0xff]
    %v376 = vld [vmem:[#allocation4 + $0x850] sm:$0xff]
    %v377 = vld [vmem:[#allocation4 + $0x858] sm:$0xff]
    %v378 = vld [vmem:[#allocation4 + $0x860] sm:$0xff]
    %v379 = vld [vmem:[#allocation4 + $0x868] sm:$0xff]
    %v380 = vld [vmem:[#allocation4 + $0x870] sm:$0xff]
    %v381 = vld [vmem:[#allocation4 + $0x878] sm:$0xff]
    %v382 = vld [vmem:[#allocation4 + $0x880] sm:$0xff]
    %v383 = vld [vmem:[#allocation4 + $0x888] sm:$0xff]
    %v384 = vld [vmem:[#allocation4 + $0x890] sm:$0xff]
    %v385 = vld [vmem:[#allocation4 + $0x898] sm:$0xff]
    %v386 = vld [vmem:[#allocation4 + $0x8a0] sm:$0xff]
    %v387 = vld [vmem:[#allocation4 + $0x8a8] sm:$0xff]
    %v388 = vld [vmem:[#allocation4 + $0x8b0] sm:$0xff]
    %v389 = vld [vmem:[#allocation4 + $0x8b8] sm:$0xff]
    %v390 = vld [vmem:[#allocation4 + $0x8c0] sm:$0xff]
    %v391 = vld [vmem:[#allocation4 + $0x8c8] sm:$0xff]
    %v392 = vld [vmem:[#allocation4 + $0x8d0] sm:$0xff]
    %v393 = vld [vmem:[#allocation4 + $0x8d8] sm:$0xff]
    %v394 = vld [vmem:[#allocation4 + $0x8e0] sm:$0xff]
    %v395 = vld [vmem:[#allocation4 + $0x8e8] sm:$0xff]
    %v396 = vld [vmem:[#allocation4 + $0x8f0] sm:$0xff]
    %v397 = vld [vmem:[#allocation4 + $0x8f8] sm:$0xff]
    %v398 = vld [vmem:[#allocation4 + $0x900] sm:$0xff]
    %v399 = vld [vmem:[#allocation4 + $0x908] sm:$0xff]
    %v400 = vld [vmem:[#allocation4 + $0x910] sm:$0xff]
    %v401 = vld [vmem:[#allocation4 + $0x918] sm:$0xff]
    %v402 = vld [vmem:[#allocation4 + $0x920] sm:$0xff]
    %v403 = vld [vmem:[#allocation4 + $0x928] sm:$0xff]
    %v404 = vld [vmem:[#allocation4 + $0x930] sm:$0xff]
    %v405 = vld [vmem:[#allocation4 + $0x938] sm:$0xff]
    %v406 = vld [vmem:[#allocation4 + $0x940] sm:$0xff]
    %v407 = vld [vmem:[#allocation4 + $0x948] sm:$0xff]
    %v408 = vld [vmem:[#allocation4 + $0x950] sm:$0xff]
    %v409 = vld [vmem:[#allocation4 + $0x958] sm:$0xff]
    %v410 = vld [vmem:[#allocation4 + $0x960] sm:$0xff]
    %v411 = vld [vmem:[#allocation4 + $0x968] sm:$0xff]
    %v412 = vld [vmem:[#allocation4 + $0x970] sm:$0xff]
    %v413 = vld [vmem:[#allocation4 + $0x978] sm:$0xff]
    %v414 = vld [vmem:[#allocation4 + $0x980] sm:$0xff]
    %v415 = vld [vmem:[#allocation4 + $0x988] sm:$0xff]
    %v416 = vld [vmem:[#allocation4 + $0x990] sm:$0xff]
    %v417 = vld [vmem:[#allocation4 + $0x998] sm:$0xff]
    %v418 = vld [vmem:[#allocation4 + $0x9a0] sm:$0xff]
    %v419 = vld [vmem:[#allocation4 + $0x9a8] sm:$0xff]
    %v420 = vld [vmem:[#allocation4 + $0x9b0] sm:$0xff]
    %v421 = vld [vmem:[#allocation4 + $0x9b8] sm:$0xff]
    %v422 = vld [vmem:[#allocation4 + $0x9c0] sm:$0xff]
    %v423 = vld [vmem:[#allocation4 + $0x9c8] sm:$0xff]
    %v424 = vld [vmem:[#allocation4 + $0x9d0] sm:$0xff]
    %v425 = vld [vmem:[#allocation4 + $0x9d8] sm:$0xff]
    %v426 = vld [vmem:[#allocation4 + $0x9e0] sm:$0xff]
    %v427 = vld [vmem:[#allocation4 + $0x9e8] sm:$0xff]
    %v428 = vld [vmem:[#allocation4 + $0x9f0] sm:$0xff]
    %v429 = vld [vmem:[#allocation4 + $0x9f8] sm:$0xff]
    %v430 = vld [vmem:[#allocation4 + $0xa00] sm:$0xff]
    %v431 = vld [vmem:[#allocation4 + $0xa08] sm:$0xff]
    %v432 = vld [vmem:[#allocation4 + $0xa10] sm:$0xff]
    %v433 = vld [vmem:[#allocation4 + $0xa18] sm:$0xff]
    %v434 = vld [vmem:[#allocation4 + $0xa20] sm:$0xff]
    %v435 = vld [vmem:[#allocation4 + $0xa28] sm:$0xff]
    %v436 = vld [vmem:[#allocation4 + $0xa30] sm:$0xff]
    %v437 = vld [vmem:[#allocation4 + $0xa38] sm:$0xff]
    %v438 = vld [vmem:[#allocation4 + $0xa40] sm:$0xff]
    %v439 = vld [vmem:[#allocation4 + $0xa48] sm:$0xff]
    %v440 = vld [vmem:[#allocation4 + $0xa50] sm:$0xff]
    %v441 = vld [vmem:[#allocation4 + $0xa58] sm:$0xff]
    %v442 = vld [vmem:[#allocation4 + $0xa60] sm:$0xff]
    %v443 = vld [vmem:[#allocation4 + $0xa68] sm:$0xff]
    %v444 = vld [vmem:[#allocation4 + $0xa70] sm:$0xff]
    %v445 = vld [vmem:[#allocation4 + $0xa78] sm:$0xff]
    %v446 = vld [vmem:[#allocation4 + $0xa80] sm:$0xff]
    %v447 = vld [vmem:[#allocation4 + $0xa88] sm:$0xff]
    %v448 = vld [vmem:[#allocation4 + $0xa90] sm:$0xff]
    %v449 = vld [vmem:[#allocation4 + $0xa98] sm:$0xff]
    %v450 = vld [vmem:[#allocation4 + $0xaa0] sm:$0xff]
    %v451 = vld [vmem:[#allocation4 + $0xaa8] sm:$0xff]
    %v452 = vld [vmem:[#allocation4 + $0xab0] sm:$0xff]
    %v453 = vld [vmem:[#allocation4 + $0xab8] sm:$0xff]
    %v454 = vld [vmem:[#allocation4 + $0xac0] sm:$0xff]
    %v455 = vld [vmem:[#allocation4 + $0xac8] sm:$0xff]
    %v456 = vld [vmem:[#allocation4 + $0xad0] sm:$0xff]
    %v457 = vld [vmem:[#allocation4 + $0xad8] sm:$0xff]
    %v458 = vld [vmem:[#allocation4 + $0xae0] sm:$0xff]
    %v459 = vld [vmem:[#allocation4 + $0xae8] sm:$0xff]
    %v460 = vld [vmem:[#allocation4 + $0xaf0] sm:$0xff]
    %v461 = vld [vmem:[#allocation4 + $0xaf8] sm:$0xff]
    %v462 = vld [vmem:[#allocation4 + $0xb00] sm:$0xff]
    %v463 = vld [vmem:[#allocation4 + $0xb08] sm:$0xff]
    %v464 = vld [vmem:[#allocation4 + $0xb10] sm:$0xff]
    %v465 = vld [vmem:[#allocation4 + $0xb18] sm:$0xff]
    %v466 = vld [vmem:[#allocation4 + $0xb20] sm:$0xff]
    %v467 = vld [vmem:[#allocation4 + $0xb28] sm:$0xff]
    %v468 = vld [vmem:[#allocation4 + $0xb30] sm:$0xff]
    %v469 = vld [vmem:[#allocation4 + $0xb38] sm:$0xff]
    %v470 = vld [vmem:[#allocation4 + $0xb40] sm:$0xff]
    %v471 = vld [vmem:[#allocation4 + $0xb48] sm:$0xff]
    %v472 = vld [vmem:[#allocation4 + $0xb50] sm:$0xff]
    %v473 = vld [vmem:[#allocation4 + $0xb58] sm:$0xff]
    %v474 = vld [vmem:[#allocation4 + $0xb60] sm:$0xff]
    %v475 = vld [vmem:[#allocation4 + $0xb68] sm:$0xff]
    %v476 = vld [vmem:[#allocation4 + $0xb70] sm:$0xff]
    %v477 = vld [vmem:[#allocation4 + $0xb78] sm:$0xff]
    %v478 = vld [vmem:[#allocation4 + $0xb80] sm:$0xff]
    %v479 = vld [vmem:[#allocation4 + $0xb88] sm:$0xff]
    %v480 = vld [vmem:[#allocation4 + $0xb90] sm:$0xff]
    %v481 = vld [vmem:[#allocation4 + $0xb98] sm:$0xff]
    %v482 = vld [vmem:[#allocation4 + $0xba0] sm:$0xff]
    %v483 = vld [vmem:[#allocation4 + $0xba8] sm:$0xff]
    %v484 = vld [vmem:[#allocation4 + $0xbb0] sm:$0xff]
    %v485 = vld [vmem:[#allocation4 + $0xbb8] sm:$0xff]
    %v486 = vld [vmem:[#allocation4 + $0xbc0] sm:$0xff]
    %v487 = vld [vmem:[#allocation4 + $0xbc8] sm:$0xff]
    %v488 = vld [vmem:[#allocation4 + $0xbd0] sm:$0xff]
    %v489 = vld [vmem:[#allocation4 + $0xbd8] sm:$0xff]
    %v490 = vld [vmem:[#allocation4 + $0xbe0] sm:$0xff]
    %v491 = vld [vmem:[#allocation4 + $0xbe8] sm:$0xff]
    %v492 = vld [vmem:[#allocation4 + $0xbf0] sm:$0xff]
    %v493 = vld [vmem:[#allocation4 + $0xbf8] sm:$0xff]
    %v494 = vld [vmem:[#allocation4 + $0xc00] sm:$0xff]
    %v495 = vld [vmem:[#allocation4 + $0xc08] sm:$0xff]
    %v496 = vld [vmem:[#allocation4 + $0xc10] sm:$0xff]
    %v497 = vld [vmem:[#allocation4 + $0xc18] sm:$0xff]
    %v498 = vld [vmem:[#allocation4 + $0xc20] sm:$0xff]
    %v499 = vld [vmem:[#allocation4 + $0xc28] sm:$0xff]
    %v500 = vld [vmem:[#allocation4 + $0xc30] sm:$0xff]
    %v501 = vld [vmem:[#allocation4 + $0xc38] sm:$0xff]
    %v502 = vld [vmem:[#allocation4 + $0xc40] sm:$0xff]
    %v503 = vld [vmem:[#allocation4 + $0xc48] sm:$0xff]
    %v504 = vld [vmem:[#allocation4 + $0xc50] sm:$0xff]
    %v505 = vld [vmem:[#allocation4 + $0xc58] sm:$0xff]
    %v506 = vld [vmem:[#allocation4 + $0xc60] sm:$0xff]
    %v507 = vld [vmem:[#allocation4 + $0xc68] sm:$0xff]
    %v508 = vld [vmem:[#allocation4 + $0xc70] sm:$0xff]
    %v509 = vld [vmem:[#allocation4 + $0xc78] sm:$0xff]
    %v510 = vld [vmem:[#allocation4 + $0xc80] sm:$0xff]
    %v511 = vld [vmem:[#allocation4 + $0xc88] sm:$0xff]
    %v512 = vld [vmem:[#allocation4 + $0xc90] sm:$0xff]
    %v513 = vld [vmem:[#allocation4 + $0xc98] sm:$0xff]
    %v514 = vld [vmem:[#allocation4 + $0xca0] sm:$0xff]
    %v515 = vld [vmem:[#allocation4 + $0xca8] sm:$0xff]
    %v516 = vld [vmem:[#allocation4 + $0xcb0] sm:$0xff]
    %v517 = vld [vmem:[#allocation4 + $0xcb8] sm:$0xff]
    %v518 = vld [vmem:[#allocation4 + $0xcc0] sm:$0xff]
    %v519 = vld [vmem:[#allocation4 + $0xcc8] sm:$0xff]
    %v520 = vld [vmem:[#allocation4 + $0xcd0] sm:$0xff]
    %v521 = vld [vmem:[#allocation4 + $0xcd8] sm:$0xff]
    %v522 = vld [vmem:[#allocation4 + $0xce0] sm:$0xff]
    %v523 = vld [vmem:[#allocation4 + $0xce8] sm:$0xff]
    %v524 = vld [vmem:[#allocation4 + $0xcf0] sm:$0xff]
    %v525 = vld [vmem:[#allocation4 + $0xcf8] sm:$0xff]
    %v526 = vld [vmem:[#allocation4 + $0xd00] sm:$0xff]
    %v527 = vld [vmem:[#allocation4 + $0xd08] sm:$0xff]
    %v528 = vld [vmem:[#allocation4 + $0xd10] sm:$0xff]
    %v529 = vld [vmem:[#allocation4 + $0xd18] sm:$0xff]
    %v530 = vld [vmem:[#allocation4 + $0xd20] sm:$0xff]
    %v531 = vld [vmem:[#allocation4 + $0xd28] sm:$0xff]
    %v532 = vld [vmem:[#allocation4 + $0xd30] sm:$0xff]
    %v533 = vld [vmem:[#allocation4 + $0xd38] sm:$0xff]
    %v534 = vld [vmem:[#allocation4 + $0xd40] sm:$0xff]
    %v535 = vld [vmem:[#allocation4 + $0xd48] sm:$0xff]
    %v536 = vld [vmem:[#allocation4 + $0xd50] sm:$0xff]
    %v537 = vld [vmem:[#allocation4 + $0xd58] sm:$0xff]
    %v538 = vld [vmem:[#allocation4 + $0xd60] sm:$0xff]
    %v539 = vld [vmem:[#allocation4 + $0xd68] sm:$0xff]
    %v540 = vld [vmem:[#allocation4 + $0xd70] sm:$0xff]
    %v541 = vld [vmem:[#allocation4 + $0xd78] sm:$0xff]
    %v542 = vld [vmem:[#allocation4 + $0xd80] sm:$0xff]
    %v543 = vld [vmem:[#allocation4 + $0xd88] sm:$0xff]
    %v544 = vld [vmem:[#allocation4 + $0xd90] sm:$0xff]
    %v545 = vld [vmem:[#allocation4 + $0xd98] sm:$0xff]
    %v546 = vld [vmem:[#allocation4 + $0xda0] sm:$0xff]
    %v547 = vld [vmem:[#allocation4 + $0xda8] sm:$0xff]
    %v548 = vld [vmem:[#allocation4 + $0xdb0] sm:$0xff]
    %v549 = vld [vmem:[#allocation4 + $0xdb8] sm:$0xff]
    %v550 = vld [vmem:[#allocation4 + $0xdc0] sm:$0xff]
    %v551 = vld [vmem:[#allocation4 + $0xdc8] sm:$0xff]
    %v552 = vld [vmem:[#allocation4 + $0xdd0] sm:$0xff]
    %v553 = vld [vmem:[#allocation4 + $0xdd8] sm:$0xff]
    %v554 = vld [vmem:[#allocation4 + $0xde0] sm:$0xff]
    %v555 = vld [vmem:[#allocation4 + $0xde8] sm:$0xff]
    %v556 = vld [vmem:[#allocation4 + $0xdf0] sm:$0xff]
    %v557 = vld [vmem:[#allocation4 + $0xdf8] sm:$0xff]
    %v558 = vld [vmem:[#allocation4 + $0xe00] sm:$0xff]
    %v559 = vld [vmem:[#allocation4 + $0xe08] sm:$0xff]
    %v560 = vld [vmem:[#allocation4 + $0xe10] sm:$0xff]
    %v561 = vld [vmem:[#allocation4 + $0xe18] sm:$0xff]
    %v562 = vld [vmem:[#allocation4 + $0xe20] sm:$0xff]
    %v563 = vld [vmem:[#allocation4 + $0xe28] sm:$0xff]
    %v564 = vld [vmem:[#allocation4 + $0xe30] sm:$0xff]
    %v565 = vld [vmem:[#allocation4 + $0xe38] sm:$0xff]
    %v566 = vld [vmem:[#allocation4 + $0xe40] sm:$0xff]
    %v567 = vld [vmem:[#allocation4 + $0xe48] sm:$0xff]
    %v568 = vld [vmem:[#allocation4 + $0xe50] sm:$0xff]
    %v569 = vld [vmem:[#allocation4 + $0xe58] sm:$0xff]
    %v570 = vld [vmem:[#allocation4 + $0xe60] sm:$0xff]
    %v571 = vld [vmem:[#allocation4 + $0xe68] sm:$0xff]
    %v572 = vld [vmem:[#allocation4 + $0xe70] sm:$0xff]
    %v573 = vld [vmem:[#allocation4 + $0xe78] sm:$0xff]
    %v574 = vld [vmem:[#allocation4 + $0xe80] sm:$0xff]
    %v575 = vld [vmem:[#allocation4 + $0xe88] sm:$0xff]
    %v576 = vld [vmem:[#allocation4 + $0xe90] sm:$0xff]
    %v577 = vld [vmem:[#allocation4 + $0xe98] sm:$0xff]
    %v578 = vld [vmem:[#allocation4 + $0xea0] sm:$0xff]
    %v579 = vld [vmem:[#allocation4 + $0xea8] sm:$0xff]
    %v580 = vld [vmem:[#allocation4 + $0xeb0] sm:$0xff]
    %v581 = vld [vmem:[#allocation4 + $0xeb8] sm:$0xff]
    %v582 = vld [vmem:[#allocation4 + $0xec0] sm:$0xff]
    %v583 = vld [vmem:[#allocation4 + $0xec8] sm:$0xff]
    %v584 = vld [vmem:[#allocation4 + $0xed0] sm:$0xff]
    %v585 = vld [vmem:[#allocation4 + $0xed8] sm:$0xff]
    %v586 = vld [vmem:[#allocation4 + $0xee0] sm:$0xff]
    %v587 = vld [vmem:[#allocation4 + $0xee8] sm:$0xff]
    %v588 = vld [vmem:[#allocation4 + $0xef0] sm:$0xff]
    %v589 = vld [vmem:[#allocation4 + $0xef8] sm:$0xff]
    %v590 = vld [vmem:[#allocation4 + $0xf00] sm:$0xff]
    %v591 = vld [vmem:[#allocation4 + $0xf08] sm:$0xff]
    %v592 = vld [vmem:[#allocation4 + $0xf10] sm:$0xff]
    %v593 = vld [vmem:[#allocation4 + $0xf18] sm:$0xff]
    %v594 = vld [vmem:[#allocation4 + $0xf20] sm:$0xff]
    %v595 = vld [vmem:[#allocation4 + $0xf28] sm:$0xff]
    %v596 = vld [vmem:[#allocation4 + $0xf30] sm:$0xff]
    %v597 = vld [vmem:[#allocation4 + $0xf38] sm:$0xff]
    %v598 = vld [vmem:[#allocation4 + $0xf40] sm:$0xff]
    %v599 = vld [vmem:[#allocation4 + $0xf48] sm:$0xff]
    %v600 = vld [vmem:[#allocation4 + $0xf50] sm:$0xff]
    %v601 = vld [vmem:[#allocation4 + $0xf58] sm:$0xff]
    %v602 = vld [vmem:[#allocation4 + $0xf60] sm:$0xff]
    %v603 = vld [vmem:[#allocation4 + $0xf68] sm:$0xff]
    %v604 = vld [vmem:[#allocation4 + $0xf70] sm:$0xff]
    %v605 = vld [vmem:[#allocation4 + $0xf78] sm:$0xff]
    %v606 = vld [vmem:[#allocation4 + $0xf80] sm:$0xff]
    %v607 = vld [vmem:[#allocation4 + $0xf88] sm:$0xff]
    %v608 = vld [vmem:[#allocation4 + $0xf90] sm:$0xff]
    %v609 = vld [vmem:[#allocation4 + $0xf98] sm:$0xff]
    %v610 = vld [vmem:[#allocation4 + $0xfa0] sm:$0xff]
    %v611 = vld [vmem:[#allocation4 + $0xfa8] sm:$0xff]
    %v612 = vld [vmem:[#allocation4 + $0xfb0] sm:$0xff]
    %v613 = vld [vmem:[#allocation4 + $0xfb8] sm:$0xff]
    %v614 = vld [vmem:[#allocation4 + $0xfc0] sm:$0xff]
    %v615 = vld [vmem:[#allocation4 + $0xfc8] sm:$0xff]
    %v616 = vld [vmem:[#allocation4 + $0xfd0] sm:$0xff]
    %v617 = vld [vmem:[#allocation4 + $0xfd8] sm:$0xff]
    %v618 = vld [vmem:[#allocation4 + $0xfe0] sm:$0xff]
    %v619 = vld [vmem:[#allocation4 + $0xfe8] sm:$0xff]
    %v620 = vld [vmem:[#allocation4 + $0xff0] sm:$0xff]
    %v621 = vld [vmem:[#allocation4 + $0xff8] sm:$0xff]
    %v1134 = vunpack.c.l.b16 %v110
    %v1135 = vunpack.c.h.b16 %v110
    %v1136 = vunpack.c.l.b16 %v111
    %v1137 = vunpack.c.h.b16 %v111
    %v1138 = vunpack.c.l.b16 %v112
    %v1139 = vunpack.c.h.b16 %v112
    %v1140 = vunpack.c.l.b16 %v113
    %v1141 = vunpack.c.h.b16 %v113
    %v1142 = vunpack.c.l.b16 %v114
    %v1143 = vunpack.c.h.b16 %v114
    %v1144 = vunpack.c.l.b16 %v115
    %v1145 = vunpack.c.h.b16 %v115
    %v1146 = vunpack.c.l.b16 %v116
    %v1147 = vunpack.c.h.b16 %v116
    %v1148 = vunpack.c.l.b16 %v117
    %v1149 = vunpack.c.h.b16 %v117
    %v1150 = vunpack.c.l.b16 %v118
    %v1151 = vunpack.c.h.b16 %v118
    %v1152 = vunpack.c.l.b16 %v119
    %v1153 = vunpack.c.h.b16 %v119
    %v1154 = vunpack.c.l.b16 %v120
    %v1155 = vunpack.c.h.b16 %v120
    %v1156 = vunpack.c.l.b16 %v121
    %v1157 = vunpack.c.h.b16 %v121
    %v1158 = vunpack.c.l.b16 %v122
    %v1159 = vunpack.c.h.b16 %v122
    %v1160 = vunpack.c.l.b16 %v123
    %v1161 = vunpack.c.h.b16 %v123
    %v1162 = vunpack.c.l.b16 %v124
    %v1163 = vunpack.c.h.b16 %v124
    %v1164 = vunpack.c.l.b16 %v125
    %v1165 = vunpack.c.h.b16 %v125
    %v1166 = vunpack.c.l.b16 %v126
    %v1167 = vunpack.c.h.b16 %v126
    %v1168 = vunpack.c.l.b16 %v127
    %v1169 = vunpack.c.h.b16 %v127
    %v1170 = vunpack.c.l.b16 %v128
    %v1171 = vunpack.c.h.b16 %v128
    %v1172 = vunpack.c.l.b16 %v129
    %v1173 = vunpack.c.h.b16 %v129
    %v1174 = vunpack.c.l.b16 %v130
    %v1175 = vunpack.c.h.b16 %v130
    %v1176 = vunpack.c.l.b16 %v131
    %v1177 = vunpack.c.h.b16 %v131
    %v1178 = vunpack.c.l.b16 %v132
    %v1179 = vunpack.c.h.b16 %v132
    %v1180 = vunpack.c.l.b16 %v133
    %v1181 = vunpack.c.h.b16 %v133
    %v1182 = vunpack.c.l.b16 %v134
    %v1183 = vunpack.c.h.b16 %v134
    %v1184 = vunpack.c.l.b16 %v135
    %v1185 = vunpack.c.h.b16 %v135
    %v1186 = vunpack.c.l.b16 %v136
    %v1187 = vunpack.c.h.b16 %v136
    %v1188 = vunpack.c.l.b16 %v137
    %v1189 = vunpack.c.h.b16 %v137
    %v1190 = vunpack.c.l.b16 %v138
    %v1191 = vunpack.c.h.b16 %v138
    %v1192 = vunpack.c.l.b16 %v139
    %v1193 = vunpack.c.h.b16 %v139
    %v1194 = vunpack.c.l.b16 %v140
    %v1195 = vunpack.c.h.b16 %v140
    %v1196 = vunpack.c.l.b16 %v141
    %v1197 = vunpack.c.h.b16 %v141
    %v1198 = vunpack.c.l.b16 %v142
    %v1199 = vunpack.c.h.b16 %v142
    %v1200 = vunpack.c.l.b16 %v143
    %v1201 = vunpack.c.h.b16 %v143
    %v1202 = vunpack.c.l.b16 %v144
    %v1203 = vunpack.c.h.b16 %v144
    %v1204 = vunpack.c.l.b16 %v145
    %v1205 = vunpack.c.h.b16 %v145
    %v1206 = vunpack.c.l.b16 %v146
    %v1207 = vunpack.c.h.b16 %v146
    %v1208 = vunpack.c.l.b16 %v147
    %v1209 = vunpack.c.h.b16 %v147
    %v1210 = vunpack.c.l.b16 %v148
    %v1211 = vunpack.c.h.b16 %v148
    %v1212 = vunpack.c.l.b16 %v149
    %v1213 = vunpack.c.h.b16 %v149
    %v1214 = vunpack.c.l.b16 %v150
    %v1215 = vunpack.c.h.b16 %v150
    %v1216 = vunpack.c.l.b16 %v151
    %v1217 = vunpack.c.h.b16 %v151
    %v1218 = vunpack.c.l.b16 %v152
    %v1219 = vunpack.c.h.b16 %v152
    %v1220 = vunpack.c.l.b16 %v153
    %v1221 = vunpack.c.h.b16 %v153
    %v1222 = vunpack.c.l.b16 %v154
    %v1223 = vunpack.c.h.b16 %v154
    %v1224 = vunpack.c.l.b16 %v155
    %v1225 = vunpack.c.h.b16 %v155
    %v1226 = vunpack.c.l.b16 %v156
    %v1227 = vunpack.c.h.b16 %v156
    %v1228 = vunpack.c.l.b16 %v157
    %v1229 = vunpack.c.h.b16 %v157
    %v1230 = vunpack.c.l.b16 %v158
    %v1231 = vunpack.c.h.b16 %v158
    %v1232 = vunpack.c.l.b16 %v159
    %v1233 = vunpack.c.h.b16 %v159
    %v1234 = vunpack.c.l.b16 %v160
    %v1235 = vunpack.c.h.b16 %v160
    %v1236 = vunpack.c.l.b16 %v161
    %v1237 = vunpack.c.h.b16 %v161
    %v1238 = vunpack.c.l.b16 %v162
    %v1239 = vunpack.c.h.b16 %v162
    %v1240 = vunpack.c.l.b16 %v163
    %v1241 = vunpack.c.h.b16 %v163
    %v1242 = vunpack.c.l.b16 %v164
    %v1243 = vunpack.c.h.b16 %v164
    %v1244 = vunpack.c.l.b16 %v165
    %v1245 = vunpack.c.h.b16 %v165
    %v1246 = vunpack.c.l.b16 %v166
    %v1247 = vunpack.c.h.b16 %v166
    %v1248 = vunpack.c.l.b16 %v167
    %v1249 = vunpack.c.h.b16 %v167
    %v1250 = vunpack.c.l.b16 %v168
    %v1251 = vunpack.c.h.b16 %v168
    %v1252 = vunpack.c.l.b16 %v169
    %v1253 = vunpack.c.h.b16 %v169
    %v1254 = vunpack.c.l.b16 %v170
    %v1255 = vunpack.c.h.b16 %v170
    %v1256 = vunpack.c.l.b16 %v171
    %v1257 = vunpack.c.h.b16 %v171
    %v1258 = vunpack.c.l.b16 %v172
    %v1259 = vunpack.c.h.b16 %v172
    %v1260 = vunpack.c.l.b16 %v173
    %v1261 = vunpack.c.h.b16 %v173
    %v1262 = vunpack.c.l.b16 %v174
    %v1263 = vunpack.c.h.b16 %v174
    %v1264 = vunpack.c.l.b16 %v175
    %v1265 = vunpack.c.h.b16 %v175
    %v1266 = vunpack.c.l.b16 %v176
    %v1267 = vunpack.c.h.b16 %v176
    %v1268 = vunpack.c.l.b16 %v177
    %v1269 = vunpack.c.h.b16 %v177
    %v1270 = vunpack.c.l.b16 %v178
    %v1271 = vunpack.c.h.b16 %v178
    %v1272 = vunpack.c.l.b16 %v179
    %v1273 = vunpack.c.h.b16 %v179
    %v1274 = vunpack.c.l.b16 %v180
    %v1275 = vunpack.c.h.b16 %v180
    %v1276 = vunpack.c.l.b16 %v181
    %v1277 = vunpack.c.h.b16 %v181
    %v1278 = vunpack.c.l.b16 %v182
    %v1279 = vunpack.c.h.b16 %v182
    %v1280 = vunpack.c.l.b16 %v183
    %v1281 = vunpack.c.h.b16 %v183
    %v1282 = vunpack.c.l.b16 %v184
    %v1283 = vunpack.c.h.b16 %v184
    %v1284 = vunpack.c.l.b16 %v185
    %v1285 = vunpack.c.h.b16 %v185
    %v1286 = vunpack.c.l.b16 %v186
    %v1287 = vunpack.c.h.b16 %v186
    %v1288 = vunpack.c.l.b16 %v187
    %v1289 = vunpack.c.h.b16 %v187
    %v1290 = vunpack.c.l.b16 %v188
    %v1291 = vunpack.c.h.b16 %v188
    %v1292 = vunpack.c.l.b16 %v189
    %v1293 = vunpack.c.h.b16 %v189
    %v1294 = vunpack.c.l.b16 %v190
    %v1295 = vunpack.c.h.b16 %v190
    %v1296 = vunpack.c.l.b16 %v191
    %v1297 = vunpack.c.h.b16 %v191
    %v1298 = vunpack.c.l.b16 %v192
    %v1299 = vunpack.c.h.b16 %v192
    %v1300 = vunpack.c.l.b16 %v193
    %v1301 = vunpack.c.h.b16 %v193
    %v1302 = vunpack.c.l.b16 %v194
    %v1303 = vunpack.c.h.b16 %v194
    %v1304 = vunpack.c.l.b16 %v195
    %v1305 = vunpack.c.h.b16 %v195
    %v1306 = vunpack.c.l.b16 %v196
    %v1307 = vunpack.c.h.b16 %v196
    %v1308 = vunpack.c.l.b16 %v197
    %v1309 = vunpack.c.h.b16 %v197
    %v1310 = vunpack.c.l.b16 %v198
    %v1311 = vunpack.c.h.b16 %v198
    %v1312 = vunpack.c.l.b16 %v199
    %v1313 = vunpack.c.h.b16 %v199
    %v1314 = vunpack.c.l.b16 %v200
    %v1315 = vunpack.c.h.b16 %v200
    %v1316 = vunpack.c.l.b16 %v201
    %v1317 = vunpack.c.h.b16 %v201
    %v1318 = vunpack.c.l.b16 %v202
    %v1319 = vunpack.c.h.b16 %v202
    %v1320 = vunpack.c.l.b16 %v203
    %v1321 = vunpack.c.h.b16 %v203
    %v1322 = vunpack.c.l.b16 %v204
    %v1323 = vunpack.c.h.b16 %v204
    %v1324 = vunpack.c.l.b16 %v205
    %v1325 = vunpack.c.h.b16 %v205
    %v1326 = vunpack.c.l.b16 %v206
    %v1327 = vunpack.c.h.b16 %v206
    %v1328 = vunpack.c.l.b16 %v207
    %v1329 = vunpack.c.h.b16 %v207
    %v1330 = vunpack.c.l.b16 %v208
    %v1331 = vunpack.c.h.b16 %v208
    %v1332 = vunpack.c.l.b16 %v209
    %v1333 = vunpack.c.h.b16 %v209
    %v1334 = vunpack.c.l.b16 %v210
    %v1335 = vunpack.c.h.b16 %v210
    %v1336 = vunpack.c.l.b16 %v211
    %v1337 = vunpack.c.h.b16 %v211
    %v1338 = vunpack.c.l.b16 %v212
    %v1339 = vunpack.c.h.b16 %v212
    %v1340 = vunpack.c.l.b16 %v213
    %v1341 = vunpack.c.h.b16 %v213
    %v1342 = vunpack.c.l.b16 %v214
    %v1343 = vunpack.c.h.b16 %v214
    %v1344 = vunpack.c.l.b16 %v215
    %v1345 = vunpack.c.h.b16 %v215
    %v1346 = vunpack.c.l.b16 %v216
    %v1347 = vunpack.c.h.b16 %v216
    %v1348 = vunpack.c.l.b16 %v217
    %v1349 = vunpack.c.h.b16 %v217
    %v1350 = vunpack.c.l.b16 %v218
    %v1351 = vunpack.c.h.b16 %v218
    %v1352 = vunpack.c.l.b16 %v219
    %v1353 = vunpack.c.h.b16 %v219
    %v1354 = vunpack.c.l.b16 %v220
    %v1355 = vunpack.c.h.b16 %v220
    %v1356 = vunpack.c.l.b16 %v221
    %v1357 = vunpack.c.h.b16 %v221
    %v1358 = vunpack.c.l.b16 %v222
    %v1359 = vunpack.c.h.b16 %v222
    %v1360 = vunpack.c.l.b16 %v223
    %v1361 = vunpack.c.h.b16 %v223
    %v1362 = vunpack.c.l.b16 %v224
    %v1363 = vunpack.c.h.b16 %v224
    %v1364 = vunpack.c.l.b16 %v225
    %v1365 = vunpack.c.h.b16 %v225
    %v1366 = vunpack.c.l.b16 %v226
    %v1367 = vunpack.c.h.b16 %v226
    %v1368 = vunpack.c.l.b16 %v227
    %v1369 = vunpack.c.h.b16 %v227
    %v1370 = vunpack.c.l.b16 %v228
    %v1371 = vunpack.c.h.b16 %v228
    %v1372 = vunpack.c.l.b16 %v229
    %v1373 = vunpack.c.h.b16 %v229
    %v1374 = vunpack.c.l.b16 %v230
    %v1375 = vunpack.c.h.b16 %v230
    %v1376 = vunpack.c.l.b16 %v231
    %v1377 = vunpack.c.h.b16 %v231
    %v1378 = vunpack.c.l.b16 %v232
    %v1379 = vunpack.c.h.b16 %v232
    %v1380 = vunpack.c.l.b16 %v233
    %v1381 = vunpack.c.h.b16 %v233
    %v1382 = vunpack.c.l.b16 %v234
    %v1383 = vunpack.c.h.b16 %v234
    %v1384 = vunpack.c.l.b16 %v235
    %v1385 = vunpack.c.h.b16 %v235
    %v1386 = vunpack.c.l.b16 %v236
    %v1387 = vunpack.c.h.b16 %v236
    %v1388 = vunpack.c.l.b16 %v237
    %v1389 = vunpack.c.h.b16 %v237
    %v1390 = vunpack.c.l.b16 %v238
    %v1391 = vunpack.c.h.b16 %v238
    %v1392 = vunpack.c.l.b16 %v239
    %v1393 = vunpack.c.h.b16 %v239
    %v1394 = vunpack.c.l.b16 %v240
    %v1395 = vunpack.c.h.b16 %v240
    %v1396 = vunpack.c.l.b16 %v241
    %v1397 = vunpack.c.h.b16 %v241
    %v1398 = vunpack.c.l.b16 %v242
    %v1399 = vunpack.c.h.b16 %v242
    %v1400 = vunpack.c.l.b16 %v243
    %v1401 = vunpack.c.h.b16 %v243
    %v1402 = vunpack.c.l.b16 %v244
    %v1403 = vunpack.c.h.b16 %v244
    %v1404 = vunpack.c.l.b16 %v245
    %v1405 = vunpack.c.h.b16 %v245
    %v1406 = vunpack.c.l.b16 %v246
    %v1407 = vunpack.c.h.b16 %v246
    %v1408 = vunpack.c.l.b16 %v247
    %v1409 = vunpack.c.h.b16 %v247
    %v1410 = vunpack.c.l.b16 %v248
    %v1411 = vunpack.c.h.b16 %v248
    %v1412 = vunpack.c.l.b16 %v249
    %v1413 = vunpack.c.h.b16 %v249
    %v1414 = vunpack.c.l.b16 %v250
    %v1415 = vunpack.c.h.b16 %v250
    %v1416 = vunpack.c.l.b16 %v251
    %v1417 = vunpack.c.h.b16 %v251
    %v1418 = vunpack.c.l.b16 %v252
    %v1419 = vunpack.c.h.b16 %v252
    %v1420 = vunpack.c.l.b16 %v253
    %v1421 = vunpack.c.h.b16 %v253
    %v1422 = vunpack.c.l.b16 %v254
    %v1423 = vunpack.c.h.b16 %v254
    %v1424 = vunpack.c.l.b16 %v255
    %v1425 = vunpack.c.h.b16 %v255
    %v1426 = vunpack.c.l.b16 %v256
    %v1427 = vunpack.c.h.b16 %v256
    %v1428 = vunpack.c.l.b16 %v257
    %v1429 = vunpack.c.h.b16 %v257
    %v1430 = vunpack.c.l.b16 %v258
    %v1431 = vunpack.c.h.b16 %v258
    %v1432 = vunpack.c.l.b16 %v259
    %v1433 = vunpack.c.h.b16 %v259
    %v1434 = vunpack.c.l.b16 %v260
    %v1435 = vunpack.c.h.b16 %v260
    %v1436 = vunpack.c.l.b16 %v261
    %v1437 = vunpack.c.h.b16 %v261
    %v1438 = vunpack.c.l.b16 %v262
    %v1439 = vunpack.c.h.b16 %v262
    %v1440 = vunpack.c.l.b16 %v263
    %v1441 = vunpack.c.h.b16 %v263
    %v1442 = vunpack.c.l.b16 %v264
    %v1443 = vunpack.c.h.b16 %v264
    %v1444 = vunpack.c.l.b16 %v265
    %v1445 = vunpack.c.h.b16 %v265
    %v1446 = vunpack.c.l.b16 %v266
    %v1447 = vunpack.c.h.b16 %v266
    %v1448 = vunpack.c.l.b16 %v267
    %v1449 = vunpack.c.h.b16 %v267
    %v1450 = vunpack.c.l.b16 %v268
    %v1451 = vunpack.c.h.b16 %v268
    %v1452 = vunpack.c.l.b16 %v269
    %v1453 = vunpack.c.h.b16 %v269
    %v1454 = vunpack.c.l.b16 %v270
    %v1455 = vunpack.c.h.b16 %v270
    %v1456 = vunpack.c.l.b16 %v271
    %v1457 = vunpack.c.h.b16 %v271
    %v1458 = vunpack.c.l.b16 %v272
    %v1459 = vunpack.c.h.b16 %v272
    %v1460 = vunpack.c.l.b16 %v273
    %v1461 = vunpack.c.h.b16 %v273
    %v1462 = vunpack.c.l.b16 %v274
    %v1463 = vunpack.c.h.b16 %v274
    %v1464 = vunpack.c.l.b16 %v275
    %v1465 = vunpack.c.h.b16 %v275
    %v1466 = vunpack.c.l.b16 %v276
    %v1467 = vunpack.c.h.b16 %v276
    %v1468 = vunpack.c.l.b16 %v277
    %v1469 = vunpack.c.h.b16 %v277
    %v1470 = vunpack.c.l.b16 %v278
    %v1471 = vunpack.c.h.b16 %v278
    %v1472 = vunpack.c.l.b16 %v279
    %v1473 = vunpack.c.h.b16 %v279
    %v1474 = vunpack.c.l.b16 %v280
    %v1475 = vunpack.c.h.b16 %v280
    %v1476 = vunpack.c.l.b16 %v281
    %v1477 = vunpack.c.h.b16 %v281
    %v1478 = vunpack.c.l.b16 %v282
    %v1479 = vunpack.c.h.b16 %v282
    %v1480 = vunpack.c.l.b16 %v283
    %v1481 = vunpack.c.h.b16 %v283
    %v1482 = vunpack.c.l.b16 %v284
    %v1483 = vunpack.c.h.b16 %v284
    %v1484 = vunpack.c.l.b16 %v285
    %v1485 = vunpack.c.h.b16 %v285
    %v1486 = vunpack.c.l.b16 %v286
    %v1487 = vunpack.c.h.b16 %v286
    %v1488 = vunpack.c.l.b16 %v287
    %v1489 = vunpack.c.h.b16 %v287
    %v1490 = vunpack.c.l.b16 %v288
    %v1491 = vunpack.c.h.b16 %v288
    %v1492 = vunpack.c.l.b16 %v289
    %v1493 = vunpack.c.h.b16 %v289
    %v1494 = vunpack.c.l.b16 %v290
    %v1495 = vunpack.c.h.b16 %v290
    %v1496 = vunpack.c.l.b16 %v291
    %v1497 = vunpack.c.h.b16 %v291
    %v1498 = vunpack.c.l.b16 %v292
    %v1499 = vunpack.c.h.b16 %v292
    %v1500 = vunpack.c.l.b16 %v293
    %v1501 = vunpack.c.h.b16 %v293
    %v1502 = vunpack.c.l.b16 %v294
    %v1503 = vunpack.c.h.b16 %v294
    %v1504 = vunpack.c.l.b16 %v295
    %v1505 = vunpack.c.h.b16 %v295
    %v1506 = vunpack.c.l.b16 %v296
    %v1507 = vunpack.c.h.b16 %v296
    %v1508 = vunpack.c.l.b16 %v297
    %v1509 = vunpack.c.h.b16 %v297
    %v1510 = vunpack.c.l.b16 %v298
    %v1511 = vunpack.c.h.b16 %v298
    %v1512 = vunpack.c.l.b16 %v299
    %v1513 = vunpack.c.h.b16 %v299
    %v1514 = vunpack.c.l.b16 %v300
    %v1515 = vunpack.c.h.b16 %v300
    %v1516 = vunpack.c.l.b16 %v301
    %v1517 = vunpack.c.h.b16 %v301
    %v1518 = vunpack.c.l.b16 %v302
    %v1519 = vunpack.c.h.b16 %v302
    %v1520 = vunpack.c.l.b16 %v303
    %v1521 = vunpack.c.h.b16 %v303
    %v1522 = vunpack.c.l.b16 %v304
    %v1523 = vunpack.c.h.b16 %v304
    %v1524 = vunpack.c.l.b16 %v305
    %v1525 = vunpack.c.h.b16 %v305
    %v1526 = vunpack.c.l.b16 %v306
    %v1527 = vunpack.c.h.b16 %v306
    %v1528 = vunpack.c.l.b16 %v307
    %v1529 = vunpack.c.h.b16 %v307
    %v1530 = vunpack.c.l.b16 %v308
    %v1531 = vunpack.c.h.b16 %v308
    %v1532 = vunpack.c.l.b16 %v309
    %v1533 = vunpack.c.h.b16 %v309
    %v1534 = vunpack.c.l.b16 %v310
    %v1535 = vunpack.c.h.b16 %v310
    %v1536 = vunpack.c.l.b16 %v311
    %v1537 = vunpack.c.h.b16 %v311
    %v1538 = vunpack.c.l.b16 %v312
    %v1539 = vunpack.c.h.b16 %v312
    %v1540 = vunpack.c.l.b16 %v313
    %v1541 = vunpack.c.h.b16 %v313
    %v1542 = vunpack.c.l.b16 %v314
    %v1543 = vunpack.c.h.b16 %v314
    %v1544 = vunpack.c.l.b16 %v315
    %v1545 = vunpack.c.h.b16 %v315
    %v1546 = vunpack.c.l.b16 %v316
    %v1547 = vunpack.c.h.b16 %v316
    %v1548 = vunpack.c.l.b16 %v317
    %v1549 = vunpack.c.h.b16 %v317
    %v1550 = vunpack.c.l.b16 %v318
    %v1551 = vunpack.c.h.b16 %v318
    %v1552 = vunpack.c.l.b16 %v319
    %v1553 = vunpack.c.h.b16 %v319
    %v1554 = vunpack.c.l.b16 %v320
    %v1555 = vunpack.c.h.b16 %v320
    %v1556 = vunpack.c.l.b16 %v321
    %v1557 = vunpack.c.h.b16 %v321
    %v1558 = vunpack.c.l.b16 %v322
    %v1559 = vunpack.c.h.b16 %v322
    %v1560 = vunpack.c.l.b16 %v323
    %v1561 = vunpack.c.h.b16 %v323
    %v1562 = vunpack.c.l.b16 %v324
    %v1563 = vunpack.c.h.b16 %v324
    %v1564 = vunpack.c.l.b16 %v325
    %v1565 = vunpack.c.h.b16 %v325
    %v1566 = vunpack.c.l.b16 %v326
    %v1567 = vunpack.c.h.b16 %v326
    %v1568 = vunpack.c.l.b16 %v327
    %v1569 = vunpack.c.h.b16 %v327
    %v1570 = vunpack.c.l.b16 %v328
    %v1571 = vunpack.c.h.b16 %v328
    %v1572 = vunpack.c.l.b16 %v329
    %v1573 = vunpack.c.h.b16 %v329
    %v1574 = vunpack.c.l.b16 %v330
    %v1575 = vunpack.c.h.b16 %v330
    %v1576 = vunpack.c.l.b16 %v331
    %v1577 = vunpack.c.h.b16 %v331
    %v1578 = vunpack.c.l.b16 %v332
    %v1579 = vunpack.c.h.b16 %v332
    %v1580 = vunpack.c.l.b16 %v333
    %v1581 = vunpack.c.h.b16 %v333
    %v1582 = vunpack.c.l.b16 %v334
    %v1583 = vunpack.c.h.b16 %v334
    %v1584 = vunpack.c.l.b16 %v335
    %v1585 = vunpack.c.h.b16 %v335
    %v1586 = vunpack.c.l.b16 %v336
    %v1587 = vunpack.c.h.b16 %v336
    %v1588 = vunpack.c.l.b16 %v337
    %v1589 = vunpack.c.h.b16 %v337
    %v1590 = vunpack.c.l.b16 %v338
    %v1591 = vunpack.c.h.b16 %v338
    %v1592 = vunpack.c.l.b16 %v339
    %v1593 = vunpack.c.h.b16 %v339
    %v1594 = vunpack.c.l.b16 %v340
    %v1595 = vunpack.c.h.b16 %v340
    %v1596 = vunpack.c.l.b16 %v341
    %v1597 = vunpack.c.h.b16 %v341
    %v1598 = vunpack.c.l.b16 %v342
    %v1599 = vunpack.c.h.b16 %v342
    %v1600 = vunpack.c.l.b16 %v343
    %v1601 = vunpack.c.h.b16 %v343
    %v1602 = vunpack.c.l.b16 %v344
    %v1603 = vunpack.c.h.b16 %v344
    %v1604 = vunpack.c.l.b16 %v345
    %v1605 = vunpack.c.h.b16 %v345
    %v1606 = vunpack.c.l.b16 %v346
    %v1607 = vunpack.c.h.b16 %v346
    %v1608 = vunpack.c.l.b16 %v347
    %v1609 = vunpack.c.h.b16 %v347
    %v1610 = vunpack.c.l.b16 %v348
    %v1611 = vunpack.c.h.b16 %v348
    %v1612 = vunpack.c.l.b16 %v349
    %v1613 = vunpack.c.h.b16 %v349
    %v1614 = vunpack.c.l.b16 %v350
    %v1615 = vunpack.c.h.b16 %v350
    %v1616 = vunpack.c.l.b16 %v351
    %v1617 = vunpack.c.h.b16 %v351
    %v1618 = vunpack.c.l.b16 %v352
    %v1619 = vunpack.c.h.b16 %v352
    %v1620 = vunpack.c.l.b16 %v353
    %v1621 = vunpack.c.h.b16 %v353
    %v1622 = vunpack.c.l.b16 %v354
    %v1623 = vunpack.c.h.b16 %v354
    %v1624 = vunpack.c.l.b16 %v355
    %v1625 = vunpack.c.h.b16 %v355
    %v1626 = vunpack.c.l.b16 %v356
    %v1627 = vunpack.c.h.b16 %v356
    %v1628 = vunpack.c.l.b16 %v357
    %v1629 = vunpack.c.h.b16 %v357
    %v1630 = vunpack.c.l.b16 %v358
    %v1631 = vunpack.c.h.b16 %v358
    %v1632 = vunpack.c.l.b16 %v359
    %v1633 = vunpack.c.h.b16 %v359
    %v1634 = vunpack.c.l.b16 %v360
    %v1635 = vunpack.c.h.b16 %v360
    %v1636 = vunpack.c.l.b16 %v361
    %v1637 = vunpack.c.h.b16 %v361
    %v1638 = vunpack.c.l.b16 %v362
    %v1639 = vunpack.c.h.b16 %v362
    %v1640 = vunpack.c.l.b16 %v363
    %v1641 = vunpack.c.h.b16 %v363
    %v1642 = vunpack.c.l.b16 %v364
    %v1643 = vunpack.c.h.b16 %v364
    %v1644 = vunpack.c.l.b16 %v365
    %v1645 = vunpack.c.h.b16 %v365
    %v1646 = vunpack.c.l.b16 %v366
    %v1647 = vunpack.c.h.b16 %v366
    %v1648 = vunpack.c.l.b16 %v367
    %v1649 = vunpack.c.h.b16 %v367
    %v1650 = vunpack.c.l.b16 %v368
    %v1651 = vunpack.c.h.b16 %v368
    %v1652 = vunpack.c.l.b16 %v369
    %v1653 = vunpack.c.h.b16 %v369
    %v1654 = vunpack.c.l.b16 %v370
    %v1655 = vunpack.c.h.b16 %v370
    %v1656 = vunpack.c.l.b16 %v371
    %v1657 = vunpack.c.h.b16 %v371
    %v1658 = vunpack.c.l.b16 %v372
    %v1659 = vunpack.c.h.b16 %v372
    %v1660 = vunpack.c.l.b16 %v373
    %v1661 = vunpack.c.h.b16 %v373
    %v1662 = vunpack.c.l.b16 %v374
    %v1663 = vunpack.c.h.b16 %v374
    %v1664 = vunpack.c.l.b16 %v375
    %v1665 = vunpack.c.h.b16 %v375
    %v1666 = vunpack.c.l.b16 %v376
    %v1667 = vunpack.c.h.b16 %v376
    %v1668 = vunpack.c.l.b16 %v377
    %v1669 = vunpack.c.h.b16 %v377
    %v1670 = vunpack.c.l.b16 %v378
    %v1671 = vunpack.c.h.b16 %v378
    %v1672 = vunpack.c.l.b16 %v379
    %v1673 = vunpack.c.h.b16 %v379
    %v1674 = vunpack.c.l.b16 %v380
    %v1675 = vunpack.c.h.b16 %v380
    %v1676 = vunpack.c.l.b16 %v381
    %v1677 = vunpack.c.h.b16 %v381
    %v1678 = vunpack.c.l.b16 %v382
    %v1679 = vunpack.c.h.b16 %v382
    %v1680 = vunpack.c.l.b16 %v383
    %v1681 = vunpack.c.h.b16 %v383
    %v1682 = vunpack.c.l.b16 %v384
    %v1683 = vunpack.c.h.b16 %v384
    %v1684 = vunpack.c.l.b16 %v385
    %v1685 = vunpack.c.h.b16 %v385
    %v1686 = vunpack.c.l.b16 %v386
    %v1687 = vunpack.c.h.b16 %v386
    %v1688 = vunpack.c.l.b16 %v387
    %v1689 = vunpack.c.h.b16 %v387
    %v1690 = vunpack.c.l.b16 %v388
    %v1691 = vunpack.c.h.b16 %v388
    %v1692 = vunpack.c.l.b16 %v389
    %v1693 = vunpack.c.h.b16 %v389
    %v1694 = vunpack.c.l.b16 %v390
    %v1695 = vunpack.c.h.b16 %v390
    %v1696 = vunpack.c.l.b16 %v391
    %v1697 = vunpack.c.h.b16 %v391
    %v1698 = vunpack.c.l.b16 %v392
    %v1699 = vunpack.c.h.b16 %v392
    %v1700 = vunpack.c.l.b16 %v393
    %v1701 = vunpack.c.h.b16 %v393
    %v1702 = vunpack.c.l.b16 %v394
    %v1703 = vunpack.c.h.b16 %v394
    %v1704 = vunpack.c.l.b16 %v395
    %v1705 = vunpack.c.h.b16 %v395
    %v1706 = vunpack.c.l.b16 %v396
    %v1707 = vunpack.c.h.b16 %v396
    %v1708 = vunpack.c.l.b16 %v397
    %v1709 = vunpack.c.h.b16 %v397
    %v1710 = vunpack.c.l.b16 %v398
    %v1711 = vunpack.c.h.b16 %v398
    %v1712 = vunpack.c.l.b16 %v399
    %v1713 = vunpack.c.h.b16 %v399
    %v1714 = vunpack.c.l.b16 %v400
    %v1715 = vunpack.c.h.b16 %v400
    %v1716 = vunpack.c.l.b16 %v401
    %v1717 = vunpack.c.h.b16 %v401
    %v1718 = vunpack.c.l.b16 %v402
    %v1719 = vunpack.c.h.b16 %v402
    %v1720 = vunpack.c.l.b16 %v403
    %v1721 = vunpack.c.h.b16 %v403
    %v1722 = vunpack.c.l.b16 %v404
    %v1723 = vunpack.c.h.b16 %v404
    %v1724 = vunpack.c.l.b16 %v405
    %v1725 = vunpack.c.h.b16 %v405
    %v1726 = vunpack.c.l.b16 %v406
    %v1727 = vunpack.c.h.b16 %v406
    %v1728 = vunpack.c.l.b16 %v407
    %v1729 = vunpack.c.h.b16 %v407
    %v1730 = vunpack.c.l.b16 %v408
    %v1731 = vunpack.c.h.b16 %v408
    %v1732 = vunpack.c.l.b16 %v409
    %v1733 = vunpack.c.h.b16 %v409
    %v1734 = vunpack.c.l.b16 %v410
    %v1735 = vunpack.c.h.b16 %v410
    %v1736 = vunpack.c.l.b16 %v411
    %v1737 = vunpack.c.h.b16 %v411
    %v1738 = vunpack.c.l.b16 %v412
    %v1739 = vunpack.c.h.b16 %v412
    %v1740 = vunpack.c.l.b16 %v413
    %v1741 = vunpack.c.h.b16 %v413
    %v1742 = vunpack.c.l.b16 %v414
    %v1743 = vunpack.c.h.b16 %v414
    %v1744 = vunpack.c.l.b16 %v415
    %v1745 = vunpack.c.h.b16 %v415
    %v1746 = vunpack.c.l.b16 %v416
    %v1747 = vunpack.c.h.b16 %v416
    %v1748 = vunpack.c.l.b16 %v417
    %v1749 = vunpack.c.h.b16 %v417
    %v1750 = vunpack.c.l.b16 %v418
    %v1751 = vunpack.c.h.b16 %v418
    %v1752 = vunpack.c.l.b16 %v419
    %v1753 = vunpack.c.h.b16 %v419
    %v1754 = vunpack.c.l.b16 %v420
    %v1755 = vunpack.c.h.b16 %v420
    %v1756 = vunpack.c.l.b16 %v421
    %v1757 = vunpack.c.h.b16 %v421
    %v1758 = vunpack.c.l.b16 %v422
    %v1759 = vunpack.c.h.b16 %v422
    %v1760 = vunpack.c.l.b16 %v423
    %v1761 = vunpack.c.h.b16 %v423
    %v1762 = vunpack.c.l.b16 %v424
    %v1763 = vunpack.c.h.b16 %v424
    %v1764 = vunpack.c.l.b16 %v425
    %v1765 = vunpack.c.h.b16 %v425
    %v1766 = vunpack.c.l.b16 %v426
    %v1767 = vunpack.c.h.b16 %v426
    %v1768 = vunpack.c.l.b16 %v427
    %v1769 = vunpack.c.h.b16 %v427
    %v1770 = vunpack.c.l.b16 %v428
    %v1771 = vunpack.c.h.b16 %v428
    %v1772 = vunpack.c.l.b16 %v429
    %v1773 = vunpack.c.h.b16 %v429
    %v1774 = vunpack.c.l.b16 %v430
    %v1775 = vunpack.c.h.b16 %v430
    %v1776 = vunpack.c.l.b16 %v431
    %v1777 = vunpack.c.h.b16 %v431
    %v1778 = vunpack.c.l.b16 %v432
    %v1779 = vunpack.c.h.b16 %v432
    %v1780 = vunpack.c.l.b16 %v433
    %v1781 = vunpack.c.h.b16 %v433
    %v1782 = vunpack.c.l.b16 %v434
    %v1783 = vunpack.c.h.b16 %v434
    %v1784 = vunpack.c.l.b16 %v435
    %v1785 = vunpack.c.h.b16 %v435
    %v1786 = vunpack.c.l.b16 %v436
    %v1787 = vunpack.c.h.b16 %v436
    %v1788 = vunpack.c.l.b16 %v437
    %v1789 = vunpack.c.h.b16 %v437
    %v1790 = vunpack.c.l.b16 %v438
    %v1791 = vunpack.c.h.b16 %v438
    %v1792 = vunpack.c.l.b16 %v439
    %v1793 = vunpack.c.h.b16 %v439
    %v1794 = vunpack.c.l.b16 %v440
    %v1795 = vunpack.c.h.b16 %v440
    %v1796 = vunpack.c.l.b16 %v441
    %v1797 = vunpack.c.h.b16 %v441
    %v1798 = vunpack.c.l.b16 %v442
    %v1799 = vunpack.c.h.b16 %v442
    %v1800 = vunpack.c.l.b16 %v443
    %v1801 = vunpack.c.h.b16 %v443
    %v1802 = vunpack.c.l.b16 %v444
    %v1803 = vunpack.c.h.b16 %v444
    %v1804 = vunpack.c.l.b16 %v445
    %v1805 = vunpack.c.h.b16 %v445
    %v1806 = vunpack.c.l.b16 %v446
    %v1807 = vunpack.c.h.b16 %v446
    %v1808 = vunpack.c.l.b16 %v447
    %v1809 = vunpack.c.h.b16 %v447
    %v1810 = vunpack.c.l.b16 %v448
    %v1811 = vunpack.c.h.b16 %v448
    %v1812 = vunpack.c.l.b16 %v449
    %v1813 = vunpack.c.h.b16 %v449
    %v1814 = vunpack.c.l.b16 %v450
    %v1815 = vunpack.c.h.b16 %v450
    %v1816 = vunpack.c.l.b16 %v451
    %v1817 = vunpack.c.h.b16 %v451
    %v1818 = vunpack.c.l.b16 %v452
    %v1819 = vunpack.c.h.b16 %v452
    %v1820 = vunpack.c.l.b16 %v453
    %v1821 = vunpack.c.h.b16 %v453
    %v1822 = vunpack.c.l.b16 %v454
    %v1823 = vunpack.c.h.b16 %v454
    %v1824 = vunpack.c.l.b16 %v455
    %v1825 = vunpack.c.h.b16 %v455
    %v1826 = vunpack.c.l.b16 %v456
    %v1827 = vunpack.c.h.b16 %v456
    %v1828 = vunpack.c.l.b16 %v457
    %v1829 = vunpack.c.h.b16 %v457
    %v1830 = vunpack.c.l.b16 %v458
    %v1831 = vunpack.c.h.b16 %v458
    %v1832 = vunpack.c.l.b16 %v459
    %v1833 = vunpack.c.h.b16 %v459
    %v1834 = vunpack.c.l.b16 %v460
    %v1835 = vunpack.c.h.b16 %v460
    %v1836 = vunpack.c.l.b16 %v461
    %v1837 = vunpack.c.h.b16 %v461
    %v1838 = vunpack.c.l.b16 %v462
    %v1839 = vunpack.c.h.b16 %v462
    %v1840 = vunpack.c.l.b16 %v463
    %v1841 = vunpack.c.h.b16 %v463
    %v1842 = vunpack.c.l.b16 %v464
    %v1843 = vunpack.c.h.b16 %v464
    %v1844 = vunpack.c.l.b16 %v465
    %v1845 = vunpack.c.h.b16 %v465
    %v1846 = vunpack.c.l.b16 %v466
    %v1847 = vunpack.c.h.b16 %v466
    %v1848 = vunpack.c.l.b16 %v467
    %v1849 = vunpack.c.h.b16 %v467
    %v1850 = vunpack.c.l.b16 %v468
    %v1851 = vunpack.c.h.b16 %v468
    %v1852 = vunpack.c.l.b16 %v469
    %v1853 = vunpack.c.h.b16 %v469
    %v1854 = vunpack.c.l.b16 %v470
    %v1855 = vunpack.c.h.b16 %v470
    %v1856 = vunpack.c.l.b16 %v471
    %v1857 = vunpack.c.h.b16 %v471
    %v1858 = vunpack.c.l.b16 %v472
    %v1859 = vunpack.c.h.b16 %v472
    %v1860 = vunpack.c.l.b16 %v473
    %v1861 = vunpack.c.h.b16 %v473
    %v1862 = vunpack.c.l.b16 %v474
    %v1863 = vunpack.c.h.b16 %v474
    %v1864 = vunpack.c.l.b16 %v475
    %v1865 = vunpack.c.h.b16 %v475
    %v1866 = vunpack.c.l.b16 %v476
    %v1867 = vunpack.c.h.b16 %v476
    %v1868 = vunpack.c.l.b16 %v477
    %v1869 = vunpack.c.h.b16 %v477
    %v1870 = vunpack.c.l.b16 %v478
    %v1871 = vunpack.c.h.b16 %v478
    %v1872 = vunpack.c.l.b16 %v479
    %v1873 = vunpack.c.h.b16 %v479
    %v1874 = vunpack.c.l.b16 %v480
    %v1875 = vunpack.c.h.b16 %v480
    %v1876 = vunpack.c.l.b16 %v481
    %v1877 = vunpack.c.h.b16 %v481
    %v1878 = vunpack.c.l.b16 %v482
    %v1879 = vunpack.c.h.b16 %v482
    %v1880 = vunpack.c.l.b16 %v483
    %v1881 = vunpack.c.h.b16 %v483
    %v1882 = vunpack.c.l.b16 %v484
    %v1883 = vunpack.c.h.b16 %v484
    %v1884 = vunpack.c.l.b16 %v485
    %v1885 = vunpack.c.h.b16 %v485
    %v1886 = vunpack.c.l.b16 %v486
    %v1887 = vunpack.c.h.b16 %v486
    %v1888 = vunpack.c.l.b16 %v487
    %v1889 = vunpack.c.h.b16 %v487
    %v1890 = vunpack.c.l.b16 %v488
    %v1891 = vunpack.c.h.b16 %v488
    %v1892 = vunpack.c.l.b16 %v489
    %v1893 = vunpack.c.h.b16 %v489
    %v1894 = vunpack.c.l.b16 %v490
    %v1895 = vunpack.c.h.b16 %v490
    %v1896 = vunpack.c.l.b16 %v491
    %v1897 = vunpack.c.h.b16 %v491
    %v1898 = vunpack.c.l.b16 %v492
    %v1899 = vunpack.c.h.b16 %v492
    %v1900 = vunpack.c.l.b16 %v493
    %v1901 = vunpack.c.h.b16 %v493
    %v1902 = vunpack.c.l.b16 %v494
    %v1903 = vunpack.c.h.b16 %v494
    %v1904 = vunpack.c.l.b16 %v495
    %v1905 = vunpack.c.h.b16 %v495
    %v1906 = vunpack.c.l.b16 %v496
    %v1907 = vunpack.c.h.b16 %v496
    %v1908 = vunpack.c.l.b16 %v497
    %v1909 = vunpack.c.h.b16 %v497
    %v1910 = vunpack.c.l.b16 %v498
    %v1911 = vunpack.c.h.b16 %v498
    %v1912 = vunpack.c.l.b16 %v499
    %v1913 = vunpack.c.h.b16 %v499
    %v1914 = vunpack.c.l.b16 %v500
    %v1915 = vunpack.c.h.b16 %v500
    %v1916 = vunpack.c.l.b16 %v501
    %v1917 = vunpack.c.h.b16 %v501
    %v1918 = vunpack.c.l.b16 %v502
    %v1919 = vunpack.c.h.b16 %v502
    %v1920 = vunpack.c.l.b16 %v503
    %v1921 = vunpack.c.h.b16 %v503
    %v1922 = vunpack.c.l.b16 %v504
    %v1923 = vunpack.c.h.b16 %v504
    %v1924 = vunpack.c.l.b16 %v505
    %v1925 = vunpack.c.h.b16 %v505
    %v1926 = vunpack.c.l.b16 %v506
    %v1927 = vunpack.c.h.b16 %v506
    %v1928 = vunpack.c.l.b16 %v507
    %v1929 = vunpack.c.h.b16 %v507
    %v1930 = vunpack.c.l.b16 %v508
    %v1931 = vunpack.c.h.b16 %v508
    %v1932 = vunpack.c.l.b16 %v509
    %v1933 = vunpack.c.h.b16 %v509
    %v1934 = vunpack.c.l.b16 %v510
    %v1935 = vunpack.c.h.b16 %v510
    %v1936 = vunpack.c.l.b16 %v511
    %v1937 = vunpack.c.h.b16 %v511
    %v1938 = vunpack.c.l.b16 %v512
    %v1939 = vunpack.c.h.b16 %v512
    %v1940 = vunpack.c.l.b16 %v513
    %v1941 = vunpack.c.h.b16 %v513
    %v1942 = vunpack.c.l.b16 %v514
    %v1943 = vunpack.c.h.b16 %v514
    %v1944 = vunpack.c.l.b16 %v515
    %v1945 = vunpack.c.h.b16 %v515
    %v1946 = vunpack.c.l.b16 %v516
    %v1947 = vunpack.c.h.b16 %v516
    %v1948 = vunpack.c.l.b16 %v517
    %v1949 = vunpack.c.h.b16 %v517
    %v1950 = vunpack.c.l.b16 %v518
    %v1951 = vunpack.c.h.b16 %v518
    %v1952 = vunpack.c.l.b16 %v519
    %v1953 = vunpack.c.h.b16 %v519
    %v1954 = vunpack.c.l.b16 %v520
    %v1955 = vunpack.c.h.b16 %v520
    %v1956 = vunpack.c.l.b16 %v521
    %v1957 = vunpack.c.h.b16 %v521
    %v1958 = vunpack.c.l.b16 %v522
    %v1959 = vunpack.c.h.b16 %v522
    %v1960 = vunpack.c.l.b16 %v523
    %v1961 = vunpack.c.h.b16 %v523
    %v1962 = vunpack.c.l.b16 %v524
    %v1963 = vunpack.c.h.b16 %v524
    %v1964 = vunpack.c.l.b16 %v525
    %v1965 = vunpack.c.h.b16 %v525
    %v1966 = vunpack.c.l.b16 %v526
    %v1967 = vunpack.c.h.b16 %v526
    %v1968 = vunpack.c.l.b16 %v527
    %v1969 = vunpack.c.h.b16 %v527
    %v1970 = vunpack.c.l.b16 %v528
    %v1971 = vunpack.c.h.b16 %v528
    %v1972 = vunpack.c.l.b16 %v529
    %v1973 = vunpack.c.h.b16 %v529
    %v1974 = vunpack.c.l.b16 %v530
    %v1975 = vunpack.c.h.b16 %v530
    %v1976 = vunpack.c.l.b16 %v531
    %v1977 = vunpack.c.h.b16 %v531
    %v1978 = vunpack.c.l.b16 %v532
    %v1979 = vunpack.c.h.b16 %v532
    %v1980 = vunpack.c.l.b16 %v533
    %v1981 = vunpack.c.h.b16 %v533
    %v1982 = vunpack.c.l.b16 %v534
    %v1983 = vunpack.c.h.b16 %v534
    %v1984 = vunpack.c.l.b16 %v535
    %v1985 = vunpack.c.h.b16 %v535
    %v1986 = vunpack.c.l.b16 %v536
    %v1987 = vunpack.c.h.b16 %v536
    %v1988 = vunpack.c.l.b16 %v537
    %v1989 = vunpack.c.h.b16 %v537
    %v1990 = vunpack.c.l.b16 %v538
    %v1991 = vunpack.c.h.b16 %v538
    %v1992 = vunpack.c.l.b16 %v539
    %v1993 = vunpack.c.h.b16 %v539
    %v1994 = vunpack.c.l.b16 %v540
    %v1995 = vunpack.c.h.b16 %v540
    %v1996 = vunpack.c.l.b16 %v541
    %v1997 = vunpack.c.h.b16 %v541
    %v1998 = vunpack.c.l.b16 %v542
    %v1999 = vunpack.c.h.b16 %v542
    %v2000 = vunpack.c.l.b16 %v543
    %v2001 = vunpack.c.h.b16 %v543
    %v2002 = vunpack.c.l.b16 %v544
    %v2003 = vunpack.c.h.b16 %v544
    %v2004 = vunpack.c.l.b16 %v545
    %v2005 = vunpack.c.h.b16 %v545
    %v2006 = vunpack.c.l.b16 %v546
    %v2007 = vunpack.c.h.b16 %v546
    %v2008 = vunpack.c.l.b16 %v547
    %v2009 = vunpack.c.h.b16 %v547
    %v2010 = vunpack.c.l.b16 %v548
    %v2011 = vunpack.c.h.b16 %v548
    %v2012 = vunpack.c.l.b16 %v549
    %v2013 = vunpack.c.h.b16 %v549
    %v2014 = vunpack.c.l.b16 %v550
    %v2015 = vunpack.c.h.b16 %v550
    %v2016 = vunpack.c.l.b16 %v551
    %v2017 = vunpack.c.h.b16 %v551
    %v2018 = vunpack.c.l.b16 %v552
    %v2019 = vunpack.c.h.b16 %v552
    %v2020 = vunpack.c.l.b16 %v553
    %v2021 = vunpack.c.h.b16 %v553
    %v2022 = vunpack.c.l.b16 %v554
    %v2023 = vunpack.c.h.b16 %v554
    %v2024 = vunpack.c.l.b16 %v555
    %v2025 = vunpack.c.h.b16 %v555
    %v2026 = vunpack.c.l.b16 %v556
    %v2027 = vunpack.c.h.b16 %v556
    %v2028 = vunpack.c.l.b16 %v557
    %v2029 = vunpack.c.h.b16 %v557
    %v2030 = vunpack.c.l.b16 %v558
    %v2031 = vunpack.c.h.b16 %v558
    %v2032 = vunpack.c.l.b16 %v559
    %v2033 = vunpack.c.h.b16 %v559
    %v2034 = vunpack.c.l.b16 %v560
    %v2035 = vunpack.c.h.b16 %v560
    %v2036 = vunpack.c.l.b16 %v561
    %v2037 = vunpack.c.h.b16 %v561
    %v2038 = vunpack.c.l.b16 %v562
    %v2039 = vunpack.c.h.b16 %v562
    %v2040 = vunpack.c.l.b16 %v563
    %v2041 = vunpack.c.h.b16 %v563
    %v2042 = vunpack.c.l.b16 %v564
    %v2043 = vunpack.c.h.b16 %v564
    %v2044 = vunpack.c.l.b16 %v565
    %v2045 = vunpack.c.h.b16 %v565
    %v2046 = vunpack.c.l.b16 %v566
    %v2047 = vunpack.c.h.b16 %v566
    %v2048 = vunpack.c.l.b16 %v567
    %v2049 = vunpack.c.h.b16 %v567
    %v2050 = vunpack.c.l.b16 %v568
    %v2051 = vunpack.c.h.b16 %v568
    %v2052 = vunpack.c.l.b16 %v569
    %v2053 = vunpack.c.h.b16 %v569
    %v2054 = vunpack.c.l.b16 %v570
    %v2055 = vunpack.c.h.b16 %v570
    %v2056 = vunpack.c.l.b16 %v571
    %v2057 = vunpack.c.h.b16 %v571
    %v2058 = vunpack.c.l.b16 %v572
    %v2059 = vunpack.c.h.b16 %v572
    %v2060 = vunpack.c.l.b16 %v573
    %v2061 = vunpack.c.h.b16 %v573
    %v2062 = vunpack.c.l.b16 %v574
    %v2063 = vunpack.c.h.b16 %v574
    %v2064 = vunpack.c.l.b16 %v575
    %v2065 = vunpack.c.h.b16 %v575
    %v2066 = vunpack.c.l.b16 %v576
    %v2067 = vunpack.c.h.b16 %v576
    %v2068 = vunpack.c.l.b16 %v577
    %v2069 = vunpack.c.h.b16 %v577
    %v2070 = vunpack.c.l.b16 %v578
    %v2071 = vunpack.c.h.b16 %v578
    %v2072 = vunpack.c.l.b16 %v579
    %v2073 = vunpack.c.h.b16 %v579
    %v2074 = vunpack.c.l.b16 %v580
    %v2075 = vunpack.c.h.b16 %v580
    %v2076 = vunpack.c.l.b16 %v581
    %v2077 = vunpack.c.h.b16 %v581
    %v2078 = vunpack.c.l.b16 %v582
    %v2079 = vunpack.c.h.b16 %v582
    %v2080 = vunpack.c.l.b16 %v583
    %v2081 = vunpack.c.h.b16 %v583
    %v2082 = vunpack.c.l.b16 %v584
    %v2083 = vunpack.c.h.b16 %v584
    %v2084 = vunpack.c.l.b16 %v585
    %v2085 = vunpack.c.h.b16 %v585
    %v2086 = vunpack.c.l.b16 %v586
    %v2087 = vunpack.c.h.b16 %v586
    %v2088 = vunpack.c.l.b16 %v587
    %v2089 = vunpack.c.h.b16 %v587
    %v2090 = vunpack.c.l.b16 %v588
    %v2091 = vunpack.c.h.b16 %v588
    %v2092 = vunpack.c.l.b16 %v589
    %v2093 = vunpack.c.h.b16 %v589
    %v2094 = vunpack.c.l.b16 %v590
    %v2095 = vunpack.c.h.b16 %v590
    %v2096 = vunpack.c.l.b16 %v591
    %v2097 = vunpack.c.h.b16 %v591
    %v2098 = vunpack.c.l.b16 %v592
    %v2099 = vunpack.c.h.b16 %v592
    %v2100 = vunpack.c.l.b16 %v593
    %v2101 = vunpack.c.h.b16 %v593
    %v2102 = vunpack.c.l.b16 %v594
    %v2103 = vunpack.c.h.b16 %v594
    %v2104 = vunpack.c.l.b16 %v595
    %v2105 = vunpack.c.h.b16 %v595
    %v2106 = vunpack.c.l.b16 %v596
    %v2107 = vunpack.c.h.b16 %v596
    %v2108 = vunpack.c.l.b16 %v597
    %v2109 = vunpack.c.h.b16 %v597
    %v2110 = vunpack.c.l.b16 %v598
    %v2111 = vunpack.c.h.b16 %v598
    %v2112 = vunpack.c.l.b16 %v599
    %v2113 = vunpack.c.h.b16 %v599
    %v2114 = vunpack.c.l.b16 %v600
    %v2115 = vunpack.c.h.b16 %v600
    %v2116 = vunpack.c.l.b16 %v601
    %v2117 = vunpack.c.h.b16 %v601
    %v2118 = vunpack.c.l.b16 %v602
    %v2119 = vunpack.c.h.b16 %v602
    %v2120 = vunpack.c.l.b16 %v603
    %v2121 = vunpack.c.h.b16 %v603
    %v2122 = vunpack.c.l.b16 %v604
    %v2123 = vunpack.c.h.b16 %v604
    %v2124 = vunpack.c.l.b16 %v605
    %v2125 = vunpack.c.h.b16 %v605
    %v2126 = vunpack.c.l.b16 %v606
    %v2127 = vunpack.c.h.b16 %v606
    %v2128 = vunpack.c.l.b16 %v607
    %v2129 = vunpack.c.h.b16 %v607
    %v2130 = vunpack.c.l.b16 %v608
    %v2131 = vunpack.c.h.b16 %v608
    %v2132 = vunpack.c.l.b16 %v609
    %v2133 = vunpack.c.h.b16 %v609
    %v2134 = vunpack.c.l.b16 %v610
    %v2135 = vunpack.c.h.b16 %v610
    %v2136 = vunpack.c.l.b16 %v611
    %v2137 = vunpack.c.h.b16 %v611
    %v2138 = vunpack.c.l.b16 %v612
    %v2139 = vunpack.c.h.b16 %v612
    %v2140 = vunpack.c.l.b16 %v613
    %v2141 = vunpack.c.h.b16 %v613
    %v2142 = vunpack.c.l.b16 %v614
    %v2143 = vunpack.c.h.b16 %v614
    %v2144 = vunpack.c.l.b16 %v615
    %v2145 = vunpack.c.h.b16 %v615
    %v2146 = vunpack.c.l.b16 %v616
    %v2147 = vunpack.c.h.b16 %v616
    %v2148 = vunpack.c.l.b16 %v617
    %v2149 = vunpack.c.h.b16 %v617
    %v2150 = vunpack.c.l.b16 %v618
    %v2151 = vunpack.c.h.b16 %v618
    %v2152 = vunpack.c.l.b16 %v619
    %v2153 = vunpack.c.h.b16 %v619
    %v2154 = vunpack.c.l.b16 %v620
    %v2155 = vunpack.c.h.b16 %v620
    %v2156 = vunpack.c.l.b16 %v621
    %v2157 = vunpack.c.h.b16 %v621
    %v2158 = vpack.c.b16 %v1142, %v1134
    %v2159 = vpack.c.b16 %v1143, %v1135
    %v2160 = vpack.c.b16 %v1144, %v1136
    %v2161 = vpack.c.b16 %v1145, %v1137
    %v2162 = vpack.c.b16 %v1146, %v1138
    %v2163 = vpack.c.b16 %v1147, %v1139
    %v2164 = vpack.c.b16 %v1148, %v1140
    %v2165 = vpack.c.b16 %v1149, %v1141
    %v2166 = vpack.c.b16 %v1158, %v1150
    %v2167 = vpack.c.b16 %v1159, %v1151
    %v2168 = vpack.c.b16 %v1160, %v1152
    %v2169 = vpack.c.b16 %v1161, %v1153
    %v2170 = vpack.c.b16 %v1162, %v1154
    %v2171 = vpack.c.b16 %v1163, %v1155
    %v2172 = vpack.c.b16 %v1164, %v1156
    %v2173 = vpack.c.b16 %v1165, %v1157
    %v2174 = vpack.c.b16 %v1174, %v1166
    %v2175 = vpack.c.b16 %v1175, %v1167
    %v2176 = vpack.c.b16 %v1176, %v1168
    %v2177 = vpack.c.b16 %v1177, %v1169
    %v2178 = vpack.c.b16 %v1178, %v1170
    %v2179 = vpack.c.b16 %v1179, %v1171
    %v2180 = vpack.c.b16 %v1180, %v1172
    %v2181 = vpack.c.b16 %v1181, %v1173
    %v2182 = vpack.c.b16 %v1190, %v1182
    %v2183 = vpack.c.b16 %v1191, %v1183
    %v2184 = vpack.c.b16 %v1192, %v1184
    %v2185 = vpack.c.b16 %v1193, %v1185
    %v2186 = vpack.c.b16 %v1194, %v1186
    %v2187 = vpack.c.b16 %v1195, %v1187
    %v2188 = vpack.c.b16 %v1196, %v1188
    %v2189 = vpack.c.b16 %v1197, %v1189
    %v2190 = vpack.c.b16 %v1206, %v1198
    %v2191 = vpack.c.b16 %v1207, %v1199
    %v2192 = vpack.c.b16 %v1208, %v1200
    %v2193 = vpack.c.b16 %v1209, %v1201
    %v2194 = vpack.c.b16 %v1210, %v1202
    %v2195 = vpack.c.b16 %v1211, %v1203
    %v2196 = vpack.c.b16 %v1212, %v1204
    %v2197 = vpack.c.b16 %v1213, %v1205
    %v2198 = vpack.c.b16 %v1222, %v1214
    %v2199 = vpack.c.b16 %v1223, %v1215
    %v2200 = vpack.c.b16 %v1224, %v1216
    %v2201 = vpack.c.b16 %v1225, %v1217
    %v2202 = vpack.c.b16 %v1226, %v1218
    %v2203 = vpack.c.b16 %v1227, %v1219
    %v2204 = vpack.c.b16 %v1228, %v1220
    %v2205 = vpack.c.b16 %v1229, %v1221
    %v2206 = vpack.c.b16 %v1238, %v1230
    %v2207 = vpack.c.b16 %v1239, %v1231
    %v2208 = vpack.c.b16 %v1240, %v1232
    %v2209 = vpack.c.b16 %v1241, %v1233
    %v2210 = vpack.c.b16 %v1242, %v1234
    %v2211 = vpack.c.b16 %v1243, %v1235
    %v2212 = vpack.c.b16 %v1244, %v1236
    %v2213 = vpack.c.b16 %v1245, %v1237
    %v2214 = vpack.c.b16 %v1254, %v1246
    %v2215 = vpack.c.b16 %v1255, %v1247
    %v2216 = vpack.c.b16 %v1256, %v1248
    %v2217 = vpack.c.b16 %v1257, %v1249
    %v2218 = vpack.c.b16 %v1258, %v1250
    %v2219 = vpack.c.b16 %v1259, %v1251
    %v2220 = vpack.c.b16 %v1260, %v1252
    %v2221 = vpack.c.b16 %v1261, %v1253
    %v2222 = vpack.c.b16 %v1270, %v1262
    %v2223 = vpack.c.b16 %v1271, %v1263
    %v2224 = vpack.c.b16 %v1272, %v1264
    %v2225 = vpack.c.b16 %v1273, %v1265
    %v2226 = vpack.c.b16 %v1274, %v1266
    %v2227 = vpack.c.b16 %v1275, %v1267
    %v2228 = vpack.c.b16 %v1276, %v1268
    %v2229 = vpack.c.b16 %v1277, %v1269
    %v2230 = vpack.c.b16 %v1286, %v1278
    %v2231 = vpack.c.b16 %v1287, %v1279
    %v2232 = vpack.c.b16 %v1288, %v1280
    %v2233 = vpack.c.b16 %v1289, %v1281
    %v2234 = vpack.c.b16 %v1290, %v1282
    %v2235 = vpack.c.b16 %v1291, %v1283
    %v2236 = vpack.c.b16 %v1292, %v1284
    %v2237 = vpack.c.b16 %v1293, %v1285
    %v2238 = vpack.c.b16 %v1302, %v1294
    %v2239 = vpack.c.b16 %v1303, %v1295
    %v2240 = vpack.c.b16 %v1304, %v1296
    %v2241 = vpack.c.b16 %v1305, %v1297
    %v2242 = vpack.c.b16 %v1306, %v1298
    %v2243 = vpack.c.b16 %v1307, %v1299
    %v2244 = vpack.c.b16 %v1308, %v1300
    %v2245 = vpack.c.b16 %v1309, %v1301
    %v2246 = vpack.c.b16 %v1318, %v1310
    %v2247 = vpack.c.b16 %v1319, %v1311
    %v2248 = vpack.c.b16 %v1320, %v1312
    %v2249 = vpack.c.b16 %v1321, %v1313
    %v2250 = vpack.c.b16 %v1322, %v1314
    %v2251 = vpack.c.b16 %v1323, %v1315
    %v2252 = vpack.c.b16 %v1324, %v1316
    %v2253 = vpack.c.b16 %v1325, %v1317
    %v2254 = vpack.c.b16 %v1334, %v1326
    %v2255 = vpack.c.b16 %v1335, %v1327
    %v2256 = vpack.c.b16 %v1336, %v1328
    %v2257 = vpack.c.b16 %v1337, %v1329
    %v2258 = vpack.c.b16 %v1338, %v1330
    %v2259 = vpack.c.b16 %v1339, %v1331
    %v2260 = vpack.c.b16 %v1340, %v1332
    %v2261 = vpack.c.b16 %v1341, %v1333
    %v2262 = vpack.c.b16 %v1350, %v1342
    %v2263 = vpack.c.b16 %v1351, %v1343
    %v2264 = vpack.c.b16 %v1352, %v1344
    %v2265 = vpack.c.b16 %v1353, %v1345
    %v2266 = vpack.c.b16 %v1354, %v1346
    %v2267 = vpack.c.b16 %v1355, %v1347
    %v2268 = vpack.c.b16 %v1356, %v1348
    %v2269 = vpack.c.b16 %v1357, %v1349
    %v2270 = vpack.c.b16 %v1366, %v1358
    %v2271 = vpack.c.b16 %v1367, %v1359
    %v2272 = vpack.c.b16 %v1368, %v1360
    %v2273 = vpack.c.b16 %v1369, %v1361
    %v2274 = vpack.c.b16 %v1370, %v1362
    %v2275 = vpack.c.b16 %v1371, %v1363
    %v2276 = vpack.c.b16 %v1372, %v1364
    %v2277 = vpack.c.b16 %v1373, %v1365
    %v2278 = vpack.c.b16 %v1382, %v1374
    %v2279 = vpack.c.b16 %v1383, %v1375
    %v2280 = vpack.c.b16 %v1384, %v1376
    %v2281 = vpack.c.b16 %v1385, %v1377
    %v2282 = vpack.c.b16 %v1386, %v1378
    %v2283 = vpack.c.b16 %v1387, %v1379
    %v2284 = vpack.c.b16 %v1388, %v1380
    %v2285 = vpack.c.b16 %v1389, %v1381
    %v2286 = vpack.c.b16 %v1398, %v1390
    %v2287 = vpack.c.b16 %v1399, %v1391
    %v2288 = vpack.c.b16 %v1400, %v1392
    %v2289 = vpack.c.b16 %v1401, %v1393
    %v2290 = vpack.c.b16 %v1402, %v1394
    %v2291 = vpack.c.b16 %v1403, %v1395
    %v2292 = vpack.c.b16 %v1404, %v1396
    %v2293 = vpack.c.b16 %v1405, %v1397
    %v2294 = vpack.c.b16 %v1414, %v1406
    %v2295 = vpack.c.b16 %v1415, %v1407
    %v2296 = vpack.c.b16 %v1416, %v1408
    %v2297 = vpack.c.b16 %v1417, %v1409
    %v2298 = vpack.c.b16 %v1418, %v1410
    %v2299 = vpack.c.b16 %v1419, %v1411
    %v2300 = vpack.c.b16 %v1420, %v1412
    %v2301 = vpack.c.b16 %v1421, %v1413
    %v2302 = vpack.c.b16 %v1430, %v1422
    %v2303 = vpack.c.b16 %v1431, %v1423
    %v2304 = vpack.c.b16 %v1432, %v1424
    %v2305 = vpack.c.b16 %v1433, %v1425
    %v2306 = vpack.c.b16 %v1434, %v1426
    %v2307 = vpack.c.b16 %v1435, %v1427
    %v2308 = vpack.c.b16 %v1436, %v1428
    %v2309 = vpack.c.b16 %v1437, %v1429
    %v2310 = vpack.c.b16 %v1446, %v1438
    %v2311 = vpack.c.b16 %v1447, %v1439
    %v2312 = vpack.c.b16 %v1448, %v1440
    %v2313 = vpack.c.b16 %v1449, %v1441
    %v2314 = vpack.c.b16 %v1450, %v1442
    %v2315 = vpack.c.b16 %v1451, %v1443
    %v2316 = vpack.c.b16 %v1452, %v1444
    %v2317 = vpack.c.b16 %v1453, %v1445
    %v2318 = vpack.c.b16 %v1462, %v1454
    %v2319 = vpack.c.b16 %v1463, %v1455
    %v2320 = vpack.c.b16 %v1464, %v1456
    %v2321 = vpack.c.b16 %v1465, %v1457
    %v2322 = vpack.c.b16 %v1466, %v1458
    %v2323 = vpack.c.b16 %v1467, %v1459
    %v2324 = vpack.c.b16 %v1468, %v1460
    %v2325 = vpack.c.b16 %v1469, %v1461
    %v2326 = vpack.c.b16 %v1478, %v1470
    %v2327 = vpack.c.b16 %v1479, %v1471
    %v2328 = vpack.c.b16 %v1480, %v1472
    %v2329 = vpack.c.b16 %v1481, %v1473
    %v2330 = vpack.c.b16 %v1482, %v1474
    %v2331 = vpack.c.b16 %v1483, %v1475
    %v2332 = vpack.c.b16 %v1484, %v1476
    %v2333 = vpack.c.b16 %v1485, %v1477
    %v2334 = vpack.c.b16 %v1494, %v1486
    %v2335 = vpack.c.b16 %v1495, %v1487
    %v2336 = vpack.c.b16 %v1496, %v1488
    %v2337 = vpack.c.b16 %v1497, %v1489
    %v2338 = vpack.c.b16 %v1498, %v1490
    %v2339 = vpack.c.b16 %v1499, %v1491
    %v2340 = vpack.c.b16 %v1500, %v1492
    %v2341 = vpack.c.b16 %v1501, %v1493
    %v2342 = vpack.c.b16 %v1510, %v1502
    %v2343 = vpack.c.b16 %v1511, %v1503
    %v2344 = vpack.c.b16 %v1512, %v1504
    %v2345 = vpack.c.b16 %v1513, %v1505
    %v2346 = vpack.c.b16 %v1514, %v1506
    %v2347 = vpack.c.b16 %v1515, %v1507
    %v2348 = vpack.c.b16 %v1516, %v1508
    %v2349 = vpack.c.b16 %v1517, %v1509
    %v2350 = vpack.c.b16 %v1526, %v1518
    %v2351 = vpack.c.b16 %v1527, %v1519
    %v2352 = vpack.c.b16 %v1528, %v1520
    %v2353 = vpack.c.b16 %v1529, %v1521
    %v2354 = vpack.c.b16 %v1530, %v1522
    %v2355 = vpack.c.b16 %v1531, %v1523
    %v2356 = vpack.c.b16 %v1532, %v1524
    %v2357 = vpack.c.b16 %v1533, %v1525
    %v2358 = vpack.c.b16 %v1542, %v1534
    %v2359 = vpack.c.b16 %v1543, %v1535
    %v2360 = vpack.c.b16 %v1544, %v1536
    %v2361 = vpack.c.b16 %v1545, %v1537
    %v2362 = vpack.c.b16 %v1546, %v1538
    %v2363 = vpack.c.b16 %v1547, %v1539
    %v2364 = vpack.c.b16 %v1548, %v1540
    %v2365 = vpack.c.b16 %v1549, %v1541
    %v2366 = vpack.c.b16 %v1558, %v1550
    %v2367 = vpack.c.b16 %v1559, %v1551
    %v2368 = vpack.c.b16 %v1560, %v1552
    %v2369 = vpack.c.b16 %v1561, %v1553
    %v2370 = vpack.c.b16 %v1562, %v1554
    %v2371 = vpack.c.b16 %v1563, %v1555
    %v2372 = vpack.c.b16 %v1564, %v1556
    %v2373 = vpack.c.b16 %v1565, %v1557
    %v2374 = vpack.c.b16 %v1574, %v1566
    %v2375 = vpack.c.b16 %v1575, %v1567
    %v2376 = vpack.c.b16 %v1576, %v1568
    %v2377 = vpack.c.b16 %v1577, %v1569
    %v2378 = vpack.c.b16 %v1578, %v1570
    %v2379 = vpack.c.b16 %v1579, %v1571
    %v2380 = vpack.c.b16 %v1580, %v1572
    %v2381 = vpack.c.b16 %v1581, %v1573
    %v2382 = vpack.c.b16 %v1590, %v1582
    %v2383 = vpack.c.b16 %v1591, %v1583
    %v2384 = vpack.c.b16 %v1592, %v1584
    %v2385 = vpack.c.b16 %v1593, %v1585
    %v2386 = vpack.c.b16 %v1594, %v1586
    %v2387 = vpack.c.b16 %v1595, %v1587
    %v2388 = vpack.c.b16 %v1596, %v1588
    %v2389 = vpack.c.b16 %v1597, %v1589
    %v2390 = vpack.c.b16 %v1606, %v1598
    %v2391 = vpack.c.b16 %v1607, %v1599
    %v2392 = vpack.c.b16 %v1608, %v1600
    %v2393 = vpack.c.b16 %v1609, %v1601
    %v2394 = vpack.c.b16 %v1610, %v1602
    %v2395 = vpack.c.b16 %v1611, %v1603
    %v2396 = vpack.c.b16 %v1612, %v1604
    %v2397 = vpack.c.b16 %v1613, %v1605
    %v2398 = vpack.c.b16 %v1622, %v1614
    %v2399 = vpack.c.b16 %v1623, %v1615
    %v2400 = vpack.c.b16 %v1624, %v1616
    %v2401 = vpack.c.b16 %v1625, %v1617
    %v2402 = vpack.c.b16 %v1626, %v1618
    %v2403 = vpack.c.b16 %v1627, %v1619
    %v2404 = vpack.c.b16 %v1628, %v1620
    %v2405 = vpack.c.b16 %v1629, %v1621
    %v2406 = vpack.c.b16 %v1638, %v1630
    %v2407 = vpack.c.b16 %v1639, %v1631
    %v2408 = vpack.c.b16 %v1640, %v1632
    %v2409 = vpack.c.b16 %v1641, %v1633
    %v2410 = vpack.c.b16 %v1642, %v1634
    %v2411 = vpack.c.b16 %v1643, %v1635
    %v2412 = vpack.c.b16 %v1644, %v1636
    %v2413 = vpack.c.b16 %v1645, %v1637
    %v2414 = vpack.c.b16 %v1654, %v1646
    %v2415 = vpack.c.b16 %v1655, %v1647
    %v2416 = vpack.c.b16 %v1656, %v1648
    %v2417 = vpack.c.b16 %v1657, %v1649
    %v2418 = vpack.c.b16 %v1658, %v1650
    %v2419 = vpack.c.b16 %v1659, %v1651
    %v2420 = vpack.c.b16 %v1660, %v1652
    %v2421 = vpack.c.b16 %v1661, %v1653
    %v2422 = vpack.c.b16 %v1670, %v1662
    %v2423 = vpack.c.b16 %v1671, %v1663
    %v2424 = vpack.c.b16 %v1672, %v1664
    %v2425 = vpack.c.b16 %v1673, %v1665
    %v2426 = vpack.c.b16 %v1674, %v1666
    %v2427 = vpack.c.b16 %v1675, %v1667
    %v2428 = vpack.c.b16 %v1676, %v1668
    %v2429 = vpack.c.b16 %v1677, %v1669
    %v2430 = vpack.c.b16 %v1686, %v1678
    %v2431 = vpack.c.b16 %v1687, %v1679
    %v2432 = vpack.c.b16 %v1688, %v1680
    %v2433 = vpack.c.b16 %v1689, %v1681
    %v2434 = vpack.c.b16 %v1690, %v1682
    %v2435 = vpack.c.b16 %v1691, %v1683
    %v2436 = vpack.c.b16 %v1692, %v1684
    %v2437 = vpack.c.b16 %v1693, %v1685
    %v2438 = vpack.c.b16 %v1702, %v1694
    %v2439 = vpack.c.b16 %v1703, %v1695
    %v2440 = vpack.c.b16 %v1704, %v1696
    %v2441 = vpack.c.b16 %v1705, %v1697
    %v2442 = vpack.c.b16 %v1706, %v1698
    %v2443 = vpack.c.b16 %v1707, %v1699
    %v2444 = vpack.c.b16 %v1708, %v1700
    %v2445 = vpack.c.b16 %v1709, %v1701
    %v2446 = vpack.c.b16 %v1718, %v1710
    %v2447 = vpack.c.b16 %v1719, %v1711
    %v2448 = vpack.c.b16 %v1720, %v1712
    %v2449 = vpack.c.b16 %v1721, %v1713
    %v2450 = vpack.c.b16 %v1722, %v1714
    %v2451 = vpack.c.b16 %v1723, %v1715
    %v2452 = vpack.c.b16 %v1724, %v1716
    %v2453 = vpack.c.b16 %v1725, %v1717
    %v2454 = vpack.c.b16 %v1734, %v1726
    %v2455 = vpack.c.b16 %v1735, %v1727
    %v2456 = vpack.c.b16 %v1736, %v1728
    %v2457 = vpack.c.b16 %v1737, %v1729
    %v2458 = vpack.c.b16 %v1738, %v1730
    %v2459 = vpack.c.b16 %v1739, %v1731
    %v2460 = vpack.c.b16 %v1740, %v1732
    %v2461 = vpack.c.b16 %v1741, %v1733
    %v2462 = vpack.c.b16 %v1750, %v1742
    %v2463 = vpack.c.b16 %v1751, %v1743
    %v2464 = vpack.c.b16 %v1752, %v1744
    %v2465 = vpack.c.b16 %v1753, %v1745
    %v2466 = vpack.c.b16 %v1754, %v1746
    %v2467 = vpack.c.b16 %v1755, %v1747
    %v2468 = vpack.c.b16 %v1756, %v1748
    %v2469 = vpack.c.b16 %v1757, %v1749
    %v2470 = vpack.c.b16 %v1766, %v1758
    %v2471 = vpack.c.b16 %v1767, %v1759
    %v2472 = vpack.c.b16 %v1768, %v1760
    %v2473 = vpack.c.b16 %v1769, %v1761
    %v2474 = vpack.c.b16 %v1770, %v1762
    %v2475 = vpack.c.b16 %v1771, %v1763
    %v2476 = vpack.c.b16 %v1772, %v1764
    %v2477 = vpack.c.b16 %v1773, %v1765
    %v2478 = vpack.c.b16 %v1782, %v1774
    %v2479 = vpack.c.b16 %v1783, %v1775
    %v2480 = vpack.c.b16 %v1784, %v1776
    %v2481 = vpack.c.b16 %v1785, %v1777
    %v2482 = vpack.c.b16 %v1786, %v1778
    %v2483 = vpack.c.b16 %v1787, %v1779
    %v2484 = vpack.c.b16 %v1788, %v1780
    %v2485 = vpack.c.b16 %v1789, %v1781
    %v2486 = vpack.c.b16 %v1798, %v1790
    %v2487 = vpack.c.b16 %v1799, %v1791
    %v2488 = vpack.c.b16 %v1800, %v1792
    %v2489 = vpack.c.b16 %v1801, %v1793
    %v2490 = vpack.c.b16 %v1802, %v1794
    %v2491 = vpack.c.b16 %v1803, %v1795
    %v2492 = vpack.c.b16 %v1804, %v1796
    %v2493 = vpack.c.b16 %v1805, %v1797
    %v2494 = vpack.c.b16 %v1814, %v1806
    %v2495 = vpack.c.b16 %v1815, %v1807
    %v2496 = vpack.c.b16 %v1816, %v1808
    %v2497 = vpack.c.b16 %v1817, %v1809
    %v2498 = vpack.c.b16 %v1818, %v1810
    %v2499 = vpack.c.b16 %v1819, %v1811
    %v2500 = vpack.c.b16 %v1820, %v1812
    %v2501 = vpack.c.b16 %v1821, %v1813
    %v2502 = vpack.c.b16 %v1830, %v1822
    %v2503 = vpack.c.b16 %v1831, %v1823
    %v2504 = vpack.c.b16 %v1832, %v1824
    %v2505 = vpack.c.b16 %v1833, %v1825
    %v2506 = vpack.c.b16 %v1834, %v1826
    %v2507 = vpack.c.b16 %v1835, %v1827
    %v2508 = vpack.c.b16 %v1836, %v1828
    %v2509 = vpack.c.b16 %v1837, %v1829
    %v2510 = vpack.c.b16 %v1846, %v1838
    %v2511 = vpack.c.b16 %v1847, %v1839
    %v2512 = vpack.c.b16 %v1848, %v1840
    %v2513 = vpack.c.b16 %v1849, %v1841
    %v2514 = vpack.c.b16 %v1850, %v1842
    %v2515 = vpack.c.b16 %v1851, %v1843
    %v2516 = vpack.c.b16 %v1852, %v1844
    %v2517 = vpack.c.b16 %v1853, %v1845
    %v2518 = vpack.c.b16 %v1862, %v1854
    %v2519 = vpack.c.b16 %v1863, %v1855
    %v2520 = vpack.c.b16 %v1864, %v1856
    %v2521 = vpack.c.b16 %v1865, %v1857
    %v2522 = vpack.c.b16 %v1866, %v1858
    %v2523 = vpack.c.b16 %v1867, %v1859
    %v2524 = vpack.c.b16 %v1868, %v1860
    %v2525 = vpack.c.b16 %v1869, %v1861
    %v2526 = vpack.c.b16 %v1878, %v1870
    %v2527 = vpack.c.b16 %v1879, %v1871
    %v2528 = vpack.c.b16 %v1880, %v1872
    %v2529 = vpack.c.b16 %v1881, %v1873
    %v2530 = vpack.c.b16 %v1882, %v1874
    %v2531 = vpack.c.b16 %v1883, %v1875
    %v2532 = vpack.c.b16 %v1884, %v1876
    %v2533 = vpack.c.b16 %v1885, %v1877
    %v2534 = vpack.c.b16 %v1894, %v1886
    %v2535 = vpack.c.b16 %v1895, %v1887
    %v2536 = vpack.c.b16 %v1896, %v1888
    %v2537 = vpack.c.b16 %v1897, %v1889
    %v2538 = vpack.c.b16 %v1898, %v1890
    %v2539 = vpack.c.b16 %v1899, %v1891
    %v2540 = vpack.c.b16 %v1900, %v1892
    %v2541 = vpack.c.b16 %v1901, %v1893
    %v2542 = vpack.c.b16 %v1910, %v1902
    %v2543 = vpack.c.b16 %v1911, %v1903
    %v2544 = vpack.c.b16 %v1912, %v1904
    %v2545 = vpack.c.b16 %v1913, %v1905
    %v2546 = vpack.c.b16 %v1914, %v1906
    %v2547 = vpack.c.b16 %v1915, %v1907
    %v2548 = vpack.c.b16 %v1916, %v1908
    %v2549 = vpack.c.b16 %v1917, %v1909
    %v2550 = vpack.c.b16 %v1926, %v1918
    %v2551 = vpack.c.b16 %v1927, %v1919
    %v2552 = vpack.c.b16 %v1928, %v1920
    %v2553 = vpack.c.b16 %v1929, %v1921
    %v2554 = vpack.c.b16 %v1930, %v1922
    %v2555 = vpack.c.b16 %v1931, %v1923
    %v2556 = vpack.c.b16 %v1932, %v1924
    %v2557 = vpack.c.b16 %v1933, %v1925
    %v2558 = vpack.c.b16 %v1942, %v1934
    %v2559 = vpack.c.b16 %v1943, %v1935
    %v2560 = vpack.c.b16 %v1944, %v1936
    %v2561 = vpack.c.b16 %v1945, %v1937
    %v2562 = vpack.c.b16 %v1946, %v1938
    %v2563 = vpack.c.b16 %v1947, %v1939
    %v2564 = vpack.c.b16 %v1948, %v1940
    %v2565 = vpack.c.b16 %v1949, %v1941
    %v2566 = vpack.c.b16 %v1958, %v1950
    %v2567 = vpack.c.b16 %v1959, %v1951
    %v2568 = vpack.c.b16 %v1960, %v1952
    %v2569 = vpack.c.b16 %v1961, %v1953
    %v2570 = vpack.c.b16 %v1962, %v1954
    %v2571 = vpack.c.b16 %v1963, %v1955
    %v2572 = vpack.c.b16 %v1964, %v1956
    %v2573 = vpack.c.b16 %v1965, %v1957
    %v2574 = vpack.c.b16 %v1974, %v1966
    %v2575 = vpack.c.b16 %v1975, %v1967
    %v2576 = vpack.c.b16 %v1976, %v1968
    %v2577 = vpack.c.b16 %v1977, %v1969
    %v2578 = vpack.c.b16 %v1978, %v1970
    %v2579 = vpack.c.b16 %v1979, %v1971
    %v2580 = vpack.c.b16 %v1980, %v1972
    %v2581 = vpack.c.b16 %v1981, %v1973
    %v2582 = vpack.c.b16 %v1990, %v1982
    %v2583 = vpack.c.b16 %v1991, %v1983
    %v2584 = vpack.c.b16 %v1992, %v1984
    %v2585 = vpack.c.b16 %v1993, %v1985
    %v2586 = vpack.c.b16 %v1994, %v1986
    %v2587 = vpack.c.b16 %v1995, %v1987
    %v2588 = vpack.c.b16 %v1996, %v1988
    %v2589 = vpack.c.b16 %v1997, %v1989
    %v2590 = vpack.c.b16 %v2006, %v1998
    %v2591 = vpack.c.b16 %v2007, %v1999
    %v2592 = vpack.c.b16 %v2008, %v2000
    %v2593 = vpack.c.b16 %v2009, %v2001
    %v2594 = vpack.c.b16 %v2010, %v2002
    %v2595 = vpack.c.b16 %v2011, %v2003
    %v2596 = vpack.c.b16 %v2012, %v2004
    %v2597 = vpack.c.b16 %v2013, %v2005
    %v2598 = vpack.c.b16 %v2022, %v2014
    %v2599 = vpack.c.b16 %v2023, %v2015
    %v2600 = vpack.c.b16 %v2024, %v2016
    %v2601 = vpack.c.b16 %v2025, %v2017
    %v2602 = vpack.c.b16 %v2026, %v2018
    %v2603 = vpack.c.b16 %v2027, %v2019
    %v2604 = vpack.c.b16 %v2028, %v2020
    %v2605 = vpack.c.b16 %v2029, %v2021
    %v2606 = vpack.c.b16 %v2038, %v2030
    %v2607 = vpack.c.b16 %v2039, %v2031
    %v2608 = vpack.c.b16 %v2040, %v2032
    %v2609 = vpack.c.b16 %v2041, %v2033
    %v2610 = vpack.c.b16 %v2042, %v2034
    %v2611 = vpack.c.b16 %v2043, %v2035
    %v2612 = vpack.c.b16 %v2044, %v2036
    %v2613 = vpack.c.b16 %v2045, %v2037
    %v2614 = vpack.c.b16 %v2054, %v2046
    %v2615 = vpack.c.b16 %v2055, %v2047
    %v2616 = vpack.c.b16 %v2056, %v2048
    %v2617 = vpack.c.b16 %v2057, %v2049
    %v2618 = vpack.c.b16 %v2058, %v2050
    %v2619 = vpack.c.b16 %v2059, %v2051
    %v2620 = vpack.c.b16 %v2060, %v2052
    %v2621 = vpack.c.b16 %v2061, %v2053
    %v2622 = vpack.c.b16 %v2070, %v2062
    %v2623 = vpack.c.b16 %v2071, %v2063
    %v2624 = vpack.c.b16 %v2072, %v2064
    %v2625 = vpack.c.b16 %v2073, %v2065
    %v2626 = vpack.c.b16 %v2074, %v2066
    %v2627 = vpack.c.b16 %v2075, %v2067
    %v2628 = vpack.c.b16 %v2076, %v2068
    %v2629 = vpack.c.b16 %v2077, %v2069
    %v2630 = vpack.c.b16 %v2086, %v2078
    %v2631 = vpack.c.b16 %v2087, %v2079
    %v2632 = vpack.c.b16 %v2088, %v2080
    %v2633 = vpack.c.b16 %v2089, %v2081
    %v2634 = vpack.c.b16 %v2090, %v2082
    %v2635 = vpack.c.b16 %v2091, %v2083
    %v2636 = vpack.c.b16 %v2092, %v2084
    %v2637 = vpack.c.b16 %v2093, %v2085
    %v2638 = vpack.c.b16 %v2102, %v2094
    %v2639 = vpack.c.b16 %v2103, %v2095
    %v2640 = vpack.c.b16 %v2104, %v2096
    %v2641 = vpack.c.b16 %v2105, %v2097
    %v2642 = vpack.c.b16 %v2106, %v2098
    %v2643 = vpack.c.b16 %v2107, %v2099
    %v2644 = vpack.c.b16 %v2108, %v2100
    %v2645 = vpack.c.b16 %v2109, %v2101
    %v2646 = vpack.c.b16 %v2118, %v2110
    %v2647 = vpack.c.b16 %v2119, %v2111
    %v2648 = vpack.c.b16 %v2120, %v2112
    %v2649 = vpack.c.b16 %v2121, %v2113
    %v2650 = vpack.c.b16 %v2122, %v2114
    %v2651 = vpack.c.b16 %v2123, %v2115
    %v2652 = vpack.c.b16 %v2124, %v2116
    %v2653 = vpack.c.b16 %v2125, %v2117
    %v2654 = vpack.c.b16 %v2134, %v2126
    %v2655 = vpack.c.b16 %v2135, %v2127
    %v2656 = vpack.c.b16 %v2136, %v2128
    %v2657 = vpack.c.b16 %v2137, %v2129
    %v2658 = vpack.c.b16 %v2138, %v2130
    %v2659 = vpack.c.b16 %v2139, %v2131
    %v2660 = vpack.c.b16 %v2140, %v2132
    %v2661 = vpack.c.b16 %v2141, %v2133
    %v2662 = vpack.c.b16 %v2150, %v2142
    %v2663 = vpack.c.b16 %v2151, %v2143
    %v2664 = vpack.c.b16 %v2152, %v2144
    %v2665 = vpack.c.b16 %v2153, %v2145
    %v2666 = vpack.c.b16 %v2154, %v2146
    %v2667 = vpack.c.b16 %v2155, %v2147
    %v2668 = vpack.c.b16 %v2156, %v2148
    %v2669 = vpack.c.b16 %v2157, %v2149
    %3182 = vmatpush.bf16.msra.mxu0 %v2214
    %3183 = vmatpush.bf16.msra.mxu0 %v2206
    %3184 = vmatpush.bf16.msra.mxu0 %v2198
    %3185 = vmatpush.bf16.msra.mxu0 %v2190
    %3186 = vmatpush.bf16.msra.mxu0 %v2182
    %3187 = vmatpush.bf16.msra.mxu0 %v2174
    %3188 = vmatpush.bf16.msra.mxu0 %v2166
    %3189 = vmatpush.bf16.msra.mxu0 %v2158
    %3190 = vmatmul.bf16.gmra.mxu0 %v102
    %v3191 = vpop.f32.mrf.mxu0
    %v3192 = vadd.f32 0.0, %v3191
    %v3193 = vpop.f32.mrf.mxu0
    %3194 = vdwg.mxu0
    %3195 = vmatpush.bf16.msra.mxu0 %v2278
    %3196 = vmatpush.bf16.msra.mxu0 %v2270
    %3197 = vmatpush.bf16.msra.mxu0 %v2262
    %3198 = vmatpush.bf16.msra.mxu0 %v2254
    %3199 = vmatpush.bf16.msra.mxu0 %v2246
    %3200 = vmatpush.bf16.msra.mxu0 %v2238
    %3201 = vmatpush.bf16.msra.mxu0 %v2230
    %3202 = vmatpush.bf16.msra.mxu0 %v2222
    %3203 = vmatmul.bf16.gmra.mxu0 %v103
    %v3204 = vpop.f32.mrf.mxu0
    %v3205 = vadd.f32 %v3192, %v3204
    %v3206 = vpop.f32.mrf.mxu0
    %3207 = vdwg.mxu0
    %3208 = vmatpush.bf16.msra.mxu0 %v2342
    %3209 = vmatpush.bf16.msra.mxu0 %v2334
    %3210 = vmatpush.bf16.msra.mxu0 %v2326
    %3211 = vmatpush.bf16.msra.mxu0 %v2318
    %3212 = vmatpush.bf16.msra.mxu0 %v2310
    %3213 = vmatpush.bf16.msra.mxu0 %v2302
    %3214 = vmatpush.bf16.msra.mxu0 %v2294
    %3215 = vmatpush.bf16.msra.mxu0 %v2286
    %3216 = vmatmul.bf16.gmra.mxu0 %v104
    %v3217 = vpop.f32.mrf.mxu0
    %v3218 = vadd.f32 %v3205, %v3217
    %v3219 = vpop.f32.mrf.mxu0
    %3220 = vdwg.mxu0
    %3221 = vmatpush.bf16.msra.mxu0 %v2406
    %3222 = vmatpush.bf16.msra.mxu0 %v2398
    %3223 = vmatpush.bf16.msra.mxu0 %v2390
    %3224 = vmatpush.bf16.msra.mxu0 %v2382
    %3225 = vmatpush.bf16.msra.mxu0 %v2374
    %3226 = vmatpush.bf16.msra.mxu0 %v2366
    %3227 = vmatpush.bf16.msra.mxu0 %v2358
    %3228 = vmatpush.bf16.msra.mxu0 %v2350
    %3229 = vmatmul.bf16.gmra.mxu0 %v105
    %v3230 = vpop.f32.mrf.mxu0
    %v3231 = vadd.f32 %v3218, %v3230
    %v3232 = vpop.f32.mrf.mxu0
    %3233 = vdwg.mxu0
    %3234 = vmatpush.bf16.msra.mxu0 %v2470
    %3235 = vmatpush.bf16.msra.mxu0 %v2462
    %3236 = vmatpush.bf16.msra.mxu0 %v2454
    %3237 = vmatpush.bf16.msra.mxu0 %v2446
    %3238 = vmatpush.bf16.msra.mxu0 %v2438
    %3239 = vmatpush.bf16.msra.mxu0 %v2430
    %3240 = vmatpush.bf16.msra.mxu0 %v2422
    %3241 = vmatpush.bf16.msra.mxu0 %v2414
    %3242 = vmatmul.bf16.gmra.mxu0 %v106
    %v3243 = vpop.f32.mrf.mxu0
    %v3244 = vadd.f32 %v3231, %v3243
    %v3245 = vpop.f32.mrf.mxu0
    %3246 = vdwg.mxu0
    %3247 = vmatpush.bf16.msra.mxu0 %v2534
    %3248 = vmatpush.bf16.msra.mxu0 %v2526
    %3249 = vmatpush.bf16.msra.mxu0 %v2518
    %3250 = vmatpush.bf16.msra.mxu0 %v2510
    %3251 = vmatpush.bf16.msra.mxu0 %v2502
    %3252 = vmatpush.bf16.msra.mxu0 %v2494
    %3253 = vmatpush.bf16.msra.mxu0 %v2486
    %3254 = vmatpush.bf16.msra.mxu0 %v2478
    %3255 = vmatmul.bf16.gmra.mxu0 %v107
    %v3256 = vpop.f32.mrf.mxu0
    %v3257 = vadd.f32 %v3244, %v3256
    %v3258 = vpop.f32.mrf.mxu0
    %3259 = vdwg.mxu0
    %3260 = vmatpush.bf16.msra.mxu0 %v2598
    %3261 = vmatpush.bf16.msra.mxu0 %v2590
    %3262 = vmatpush.bf16.msra.mxu0 %v2582
    %3263 = vmatpush.bf16.msra.mxu0 %v2574
    %3264 = vmatpush.bf16.msra.mxu0 %v2566
    %3265 = vmatpush.bf16.msra.mxu0 %v2558
    %3266 = vmatpush.bf16.msra.mxu0 %v2550
    %3267 = vmatpush.bf16.msra.mxu0 %v2542
    %3268 = vmatmul.bf16.gmra.mxu0 %v108
    %v3269 = vpop.f32.mrf.mxu0
    %v3270 = vadd.f32 %v3257, %v3269
    %v3271 = vpop.f32.mrf.mxu0
    %3272 = vdwg.mxu0
    %3273 = vmatpush.bf16.msra.mxu0 %v2662
    %3274 = vmatpush.bf16.msra.mxu0 %v2654
    %3275 = vmatpush.bf16.msra.mxu0 %v2646
    %3276 = vmatpush.bf16.msra.mxu0 %v2638
    %3277 = vmatpush.bf16.msra.mxu0 %v2630
    %3278 = vmatpush.bf16.msra.mxu0 %v2622
    %3279 = vmatpush.bf16.msra.mxu0 %v2614
    %3280 = vmatpush.bf16.msra.mxu0 %v2606
    %3281 = vmatmul.bf16.gmra.mxu0 %v109
    %v3282 = vpop.f32.mrf.mxu0
    %v3283 = vadd.f32 %v3270, %v3282
    %v3284 = vpop.f32.mrf.mxu0
    %3285 = vdwg.mxu0
    %3286 = vmatpush.bf16.msra.mxu0 %v2215
    %3287 = vmatpush.bf16.msra.mxu0 %v2207
    %3288 = vmatpush.bf16.msra.mxu0 %v2199
    %3289 = vmatpush.bf16.msra.mxu0 %v2191
    %3290 = vmatpush.bf16.msra.mxu0 %v2183
    %3291 = vmatpush.bf16.msra.mxu0 %v2175
    %3292 = vmatpush.bf16.msra.mxu0 %v2167
    %3293 = vmatpush.bf16.msra.mxu0 %v2159
    %3294 = vmatmul.bf16.gmra.mxu0 %v102
    %v3295 = vpop.f32.mrf.mxu0
    %v3296 = vadd.f32 0.0, %v3295
    %v3297 = vpop.f32.mrf.mxu0
    %3298 = vdwg.mxu0
    %3299 = vmatpush.bf16.msra.mxu0 %v2279
    %3300 = vmatpush.bf16.msra.mxu0 %v2271
    %3301 = vmatpush.bf16.msra.mxu0 %v2263
    %3302 = vmatpush.bf16.msra.mxu0 %v2255
    %3303 = vmatpush.bf16.msra.mxu0 %v2247
    %3304 = vmatpush.bf16.msra.mxu0 %v2239
    %3305 = vmatpush.bf16.msra.mxu0 %v2231
    %3306 = vmatpush.bf16.msra.mxu0 %v2223
    %3307 = vmatmul.bf16.gmra.mxu0 %v103
    %v3308 = vpop.f32.mrf.mxu0
    %v3309 = vadd.f32 %v3296, %v3308
    %v3310 = vpop.f32.mrf.mxu0
    %3311 = vdwg.mxu0
    %3312 = vmatpush.bf16.msra.mxu0 %v2343
    %3313 = vmatpush.bf16.msra.mxu0 %v2335
    %3314 = vmatpush.bf16.msra.mxu0 %v2327
    %3315 = vmatpush.bf16.msra.mxu0 %v2319
    %3316 = vmatpush.bf16.msra.mxu0 %v2311
    %3317 = vmatpush.bf16.msra.mxu0 %v2303
    %3318 = vmatpush.bf16.msra.mxu0 %v2295
    %3319 = vmatpush.bf16.msra.mxu0 %v2287
    %3320 = vmatmul.bf16.gmra.mxu0 %v104
    %v3321 = vpop.f32.mrf.mxu0
    %v3322 = vadd.f32 %v3309, %v3321
    %v3323 = vpop.f32.mrf.mxu0
    %3324 = vdwg.mxu0
    %3325 = vmatpush.bf16.msra.mxu0 %v2407
    %3326 = vmatpush.bf16.msra.mxu0 %v2399
    %3327 = vmatpush.bf16.msra.mxu0 %v2391
    %3328 = vmatpush.bf16.msra.mxu0 %v2383
    %3329 = vmatpush.bf16.msra.mxu0 %v2375
    %3330 = vmatpush.bf16.msra.mxu0 %v2367
    %3331 = vmatpush.bf16.msra.mxu0 %v2359
    %3332 = vmatpush.bf16.msra.mxu0 %v2351
    %3333 = vmatmul.bf16.gmra.mxu0 %v105
    %v3334 = vpop.f32.mrf.mxu0
    %v3335 = vadd.f32 %v3322, %v3334
    %v3336 = vpop.f32.mrf.mxu0
    %3337 = vdwg.mxu0
    %3338 = vmatpush.bf16.msra.mxu0 %v2471
    %3339 = vmatpush.bf16.msra.mxu0 %v2463
    %3340 = vmatpush.bf16.msra.mxu0 %v2455
    %3341 = vmatpush.bf16.msra.mxu0 %v2447
    %3342 = vmatpush.bf16.msra.mxu0 %v2439
    %3343 = vmatpush.bf16.msra.mxu0 %v2431
    %3344 = vmatpush.bf16.msra.mxu0 %v2423
    %3345 = vmatpush.bf16.msra.mxu0 %v2415
    %3346 = vmatmul.bf16.gmra.mxu0 %v106
    %v3347 = vpop.f32.mrf.mxu0
    %v3348 = vadd.f32 %v3335, %v3347
    %v3349 = vpop.f32.mrf.mxu0
    %3350 = vdwg.mxu0
    %3351 = vmatpush.bf16.msra.mxu0 %v2535
    %3352 = vmatpush.bf16.msra.mxu0 %v2527
    %3353 = vmatpush.bf16.msra.mxu0 %v2519
    %3354 = vmatpush.bf16.msra.mxu0 %v2511
    %3355 = vmatpush.bf16.msra.mxu0 %v2503
    %3356 = vmatpush.bf16.msra.mxu0 %v2495
    %3357 = vmatpush.bf16.msra.mxu0 %v2487
    %3358 = vmatpush.bf16.msra.mxu0 %v2479
    %3359 = vmatmul.bf16.gmra.mxu0 %v107
    %v3360 = vpop.f32.mrf.mxu0
    %v3361 = vadd.f32 %v3348, %v3360
    %v3362 = vpop.f32.mrf.mxu0
    %3363 = vdwg.mxu0
    %3364 = vmatpush.bf16.msra.mxu0 %v2599
    %3365 = vmatpush.bf16.msra.mxu0 %v2591
    %3366 = vmatpush.bf16.msra.mxu0 %v2583
    %3367 = vmatpush.bf16.msra.mxu0 %v2575
    %3368 = vmatpush.bf16.msra.mxu0 %v2567
    %3369 = vmatpush.bf16.msra.mxu0 %v2559
    %3370 = vmatpush.bf16.msra.mxu0 %v2551
    %3371 = vmatpush.bf16.msra.mxu0 %v2543
    %3372 = vmatmul.bf16.gmra.mxu0 %v108
    %v3373 = vpop.f32.mrf.mxu0
    %v3374 = vadd.f32 %v3361, %v3373
    %v3375 = vpop.f32.mrf.mxu0
    %3376 = vdwg.mxu0
    %3377 = vmatpush.bf16.msra.mxu0 %v2663
    %3378 = vmatpush.bf16.msra.mxu0 %v2655
    %3379 = vmatpush.bf16.msra.mxu0 %v2647
    %3380 = vmatpush.bf16.msra.mxu0 %v2639
    %3381 = vmatpush.bf16.msra.mxu0 %v2631
    %3382 = vmatpush.bf16.msra.mxu0 %v2623
    %3383 = vmatpush.bf16.msra.mxu0 %v2615
    %3384 = vmatpush.bf16.msra.mxu0 %v2607
    %3385 = vmatmul.bf16.gmra.mxu0 %v109
    %v3386 = vpop.f32.mrf.mxu0
    %v3387 = vadd.f32 %v3374, %v3386
    %v3388 = vpop.f32.mrf.mxu0
    %3389 = vdwg.mxu0
    %3390 = vmatpush.bf16.msra.mxu0 %v2216
    %3391 = vmatpush.bf16.msra.mxu0 %v2208
    %3392 = vmatpush.bf16.msra.mxu0 %v2200
    %3393 = vmatpush.bf16.msra.mxu0 %v2192
    %3394 = vmatpush.bf16.msra.mxu0 %v2184
    %3395 = vmatpush.bf16.msra.mxu0 %v2176
    %3396 = vmatpush.bf16.msra.mxu0 %v2168
    %3397 = vmatpush.bf16.msra.mxu0 %v2160
    %3398 = vmatmul.bf16.gmra.mxu0 %v102
    %v3399 = vpop.f32.mrf.mxu0
    %v3400 = vadd.f32 0.0, %v3399
    %v3401 = vpop.f32.mrf.mxu0
    %3402 = vdwg.mxu0
    %3403 = vmatpush.bf16.msra.mxu0 %v2280
    %3404 = vmatpush.bf16.msra.mxu0 %v2272
    %3405 = vmatpush.bf16.msra.mxu0 %v2264
    %3406 = vmatpush.bf16.msra.mxu0 %v2256
    %3407 = vmatpush.bf16.msra.mxu0 %v2248
    %3408 = vmatpush.bf16.msra.mxu0 %v2240
    %3409 = vmatpush.bf16.msra.mxu0 %v2232
    %3410 = vmatpush.bf16.msra.mxu0 %v2224
    %3411 = vmatmul.bf16.gmra.mxu0 %v103
    %v3412 = vpop.f32.mrf.mxu0
    %v3413 = vadd.f32 %v3400, %v3412
    %v3414 = vpop.f32.mrf.mxu0
    %3415 = vdwg.mxu0
    %3416 = vmatpush.bf16.msra.mxu0 %v2344
    %3417 = vmatpush.bf16.msra.mxu0 %v2336
    %3418 = vmatpush.bf16.msra.mxu0 %v2328
    %3419 = vmatpush.bf16.msra.mxu0 %v2320
    %3420 = vmatpush.bf16.msra.mxu0 %v2312
    %3421 = vmatpush.bf16.msra.mxu0 %v2304
    %3422 = vmatpush.bf16.msra.mxu0 %v2296
    %3423 = vmatpush.bf16.msra.mxu0 %v2288
    %3424 = vmatmul.bf16.gmra.mxu0 %v104
    %v3425 = vpop.f32.mrf.mxu0
    %v3426 = vadd.f32 %v3413, %v3425
    %v3427 = vpop.f32.mrf.mxu0
    %3428 = vdwg.mxu0
    %3429 = vmatpush.bf16.msra.mxu0 %v2408
    %3430 = vmatpush.bf16.msra.mxu0 %v2400
    %3431 = vmatpush.bf16.msra.mxu0 %v2392
    %3432 = vmatpush.bf16.msra.mxu0 %v2384
    %3433 = vmatpush.bf16.msra.mxu0 %v2376
    %3434 = vmatpush.bf16.msra.mxu0 %v2368
    %3435 = vmatpush.bf16.msra.mxu0 %v2360
    %3436 = vmatpush.bf16.msra.mxu0 %v2352
    %3437 = vmatmul.bf16.gmra.mxu0 %v105
    %v3438 = vpop.f32.mrf.mxu0
    %v3439 = vadd.f32 %v3426, %v3438
    %v3440 = vpop.f32.mrf.mxu0
    %3441 = vdwg.mxu0
    %3442 = vmatpush.bf16.msra.mxu0 %v2472
    %3443 = vmatpush.bf16.msra.mxu0 %v2464
    %3444 = vmatpush.bf16.msra.mxu0 %v2456
    %3445 = vmatpush.bf16.msra.mxu0 %v2448
    %3446 = vmatpush.bf16.msra.mxu0 %v2440
    %3447 = vmatpush.bf16.msra.mxu0 %v2432
    %3448 = vmatpush.bf16.msra.mxu0 %v2424
    %3449 = vmatpush.bf16.msra.mxu0 %v2416
    %3450 = vmatmul.bf16.gmra.mxu0 %v106
    %v3451 = vpop.f32.mrf.mxu0
    %v3452 = vadd.f32 %v3439, %v3451
    %v3453 = vpop.f32.mrf.mxu0
    %3454 = vdwg.mxu0
    %3455 = vmatpush.bf16.msra.mxu0 %v2536
    %3456 = vmatpush.bf16.msra.mxu0 %v2528
    %3457 = vmatpush.bf16.msra.mxu0 %v2520
    %3458 = vmatpush.bf16.msra.mxu0 %v2512
    %3459 = vmatpush.bf16.msra.mxu0 %v2504
    %3460 = vmatpush.bf16.msra.mxu0 %v2496
    %3461 = vmatpush.bf16.msra.mxu0 %v2488
    %3462 = vmatpush.bf16.msra.mxu0 %v2480
    %3463 = vmatmul.bf16.gmra.mxu0 %v107
    %v3464 = vpop.f32.mrf.mxu0
    %v3465 = vadd.f32 %v3452, %v3464
    %v3466 = vpop.f32.mrf.mxu0
    %3467 = vdwg.mxu0
    %3468 = vmatpush.bf16.msra.mxu0 %v2600
    %3469 = vmatpush.bf16.msra.mxu0 %v2592
    %3470 = vmatpush.bf16.msra.mxu0 %v2584
    %3471 = vmatpush.bf16.msra.mxu0 %v2576
    %3472 = vmatpush.bf16.msra.mxu0 %v2568
    %3473 = vmatpush.bf16.msra.mxu0 %v2560
    %3474 = vmatpush.bf16.msra.mxu0 %v2552
    %3475 = vmatpush.bf16.msra.mxu0 %v2544
    %3476 = vmatmul.bf16.gmra.mxu0 %v108
    %v3477 = vpop.f32.mrf.mxu0
    %v3478 = vadd.f32 %v3465, %v3477
    %v3479 = vpop.f32.mrf.mxu0
    %3480 = vdwg.mxu0
    %3481 = vmatpush.bf16.msra.mxu0 %v2664
    %3482 = vmatpush.bf16.msra.mxu0 %v2656
    %3483 = vmatpush.bf16.msra.mxu0 %v2648
    %3484 = vmatpush.bf16.msra.mxu0 %v2640
    %3485 = vmatpush.bf16.msra.mxu0 %v2632
    %3486 = vmatpush.bf16.msra.mxu0 %v2624
    %3487 = vmatpush.bf16.msra.mxu0 %v2616
    %3488 = vmatpush.bf16.msra.mxu0 %v2608
    %3489 = vmatmul.bf16.gmra.mxu0 %v109
    %v3490 = vpop.f32.mrf.mxu0
    %v3491 = vadd.f32 %v3478, %v3490
    %v3492 = vpop.f32.mrf.mxu0
    %3493 = vdwg.mxu0
    %3494 = vmatpush.bf16.msra.mxu0 %v2217
    %3495 = vmatpush.bf16.msra.mxu0 %v2209
    %3496 = vmatpush.bf16.msra.mxu0 %v2201
    %3497 = vmatpush.bf16.msra.mxu0 %v2193
    %3498 = vmatpush.bf16.msra.mxu0 %v2185
    %3499 = vmatpush.bf16.msra.mxu0 %v2177
    %3500 = vmatpush.bf16.msra.mxu0 %v2169
    %3501 = vmatpush.bf16.msra.mxu0 %v2161
    %3502 = vmatmul.bf16.gmra.mxu0 %v102
    %v3503 = vpop.f32.mrf.mxu0
    %v3504 = vadd.f32 0.0, %v3503
    %v3505 = vpop.f32.mrf.mxu0
    %3506 = vdwg.mxu0
    %3507 = vmatpush.bf16.msra.mxu0 %v2281
    %3508 = vmatpush.bf16.msra.mxu0 %v2273
    %3509 = vmatpush.bf16.msra.mxu0 %v2265
    %3510 = vmatpush.bf16.msra.mxu0 %v2257
    %3511 = vmatpush.bf16.msra.mxu0 %v2249
    %3512 = vmatpush.bf16.msra.mxu0 %v2241
    %3513 = vmatpush.bf16.msra.mxu0 %v2233
    %3514 = vmatpush.bf16.msra.mxu0 %v2225
    %3515 = vmatmul.bf16.gmra.mxu0 %v103
    %v3516 = vpop.f32.mrf.mxu0
    %v3517 = vadd.f32 %v3504, %v3516
    %v3518 = vpop.f32.mrf.mxu0
    %3519 = vdwg.mxu0
    %3520 = vmatpush.bf16.msra.mxu0 %v2345
    %3521 = vmatpush.bf16.msra.mxu0 %v2337
    %3522 = vmatpush.bf16.msra.mxu0 %v2329
    %3523 = vmatpush.bf16.msra.mxu0 %v2321
    %3524 = vmatpush.bf16.msra.mxu0 %v2313
    %3525 = vmatpush.bf16.msra.mxu0 %v2305
    %3526 = vmatpush.bf16.msra.mxu0 %v2297
    %3527 = vmatpush.bf16.msra.mxu0 %v2289
    %3528 = vmatmul.bf16.gmra.mxu0 %v104
    %v3529 = vpop.f32.mrf.mxu0
    %v3530 = vadd.f32 %v3517, %v3529
    %v3531 = vpop.f32.mrf.mxu0
    %3532 = vdwg.mxu0
    %3533 = vmatpush.bf16.msra.mxu0 %v2409
    %3534 = vmatpush.bf16.msra.mxu0 %v2401
    %3535 = vmatpush.bf16.msra.mxu0 %v2393
    %3536 = vmatpush.bf16.msra.mxu0 %v2385
    %3537 = vmatpush.bf16.msra.mxu0 %v2377
    %3538 = vmatpush.bf16.msra.mxu0 %v2369
    %3539 = vmatpush.bf16.msra.mxu0 %v2361
    %3540 = vmatpush.bf16.msra.mxu0 %v2353
    %3541 = vmatmul.bf16.gmra.mxu0 %v105
    %v3542 = vpop.f32.mrf.mxu0
    %v3543 = vadd.f32 %v3530, %v3542
    %v3544 = vpop.f32.mrf.mxu0
    %3545 = vdwg.mxu0
    %3546 = vmatpush.bf16.msra.mxu0 %v2473
    %3547 = vmatpush.bf16.msra.mxu0 %v2465
    %3548 = vmatpush.bf16.msra.mxu0 %v2457
    %3549 = vmatpush.bf16.msra.mxu0 %v2449
    %3550 = vmatpush.bf16.msra.mxu0 %v2441
    %3551 = vmatpush.bf16.msra.mxu0 %v2433
    %3552 = vmatpush.bf16.msra.mxu0 %v2425
    %3553 = vmatpush.bf16.msra.mxu0 %v2417
    %3554 = vmatmul.bf16.gmra.mxu0 %v106
    %v3555 = vpop.f32.mrf.mxu0
    %v3556 = vadd.f32 %v3543, %v3555
    %v3557 = vpop.f32.mrf.mxu0
    %3558 = vdwg.mxu0
    %3559 = vmatpush.bf16.msra.mxu0 %v2537
    %3560 = vmatpush.bf16.msra.mxu0 %v2529
    %3561 = vmatpush.bf16.msra.mxu0 %v2521
    %3562 = vmatpush.bf16.msra.mxu0 %v2513
    %3563 = vmatpush.bf16.msra.mxu0 %v2505
    %3564 = vmatpush.bf16.msra.mxu0 %v2497
    %3565 = vmatpush.bf16.msra.mxu0 %v2489
    %3566 = vmatpush.bf16.msra.mxu0 %v2481
    %3567 = vmatmul.bf16.gmra.mxu0 %v107
    %v3568 = vpop.f32.mrf.mxu0
    %v3569 = vadd.f32 %v3556, %v3568
    %v3570 = vpop.f32.mrf.mxu0
    %3571 = vdwg.mxu0
    %3572 = vmatpush.bf16.msra.mxu0 %v2601
    %3573 = vmatpush.bf16.msra.mxu0 %v2593
    %3574 = vmatpush.bf16.msra.mxu0 %v2585
    %3575 = vmatpush.bf16.msra.mxu0 %v2577
    %3576 = vmatpush.bf16.msra.mxu0 %v2569
    %3577 = vmatpush.bf16.msra.mxu0 %v2561
    %3578 = vmatpush.bf16.msra.mxu0 %v2553
    %3579 = vmatpush.bf16.msra.mxu0 %v2545
    %3580 = vmatmul.bf16.gmra.mxu0 %v108
    %v3581 = vpop.f32.mrf.mxu0
    %v3582 = vadd.f32 %v3569, %v3581
    %v3583 = vpop.f32.mrf.mxu0
    %3584 = vdwg.mxu0
    %3585 = vmatpush.bf16.msra.mxu0 %v2665
    %3586 = vmatpush.bf16.msra.mxu0 %v2657
    %3587 = vmatpush.bf16.msra.mxu0 %v2649
    %3588 = vmatpush.bf16.msra.mxu0 %v2641
    %3589 = vmatpush.bf16.msra.mxu0 %v2633
    %3590 = vmatpush.bf16.msra.mxu0 %v2625
    %3591 = vmatpush.bf16.msra.mxu0 %v2617
    %3592 = vmatpush.bf16.msra.mxu0 %v2609
    %3593 = vmatmul.bf16.gmra.mxu0 %v109
    %v3594 = vpop.f32.mrf.mxu0
    %v3595 = vadd.f32 %v3582, %v3594
    %v3596 = vpop.f32.mrf.mxu0
    %3597 = vdwg.mxu0
    %3598 = vmatpush.bf16.msra.mxu0 %v2218
    %3599 = vmatpush.bf16.msra.mxu0 %v2210
    %3600 = vmatpush.bf16.msra.mxu0 %v2202
    %3601 = vmatpush.bf16.msra.mxu0 %v2194
    %3602 = vmatpush.bf16.msra.mxu0 %v2186
    %3603 = vmatpush.bf16.msra.mxu0 %v2178
    %3604 = vmatpush.bf16.msra.mxu0 %v2170
    %3605 = vmatpush.bf16.msra.mxu0 %v2162
    %3606 = vmatmul.bf16.gmra.mxu0 %v102
    %v3607 = vpop.f32.mrf.mxu0
    %v3608 = vadd.f32 0.0, %v3607
    %v3609 = vpop.f32.mrf.mxu0
    %3610 = vdwg.mxu0
    %3611 = vmatpush.bf16.msra.mxu0 %v2282
    %3612 = vmatpush.bf16.msra.mxu0 %v2274
    %3613 = vmatpush.bf16.msra.mxu0 %v2266
    %3614 = vmatpush.bf16.msra.mxu0 %v2258
    %3615 = vmatpush.bf16.msra.mxu0 %v2250
    %3616 = vmatpush.bf16.msra.mxu0 %v2242
    %3617 = vmatpush.bf16.msra.mxu0 %v2234
    %3618 = vmatpush.bf16.msra.mxu0 %v2226
    %3619 = vmatmul.bf16.gmra.mxu0 %v103
    %v3620 = vpop.f32.mrf.mxu0
    %v3621 = vadd.f32 %v3608, %v3620
    %v3622 = vpop.f32.mrf.mxu0
    %3623 = vdwg.mxu0
    %3624 = vmatpush.bf16.msra.mxu0 %v2346
    %3625 = vmatpush.bf16.msra.mxu0 %v2338
    %3626 = vmatpush.bf16.msra.mxu0 %v2330
    %3627 = vmatpush.bf16.msra.mxu0 %v2322
    %3628 = vmatpush.bf16.msra.mxu0 %v2314
    %3629 = vmatpush.bf16.msra.mxu0 %v2306
    %3630 = vmatpush.bf16.msra.mxu0 %v2298
    %3631 = vmatpush.bf16.msra.mxu0 %v2290
    %3632 = vmatmul.bf16.gmra.mxu0 %v104
    %v3633 = vpop.f32.mrf.mxu0
    %v3634 = vadd.f32 %v3621, %v3633
    %v3635 = vpop.f32.mrf.mxu0
    %3636 = vdwg.mxu0
    %3637 = vmatpush.bf16.msra.mxu0 %v2410
    %3638 = vmatpush.bf16.msra.mxu0 %v2402
    %3639 = vmatpush.bf16.msra.mxu0 %v2394
    %3640 = vmatpush.bf16.msra.mxu0 %v2386
    %3641 = vmatpush.bf16.msra.mxu0 %v2378
    %3642 = vmatpush.bf16.msra.mxu0 %v2370
    %3643 = vmatpush.bf16.msra.mxu0 %v2362
    %3644 = vmatpush.bf16.msra.mxu0 %v2354
    %3645 = vmatmul.bf16.gmra.mxu0 %v105
    %v3646 = vpop.f32.mrf.mxu0
    %v3647 = vadd.f32 %v3634, %v3646
    %v3648 = vpop.f32.mrf.mxu0
    %3649 = vdwg.mxu0
    %3650 = vmatpush.bf16.msra.mxu0 %v2474
    %3651 = vmatpush.bf16.msra.mxu0 %v2466
    %3652 = vmatpush.bf16.msra.mxu0 %v2458
    %3653 = vmatpush.bf16.msra.mxu0 %v2450
    %3654 = vmatpush.bf16.msra.mxu0 %v2442
    %3655 = vmatpush.bf16.msra.mxu0 %v2434
    %3656 = vmatpush.bf16.msra.mxu0 %v2426
    %3657 = vmatpush.bf16.msra.mxu0 %v2418
    %3658 = vmatmul.bf16.gmra.mxu0 %v106
    %v3659 = vpop.f32.mrf.mxu0
    %v3660 = vadd.f32 %v3647, %v3659
    %v3661 = vpop.f32.mrf.mxu0
    %3662 = vdwg.mxu0
    %3663 = vmatpush.bf16.msra.mxu0 %v2538
    %3664 = vmatpush.bf16.msra.mxu0 %v2530
    %3665 = vmatpush.bf16.msra.mxu0 %v2522
    %3666 = vmatpush.bf16.msra.mxu0 %v2514
    %3667 = vmatpush.bf16.msra.mxu0 %v2506
    %3668 = vmatpush.bf16.msra.mxu0 %v2498
    %3669 = vmatpush.bf16.msra.mxu0 %v2490
    %3670 = vmatpush.bf16.msra.mxu0 %v2482
    %3671 = vmatmul.bf16.gmra.mxu0 %v107
    %v3672 = vpop.f32.mrf.mxu0
    %v3673 = vadd.f32 %v3660, %v3672
    %v3674 = vpop.f32.mrf.mxu0
    %3675 = vdwg.mxu0
    %3676 = vmatpush.bf16.msra.mxu0 %v2602
    %3677 = vmatpush.bf16.msra.mxu0 %v2594
    %3678 = vmatpush.bf16.msra.mxu0 %v2586
    %3679 = vmatpush.bf16.msra.mxu0 %v2578
    %3680 = vmatpush.bf16.msra.mxu0 %v2570
    %3681 = vmatpush.bf16.msra.mxu0 %v2562
    %3682 = vmatpush.bf16.msra.mxu0 %v2554
    %3683 = vmatpush.bf16.msra.mxu0 %v2546
    %3684 = vmatmul.bf16.gmra.mxu0 %v108
    %v3685 = vpop.f32.mrf.mxu0
    %v3686 = vadd.f32 %v3673, %v3685
    %v3687 = vpop.f32.mrf.mxu0
    %3688 = vdwg.mxu0
    %3689 = vmatpush.bf16.msra.mxu0 %v2666
    %3690 = vmatpush.bf16.msra.mxu0 %v2658
    %3691 = vmatpush.bf16.msra.mxu0 %v2650
    %3692 = vmatpush.bf16.msra.mxu0 %v2642
    %3693 = vmatpush.bf16.msra.mxu0 %v2634
    %3694 = vmatpush.bf16.msra.mxu0 %v2626
    %3695 = vmatpush.bf16.msra.mxu0 %v2618
    %3696 = vmatpush.bf16.msra.mxu0 %v2610
    %3697 = vmatmul.bf16.gmra.mxu0 %v109
    %v3698 = vpop.f32.mrf.mxu0
    %v3699 = vadd.f32 %v3686, %v3698
    %v3700 = vpop.f32.mrf.mxu0
    %3701 = vdwg.mxu0
    %3702 = vmatpush.bf16.msra.mxu0 %v2219
    %3703 = vmatpush.bf16.msra.mxu0 %v2211
    %3704 = vmatpush.bf16.msra.mxu0 %v2203
    %3705 = vmatpush.bf16.msra.mxu0 %v2195
    %3706 = vmatpush.bf16.msra.mxu0 %v2187
    %3707 = vmatpush.bf16.msra.mxu0 %v2179
    %3708 = vmatpush.bf16.msra.mxu0 %v2171
    %3709 = vmatpush.bf16.msra.mxu0 %v2163
    %3710 = vmatmul.bf16.gmra.mxu0 %v102
    %v3711 = vpop.f32.mrf.mxu0
    %v3712 = vadd.f32 0.0, %v3711
    %v3713 = vpop.f32.mrf.mxu0
    %3714 = vdwg.mxu0
    %3715 = vmatpush.bf16.msra.mxu0 %v2283
    %3716 = vmatpush.bf16.msra.mxu0 %v2275
    %3717 = vmatpush.bf16.msra.mxu0 %v2267
    %3718 = vmatpush.bf16.msra.mxu0 %v2259
    %3719 = vmatpush.bf16.msra.mxu0 %v2251
    %3720 = vmatpush.bf16.msra.mxu0 %v2243
    %3721 = vmatpush.bf16.msra.mxu0 %v2235
    %3722 = vmatpush.bf16.msra.mxu0 %v2227
    %3723 = vmatmul.bf16.gmra.mxu0 %v103
    %v3724 = vpop.f32.mrf.mxu0
    %v3725 = vadd.f32 %v3712, %v3724
    %v3726 = vpop.f32.mrf.mxu0
    %3727 = vdwg.mxu0
    %3728 = vmatpush.bf16.msra.mxu0 %v2347
    %3729 = vmatpush.bf16.msra.mxu0 %v2339
    %3730 = vmatpush.bf16.msra.mxu0 %v2331
    %3731 = vmatpush.bf16.msra.mxu0 %v2323
    %3732 = vmatpush.bf16.msra.mxu0 %v2315
    %3733 = vmatpush.bf16.msra.mxu0 %v2307
    %3734 = vmatpush.bf16.msra.mxu0 %v2299
    %3735 = vmatpush.bf16.msra.mxu0 %v2291
    %3736 = vmatmul.bf16.gmra.mxu0 %v104
    %v3737 = vpop.f32.mrf.mxu0
    %v3738 = vadd.f32 %v3725, %v3737
    %v3739 = vpop.f32.mrf.mxu0
    %3740 = vdwg.mxu0
    %3741 = vmatpush.bf16.msra.mxu0 %v2411
    %3742 = vmatpush.bf16.msra.mxu0 %v2403
    %3743 = vmatpush.bf16.msra.mxu0 %v2395
    %3744 = vmatpush.bf16.msra.mxu0 %v2387
    %3745 = vmatpush.bf16.msra.mxu0 %v2379
    %3746 = vmatpush.bf16.msra.mxu0 %v2371
    %3747 = vmatpush.bf16.msra.mxu0 %v2363
    %3748 = vmatpush.bf16.msra.mxu0 %v2355
    %3749 = vmatmul.bf16.gmra.mxu0 %v105
    %v3750 = vpop.f32.mrf.mxu0
    %v3751 = vadd.f32 %v3738, %v3750
    %v3752 = vpop.f32.mrf.mxu0
    %3753 = vdwg.mxu0
    %3754 = vmatpush.bf16.msra.mxu0 %v2475
    %3755 = vmatpush.bf16.msra.mxu0 %v2467
    %3756 = vmatpush.bf16.msra.mxu0 %v2459
    %3757 = vmatpush.bf16.msra.mxu0 %v2451
    %3758 = vmatpush.bf16.msra.mxu0 %v2443
    %3759 = vmatpush.bf16.msra.mxu0 %v2435
    %3760 = vmatpush.bf16.msra.mxu0 %v2427
    %3761 = vmatpush.bf16.msra.mxu0 %v2419
    %3762 = vmatmul.bf16.gmra.mxu0 %v106
    %v3763 = vpop.f32.mrf.mxu0
    %v3764 = vadd.f32 %v3751, %v3763
    %v3765 = vpop.f32.mrf.mxu0
    %3766 = vdwg.mxu0
    %3767 = vmatpush.bf16.msra.mxu0 %v2539
    %3768 = vmatpush.bf16.msra.mxu0 %v2531
    %3769 = vmatpush.bf16.msra.mxu0 %v2523
    %3770 = vmatpush.bf16.msra.mxu0 %v2515
    %3771 = vmatpush.bf16.msra.mxu0 %v2507
    %3772 = vmatpush.bf16.msra.mxu0 %v2499
    %3773 = vmatpush.bf16.msra.mxu0 %v2491
    %3774 = vmatpush.bf16.msra.mxu0 %v2483
    %3775 = vmatmul.bf16.gmra.mxu0 %v107
    %v3776 = vpop.f32.mrf.mxu0
    %v3777 = vadd.f32 %v3764, %v3776
    %v3778 = vpop.f32.mrf.mxu0
    %3779 = vdwg.mxu0
    %3780 = vmatpush.bf16.msra.mxu0 %v2603
    %3781 = vmatpush.bf16.msra.mxu0 %v2595
    %3782 = vmatpush.bf16.msra.mxu0 %v2587
    %3783 = vmatpush.bf16.msra.mxu0 %v2579
    %3784 = vmatpush.bf16.msra.mxu0 %v2571
    %3785 = vmatpush.bf16.msra.mxu0 %v2563
    %3786 = vmatpush.bf16.msra.mxu0 %v2555
    %3787 = vmatpush.bf16.msra.mxu0 %v2547
    %3788 = vmatmul.bf16.gmra.mxu0 %v108
    %v3789 = vpop.f32.mrf.mxu0
    %v3790 = vadd.f32 %v3777, %v3789
    %v3791 = vpop.f32.mrf.mxu0
    %3792 = vdwg.mxu0
    %3793 = vmatpush.bf16.msra.mxu0 %v2667
    %3794 = vmatpush.bf16.msra.mxu0 %v2659
    %3795 = vmatpush.bf16.msra.mxu0 %v2651
    %3796 = vmatpush.bf16.msra.mxu0 %v2643
    %3797 = vmatpush.bf16.msra.mxu0 %v2635
    %3798 = vmatpush.bf16.msra.mxu0 %v2627
    %3799 = vmatpush.bf16.msra.mxu0 %v2619
    %3800 = vmatpush.bf16.msra.mxu0 %v2611
    %3801 = vmatmul.bf16.gmra.mxu0 %v109
    %v3802 = vpop.f32.mrf.mxu0
    %v3803 = vadd.f32 %v3790, %v3802
    %v3804 = vpop.f32.mrf.mxu0
    %3805 = vdwg.mxu0
    %3806 = vmatpush.bf16.msra.mxu0 %v2220
    %3807 = vmatpush.bf16.msra.mxu0 %v2212
    %3808 = vmatpush.bf16.msra.mxu0 %v2204
    %3809 = vmatpush.bf16.msra.mxu0 %v2196
    %3810 = vmatpush.bf16.msra.mxu0 %v2188
    %3811 = vmatpush.bf16.msra.mxu0 %v2180
    %3812 = vmatpush.bf16.msra.mxu0 %v2172
    %3813 = vmatpush.bf16.msra.mxu0 %v2164
    %3814 = vmatmul.bf16.gmra.mxu0 %v102
    %v3815 = vpop.f32.mrf.mxu0
    %v3816 = vadd.f32 0.0, %v3815
    %v3817 = vpop.f32.mrf.mxu0
    %3818 = vdwg.mxu0
    %3819 = vmatpush.bf16.msra.mxu0 %v2284
    %3820 = vmatpush.bf16.msra.mxu0 %v2276
    %3821 = vmatpush.bf16.msra.mxu0 %v2268
    %3822 = vmatpush.bf16.msra.mxu0 %v2260
    %3823 = vmatpush.bf16.msra.mxu0 %v2252
    %3824 = vmatpush.bf16.msra.mxu0 %v2244
    %3825 = vmatpush.bf16.msra.mxu0 %v2236
    %3826 = vmatpush.bf16.msra.mxu0 %v2228
    %3827 = vmatmul.bf16.gmra.mxu0 %v103
    %v3828 = vpop.f32.mrf.mxu0
    %v3829 = vadd.f32 %v3816, %v3828
    %v3830 = vpop.f32.mrf.mxu0
    %3831 = vdwg.mxu0
    %3832 = vmatpush.bf16.msra.mxu0 %v2348
    %3833 = vmatpush.bf16.msra.mxu0 %v2340
    %3834 = vmatpush.bf16.msra.mxu0 %v2332
    %3835 = vmatpush.bf16.msra.mxu0 %v2324
    %3836 = vmatpush.bf16.msra.mxu0 %v2316
    %3837 = vmatpush.bf16.msra.mxu0 %v2308
    %3838 = vmatpush.bf16.msra.mxu0 %v2300
    %3839 = vmatpush.bf16.msra.mxu0 %v2292
    %3840 = vmatmul.bf16.gmra.mxu0 %v104
    %v3841 = vpop.f32.mrf.mxu0
    %v3842 = vadd.f32 %v3829, %v3841
    %v3843 = vpop.f32.mrf.mxu0
    %3844 = vdwg.mxu0
    %3845 = vmatpush.bf16.msra.mxu0 %v2412
    %3846 = vmatpush.bf16.msra.mxu0 %v2404
    %3847 = vmatpush.bf16.msra.mxu0 %v2396
    %3848 = vmatpush.bf16.msra.mxu0 %v2388
    %3849 = vmatpush.bf16.msra.mxu0 %v2380
    %3850 = vmatpush.bf16.msra.mxu0 %v2372
    %3851 = vmatpush.bf16.msra.mxu0 %v2364
    %3852 = vmatpush.bf16.msra.mxu0 %v2356
    %3853 = vmatmul.bf16.gmra.mxu0 %v105
    %v3854 = vpop.f32.mrf.mxu0
    %v3855 = vadd.f32 %v3842, %v3854
    %v3856 = vpop.f32.mrf.mxu0
    %3857 = vdwg.mxu0
    %3858 = vmatpush.bf16.msra.mxu0 %v2476
    %3859 = vmatpush.bf16.msra.mxu0 %v2468
    %3860 = vmatpush.bf16.msra.mxu0 %v2460
    %3861 = vmatpush.bf16.msra.mxu0 %v2452
    %3862 = vmatpush.bf16.msra.mxu0 %v2444
    %3863 = vmatpush.bf16.msra.mxu0 %v2436
    %3864 = vmatpush.bf16.msra.mxu0 %v2428
    %3865 = vmatpush.bf16.msra.mxu0 %v2420
    %3866 = vmatmul.bf16.gmra.mxu0 %v106
    %v3867 = vpop.f32.mrf.mxu0
    %v3868 = vadd.f32 %v3855, %v3867
    %v3869 = vpop.f32.mrf.mxu0
    %3870 = vdwg.mxu0
    %3871 = vmatpush.bf16.msra.mxu0 %v2540
    %3872 = vmatpush.bf16.msra.mxu0 %v2532
    %3873 = vmatpush.bf16.msra.mxu0 %v2524
    %3874 = vmatpush.bf16.msra.mxu0 %v2516
    %3875 = vmatpush.bf16.msra.mxu0 %v2508
    %3876 = vmatpush.bf16.msra.mxu0 %v2500
    %3877 = vmatpush.bf16.msra.mxu0 %v2492
    %3878 = vmatpush.bf16.msra.mxu0 %v2484
    %3879 = vmatmul.bf16.gmra.mxu0 %v107
    %v3880 = vpop.f32.mrf.mxu0
    %v3881 = vadd.f32 %v3868, %v3880
    %v3882 = vpop.f32.mrf.mxu0
    %3883 = vdwg.mxu0
    %3884 = vmatpush.bf16.msra.mxu0 %v2604
    %3885 = vmatpush.bf16.msra.mxu0 %v2596
    %3886 = vmatpush.bf16.msra.mxu0 %v2588
    %3887 = vmatpush.bf16.msra.mxu0 %v2580
    %3888 = vmatpush.bf16.msra.mxu0 %v2572
    %3889 = vmatpush.bf16.msra.mxu0 %v2564
    %3890 = vmatpush.bf16.msra.mxu0 %v2556
    %3891 = vmatpush.bf16.msra.mxu0 %v2548
    %3892 = vmatmul.bf16.gmra.mxu0 %v108
    %v3893 = vpop.f32.mrf.mxu0
    %v3894 = vadd.f32 %v3881, %v3893
    %v3895 = vpop.f32.mrf.mxu0
    %3896 = vdwg.mxu0
    %3897 = vmatpush.bf16.msra.mxu0 %v2668
    %3898 = vmatpush.bf16.msra.mxu0 %v2660
    %3899 = vmatpush.bf16.msra.mxu0 %v2652
    %3900 = vmatpush.bf16.msra.mxu0 %v2644
    %3901 = vmatpush.bf16.msra.mxu0 %v2636
    %3902 = vmatpush.bf16.msra.mxu0 %v2628
    %3903 = vmatpush.bf16.msra.mxu0 %v2620
    %3904 = vmatpush.bf16.msra.mxu0 %v2612
    %3905 = vmatmul.bf16.gmra.mxu0 %v109
    %v3906 = vpop.f32.mrf.mxu0
    %v3907 = vadd.f32 %v3894, %v3906
    %v3908 = vpop.f32.mrf.mxu0
    %3909 = vdwg.mxu0
    %3910 = vmatpush.bf16.msra.mxu0 %v2221
    %3911 = vmatpush.bf16.msra.mxu0 %v2213
    %3912 = vmatpush.bf16.msra.mxu0 %v2205
    %3913 = vmatpush.bf16.msra.mxu0 %v2197
    %3914 = vmatpush.bf16.msra.mxu0 %v2189
    %3915 = vmatpush.bf16.msra.mxu0 %v2181
    %3916 = vmatpush.bf16.msra.mxu0 %v2173
    %3917 = vmatpush.bf16.msra.mxu0 %v2165
    %3918 = vmatmul.bf16.gmra.mxu0 %v102
    %v3919 = vpop.f32.mrf.mxu0
    %v3920 = vadd.f32 0.0, %v3919
    %v3921 = vpop.f32.mrf.mxu0
    %3922 = vdwg.mxu0
    %3923 = vmatpush.bf16.msra.mxu0 %v2285
    %3924 = vmatpush.bf16.msra.mxu0 %v2277
    %3925 = vmatpush.bf16.msra.mxu0 %v2269
    %3926 = vmatpush.bf16.msra.mxu0 %v2261
    %3927 = vmatpush.bf16.msra.mxu0 %v2253
    %3928 = vmatpush.bf16.msra.mxu0 %v2245
    %3929 = vmatpush.bf16.msra.mxu0 %v2237
    %3930 = vmatpush.bf16.msra.mxu0 %v2229
    %3931 = vmatmul.bf16.gmra.mxu0 %v103
    %v3932 = vpop.f32.mrf.mxu0
    %v3933 = vadd.f32 %v3920, %v3932
    %v3934 = vpop.f32.mrf.mxu0
    %3935 = vdwg.mxu0
    %3936 = vmatpush.bf16.msra.mxu0 %v2349
    %3937 = vmatpush.bf16.msra.mxu0 %v2341
    %3938 = vmatpush.bf16.msra.mxu0 %v2333
    %3939 = vmatpush.bf16.msra.mxu0 %v2325
    %3940 = vmatpush.bf16.msra.mxu0 %v2317
    %3941 = vmatpush.bf16.msra.mxu0 %v2309
    %3942 = vmatpush.bf16.msra.mxu0 %v2301
    %3943 = vmatpush.bf16.msra.mxu0 %v2293
    %3944 = vmatmul.bf16.gmra.mxu0 %v104
    %v3945 = vpop.f32.mrf.mxu0
    %v3946 = vadd.f32 %v3933, %v3945
    %v3947 = vpop.f32.mrf.mxu0
    %3948 = vdwg.mxu0
    %3949 = vmatpush.bf16.msra.mxu0 %v2413
    %3950 = vmatpush.bf16.msra.mxu0 %v2405
    %3951 = vmatpush.bf16.msra.mxu0 %v2397
    %3952 = vmatpush.bf16.msra.mxu0 %v2389
    %3953 = vmatpush.bf16.msra.mxu0 %v2381
    %3954 = vmatpush.bf16.msra.mxu0 %v2373
    %3955 = vmatpush.bf16.msra.mxu0 %v2365
    %3956 = vmatpush.bf16.msra.mxu0 %v2357
    %3957 = vmatmul.bf16.gmra.mxu0 %v105
    %v3958 = vpop.f32.mrf.mxu0
    %v3959 = vadd.f32 %v3946, %v3958
    %v3960 = vpop.f32.mrf.mxu0
    %3961 = vdwg.mxu0
    %3962 = vmatpush.bf16.msra.mxu0 %v2477
    %3963 = vmatpush.bf16.msra.mxu0 %v2469
    %3964 = vmatpush.bf16.msra.mxu0 %v2461
    %3965 = vmatpush.bf16.msra.mxu0 %v2453
    %3966 = vmatpush.bf16.msra.mxu0 %v2445
    %3967 = vmatpush.bf16.msra.mxu0 %v2437
    %3968 = vmatpush.bf16.msra.mxu0 %v2429
    %3969 = vmatpush.bf16.msra.mxu0 %v2421
    %3970 = vmatmul.bf16.gmra.mxu0 %v106
    %v3971 = vpop.f32.mrf.mxu0
    %v3972 = vadd.f32 %v3959, %v3971
    %v3973 = vpop.f32.mrf.mxu0
    %3974 = vdwg.mxu0
    %3975 = vmatpush.bf16.msra.mxu0 %v2541
    %3976 = vmatpush.bf16.msra.mxu0 %v2533
    %3977 = vmatpush.bf16.msra.mxu0 %v2525
    %3978 = vmatpush.bf16.msra.mxu0 %v2517
    %3979 = vmatpush.bf16.msra.mxu0 %v2509
    %3980 = vmatpush.bf16.msra.mxu0 %v2501
    %3981 = vmatpush.bf16.msra.mxu0 %v2493
    %3982 = vmatpush.bf16.msra.mxu0 %v2485
    %3983 = vmatmul.bf16.gmra.mxu0 %v107
    %v3984 = vpop.f32.mrf.mxu0
    %v3985 = vadd.f32 %v3972, %v3984
    %v3986 = vpop.f32.mrf.mxu0
    %3987 = vdwg.mxu0
    %3988 = vmatpush.bf16.msra.mxu0 %v2605
    %3989 = vmatpush.bf16.msra.mxu0 %v2597
    %3990 = vmatpush.bf16.msra.mxu0 %v2589
    %3991 = vmatpush.bf16.msra.mxu0 %v2581
    %3992 = vmatpush.bf16.msra.mxu0 %v2573
    %3993 = vmatpush.bf16.msra.mxu0 %v2565
    %3994 = vmatpush.bf16.msra.mxu0 %v2557
    %3995 = vmatpush.bf16.msra.mxu0 %v2549
    %3996 = vmatmul.bf16.gmra.mxu0 %v108
    %v3997 = vpop.f32.mrf.mxu0
    %v3998 = vadd.f32 %v3985, %v3997
    %v3999 = vpop.f32.mrf.mxu0
    %4000 = vdwg.mxu0
    %4001 = vmatpush.bf16.msra.mxu0 %v2669
    %4002 = vmatpush.bf16.msra.mxu0 %v2661
    %4003 = vmatpush.bf16.msra.mxu0 %v2653
    %4004 = vmatpush.bf16.msra.mxu0 %v2645
    %4005 = vmatpush.bf16.msra.mxu0 %v2637
    %4006 = vmatpush.bf16.msra.mxu0 %v2629
    %4007 = vmatpush.bf16.msra.mxu0 %v2621
    %4008 = vmatpush.bf16.msra.mxu0 %v2613
    %4009 = vmatmul.bf16.gmra.mxu0 %v109
    %v4010 = vpop.f32.mrf.mxu0
    %v4011 = vadd.f32 %v3998, %v4010
    %v4012 = vpop.f32.mrf.mxu0
    %4013 = vdwg.mxu0
    %v4014 = vmul.f32 %v3283, 0.2
    %v4015 = vmul.f32 %v3387, 0.2
    %v4016 = vmul.f32 %v3491, 0.2
    %v4017 = vmul.f32 %v3595, 0.2
    %v4018 = vmul.f32 %v3699, 0.2
    %v4019 = vmul.f32 %v3803, 0.2
    %v4020 = vmul.f32 %v3907, 0.2
    %v4021 = vmul.f32 %v4011, 0.2
    %v4022 = vmax.f32 %v3283, %v4014
    %v4023 = vmax.f32 %v3387, %v4015
    %v4024 = vmax.f32 %v3491, %v4016
    %v4025 = vmax.f32 %v3595, %v4017
    %v4026 = vmax.f32 %v3699, %v4018
    %v4027 = vmax.f32 %v3803, %v4019
    %v4028 = vmax.f32 %v3907, %v4020
    %v4029 = vmax.f32 %v4011, %v4021
    %v4030 = vpack.c.bf16 %v4022, %v4022
    %v4031 = vpack.c.bf16 %v4023, %v4023
    %v4032 = vpack.c.bf16 %v4024, %v4024
    %v4033 = vpack.c.bf16 %v4025, %v4025
    %v4034 = vpack.c.bf16 %v4026, %v4026
    %v4035 = vpack.c.bf16 %v4027, %v4027
    %v4036 = vpack.c.bf16 %v4028, %v4028
    %v4037 = vpack.c.bf16 %v4029, %v4029
    %v4038 = vld [vmem:[#allocation6] sm:$0xff]
    %v4039 = vld [vmem:[#allocation6 + $0x8] sm:$0xff]
    %v4040 = vld [vmem:[#allocation6 + $0x10] sm:$0xff]
    %v4041 = vld [vmem:[#allocation6 + $0x18] sm:$0xff]
    %v4042 = vld [vmem:[#allocation6 + $0x20] sm:$0xff]
    %v4043 = vld [vmem:[#allocation6 + $0x28] sm:$0xff]
    %v4044 = vld [vmem:[#allocation6 + $0x30] sm:$0xff]
    %v4045 = vld [vmem:[#allocation6 + $0x38] sm:$0xff]
    %v4046 = vld [vmem:[#allocation6 + $0x40] sm:$0xff]
    %v4047 = vld [vmem:[#allocation6 + $0x48] sm:$0xff]
    %v4048 = vld [vmem:[#allocation6 + $0x50] sm:$0xff]
    %v4049 = vld [vmem:[#allocation6 + $0x58] sm:$0xff]
    %v4050 = vld [vmem:[#allocation6 + $0x60] sm:$0xff]
    %v4051 = vld [vmem:[#allocation6 + $0x68] sm:$0xff]
    %v4052 = vld [vmem:[#allocation6 + $0x70] sm:$0xff]
    %v4053 = vld [vmem:[#allocation6 + $0x78] sm:$0xff]
    %v4054 = vld [vmem:[#allocation6 + $0x80] sm:$0xff]
    %v4055 = vld [vmem:[#allocation6 + $0x88] sm:$0xff]
    %v4056 = vld [vmem:[#allocation6 + $0x90] sm:$0xff]
    %v4057 = vld [vmem:[#allocation6 + $0x98] sm:$0xff]
    %v4058 = vld [vmem:[#allocation6 + $0xa0] sm:$0xff]
    %v4059 = vld [vmem:[#allocation6 + $0xa8] sm:$0xff]
    %v4060 = vld [vmem:[#allocation6 + $0xb0] sm:$0xff]
    %v4061 = vld [vmem:[#allocation6 + $0xb8] sm:$0xff]
    %v4062 = vld [vmem:[#allocation6 + $0xc0] sm:$0xff]
    %v4063 = vld [vmem:[#allocation6 + $0xc8] sm:$0xff]
    %v4064 = vld [vmem:[#allocation6 + $0xd0] sm:$0xff]
    %v4065 = vld [vmem:[#allocation6 + $0xd8] sm:$0xff]
    %v4066 = vld [vmem:[#allocation6 + $0xe0] sm:$0xff]
    %v4067 = vld [vmem:[#allocation6 + $0xe8] sm:$0xff]
    %v4068 = vld [vmem:[#allocation6 + $0xf0] sm:$0xff]
    %v4069 = vld [vmem:[#allocation6 + $0xf8] sm:$0xff]
    %v4070 = vld [vmem:[#allocation6 + $0x100] sm:$0xff]
    %v4071 = vld [vmem:[#allocation6 + $0x108] sm:$0xff]
    %v4072 = vld [vmem:[#allocation6 + $0x110] sm:$0xff]
    %v4073 = vld [vmem:[#allocation6 + $0x118] sm:$0xff]
    %v4074 = vld [vmem:[#allocation6 + $0x120] sm:$0xff]
    %v4075 = vld [vmem:[#allocation6 + $0x128] sm:$0xff]
    %v4076 = vld [vmem:[#allocation6 + $0x130] sm:$0xff]
    %v4077 = vld [vmem:[#allocation6 + $0x138] sm:$0xff]
    %v4078 = vld [vmem:[#allocation6 + $0x140] sm:$0xff]
    %v4079 = vld [vmem:[#allocation6 + $0x148] sm:$0xff]
    %v4080 = vld [vmem:[#allocation6 + $0x150] sm:$0xff]
    %v4081 = vld [vmem:[#allocation6 + $0x158] sm:$0xff]
    %v4082 = vld [vmem:[#allocation6 + $0x160] sm:$0xff]
    %v4083 = vld [vmem:[#allocation6 + $0x168] sm:$0xff]
    %v4084 = vld [vmem:[#allocation6 + $0x170] sm:$0xff]
    %v4085 = vld [vmem:[#allocation6 + $0x178] sm:$0xff]
    %v4086 = vld [vmem:[#allocation6 + $0x180] sm:$0xff]
    %v4087 = vld [vmem:[#allocation6 + $0x188] sm:$0xff]
    %v4088 = vld [vmem:[#allocation6 + $0x190] sm:$0xff]
    %v4089 = vld [vmem:[#allocation6 + $0x198] sm:$0xff]
    %v4090 = vld [vmem:[#allocation6 + $0x1a0] sm:$0xff]
    %v4091 = vld [vmem:[#allocation6 + $0x1a8] sm:$0xff]
    %v4092 = vld [vmem:[#allocation6 + $0x1b0] sm:$0xff]
    %v4093 = vld [vmem:[#allocation6 + $0x1b8] sm:$0xff]
    %v4094 = vld [vmem:[#allocation6 + $0x1c0] sm:$0xff]
    %v4095 = vld [vmem:[#allocation6 + $0x1c8] sm:$0xff]
    %v4096 = vld [vmem:[#allocation6 + $0x1d0] sm:$0xff]
    %v4097 = vld [vmem:[#allocation6 + $0x1d8] sm:$0xff]
    %v4098 = vld [vmem:[#allocation6 + $0x1e0] sm:$0xff]
    %v4099 = vld [vmem:[#allocation6 + $0x1e8] sm:$0xff]
    %v4100 = vld [vmem:[#allocation6 + $0x1f0] sm:$0xff]
    %v4101 = vld [vmem:[#allocation6 + $0x1f8] sm:$0xff]
    %v4102 = vld [vmem:[#allocation6 + $0x200] sm:$0xff]
    %v4103 = vld [vmem:[#allocation6 + $0x208] sm:$0xff]
    %v4104 = vld [vmem:[#allocation6 + $0x210] sm:$0xff]
    %v4105 = vld [vmem:[#allocation6 + $0x218] sm:$0xff]
    %v4106 = vld [vmem:[#allocation6 + $0x220] sm:$0xff]
    %v4107 = vld [vmem:[#allocation6 + $0x228] sm:$0xff]
    %v4108 = vld [vmem:[#allocation6 + $0x230] sm:$0xff]
    %v4109 = vld [vmem:[#allocation6 + $0x238] sm:$0xff]
    %v4110 = vld [vmem:[#allocation6 + $0x240] sm:$0xff]
    %v4111 = vld [vmem:[#allocation6 + $0x248] sm:$0xff]
    %v4112 = vld [vmem:[#allocation6 + $0x250] sm:$0xff]
    %v4113 = vld [vmem:[#allocation6 + $0x258] sm:$0xff]
    %v4114 = vld [vmem:[#allocation6 + $0x260] sm:$0xff]
    %v4115 = vld [vmem:[#allocation6 + $0x268] sm:$0xff]
    %v4116 = vld [vmem:[#allocation6 + $0x270] sm:$0xff]
    %v4117 = vld [vmem:[#allocation6 + $0x278] sm:$0xff]
    %v4118 = vld [vmem:[#allocation6 + $0x280] sm:$0xff]
    %v4119 = vld [vmem:[#allocation6 + $0x288] sm:$0xff]
    %v4120 = vld [vmem:[#allocation6 + $0x290] sm:$0xff]
    %v4121 = vld [vmem:[#allocation6 + $0x298] sm:$0xff]
    %v4122 = vld [vmem:[#allocation6 + $0x2a0] sm:$0xff]
    %v4123 = vld [vmem:[#allocation6 + $0x2a8] sm:$0xff]
    %v4124 = vld [vmem:[#allocation6 + $0x2b0] sm:$0xff]
    %v4125 = vld [vmem:[#allocation6 + $0x2b8] sm:$0xff]
    %v4126 = vld [vmem:[#allocation6 + $0x2c0] sm:$0xff]
    %v4127 = vld [vmem:[#allocation6 + $0x2c8] sm:$0xff]
    %v4128 = vld [vmem:[#allocation6 + $0x2d0] sm:$0xff]
    %v4129 = vld [vmem:[#allocation6 + $0x2d8] sm:$0xff]
    %v4130 = vld [vmem:[#allocation6 + $0x2e0] sm:$0xff]
    %v4131 = vld [vmem:[#allocation6 + $0x2e8] sm:$0xff]
    %v4132 = vld [vmem:[#allocation6 + $0x2f0] sm:$0xff]
    %v4133 = vld [vmem:[#allocation6 + $0x2f8] sm:$0xff]
    %v4134 = vld [vmem:[#allocation6 + $0x300] sm:$0xff]
    %v4135 = vld [vmem:[#allocation6 + $0x308] sm:$0xff]
    %v4136 = vld [vmem:[#allocation6 + $0x310] sm:$0xff]
    %v4137 = vld [vmem:[#allocation6 + $0x318] sm:$0xff]
    %v4138 = vld [vmem:[#allocation6 + $0x320] sm:$0xff]
    %v4139 = vld [vmem:[#allocation6 + $0x328] sm:$0xff]
    %v4140 = vld [vmem:[#allocation6 + $0x330] sm:$0xff]
    %v4141 = vld [vmem:[#allocation6 + $0x338] sm:$0xff]
    %v4142 = vld [vmem:[#allocation6 + $0x340] sm:$0xff]
    %v4143 = vld [vmem:[#allocation6 + $0x348] sm:$0xff]
    %v4144 = vld [vmem:[#allocation6 + $0x350] sm:$0xff]
    %v4145 = vld [vmem:[#allocation6 + $0x358] sm:$0xff]
    %v4146 = vld [vmem:[#allocation6 + $0x360] sm:$0xff]
    %v4147 = vld [vmem:[#allocation6 + $0x368] sm:$0xff]
    %v4148 = vld [vmem:[#allocation6 + $0x370] sm:$0xff]
    %v4149 = vld [vmem:[#allocation6 + $0x378] sm:$0xff]
    %v4150 = vld [vmem:[#allocation6 + $0x380] sm:$0xff]
    %v4151 = vld [vmem:[#allocation6 + $0x388] sm:$0xff]
    %v4152 = vld [vmem:[#allocation6 + $0x390] sm:$0xff]
    %v4153 = vld [vmem:[#allocation6 + $0x398] sm:$0xff]
    %v4154 = vld [vmem:[#allocation6 + $0x3a0] sm:$0xff]
    %v4155 = vld [vmem:[#allocation6 + $0x3a8] sm:$0xff]
    %v4156 = vld [vmem:[#allocation6 + $0x3b0] sm:$0xff]
    %v4157 = vld [vmem:[#allocation6 + $0x3b8] sm:$0xff]
    %v4158 = vld [vmem:[#allocation6 + $0x3c0] sm:$0xff]
    %v4159 = vld [vmem:[#allocation6 + $0x3c8] sm:$0xff]
    %v4160 = vld [vmem:[#allocation6 + $0x3d0] sm:$0xff]
    %v4161 = vld [vmem:[#allocation6 + $0x3d8] sm:$0xff]
    %v4162 = vld [vmem:[#allocation6 + $0x3e0] sm:$0xff]
    %v4163 = vld [vmem:[#allocation6 + $0x3e8] sm:$0xff]
    %v4164 = vld [vmem:[#allocation6 + $0x3f0] sm:$0xff]
    %v4165 = vld [vmem:[#allocation6 + $0x3f8] sm:$0xff]
    %v4166 = vld [vmem:[#allocation6 + $0x400] sm:$0xff]
    %v4167 = vld [vmem:[#allocation6 + $0x408] sm:$0xff]
    %v4168 = vld [vmem:[#allocation6 + $0x410] sm:$0xff]
    %v4169 = vld [vmem:[#allocation6 + $0x418] sm:$0xff]
    %v4170 = vld [vmem:[#allocation6 + $0x420] sm:$0xff]
    %v4171 = vld [vmem:[#allocation6 + $0x428] sm:$0xff]
    %v4172 = vld [vmem:[#allocation6 + $0x430] sm:$0xff]
    %v4173 = vld [vmem:[#allocation6 + $0x438] sm:$0xff]
    %v4174 = vld [vmem:[#allocation6 + $0x440] sm:$0xff]
    %v4175 = vld [vmem:[#allocation6 + $0x448] sm:$0xff]
    %v4176 = vld [vmem:[#allocation6 + $0x450] sm:$0xff]
    %v4177 = vld [vmem:[#allocation6 + $0x458] sm:$0xff]
    %v4178 = vld [vmem:[#allocation6 + $0x460] sm:$0xff]
    %v4179 = vld [vmem:[#allocation6 + $0x468] sm:$0xff]
    %v4180 = vld [vmem:[#allocation6 + $0x470] sm:$0xff]
    %v4181 = vld [vmem:[#allocation6 + $0x478] sm:$0xff]
    %v4182 = vld [vmem:[#allocation6 + $0x480] sm:$0xff]
    %v4183 = vld [vmem:[#allocation6 + $0x488] sm:$0xff]
    %v4184 = vld [vmem:[#allocation6 + $0x490] sm:$0xff]
    %v4185 = vld [vmem:[#allocation6 + $0x498] sm:$0xff]
    %v4186 = vld [vmem:[#allocation6 + $0x4a0] sm:$0xff]
    %v4187 = vld [vmem:[#allocation6 + $0x4a8] sm:$0xff]
    %v4188 = vld [vmem:[#allocation6 + $0x4b0] sm:$0xff]
    %v4189 = vld [vmem:[#allocation6 + $0x4b8] sm:$0xff]
    %v4190 = vld [vmem:[#allocation6 + $0x4c0] sm:$0xff]
    %v4191 = vld [vmem:[#allocation6 + $0x4c8] sm:$0xff]
    %v4192 = vld [vmem:[#allocation6 + $0x4d0] sm:$0xff]
    %v4193 = vld [vmem:[#allocation6 + $0x4d8] sm:$0xff]
    %v4194 = vld [vmem:[#allocation6 + $0x4e0] sm:$0xff]
    %v4195 = vld [vmem:[#allocation6 + $0x4e8] sm:$0xff]
    %v4196 = vld [vmem:[#allocation6 + $0x4f0] sm:$0xff]
    %v4197 = vld [vmem:[#allocation6 + $0x4f8] sm:$0xff]
    %v4198 = vld [vmem:[#allocation6 + $0x500] sm:$0xff]
    %v4199 = vld [vmem:[#allocation6 + $0x508] sm:$0xff]
    %v4200 = vld [vmem:[#allocation6 + $0x510] sm:$0xff]
    %v4201 = vld [vmem:[#allocation6 + $0x518] sm:$0xff]
    %v4202 = vld [vmem:[#allocation6 + $0x520] sm:$0xff]
    %v4203 = vld [vmem:[#allocation6 + $0x528] sm:$0xff]
    %v4204 = vld [vmem:[#allocation6 + $0x530] sm:$0xff]
    %v4205 = vld [vmem:[#allocation6 + $0x538] sm:$0xff]
    %v4206 = vld [vmem:[#allocation6 + $0x540] sm:$0xff]
    %v4207 = vld [vmem:[#allocation6 + $0x548] sm:$0xff]
    %v4208 = vld [vmem:[#allocation6 + $0x550] sm:$0xff]
    %v4209 = vld [vmem:[#allocation6 + $0x558] sm:$0xff]
    %v4210 = vld [vmem:[#allocation6 + $0x560] sm:$0xff]
    %v4211 = vld [vmem:[#allocation6 + $0x568] sm:$0xff]
    %v4212 = vld [vmem:[#allocation6 + $0x570] sm:$0xff]
    %v4213 = vld [vmem:[#allocation6 + $0x578] sm:$0xff]
    %v4214 = vld [vmem:[#allocation6 + $0x580] sm:$0xff]
    %v4215 = vld [vmem:[#allocation6 + $0x588] sm:$0xff]
    %v4216 = vld [vmem:[#allocation6 + $0x590] sm:$0xff]
    %v4217 = vld [vmem:[#allocation6 + $0x598] sm:$0xff]
    %v4218 = vld [vmem:[#allocation6 + $0x5a0] sm:$0xff]
    %v4219 = vld [vmem:[#allocation6 + $0x5a8] sm:$0xff]
    %v4220 = vld [vmem:[#allocation6 + $0x5b0] sm:$0xff]
    %v4221 = vld [vmem:[#allocation6 + $0x5b8] sm:$0xff]
    %v4222 = vld [vmem:[#allocation6 + $0x5c0] sm:$0xff]
    %v4223 = vld [vmem:[#allocation6 + $0x5c8] sm:$0xff]
    %v4224 = vld [vmem:[#allocation6 + $0x5d0] sm:$0xff]
    %v4225 = vld [vmem:[#allocation6 + $0x5d8] sm:$0xff]
    %v4226 = vld [vmem:[#allocation6 + $0x5e0] sm:$0xff]
    %v4227 = vld [vmem:[#allocation6 + $0x5e8] sm:$0xff]
    %v4228 = vld [vmem:[#allocation6 + $0x5f0] sm:$0xff]
    %v4229 = vld [vmem:[#allocation6 + $0x5f8] sm:$0xff]
    %v4230 = vld [vmem:[#allocation6 + $0x600] sm:$0xff]
    %v4231 = vld [vmem:[#allocation6 + $0x608] sm:$0xff]
    %v4232 = vld [vmem:[#allocation6 + $0x610] sm:$0xff]
    %v4233 = vld [vmem:[#allocation6 + $0x618] sm:$0xff]
    %v4234 = vld [vmem:[#allocation6 + $0x620] sm:$0xff]
    %v4235 = vld [vmem:[#allocation6 + $0x628] sm:$0xff]
    %v4236 = vld [vmem:[#allocation6 + $0x630] sm:$0xff]
    %v4237 = vld [vmem:[#allocation6 + $0x638] sm:$0xff]
    %v4238 = vld [vmem:[#allocation6 + $0x640] sm:$0xff]
    %v4239 = vld [vmem:[#allocation6 + $0x648] sm:$0xff]
    %v4240 = vld [vmem:[#allocation6 + $0x650] sm:$0xff]
    %v4241 = vld [vmem:[#allocation6 + $0x658] sm:$0xff]
    %v4242 = vld [vmem:[#allocation6 + $0x660] sm:$0xff]
    %v4243 = vld [vmem:[#allocation6 + $0x668] sm:$0xff]
    %v4244 = vld [vmem:[#allocation6 + $0x670] sm:$0xff]
    %v4245 = vld [vmem:[#allocation6 + $0x678] sm:$0xff]
    %v4246 = vld [vmem:[#allocation6 + $0x680] sm:$0xff]
    %v4247 = vld [vmem:[#allocation6 + $0x688] sm:$0xff]
    %v4248 = vld [vmem:[#allocation6 + $0x690] sm:$0xff]
    %v4249 = vld [vmem:[#allocation6 + $0x698] sm:$0xff]
    %v4250 = vld [vmem:[#allocation6 + $0x6a0] sm:$0xff]
    %v4251 = vld [vmem:[#allocation6 + $0x6a8] sm:$0xff]
    %v4252 = vld [vmem:[#allocation6 + $0x6b0] sm:$0xff]
    %v4253 = vld [vmem:[#allocation6 + $0x6b8] sm:$0xff]
    %v4254 = vld [vmem:[#allocation6 + $0x6c0] sm:$0xff]
    %v4255 = vld [vmem:[#allocation6 + $0x6c8] sm:$0xff]
    %v4256 = vld [vmem:[#allocation6 + $0x6d0] sm:$0xff]
    %v4257 = vld [vmem:[#allocation6 + $0x6d8] sm:$0xff]
    %v4258 = vld [vmem:[#allocation6 + $0x6e0] sm:$0xff]
    %v4259 = vld [vmem:[#allocation6 + $0x6e8] sm:$0xff]
    %v4260 = vld [vmem:[#allocation6 + $0x6f0] sm:$0xff]
    %v4261 = vld [vmem:[#allocation6 + $0x6f8] sm:$0xff]
    %v4262 = vld [vmem:[#allocation6 + $0x700] sm:$0xff]
    %v4263 = vld [vmem:[#allocation6 + $0x708] sm:$0xff]
    %v4264 = vld [vmem:[#allocation6 + $0x710] sm:$0xff]
    %v4265 = vld [vmem:[#allocation6 + $0x718] sm:$0xff]
    %v4266 = vld [vmem:[#allocation6 + $0x720] sm:$0xff]
    %v4267 = vld [vmem:[#allocation6 + $0x728] sm:$0xff]
    %v4268 = vld [vmem:[#allocation6 + $0x730] sm:$0xff]
    %v4269 = vld [vmem:[#allocation6 + $0x738] sm:$0xff]
    %v4270 = vld [vmem:[#allocation6 + $0x740] sm:$0xff]
    %v4271 = vld [vmem:[#allocation6 + $0x748] sm:$0xff]
    %v4272 = vld [vmem:[#allocation6 + $0x750] sm:$0xff]
    %v4273 = vld [vmem:[#allocation6 + $0x758] sm:$0xff]
    %v4274 = vld [vmem:[#allocation6 + $0x760] sm:$0xff]
    %v4275 = vld [vmem:[#allocation6 + $0x768] sm:$0xff]
    %v4276 = vld [vmem:[#allocation6 + $0x770] sm:$0xff]
    %v4277 = vld [vmem:[#allocation6 + $0x778] sm:$0xff]
    %v4278 = vld [vmem:[#allocation6 + $0x780] sm:$0xff]
    %v4279 = vld [vmem:[#allocation6 + $0x788] sm:$0xff]
    %v4280 = vld [vmem:[#allocation6 + $0x790] sm:$0xff]
    %v4281 = vld [vmem:[#allocation6 + $0x798] sm:$0xff]
    %v4282 = vld [vmem:[#allocation6 + $0x7a0] sm:$0xff]
    %v4283 = vld [vmem:[#allocation6 + $0x7a8] sm:$0xff]
    %v4284 = vld [vmem:[#allocation6 + $0x7b0] sm:$0xff]
    %v4285 = vld [vmem:[#allocation6 + $0x7b8] sm:$0xff]
    %v4286 = vld [vmem:[#allocation6 + $0x7c0] sm:$0xff]
    %v4287 = vld [vmem:[#allocation6 + $0x7c8] sm:$0xff]
    %v4288 = vld [vmem:[#allocation6 + $0x7d0] sm:$0xff]
    %v4289 = vld [vmem:[#allocation6 + $0x7d8] sm:$0xff]
    %v4290 = vld [vmem:[#allocation6 + $0x7e0] sm:$0xff]
    %v4291 = vld [vmem:[#allocation6 + $0x7e8] sm:$0xff]
    %v4292 = vld [vmem:[#allocation6 + $0x7f0] sm:$0xff]
    %v4293 = vld [vmem:[#allocation6 + $0x7f8] sm:$0xff]
    %v4550 = vunpack.c.l.b16 %v4038
    %v4551 = vunpack.c.h.b16 %v4038
    %v4552 = vunpack.c.l.b16 %v4039
    %v4553 = vunpack.c.h.b16 %v4039
    %v4554 = vunpack.c.l.b16 %v4040
    %v4555 = vunpack.c.h.b16 %v4040
    %v4556 = vunpack.c.l.b16 %v4041
    %v4557 = vunpack.c.h.b16 %v4041
    %v4558 = vunpack.c.l.b16 %v4042
    %v4559 = vunpack.c.h.b16 %v4042
    %v4560 = vunpack.c.l.b16 %v4043
    %v4561 = vunpack.c.h.b16 %v4043
    %v4562 = vunpack.c.l.b16 %v4044
    %v4563 = vunpack.c.h.b16 %v4044
    %v4564 = vunpack.c.l.b16 %v4045
    %v4565 = vunpack.c.h.b16 %v4045
    %v4566 = vunpack.c.l.b16 %v4046
    %v4567 = vunpack.c.h.b16 %v4046
    %v4568 = vunpack.c.l.b16 %v4047
    %v4569 = vunpack.c.h.b16 %v4047
    %v4570 = vunpack.c.l.b16 %v4048
    %v4571 = vunpack.c.h.b16 %v4048
    %v4572 = vunpack.c.l.b16 %v4049
    %v4573 = vunpack.c.h.b16 %v4049
    %v4574 = vunpack.c.l.b16 %v4050
    %v4575 = vunpack.c.h.b16 %v4050
    %v4576 = vunpack.c.l.b16 %v4051
    %v4577 = vunpack.c.h.b16 %v4051
    %v4578 = vunpack.c.l.b16 %v4052
    %v4579 = vunpack.c.h.b16 %v4052
    %v4580 = vunpack.c.l.b16 %v4053
    %v4581 = vunpack.c.h.b16 %v4053
    %v4582 = vunpack.c.l.b16 %v4054
    %v4583 = vunpack.c.h.b16 %v4054
    %v4584 = vunpack.c.l.b16 %v4055
    %v4585 = vunpack.c.h.b16 %v4055
    %v4586 = vunpack.c.l.b16 %v4056
    %v4587 = vunpack.c.h.b16 %v4056
    %v4588 = vunpack.c.l.b16 %v4057
    %v4589 = vunpack.c.h.b16 %v4057
    %v4590 = vunpack.c.l.b16 %v4058
    %v4591 = vunpack.c.h.b16 %v4058
    %v4592 = vunpack.c.l.b16 %v4059
    %v4593 = vunpack.c.h.b16 %v4059
    %v4594 = vunpack.c.l.b16 %v4060
    %v4595 = vunpack.c.h.b16 %v4060
    %v4596 = vunpack.c.l.b16 %v4061
    %v4597 = vunpack.c.h.b16 %v4061
    %v4598 = vunpack.c.l.b16 %v4062
    %v4599 = vunpack.c.h.b16 %v4062
    %v4600 = vunpack.c.l.b16 %v4063
    %v4601 = vunpack.c.h.b16 %v4063
    %v4602 = vunpack.c.l.b16 %v4064
    %v4603 = vunpack.c.h.b16 %v4064
    %v4604 = vunpack.c.l.b16 %v4065
    %v4605 = vunpack.c.h.b16 %v4065
    %v4606 = vunpack.c.l.b16 %v4066
    %v4607 = vunpack.c.h.b16 %v4066
    %v4608 = vunpack.c.l.b16 %v4067
    %v4609 = vunpack.c.h.b16 %v4067
    %v4610 = vunpack.c.l.b16 %v4068
    %v4611 = vunpack.c.h.b16 %v4068
    %v4612 = vunpack.c.l.b16 %v4069
    %v4613 = vunpack.c.h.b16 %v4069
    %v4614 = vunpack.c.l.b16 %v4070
    %v4615 = vunpack.c.h.b16 %v4070
    %v4616 = vunpack.c.l.b16 %v4071
    %v4617 = vunpack.c.h.b16 %v4071
    %v4618 = vunpack.c.l.b16 %v4072
    %v4619 = vunpack.c.h.b16 %v4072
    %v4620 = vunpack.c.l.b16 %v4073
    %v4621 = vunpack.c.h.b16 %v4073
    %v4622 = vunpack.c.l.b16 %v4074
    %v4623 = vunpack.c.h.b16 %v4074
    %v4624 = vunpack.c.l.b16 %v4075
    %v4625 = vunpack.c.h.b16 %v4075
    %v4626 = vunpack.c.l.b16 %v4076
    %v4627 = vunpack.c.h.b16 %v4076
    %v4628 = vunpack.c.l.b16 %v4077
    %v4629 = vunpack.c.h.b16 %v4077
    %v4630 = vunpack.c.l.b16 %v4078
    %v4631 = vunpack.c.h.b16 %v4078
    %v4632 = vunpack.c.l.b16 %v4079
    %v4633 = vunpack.c.h.b16 %v4079
    %v4634 = vunpack.c.l.b16 %v4080
    %v4635 = vunpack.c.h.b16 %v4080
    %v4636 = vunpack.c.l.b16 %v4081
    %v4637 = vunpack.c.h.b16 %v4081
    %v4638 = vunpack.c.l.b16 %v4082
    %v4639 = vunpack.c.h.b16 %v4082
    %v4640 = vunpack.c.l.b16 %v4083
    %v4641 = vunpack.c.h.b16 %v4083
    %v4642 = vunpack.c.l.b16 %v4084
    %v4643 = vunpack.c.h.b16 %v4084
    %v4644 = vunpack.c.l.b16 %v4085
    %v4645 = vunpack.c.h.b16 %v4085
    %v4646 = vunpack.c.l.b16 %v4086
    %v4647 = vunpack.c.h.b16 %v4086
    %v4648 = vunpack.c.l.b16 %v4087
    %v4649 = vunpack.c.h.b16 %v4087
    %v4650 = vunpack.c.l.b16 %v4088
    %v4651 = vunpack.c.h.b16 %v4088
    %v4652 = vunpack.c.l.b16 %v4089
    %v4653 = vunpack.c.h.b16 %v4089
    %v4654 = vunpack.c.l.b16 %v4090
    %v4655 = vunpack.c.h.b16 %v4090
    %v4656 = vunpack.c.l.b16 %v4091
    %v4657 = vunpack.c.h.b16 %v4091
    %v4658 = vunpack.c.l.b16 %v4092
    %v4659 = vunpack.c.h.b16 %v4092
    %v4660 = vunpack.c.l.b16 %v4093
    %v4661 = vunpack.c.h.b16 %v4093
    %v4662 = vunpack.c.l.b16 %v4094
    %v4663 = vunpack.c.h.b16 %v4094
    %v4664 = vunpack.c.l.b16 %v4095
    %v4665 = vunpack.c.h.b16 %v4095
    %v4666 = vunpack.c.l.b16 %v4096
    %v4667 = vunpack.c.h.b16 %v4096
    %v4668 = vunpack.c.l.b16 %v4097
    %v4669 = vunpack.c.h.b16 %v4097
    %v4670 = vunpack.c.l.b16 %v4098
    %v4671 = vunpack.c.h.b16 %v4098
    %v4672 = vunpack.c.l.b16 %v4099
    %v4673 = vunpack.c.h.b16 %v4099
    %v4674 = vunpack.c.l.b16 %v4100
    %v4675 = vunpack.c.h.b16 %v4100
    %v4676 = vunpack.c.l.b16 %v4101
    %v4677 = vunpack.c.h.b16 %v4101
    %v4678 = vunpack.c.l.b16 %v4102
    %v4679 = vunpack.c.h.b16 %v4102
    %v4680 = vunpack.c.l.b16 %v4103
    %v4681 = vunpack.c.h.b16 %v4103
    %v4682 = vunpack.c.l.b16 %v4104
    %v4683 = vunpack.c.h.b16 %v4104
    %v4684 = vunpack.c.l.b16 %v4105
    %v4685 = vunpack.c.h.b16 %v4105
    %v4686 = vunpack.c.l.b16 %v4106
    %v4687 = vunpack.c.h.b16 %v4106
    %v4688 = vunpack.c.l.b16 %v4107
    %v4689 = vunpack.c.h.b16 %v4107
    %v4690 = vunpack.c.l.b16 %v4108
    %v4691 = vunpack.c.h.b16 %v4108
    %v4692 = vunpack.c.l.b16 %v4109
    %v4693 = vunpack.c.h.b16 %v4109
    %v4694 = vunpack.c.l.b16 %v4110
    %v4695 = vunpack.c.h.b16 %v4110
    %v4696 = vunpack.c.l.b16 %v4111
    %v4697 = vunpack.c.h.b16 %v4111
    %v4698 = vunpack.c.l.b16 %v4112
    %v4699 = vunpack.c.h.b16 %v4112
    %v4700 = vunpack.c.l.b16 %v4113
    %v4701 = vunpack.c.h.b16 %v4113
    %v4702 = vunpack.c.l.b16 %v4114
    %v4703 = vunpack.c.h.b16 %v4114
    %v4704 = vunpack.c.l.b16 %v4115
    %v4705 = vunpack.c.h.b16 %v4115
    %v4706 = vunpack.c.l.b16 %v4116
    %v4707 = vunpack.c.h.b16 %v4116
    %v4708 = vunpack.c.l.b16 %v4117
    %v4709 = vunpack.c.h.b16 %v4117
    %v4710 = vunpack.c.l.b16 %v4118
    %v4711 = vunpack.c.h.b16 %v4118
    %v4712 = vunpack.c.l.b16 %v4119
    %v4713 = vunpack.c.h.b16 %v4119
    %v4714 = vunpack.c.l.b16 %v4120
    %v4715 = vunpack.c.h.b16 %v4120
    %v4716 = vunpack.c.l.b16 %v4121
    %v4717 = vunpack.c.h.b16 %v4121
    %v4718 = vunpack.c.l.b16 %v4122
    %v4719 = vunpack.c.h.b16 %v4122
    %v4720 = vunpack.c.l.b16 %v4123
    %v4721 = vunpack.c.h.b16 %v4123
    %v4722 = vunpack.c.l.b16 %v4124
    %v4723 = vunpack.c.h.b16 %v4124
    %v4724 = vunpack.c.l.b16 %v4125
    %v4725 = vunpack.c.h.b16 %v4125
    %v4726 = vunpack.c.l.b16 %v4126
    %v4727 = vunpack.c.h.b16 %v4126
    %v4728 = vunpack.c.l.b16 %v4127
    %v4729 = vunpack.c.h.b16 %v4127
    %v4730 = vunpack.c.l.b16 %v4128
    %v4731 = vunpack.c.h.b16 %v4128
    %v4732 = vunpack.c.l.b16 %v4129
    %v4733 = vunpack.c.h.b16 %v4129
    %v4734 = vunpack.c.l.b16 %v4130
    %v4735 = vunpack.c.h.b16 %v4130
    %v4736 = vunpack.c.l.b16 %v4131
    %v4737 = vunpack.c.h.b16 %v4131
    %v4738 = vunpack.c.l.b16 %v4132
    %v4739 = vunpack.c.h.b16 %v4132
    %v4740 = vunpack.c.l.b16 %v4133
    %v4741 = vunpack.c.h.b16 %v4133
    %v4742 = vunpack.c.l.b16 %v4134
    %v4743 = vunpack.c.h.b16 %v4134
    %v4744 = vunpack.c.l.b16 %v4135
    %v4745 = vunpack.c.h.b16 %v4135
    %v4746 = vunpack.c.l.b16 %v4136
    %v4747 = vunpack.c.h.b16 %v4136
    %v4748 = vunpack.c.l.b16 %v4137
    %v4749 = vunpack.c.h.b16 %v4137
    %v4750 = vunpack.c.l.b16 %v4138
    %v4751 = vunpack.c.h.b16 %v4138
    %v4752 = vunpack.c.l.b16 %v4139
    %v4753 = vunpack.c.h.b16 %v4139
    %v4754 = vunpack.c.l.b16 %v4140
    %v4755 = vunpack.c.h.b16 %v4140
    %v4756 = vunpack.c.l.b16 %v4141
    %v4757 = vunpack.c.h.b16 %v4141
    %v4758 = vunpack.c.l.b16 %v4142
    %v4759 = vunpack.c.h.b16 %v4142
    %v4760 = vunpack.c.l.b16 %v4143
    %v4761 = vunpack.c.h.b16 %v4143
    %v4762 = vunpack.c.l.b16 %v4144
    %v4763 = vunpack.c.h.b16 %v4144
    %v4764 = vunpack.c.l.b16 %v4145
    %v4765 = vunpack.c.h.b16 %v4145
    %v4766 = vunpack.c.l.b16 %v4146
    %v4767 = vunpack.c.h.b16 %v4146
    %v4768 = vunpack.c.l.b16 %v4147
    %v4769 = vunpack.c.h.b16 %v4147
    %v4770 = vunpack.c.l.b16 %v4148
    %v4771 = vunpack.c.h.b16 %v4148
    %v4772 = vunpack.c.l.b16 %v4149
    %v4773 = vunpack.c.h.b16 %v4149
    %v4774 = vunpack.c.l.b16 %v4150
    %v4775 = vunpack.c.h.b16 %v4150
    %v4776 = vunpack.c.l.b16 %v4151
    %v4777 = vunpack.c.h.b16 %v4151
    %v4778 = vunpack.c.l.b16 %v4152
    %v4779 = vunpack.c.h.b16 %v4152
    %v4780 = vunpack.c.l.b16 %v4153
    %v4781 = vunpack.c.h.b16 %v4153
    %v4782 = vunpack.c.l.b16 %v4154
    %v4783 = vunpack.c.h.b16 %v4154
    %v4784 = vunpack.c.l.b16 %v4155
    %v4785 = vunpack.c.h.b16 %v4155
    %v4786 = vunpack.c.l.b16 %v4156
    %v4787 = vunpack.c.h.b16 %v4156
    %v4788 = vunpack.c.l.b16 %v4157
    %v4789 = vunpack.c.h.b16 %v4157
    %v4790 = vunpack.c.l.b16 %v4158
    %v4791 = vunpack.c.h.b16 %v4158
    %v4792 = vunpack.c.l.b16 %v4159
    %v4793 = vunpack.c.h.b16 %v4159
    %v4794 = vunpack.c.l.b16 %v4160
    %v4795 = vunpack.c.h.b16 %v4160
    %v4796 = vunpack.c.l.b16 %v4161
    %v4797 = vunpack.c.h.b16 %v4161
    %v4798 = vunpack.c.l.b16 %v4162
    %v4799 = vunpack.c.h.b16 %v4162
    %v4800 = vunpack.c.l.b16 %v4163
    %v4801 = vunpack.c.h.b16 %v4163
    %v4802 = vunpack.c.l.b16 %v4164
    %v4803 = vunpack.c.h.b16 %v4164
    %v4804 = vunpack.c.l.b16 %v4165
    %v4805 = vunpack.c.h.b16 %v4165
    %v4806 = vunpack.c.l.b16 %v4166
    %v4807 = vunpack.c.h.b16 %v4166
    %v4808 = vunpack.c.l.b16 %v4167
    %v4809 = vunpack.c.h.b16 %v4167
    %v4810 = vunpack.c.l.b16 %v4168
    %v4811 = vunpack.c.h.b16 %v4168
    %v4812 = vunpack.c.l.b16 %v4169
    %v4813 = vunpack.c.h.b16 %v4169
    %v4814 = vunpack.c.l.b16 %v4170
    %v4815 = vunpack.c.h.b16 %v4170
    %v4816 = vunpack.c.l.b16 %v4171
    %v4817 = vunpack.c.h.b16 %v4171
    %v4818 = vunpack.c.l.b16 %v4172
    %v4819 = vunpack.c.h.b16 %v4172
    %v4820 = vunpack.c.l.b16 %v4173
    %v4821 = vunpack.c.h.b16 %v4173
    %v4822 = vunpack.c.l.b16 %v4174
    %v4823 = vunpack.c.h.b16 %v4174
    %v4824 = vunpack.c.l.b16 %v4175
    %v4825 = vunpack.c.h.b16 %v4175
    %v4826 = vunpack.c.l.b16 %v4176
    %v4827 = vunpack.c.h.b16 %v4176
    %v4828 = vunpack.c.l.b16 %v4177
    %v4829 = vunpack.c.h.b16 %v4177
    %v4830 = vunpack.c.l.b16 %v4178
    %v4831 = vunpack.c.h.b16 %v4178
    %v4832 = vunpack.c.l.b16 %v4179
    %v4833 = vunpack.c.h.b16 %v4179
    %v4834 = vunpack.c.l.b16 %v4180
    %v4835 = vunpack.c.h.b16 %v4180
    %v4836 = vunpack.c.l.b16 %v4181
    %v4837 = vunpack.c.h.b16 %v4181
    %v4838 = vunpack.c.l.b16 %v4182
    %v4839 = vunpack.c.h.b16 %v4182
    %v4840 = vunpack.c.l.b16 %v4183
    %v4841 = vunpack.c.h.b16 %v4183
    %v4842 = vunpack.c.l.b16 %v4184
    %v4843 = vunpack.c.h.b16 %v4184
    %v4844 = vunpack.c.l.b16 %v4185
    %v4845 = vunpack.c.h.b16 %v4185
    %v4846 = vunpack.c.l.b16 %v4186
    %v4847 = vunpack.c.h.b16 %v4186
    %v4848 = vunpack.c.l.b16 %v4187
    %v4849 = vunpack.c.h.b16 %v4187
    %v4850 = vunpack.c.l.b16 %v4188
    %v4851 = vunpack.c.h.b16 %v4188
    %v4852 = vunpack.c.l.b16 %v4189
    %v4853 = vunpack.c.h.b16 %v4189
    %v4854 = vunpack.c.l.b16 %v4190
    %v4855 = vunpack.c.h.b16 %v4190
    %v4856 = vunpack.c.l.b16 %v4191
    %v4857 = vunpack.c.h.b16 %v4191
    %v4858 = vunpack.c.l.b16 %v4192
    %v4859 = vunpack.c.h.b16 %v4192
    %v4860 = vunpack.c.l.b16 %v4193
    %v4861 = vunpack.c.h.b16 %v4193
    %v4862 = vunpack.c.l.b16 %v4194
    %v4863 = vunpack.c.h.b16 %v4194
    %v4864 = vunpack.c.l.b16 %v4195
    %v4865 = vunpack.c.h.b16 %v4195
    %v4866 = vunpack.c.l.b16 %v4196
    %v4867 = vunpack.c.h.b16 %v4196
    %v4868 = vunpack.c.l.b16 %v4197
    %v4869 = vunpack.c.h.b16 %v4197
    %v4870 = vunpack.c.l.b16 %v4198
    %v4871 = vunpack.c.h.b16 %v4198
    %v4872 = vunpack.c.l.b16 %v4199
    %v4873 = vunpack.c.h.b16 %v4199
    %v4874 = vunpack.c.l.b16 %v4200
    %v4875 = vunpack.c.h.b16 %v4200
    %v4876 = vunpack.c.l.b16 %v4201
    %v4877 = vunpack.c.h.b16 %v4201
    %v4878 = vunpack.c.l.b16 %v4202
    %v4879 = vunpack.c.h.b16 %v4202
    %v4880 = vunpack.c.l.b16 %v4203
    %v4881 = vunpack.c.h.b16 %v4203
    %v4882 = vunpack.c.l.b16 %v4204
    %v4883 = vunpack.c.h.b16 %v4204
    %v4884 = vunpack.c.l.b16 %v4205
    %v4885 = vunpack.c.h.b16 %v4205
    %v4886 = vunpack.c.l.b16 %v4206
    %v4887 = vunpack.c.h.b16 %v4206
    %v4888 = vunpack.c.l.b16 %v4207
    %v4889 = vunpack.c.h.b16 %v4207
    %v4890 = vunpack.c.l.b16 %v4208
    %v4891 = vunpack.c.h.b16 %v4208
    %v4892 = vunpack.c.l.b16 %v4209
    %v4893 = vunpack.c.h.b16 %v4209
    %v4894 = vunpack.c.l.b16 %v4210
    %v4895 = vunpack.c.h.b16 %v4210
    %v4896 = vunpack.c.l.b16 %v4211
    %v4897 = vunpack.c.h.b16 %v4211
    %v4898 = vunpack.c.l.b16 %v4212
    %v4899 = vunpack.c.h.b16 %v4212
    %v4900 = vunpack.c.l.b16 %v4213
    %v4901 = vunpack.c.h.b16 %v4213
    %v4902 = vunpack.c.l.b16 %v4214
    %v4903 = vunpack.c.h.b16 %v4214
    %v4904 = vunpack.c.l.b16 %v4215
    %v4905 = vunpack.c.h.b16 %v4215
    %v4906 = vunpack.c.l.b16 %v4216
    %v4907 = vunpack.c.h.b16 %v4216
    %v4908 = vunpack.c.l.b16 %v4217
    %v4909 = vunpack.c.h.b16 %v4217
    %v4910 = vunpack.c.l.b16 %v4218
    %v4911 = vunpack.c.h.b16 %v4218
    %v4912 = vunpack.c.l.b16 %v4219
    %v4913 = vunpack.c.h.b16 %v4219
    %v4914 = vunpack.c.l.b16 %v4220
    %v4915 = vunpack.c.h.b16 %v4220
    %v4916 = vunpack.c.l.b16 %v4221
    %v4917 = vunpack.c.h.b16 %v4221
    %v4918 = vunpack.c.l.b16 %v4222
    %v4919 = vunpack.c.h.b16 %v4222
    %v4920 = vunpack.c.l.b16 %v4223
    %v4921 = vunpack.c.h.b16 %v4223
    %v4922 = vunpack.c.l.b16 %v4224
    %v4923 = vunpack.c.h.b16 %v4224
    %v4924 = vunpack.c.l.b16 %v4225
    %v4925 = vunpack.c.h.b16 %v4225
    %v4926 = vunpack.c.l.b16 %v4226
    %v4927 = vunpack.c.h.b16 %v4226
    %v4928 = vunpack.c.l.b16 %v4227
    %v4929 = vunpack.c.h.b16 %v4227
    %v4930 = vunpack.c.l.b16 %v4228
    %v4931 = vunpack.c.h.b16 %v4228
    %v4932 = vunpack.c.l.b16 %v4229
    %v4933 = vunpack.c.h.b16 %v4229
    %v4934 = vunpack.c.l.b16 %v4230
    %v4935 = vunpack.c.h.b16 %v4230
    %v4936 = vunpack.c.l.b16 %v4231
    %v4937 = vunpack.c.h.b16 %v4231
    %v4938 = vunpack.c.l.b16 %v4232
    %v4939 = vunpack.c.h.b16 %v4232
    %v4940 = vunpack.c.l.b16 %v4233
    %v4941 = vunpack.c.h.b16 %v4233
    %v4942 = vunpack.c.l.b16 %v4234
    %v4943 = vunpack.c.h.b16 %v4234
    %v4944 = vunpack.c.l.b16 %v4235
    %v4945 = vunpack.c.h.b16 %v4235
    %v4946 = vunpack.c.l.b16 %v4236
    %v4947 = vunpack.c.h.b16 %v4236
    %v4948 = vunpack.c.l.b16 %v4237
    %v4949 = vunpack.c.h.b16 %v4237
    %v4950 = vunpack.c.l.b16 %v4238
    %v4951 = vunpack.c.h.b16 %v4238
    %v4952 = vunpack.c.l.b16 %v4239
    %v4953 = vunpack.c.h.b16 %v4239
    %v4954 = vunpack.c.l.b16 %v4240
    %v4955 = vunpack.c.h.b16 %v4240
    %v4956 = vunpack.c.l.b16 %v4241
    %v4957 = vunpack.c.h.b16 %v4241
    %v4958 = vunpack.c.l.b16 %v4242
    %v4959 = vunpack.c.h.b16 %v4242
    %v4960 = vunpack.c.l.b16 %v4243
    %v4961 = vunpack.c.h.b16 %v4243
    %v4962 = vunpack.c.l.b16 %v4244
    %v4963 = vunpack.c.h.b16 %v4244
    %v4964 = vunpack.c.l.b16 %v4245
    %v4965 = vunpack.c.h.b16 %v4245
    %v4966 = vunpack.c.l.b16 %v4246
    %v4967 = vunpack.c.h.b16 %v4246
    %v4968 = vunpack.c.l.b16 %v4247
    %v4969 = vunpack.c.h.b16 %v4247
    %v4970 = vunpack.c.l.b16 %v4248
    %v4971 = vunpack.c.h.b16 %v4248
    %v4972 = vunpack.c.l.b16 %v4249
    %v4973 = vunpack.c.h.b16 %v4249
    %v4974 = vunpack.c.l.b16 %v4250
    %v4975 = vunpack.c.h.b16 %v4250
    %v4976 = vunpack.c.l.b16 %v4251
    %v4977 = vunpack.c.h.b16 %v4251
    %v4978 = vunpack.c.l.b16 %v4252
    %v4979 = vunpack.c.h.b16 %v4252
    %v4980 = vunpack.c.l.b16 %v4253
    %v4981 = vunpack.c.h.b16 %v4253
    %v4982 = vunpack.c.l.b16 %v4254
    %v4983 = vunpack.c.h.b16 %v4254
    %v4984 = vunpack.c.l.b16 %v4255
    %v4985 = vunpack.c.h.b16 %v4255
    %v4986 = vunpack.c.l.b16 %v4256
    %v4987 = vunpack.c.h.b16 %v4256
    %v4988 = vunpack.c.l.b16 %v4257
    %v4989 = vunpack.c.h.b16 %v4257
    %v4990 = vunpack.c.l.b16 %v4258
    %v4991 = vunpack.c.h.b16 %v4258
    %v4992 = vunpack.c.l.b16 %v4259
    %v4993 = vunpack.c.h.b16 %v4259
    %v4994 = vunpack.c.l.b16 %v4260
    %v4995 = vunpack.c.h.b16 %v4260
    %v4996 = vunpack.c.l.b16 %v4261
    %v4997 = vunpack.c.h.b16 %v4261
    %v4998 = vunpack.c.l.b16 %v4262
    %v4999 = vunpack.c.h.b16 %v4262
    %v5000 = vunpack.c.l.b16 %v4263
    %v5001 = vunpack.c.h.b16 %v4263
    %v5002 = vunpack.c.l.b16 %v4264
    %v5003 = vunpack.c.h.b16 %v4264
    %v5004 = vunpack.c.l.b16 %v4265
    %v5005 = vunpack.c.h.b16 %v4265
    %v5006 = vunpack.c.l.b16 %v4266
    %v5007 = vunpack.c.h.b16 %v4266
    %v5008 = vunpack.c.l.b16 %v4267
    %v5009 = vunpack.c.h.b16 %v4267
    %v5010 = vunpack.c.l.b16 %v4268
    %v5011 = vunpack.c.h.b16 %v4268
    %v5012 = vunpack.c.l.b16 %v4269
    %v5013 = vunpack.c.h.b16 %v4269
    %v5014 = vunpack.c.l.b16 %v4270
    %v5015 = vunpack.c.h.b16 %v4270
    %v5016 = vunpack.c.l.b16 %v4271
    %v5017 = vunpack.c.h.b16 %v4271
    %v5018 = vunpack.c.l.b16 %v4272
    %v5019 = vunpack.c.h.b16 %v4272
    %v5020 = vunpack.c.l.b16 %v4273
    %v5021 = vunpack.c.h.b16 %v4273
    %v5022 = vunpack.c.l.b16 %v4274
    %v5023 = vunpack.c.h.b16 %v4274
    %v5024 = vunpack.c.l.b16 %v4275
    %v5025 = vunpack.c.h.b16 %v4275
    %v5026 = vunpack.c.l.b16 %v4276
    %v5027 = vunpack.c.h.b16 %v4276
    %v5028 = vunpack.c.l.b16 %v4277
    %v5029 = vunpack.c.h.b16 %v4277
    %v5030 = vunpack.c.l.b16 %v4278
    %v5031 = vunpack.c.h.b16 %v4278
    %v5032 = vunpack.c.l.b16 %v4279
    %v5033 = vunpack.c.h.b16 %v4279
    %v5034 = vunpack.c.l.b16 %v4280
    %v5035 = vunpack.c.h.b16 %v4280
    %v5036 = vunpack.c.l.b16 %v4281
    %v5037 = vunpack.c.h.b16 %v4281
    %v5038 = vunpack.c.l.b16 %v4282
    %v5039 = vunpack.c.h.b16 %v4282
    %v5040 = vunpack.c.l.b16 %v4283
    %v5041 = vunpack.c.h.b16 %v4283
    %v5042 = vunpack.c.l.b16 %v4284
    %v5043 = vunpack.c.h.b16 %v4284
    %v5044 = vunpack.c.l.b16 %v4285
    %v5045 = vunpack.c.h.b16 %v4285
    %v5046 = vunpack.c.l.b16 %v4286
    %v5047 = vunpack.c.h.b16 %v4286
    %v5048 = vunpack.c.l.b16 %v4287
    %v5049 = vunpack.c.h.b16 %v4287
    %v5050 = vunpack.c.l.b16 %v4288
    %v5051 = vunpack.c.h.b16 %v4288
    %v5052 = vunpack.c.l.b16 %v4289
    %v5053 = vunpack.c.h.b16 %v4289
    %v5054 = vunpack.c.l.b16 %v4290
    %v5055 = vunpack.c.h.b16 %v4290
    %v5056 = vunpack.c.l.b16 %v4291
    %v5057 = vunpack.c.h.b16 %v4291
    %v5058 = vunpack.c.l.b16 %v4292
    %v5059 = vunpack.c.h.b16 %v4292
    %v5060 = vunpack.c.l.b16 %v4293
    %v5061 = vunpack.c.h.b16 %v4293
    %v5062 = vpack.c.b16 %v4554, %v4550
    %v5063 = vpack.c.b16 %v4555, %v4551
    %v5064 = vpack.c.b16 %v4556, %v4552
    %v5065 = vpack.c.b16 %v4557, %v4553
    %v5066 = vpack.c.b16 %v4562, %v4558
    %v5067 = vpack.c.b16 %v4563, %v4559
    %v5068 = vpack.c.b16 %v4564, %v4560
    %v5069 = vpack.c.b16 %v4565, %v4561
    %v5070 = vpack.c.b16 %v4570, %v4566
    %v5071 = vpack.c.b16 %v4571, %v4567
    %v5072 = vpack.c.b16 %v4572, %v4568
    %v5073 = vpack.c.b16 %v4573, %v4569
    %v5074 = vpack.c.b16 %v4578, %v4574
    %v5075 = vpack.c.b16 %v4579, %v4575
    %v5076 = vpack.c.b16 %v4580, %v4576
    %v5077 = vpack.c.b16 %v4581, %v4577
    %v5078 = vpack.c.b16 %v4586, %v4582
    %v5079 = vpack.c.b16 %v4587, %v4583
    %v5080 = vpack.c.b16 %v4588, %v4584
    %v5081 = vpack.c.b16 %v4589, %v4585
    %v5082 = vpack.c.b16 %v4594, %v4590
    %v5083 = vpack.c.b16 %v4595, %v4591
    %v5084 = vpack.c.b16 %v4596, %v4592
    %v5085 = vpack.c.b16 %v4597, %v4593
    %v5086 = vpack.c.b16 %v4602, %v4598
    %v5087 = vpack.c.b16 %v4603, %v4599
    %v5088 = vpack.c.b16 %v4604, %v4600
    %v5089 = vpack.c.b16 %v4605, %v4601
    %v5090 = vpack.c.b16 %v4610, %v4606
    %v5091 = vpack.c.b16 %v4611, %v4607
    %v5092 = vpack.c.b16 %v4612, %v4608
    %v5093 = vpack.c.b16 %v4613, %v4609
    %v5094 = vpack.c.b16 %v4618, %v4614
    %v5095 = vpack.c.b16 %v4619, %v4615
    %v5096 = vpack.c.b16 %v4620, %v4616
    %v5097 = vpack.c.b16 %v4621, %v4617
    %v5098 = vpack.c.b16 %v4626, %v4622
    %v5099 = vpack.c.b16 %v4627, %v4623
    %v5100 = vpack.c.b16 %v4628, %v4624
    %v5101 = vpack.c.b16 %v4629, %v4625
    %v5102 = vpack.c.b16 %v4634, %v4630
    %v5103 = vpack.c.b16 %v4635, %v4631
    %v5104 = vpack.c.b16 %v4636, %v4632
    %v5105 = vpack.c.b16 %v4637, %v4633
    %v5106 = vpack.c.b16 %v4642, %v4638
    %v5107 = vpack.c.b16 %v4643, %v4639
    %v5108 = vpack.c.b16 %v4644, %v4640
    %v5109 = vpack.c.b16 %v4645, %v4641
    %v5110 = vpack.c.b16 %v4650, %v4646
    %v5111 = vpack.c.b16 %v4651, %v4647
    %v5112 = vpack.c.b16 %v4652, %v4648
    %v5113 = vpack.c.b16 %v4653, %v4649
    %v5114 = vpack.c.b16 %v4658, %v4654
    %v5115 = vpack.c.b16 %v4659, %v4655
    %v5116 = vpack.c.b16 %v4660, %v4656
    %v5117 = vpack.c.b16 %v4661, %v4657
    %v5118 = vpack.c.b16 %v4666, %v4662
    %v5119 = vpack.c.b16 %v4667, %v4663
    %v5120 = vpack.c.b16 %v4668, %v4664
    %v5121 = vpack.c.b16 %v4669, %v4665
    %v5122 = vpack.c.b16 %v4674, %v4670
    %v5123 = vpack.c.b16 %v4675, %v4671
    %v5124 = vpack.c.b16 %v4676, %v4672
    %v5125 = vpack.c.b16 %v4677, %v4673
    %v5126 = vpack.c.b16 %v4682, %v4678
    %v5127 = vpack.c.b16 %v4683, %v4679
    %v5128 = vpack.c.b16 %v4684, %v4680
    %v5129 = vpack.c.b16 %v4685, %v4681
    %v5130 = vpack.c.b16 %v4690, %v4686
    %v5131 = vpack.c.b16 %v4691, %v4687
    %v5132 = vpack.c.b16 %v4692, %v4688
    %v5133 = vpack.c.b16 %v4693, %v4689
    %v5134 = vpack.c.b16 %v4698, %v4694
    %v5135 = vpack.c.b16 %v4699, %v4695
    %v5136 = vpack.c.b16 %v4700, %v4696
    %v5137 = vpack.c.b16 %v4701, %v4697
    %v5138 = vpack.c.b16 %v4706, %v4702
    %v5139 = vpack.c.b16 %v4707, %v4703
    %v5140 = vpack.c.b16 %v4708, %v4704
    %v5141 = vpack.c.b16 %v4709, %v4705
    %v5142 = vpack.c.b16 %v4714, %v4710
    %v5143 = vpack.c.b16 %v4715, %v4711
    %v5144 = vpack.c.b16 %v4716, %v4712
    %v5145 = vpack.c.b16 %v4717, %v4713
    %v5146 = vpack.c.b16 %v4722, %v4718
    %v5147 = vpack.c.b16 %v4723, %v4719
    %v5148 = vpack.c.b16 %v4724, %v4720
    %v5149 = vpack.c.b16 %v4725, %v4721
    %v5150 = vpack.c.b16 %v4730, %v4726
    %v5151 = vpack.c.b16 %v4731, %v4727
    %v5152 = vpack.c.b16 %v4732, %v4728
    %v5153 = vpack.c.b16 %v4733, %v4729
    %v5154 = vpack.c.b16 %v4738, %v4734
    %v5155 = vpack.c.b16 %v4739, %v4735
    %v5156 = vpack.c.b16 %v4740, %v4736
    %v5157 = vpack.c.b16 %v4741, %v4737
    %v5158 = vpack.c.b16 %v4746, %v4742
    %v5159 = vpack.c.b16 %v4747, %v4743
    %v5160 = vpack.c.b16 %v4748, %v4744
    %v5161 = vpack.c.b16 %v4749, %v4745
    %v5162 = vpack.c.b16 %v4754, %v4750
    %v5163 = vpack.c.b16 %v4755, %v4751
    %v5164 = vpack.c.b16 %v4756, %v4752
    %v5165 = vpack.c.b16 %v4757, %v4753
    %v5166 = vpack.c.b16 %v4762, %v4758
    %v5167 = vpack.c.b16 %v4763, %v4759
    %v5168 = vpack.c.b16 %v4764, %v4760
    %v5169 = vpack.c.b16 %v4765, %v4761
    %v5170 = vpack.c.b16 %v4770, %v4766
    %v5171 = vpack.c.b16 %v4771, %v4767
    %v5172 = vpack.c.b16 %v4772, %v4768
    %v5173 = vpack.c.b16 %v4773, %v4769
    %v5174 = vpack.c.b16 %v4778, %v4774
    %v5175 = vpack.c.b16 %v4779, %v4775
    %v5176 = vpack.c.b16 %v4780, %v4776
    %v5177 = vpack.c.b16 %v4781, %v4777
    %v5178 = vpack.c.b16 %v4786, %v4782
    %v5179 = vpack.c.b16 %v4787, %v4783
    %v5180 = vpack.c.b16 %v4788, %v4784
    %v5181 = vpack.c.b16 %v4789, %v4785
    %v5182 = vpack.c.b16 %v4794, %v4790
    %v5183 = vpack.c.b16 %v4795, %v4791
    %v5184 = vpack.c.b16 %v4796, %v4792
    %v5185 = vpack.c.b16 %v4797, %v4793
    %v5186 = vpack.c.b16 %v4802, %v4798
    %v5187 = vpack.c.b16 %v4803, %v4799
    %v5188 = vpack.c.b16 %v4804, %v4800
    %v5189 = vpack.c.b16 %v4805, %v4801
    %v5190 = vpack.c.b16 %v4810, %v4806
    %v5191 = vpack.c.b16 %v4811, %v4807
    %v5192 = vpack.c.b16 %v4812, %v4808
    %v5193 = vpack.c.b16 %v4813, %v4809
    %v5194 = vpack.c.b16 %v4818, %v4814
    %v5195 = vpack.c.b16 %v4819, %v4815
    %v5196 = vpack.c.b16 %v4820, %v4816
    %v5197 = vpack.c.b16 %v4821, %v4817
    %v5198 = vpack.c.b16 %v4826, %v4822
    %v5199 = vpack.c.b16 %v4827, %v4823
    %v5200 = vpack.c.b16 %v4828, %v4824
    %v5201 = vpack.c.b16 %v4829, %v4825
    %v5202 = vpack.c.b16 %v4834, %v4830
    %v5203 = vpack.c.b16 %v4835, %v4831
    %v5204 = vpack.c.b16 %v4836, %v4832
    %v5205 = vpack.c.b16 %v4837, %v4833
    %v5206 = vpack.c.b16 %v4842, %v4838
    %v5207 = vpack.c.b16 %v4843, %v4839
    %v5208 = vpack.c.b16 %v4844, %v4840
    %v5209 = vpack.c.b16 %v4845, %v4841
    %v5210 = vpack.c.b16 %v4850, %v4846
    %v5211 = vpack.c.b16 %v4851, %v4847
    %v5212 = vpack.c.b16 %v4852, %v4848
    %v5213 = vpack.c.b16 %v4853, %v4849
    %v5214 = vpack.c.b16 %v4858, %v4854
    %v5215 = vpack.c.b16 %v4859, %v4855
    %v5216 = vpack.c.b16 %v4860, %v4856
    %v5217 = vpack.c.b16 %v4861, %v4857
    %v5218 = vpack.c.b16 %v4866, %v4862
    %v5219 = vpack.c.b16 %v4867, %v4863
    %v5220 = vpack.c.b16 %v4868, %v4864
    %v5221 = vpack.c.b16 %v4869, %v4865
    %v5222 = vpack.c.b16 %v4874, %v4870
    %v5223 = vpack.c.b16 %v4875, %v4871
    %v5224 = vpack.c.b16 %v4876, %v4872
    %v5225 = vpack.c.b16 %v4877, %v4873
    %v5226 = vpack.c.b16 %v4882, %v4878
    %v5227 = vpack.c.b16 %v4883, %v4879
    %v5228 = vpack.c.b16 %v4884, %v4880
    %v5229 = vpack.c.b16 %v4885, %v4881
    %v5230 = vpack.c.b16 %v4890, %v4886
    %v5231 = vpack.c.b16 %v4891, %v4887
    %v5232 = vpack.c.b16 %v4892, %v4888
    %v5233 = vpack.c.b16 %v4893, %v4889
    %v5234 = vpack.c.b16 %v4898, %v4894
    %v5235 = vpack.c.b16 %v4899, %v4895
    %v5236 = vpack.c.b16 %v4900, %v4896
    %v5237 = vpack.c.b16 %v4901, %v4897
    %v5238 = vpack.c.b16 %v4906, %v4902
    %v5239 = vpack.c.b16 %v4907, %v4903
    %v5240 = vpack.c.b16 %v4908, %v4904
    %v5241 = vpack.c.b16 %v4909, %v4905
    %v5242 = vpack.c.b16 %v4914, %v4910
    %v5243 = vpack.c.b16 %v4915, %v4911
    %v5244 = vpack.c.b16 %v4916, %v4912
    %v5245 = vpack.c.b16 %v4917, %v4913
    %v5246 = vpack.c.b16 %v4922, %v4918
    %v5247 = vpack.c.b16 %v4923, %v4919
    %v5248 = vpack.c.b16 %v4924, %v4920
    %v5249 = vpack.c.b16 %v4925, %v4921
    %v5250 = vpack.c.b16 %v4930, %v4926
    %v5251 = vpack.c.b16 %v4931, %v4927
    %v5252 = vpack.c.b16 %v4932, %v4928
    %v5253 = vpack.c.b16 %v4933, %v4929
    %v5254 = vpack.c.b16 %v4938, %v4934
    %v5255 = vpack.c.b16 %v4939, %v4935
    %v5256 = vpack.c.b16 %v4940, %v4936
    %v5257 = vpack.c.b16 %v4941, %v4937
    %v5258 = vpack.c.b16 %v4946, %v4942
    %v5259 = vpack.c.b16 %v4947, %v4943
    %v5260 = vpack.c.b16 %v4948, %v4944
    %v5261 = vpack.c.b16 %v4949, %v4945
    %v5262 = vpack.c.b16 %v4954, %v4950
    %v5263 = vpack.c.b16 %v4955, %v4951
    %v5264 = vpack.c.b16 %v4956, %v4952
    %v5265 = vpack.c.b16 %v4957, %v4953
    %v5266 = vpack.c.b16 %v4962, %v4958
    %v5267 = vpack.c.b16 %v4963, %v4959
    %v5268 = vpack.c.b16 %v4964, %v4960
    %v5269 = vpack.c.b16 %v4965, %v4961
    %v5270 = vpack.c.b16 %v4970, %v4966
    %v5271 = vpack.c.b16 %v4971, %v4967
    %v5272 = vpack.c.b16 %v4972, %v4968
    %v5273 = vpack.c.b16 %v4973, %v4969
    %v5274 = vpack.c.b16 %v4978, %v4974
    %v5275 = vpack.c.b16 %v4979, %v4975
    %v5276 = vpack.c.b16 %v4980, %v4976
    %v5277 = vpack.c.b16 %v4981, %v4977
    %v5278 = vpack.c.b16 %v4986, %v4982
    %v5279 = vpack.c.b16 %v4987, %v4983
    %v5280 = vpack.c.b16 %v4988, %v4984
    %v5281 = vpack.c.b16 %v4989, %v4985
    %v5282 = vpack.c.b16 %v4994, %v4990
    %v5283 = vpack.c.b16 %v4995, %v4991
    %v5284 = vpack.c.b16 %v4996, %v4992
    %v5285 = vpack.c.b16 %v4997, %v4993
    %v5286 = vpack.c.b16 %v5002, %v4998
    %v5287 = vpack.c.b16 %v5003, %v4999
    %v5288 = vpack.c.b16 %v5004, %v5000
    %v5289 = vpack.c.b16 %v5005, %v5001
    %v5290 = vpack.c.b16 %v5010, %v5006
    %v5291 = vpack.c.b16 %v5011, %v5007
    %v5292 = vpack.c.b16 %v5012, %v5008
    %v5293 = vpack.c.b16 %v5013, %v5009
    %v5294 = vpack.c.b16 %v5018, %v5014
    %v5295 = vpack.c.b16 %v5019, %v5015
    %v5296 = vpack.c.b16 %v5020, %v5016
    %v5297 = vpack.c.b16 %v5021, %v5017
    %v5298 = vpack.c.b16 %v5026, %v5022
    %v5299 = vpack.c.b16 %v5027, %v5023
    %v5300 = vpack.c.b16 %v5028, %v5024
    %v5301 = vpack.c.b16 %v5029, %v5025
    %v5302 = vpack.c.b16 %v5034, %v5030
    %v5303 = vpack.c.b16 %v5035, %v5031
    %v5304 = vpack.c.b16 %v5036, %v5032
    %v5305 = vpack.c.b16 %v5037, %v5033
    %v5306 = vpack.c.b16 %v5042, %v5038
    %v5307 = vpack.c.b16 %v5043, %v5039
    %v5308 = vpack.c.b16 %v5044, %v5040
    %v5309 = vpack.c.b16 %v5045, %v5041
    %v5310 = vpack.c.b16 %v5050, %v5046
    %v5311 = vpack.c.b16 %v5051, %v5047
    %v5312 = vpack.c.b16 %v5052, %v5048
    %v5313 = vpack.c.b16 %v5053, %v5049
    %v5314 = vpack.c.b16 %v5058, %v5054
    %v5315 = vpack.c.b16 %v5059, %v5055
    %v5316 = vpack.c.b16 %v5060, %v5056
    %v5317 = vpack.c.b16 %v5061, %v5057
    %5574 = vmatpush.bf16.msra.mxu0 %v5090
    %5575 = vmatpush.bf16.msra.mxu0 %v5086
    %5576 = vmatpush.bf16.msra.mxu0 %v5082
    %5577 = vmatpush.bf16.msra.mxu0 %v5078
    %5578 = vmatpush.bf16.msra.mxu0 %v5074
    %5579 = vmatpush.bf16.msra.mxu0 %v5070
    %5580 = vmatpush.bf16.msra.mxu0 %v5066
    %5581 = vmatpush.bf16.msra.mxu0 %v5062
    %5582 = vmatmul.bf16.gmra.mxu0 %v4030
    %v5583 = vpop.f32.mrf.mxu0
    %v5584 = vadd.f32 0.0, %v5583
    %v5585 = vpop.f32.mrf.mxu0
    %5586 = vdwg.mxu0
    %5587 = vmatpush.bf16.msra.mxu0 %v5122
    %5588 = vmatpush.bf16.msra.mxu0 %v5118
    %5589 = vmatpush.bf16.msra.mxu0 %v5114
    %5590 = vmatpush.bf16.msra.mxu0 %v5110
    %5591 = vmatpush.bf16.msra.mxu0 %v5106
    %5592 = vmatpush.bf16.msra.mxu0 %v5102
    %5593 = vmatpush.bf16.msra.mxu0 %v5098
    %5594 = vmatpush.bf16.msra.mxu0 %v5094
    %5595 = vmatmul.bf16.gmra.mxu0 %v4031
    %v5596 = vpop.f32.mrf.mxu0
    %v5597 = vadd.f32 %v5584, %v5596
    %v5598 = vpop.f32.mrf.mxu0
    %5599 = vdwg.mxu0
    %5600 = vmatpush.bf16.msra.mxu0 %v5154
    %5601 = vmatpush.bf16.msra.mxu0 %v5150
    %5602 = vmatpush.bf16.msra.mxu0 %v5146
    %5603 = vmatpush.bf16.msra.mxu0 %v5142
    %5604 = vmatpush.bf16.msra.mxu0 %v5138
    %5605 = vmatpush.bf16.msra.mxu0 %v5134
    %5606 = vmatpush.bf16.msra.mxu0 %v5130
    %5607 = vmatpush.bf16.msra.mxu0 %v5126
    %5608 = vmatmul.bf16.gmra.mxu0 %v4032
    %v5609 = vpop.f32.mrf.mxu0
    %v5610 = vadd.f32 %v5597, %v5609
    %v5611 = vpop.f32.mrf.mxu0
    %5612 = vdwg.mxu0
    %5613 = vmatpush.bf16.msra.mxu0 %v5186
    %5614 = vmatpush.bf16.msra.mxu0 %v5182
    %5615 = vmatpush.bf16.msra.mxu0 %v5178
    %5616 = vmatpush.bf16.msra.mxu0 %v5174
    %5617 = vmatpush.bf16.msra.mxu0 %v5170
    %5618 = vmatpush.bf16.msra.mxu0 %v5166
    %5619 = vmatpush.bf16.msra.mxu0 %v5162
    %5620 = vmatpush.bf16.msra.mxu0 %v5158
    %5621 = vmatmul.bf16.gmra.mxu0 %v4033
    %v5622 = vpop.f32.mrf.mxu0
    %v5623 = vadd.f32 %v5610, %v5622
    %v5624 = vpop.f32.mrf.mxu0
    %5625 = vdwg.mxu0
    %5626 = vmatpush.bf16.msra.mxu0 %v5218
    %5627 = vmatpush.bf16.msra.mxu0 %v5214
    %5628 = vmatpush.bf16.msra.mxu0 %v5210
    %5629 = vmatpush.bf16.msra.mxu0 %v5206
    %5630 = vmatpush.bf16.msra.mxu0 %v5202
    %5631 = vmatpush.bf16.msra.mxu0 %v5198
    %5632 = vmatpush.bf16.msra.mxu0 %v5194
    %5633 = vmatpush.bf16.msra.mxu0 %v5190
    %5634 = vmatmul.bf16.gmra.mxu0 %v4034
    %v5635 = vpop.f32.mrf.mxu0
    %v5636 = vadd.f32 %v5623, %v5635
    %v5637 = vpop.f32.mrf.mxu0
    %5638 = vdwg.mxu0
    %5639 = vmatpush.bf16.msra.mxu0 %v5250
    %5640 = vmatpush.bf16.msra.mxu0 %v5246
    %5641 = vmatpush.bf16.msra.mxu0 %v5242
    %5642 = vmatpush.bf16.msra.mxu0 %v5238
    %5643 = vmatpush.bf16.msra.mxu0 %v5234
    %5644 = vmatpush.bf16.msra.mxu0 %v5230
    %5645 = vmatpush.bf16.msra.mxu0 %v5226
    %5646 = vmatpush.bf16.msra.mxu0 %v5222
    %5647 = vmatmul.bf16.gmra.mxu0 %v4035
    %v5648 = vpop.f32.mrf.mxu0
    %v5649 = vadd.f32 %v5636, %v5648
    %v5650 = vpop.f32.mrf.mxu0
    %5651 = vdwg.mxu0
    %5652 = vmatpush.bf16.msra.mxu0 %v5282
    %5653 = vmatpush.bf16.msra.mxu0 %v5278
    %5654 = vmatpush.bf16.msra.mxu0 %v5274
    %5655 = vmatpush.bf16.msra.mxu0 %v5270
    %5656 = vmatpush.bf16.msra.mxu0 %v5266
    %5657 = vmatpush.bf16.msra.mxu0 %v5262
    %5658 = vmatpush.bf16.msra.mxu0 %v5258
    %5659 = vmatpush.bf16.msra.mxu0 %v5254
    %5660 = vmatmul.bf16.gmra.mxu0 %v4036
    %v5661 = vpop.f32.mrf.mxu0
    %v5662 = vadd.f32 %v5649, %v5661
    %v5663 = vpop.f32.mrf.mxu0
    %5664 = vdwg.mxu0
    %5665 = vmatpush.bf16.msra.mxu0 %v5314
    %5666 = vmatpush.bf16.msra.mxu0 %v5310
    %5667 = vmatpush.bf16.msra.mxu0 %v5306
    %5668 = vmatpush.bf16.msra.mxu0 %v5302
    %5669 = vmatpush.bf16.msra.mxu0 %v5298
    %5670 = vmatpush.bf16.msra.mxu0 %v5294
    %5671 = vmatpush.bf16.msra.mxu0 %v5290
    %5672 = vmatpush.bf16.msra.mxu0 %v5286
    %5673 = vmatmul.bf16.gmra.mxu0 %v4037
    %v5674 = vpop.f32.mrf.mxu0
    %v5675 = vadd.f32 %v5662, %v5674
    %v5676 = vpop.f32.mrf.mxu0
    %5677 = vdwg.mxu0
    %5678 = vmatpush.bf16.msra.mxu0 %v5091
    %5679 = vmatpush.bf16.msra.mxu0 %v5087
    %5680 = vmatpush.bf16.msra.mxu0 %v5083
    %5681 = vmatpush.bf16.msra.mxu0 %v5079
    %5682 = vmatpush.bf16.msra.mxu0 %v5075
    %5683 = vmatpush.bf16.msra.mxu0 %v5071
    %5684 = vmatpush.bf16.msra.mxu0 %v5067
    %5685 = vmatpush.bf16.msra.mxu0 %v5063
    %5686 = vmatmul.bf16.gmra.mxu0 %v4030
    %v5687 = vpop.f32.mrf.mxu0
    %v5688 = vadd.f32 0.0, %v5687
    %v5689 = vpop.f32.mrf.mxu0
    %5690 = vdwg.mxu0
    %5691 = vmatpush.bf16.msra.mxu0 %v5123
    %5692 = vmatpush.bf16.msra.mxu0 %v5119
    %5693 = vmatpush.bf16.msra.mxu0 %v5115
    %5694 = vmatpush.bf16.msra.mxu0 %v5111
    %5695 = vmatpush.bf16.msra.mxu0 %v5107
    %5696 = vmatpush.bf16.msra.mxu0 %v5103
    %5697 = vmatpush.bf16.msra.mxu0 %v5099
    %5698 = vmatpush.bf16.msra.mxu0 %v5095
    %5699 = vmatmul.bf16.gmra.mxu0 %v4031
    %v5700 = vpop.f32.mrf.mxu0
    %v5701 = vadd.f32 %v5688, %v5700
    %v5702 = vpop.f32.mrf.mxu0
    %5703 = vdwg.mxu0
    %5704 = vmatpush.bf16.msra.mxu0 %v5155
    %5705 = vmatpush.bf16.msra.mxu0 %v5151
    %5706 = vmatpush.bf16.msra.mxu0 %v5147
    %5707 = vmatpush.bf16.msra.mxu0 %v5143
    %5708 = vmatpush.bf16.msra.mxu0 %v5139
    %5709 = vmatpush.bf16.msra.mxu0 %v5135
    %5710 = vmatpush.bf16.msra.mxu0 %v5131
    %5711 = vmatpush.bf16.msra.mxu0 %v5127
    %5712 = vmatmul.bf16.gmra.mxu0 %v4032
    %v5713 = vpop.f32.mrf.mxu0
    %v5714 = vadd.f32 %v5701, %v5713
    %v5715 = vpop.f32.mrf.mxu0
    %5716 = vdwg.mxu0
    %5717 = vmatpush.bf16.msra.mxu0 %v5187
    %5718 = vmatpush.bf16.msra.mxu0 %v5183
    %5719 = vmatpush.bf16.msra.mxu0 %v5179
    %5720 = vmatpush.bf16.msra.mxu0 %v5175
    %5721 = vmatpush.bf16.msra.mxu0 %v5171
    %5722 = vmatpush.bf16.msra.mxu0 %v5167
    %5723 = vmatpush.bf16.msra.mxu0 %v5163
    %5724 = vmatpush.bf16.msra.mxu0 %v5159
    %5725 = vmatmul.bf16.gmra.mxu0 %v4033
    %v5726 = vpop.f32.mrf.mxu0
    %v5727 = vadd.f32 %v5714, %v5726
    %v5728 = vpop.f32.mrf.mxu0
    %5729 = vdwg.mxu0
    %5730 = vmatpush.bf16.msra.mxu0 %v5219
    %5731 = vmatpush.bf16.msra.mxu0 %v5215
    %5732 = vmatpush.bf16.msra.mxu0 %v5211
    %5733 = vmatpush.bf16.msra.mxu0 %v5207
    %5734 = vmatpush.bf16.msra.mxu0 %v5203
    %5735 = vmatpush.bf16.msra.mxu0 %v5199
    %5736 = vmatpush.bf16.msra.mxu0 %v5195
    %5737 = vmatpush.bf16.msra.mxu0 %v5191
    %5738 = vmatmul.bf16.gmra.mxu0 %v4034
    %v5739 = vpop.f32.mrf.mxu0
    %v5740 = vadd.f32 %v5727, %v5739
    %v5741 = vpop.f32.mrf.mxu0
    %5742 = vdwg.mxu0
    %5743 = vmatpush.bf16.msra.mxu0 %v5251
    %5744 = vmatpush.bf16.msra.mxu0 %v5247
    %5745 = vmatpush.bf16.msra.mxu0 %v5243
    %5746 = vmatpush.bf16.msra.mxu0 %v5239
    %5747 = vmatpush.bf16.msra.mxu0 %v5235
    %5748 = vmatpush.bf16.msra.mxu0 %v5231
    %5749 = vmatpush.bf16.msra.mxu0 %v5227
    %5750 = vmatpush.bf16.msra.mxu0 %v5223
    %5751 = vmatmul.bf16.gmra.mxu0 %v4035
    %v5752 = vpop.f32.mrf.mxu0
    %v5753 = vadd.f32 %v5740, %v5752
    %v5754 = vpop.f32.mrf.mxu0
    %5755 = vdwg.mxu0
    %5756 = vmatpush.bf16.msra.mxu0 %v5283
    %5757 = vmatpush.bf16.msra.mxu0 %v5279
    %5758 = vmatpush.bf16.msra.mxu0 %v5275
    %5759 = vmatpush.bf16.msra.mxu0 %v5271
    %5760 = vmatpush.bf16.msra.mxu0 %v5267
    %5761 = vmatpush.bf16.msra.mxu0 %v5263
    %5762 = vmatpush.bf16.msra.mxu0 %v5259
    %5763 = vmatpush.bf16.msra.mxu0 %v5255
    %5764 = vmatmul.bf16.gmra.mxu0 %v4036
    %v5765 = vpop.f32.mrf.mxu0
    %v5766 = vadd.f32 %v5753, %v5765
    %v5767 = vpop.f32.mrf.mxu0
    %5768 = vdwg.mxu0
    %5769 = vmatpush.bf16.msra.mxu0 %v5315
    %5770 = vmatpush.bf16.msra.mxu0 %v5311
    %5771 = vmatpush.bf16.msra.mxu0 %v5307
    %5772 = vmatpush.bf16.msra.mxu0 %v5303
    %5773 = vmatpush.bf16.msra.mxu0 %v5299
    %5774 = vmatpush.bf16.msra.mxu0 %v5295
    %5775 = vmatpush.bf16.msra.mxu0 %v5291
    %5776 = vmatpush.bf16.msra.mxu0 %v5287
    %5777 = vmatmul.bf16.gmra.mxu0 %v4037
    %v5778 = vpop.f32.mrf.mxu0
    %v5779 = vadd.f32 %v5766, %v5778
    %v5780 = vpop.f32.mrf.mxu0
    %5781 = vdwg.mxu0
    %5782 = vmatpush.bf16.msra.mxu0 %v5092
    %5783 = vmatpush.bf16.msra.mxu0 %v5088
    %5784 = vmatpush.bf16.msra.mxu0 %v5084
    %5785 = vmatpush.bf16.msra.mxu0 %v5080
    %5786 = vmatpush.bf16.msra.mxu0 %v5076
    %5787 = vmatpush.bf16.msra.mxu0 %v5072
    %5788 = vmatpush.bf16.msra.mxu0 %v5068
    %5789 = vmatpush.bf16.msra.mxu0 %v5064
    %5790 = vmatmul.bf16.gmra.mxu0 %v4030
    %v5791 = vpop.f32.mrf.mxu0
    %v5792 = vadd.f32 0.0, %v5791
    %v5793 = vpop.f32.mrf.mxu0
    %5794 = vdwg.mxu0
    %5795 = vmatpush.bf16.msra.mxu0 %v5124
    %5796 = vmatpush.bf16.msra.mxu0 %v5120
    %5797 = vmatpush.bf16.msra.mxu0 %v5116
    %5798 = vmatpush.bf16.msra.mxu0 %v5112
    %5799 = vmatpush.bf16.msra.mxu0 %v5108
    %5800 = vmatpush.bf16.msra.mxu0 %v5104
    %5801 = vmatpush.bf16.msra.mxu0 %v5100
    %5802 = vmatpush.bf16.msra.mxu0 %v5096
    %5803 = vmatmul.bf16.gmra.mxu0 %v4031
    %v5804 = vpop.f32.mrf.mxu0
    %v5805 = vadd.f32 %v5792, %v5804
    %v5806 = vpop.f32.mrf.mxu0
    %5807 = vdwg.mxu0
    %5808 = vmatpush.bf16.msra.mxu0 %v5156
    %5809 = vmatpush.bf16.msra.mxu0 %v5152
    %5810 = vmatpush.bf16.msra.mxu0 %v5148
    %5811 = vmatpush.bf16.msra.mxu0 %v5144
    %5812 = vmatpush.bf16.msra.mxu0 %v5140
    %5813 = vmatpush.bf16.msra.mxu0 %v5136
    %5814 = vmatpush.bf16.msra.mxu0 %v5132
    %5815 = vmatpush.bf16.msra.mxu0 %v5128
    %5816 = vmatmul.bf16.gmra.mxu0 %v4032
    %v5817 = vpop.f32.mrf.mxu0
    %v5818 = vadd.f32 %v5805, %v5817
    %v5819 = vpop.f32.mrf.mxu0
    %5820 = vdwg.mxu0
    %5821 = vmatpush.bf16.msra.mxu0 %v5188
    %5822 = vmatpush.bf16.msra.mxu0 %v5184
    %5823 = vmatpush.bf16.msra.mxu0 %v5180
    %5824 = vmatpush.bf16.msra.mxu0 %v5176
    %5825 = vmatpush.bf16.msra.mxu0 %v5172
    %5826 = vmatpush.bf16.msra.mxu0 %v5168
    %5827 = vmatpush.bf16.msra.mxu0 %v5164
    %5828 = vmatpush.bf16.msra.mxu0 %v5160
    %5829 = vmatmul.bf16.gmra.mxu0 %v4033
    %v5830 = vpop.f32.mrf.mxu0
    %v5831 = vadd.f32 %v5818, %v5830
    %v5832 = vpop.f32.mrf.mxu0
    %5833 = vdwg.mxu0
    %5834 = vmatpush.bf16.msra.mxu0 %v5220
    %5835 = vmatpush.bf16.msra.mxu0 %v5216
    %5836 = vmatpush.bf16.msra.mxu0 %v5212
    %5837 = vmatpush.bf16.msra.mxu0 %v5208
    %5838 = vmatpush.bf16.msra.mxu0 %v5204
    %5839 = vmatpush.bf16.msra.mxu0 %v5200
    %5840 = vmatpush.bf16.msra.mxu0 %v5196
    %5841 = vmatpush.bf16.msra.mxu0 %v5192
    %5842 = vmatmul.bf16.gmra.mxu0 %v4034
    %v5843 = vpop.f32.mrf.mxu0
    %v5844 = vadd.f32 %v5831, %v5843
    %v5845 = vpop.f32.mrf.mxu0
    %5846 = vdwg.mxu0
    %5847 = vmatpush.bf16.msra.mxu0 %v5252
    %5848 = vmatpush.bf16.msra.mxu0 %v5248
    %5849 = vmatpush.bf16.msra.mxu0 %v5244
    %5850 = vmatpush.bf16.msra.mxu0 %v5240
    %5851 = vmatpush.bf16.msra.mxu0 %v5236
    %5852 = vmatpush.bf16.msra.mxu0 %v5232
    %5853 = vmatpush.bf16.msra.mxu0 %v5228
    %5854 = vmatpush.bf16.msra.mxu0 %v5224
    %5855 = vmatmul.bf16.gmra.mxu0 %v4035
    %v5856 = vpop.f32.mrf.mxu0
    %v5857 = vadd.f32 %v5844, %v5856
    %v5858 = vpop.f32.mrf.mxu0
    %5859 = vdwg.mxu0
    %5860 = vmatpush.bf16.msra.mxu0 %v5284
    %5861 = vmatpush.bf16.msra.mxu0 %v5280
    %5862 = vmatpush.bf16.msra.mxu0 %v5276
    %5863 = vmatpush.bf16.msra.mxu0 %v5272
    %5864 = vmatpush.bf16.msra.mxu0 %v5268
    %5865 = vmatpush.bf16.msra.mxu0 %v5264
    %5866 = vmatpush.bf16.msra.mxu0 %v5260
    %5867 = vmatpush.bf16.msra.mxu0 %v5256
    %5868 = vmatmul.bf16.gmra.mxu0 %v4036
    %v5869 = vpop.f32.mrf.mxu0
    %v5870 = vadd.f32 %v5857, %v5869
    %v5871 = vpop.f32.mrf.mxu0
    %5872 = vdwg.mxu0
    %5873 = vmatpush.bf16.msra.mxu0 %v5316
    %5874 = vmatpush.bf16.msra.mxu0 %v5312
    %5875 = vmatpush.bf16.msra.mxu0 %v5308
    %5876 = vmatpush.bf16.msra.mxu0 %v5304
    %5877 = vmatpush.bf16.msra.mxu0 %v5300
    %5878 = vmatpush.bf16.msra.mxu0 %v5296
    %5879 = vmatpush.bf16.msra.mxu0 %v5292
    %5880 = vmatpush.bf16.msra.mxu0 %v5288
    %5881 = vmatmul.bf16.gmra.mxu0 %v4037
    %v5882 = vpop.f32.mrf.mxu0
    %v5883 = vadd.f32 %v5870, %v5882
    %v5884 = vpop.f32.mrf.mxu0
    %5885 = vdwg.mxu0
    %5886 = vmatpush.bf16.msra.mxu0 %v5093
    %5887 = vmatpush.bf16.msra.mxu0 %v5089
    %5888 = vmatpush.bf16.msra.mxu0 %v5085
    %5889 = vmatpush.bf16.msra.mxu0 %v5081
    %5890 = vmatpush.bf16.msra.mxu0 %v5077
    %5891 = vmatpush.bf16.msra.mxu0 %v5073
    %5892 = vmatpush.bf16.msra.mxu0 %v5069
    %5893 = vmatpush.bf16.msra.mxu0 %v5065
    %5894 = vmatmul.bf16.gmra.mxu0 %v4030
    %v5895 = vpop.f32.mrf.mxu0
    %v5896 = vadd.f32 0.0, %v5895
    %v5897 = vpop.f32.mrf.mxu0
    %5898 = vdwg.mxu0
    %5899 = vmatpush.bf16.msra.mxu0 %v5125
    %5900 = vmatpush.bf16.msra.mxu0 %v5121
    %5901 = vmatpush.bf16.msra.mxu0 %v5117
    %5902 = vmatpush.bf16.msra.mxu0 %v5113
    %5903 = vmatpush.bf16.msra.mxu0 %v5109
    %5904 = vmatpush.bf16.msra.mxu0 %v5105
    %5905 = vmatpush.bf16.msra.mxu0 %v5101
    %5906 = vmatpush.bf16.msra.mxu0 %v5097
    %5907 = vmatmul.bf16.gmra.mxu0 %v4031
    %v5908 = vpop.f32.mrf.mxu0
    %v5909 = vadd.f32 %v5896, %v5908
    %v5910 = vpop.f32.mrf.mxu0
    %5911 = vdwg.mxu0
    %5912 = vmatpush.bf16.msra.mxu0 %v5157
    %5913 = vmatpush.bf16.msra.mxu0 %v5153
    %5914 = vmatpush.bf16.msra.mxu0 %v5149
    %5915 = vmatpush.bf16.msra.mxu0 %v5145
    %5916 = vmatpush.bf16.msra.mxu0 %v5141
    %5917 = vmatpush.bf16.msra.mxu0 %v5137
    %5918 = vmatpush.bf16.msra.mxu0 %v5133
    %5919 = vmatpush.bf16.msra.mxu0 %v5129
    %5920 = vmatmul.bf16.gmra.mxu0 %v4032
    %v5921 = vpop.f32.mrf.mxu0
    %v5922 = vadd.f32 %v5909, %v5921
    %v5923 = vpop.f32.mrf.mxu0
    %5924 = vdwg.mxu0
    %5925 = vmatpush.bf16.msra.mxu0 %v5189
    %5926 = vmatpush.bf16.msra.mxu0 %v5185
    %5927 = vmatpush.bf16.msra.mxu0 %v5181
    %5928 = vmatpush.bf16.msra.mxu0 %v5177
    %5929 = vmatpush.bf16.msra.mxu0 %v5173
    %5930 = vmatpush.bf16.msra.mxu0 %v5169
    %5931 = vmatpush.bf16.msra.mxu0 %v5165
    %5932 = vmatpush.bf16.msra.mxu0 %v5161
    %5933 = vmatmul.bf16.gmra.mxu0 %v4033
    %v5934 = vpop.f32.mrf.mxu0
    %v5935 = vadd.f32 %v5922, %v5934
    %v5936 = vpop.f32.mrf.mxu0
    %5937 = vdwg.mxu0
    %5938 = vmatpush.bf16.msra.mxu0 %v5221
    %5939 = vmatpush.bf16.msra.mxu0 %v5217
    %5940 = vmatpush.bf16.msra.mxu0 %v5213
    %5941 = vmatpush.bf16.msra.mxu0 %v5209
    %5942 = vmatpush.bf16.msra.mxu0 %v5205
    %5943 = vmatpush.bf16.msra.mxu0 %v5201
    %5944 = vmatpush.bf16.msra.mxu0 %v5197
    %5945 = vmatpush.bf16.msra.mxu0 %v5193
    %5946 = vmatmul.bf16.gmra.mxu0 %v4034
    %v5947 = vpop.f32.mrf.mxu0
    %v5948 = vadd.f32 %v5935, %v5947
    %v5949 = vpop.f32.mrf.mxu0
    %5950 = vdwg.mxu0
    %5951 = vmatpush.bf16.msra.mxu0 %v5253
    %5952 = vmatpush.bf16.msra.mxu0 %v5249
    %5953 = vmatpush.bf16.msra.mxu0 %v5245
    %5954 = vmatpush.bf16.msra.mxu0 %v5241
    %5955 = vmatpush.bf16.msra.mxu0 %v5237
    %5956 = vmatpush.bf16.msra.mxu0 %v5233
    %5957 = vmatpush.bf16.msra.mxu0 %v5229
    %5958 = vmatpush.bf16.msra.mxu0 %v5225
    %5959 = vmatmul.bf16.gmra.mxu0 %v4035
    %v5960 = vpop.f32.mrf.mxu0
    %v5961 = vadd.f32 %v5948, %v5960
    %v5962 = vpop.f32.mrf.mxu0
    %5963 = vdwg.mxu0
    %5964 = vmatpush.bf16.msra.mxu0 %v5285
    %5965 = vmatpush.bf16.msra.mxu0 %v5281
    %5966 = vmatpush.bf16.msra.mxu0 %v5277
    %5967 = vmatpush.bf16.msra.mxu0 %v5273
    %5968 = vmatpush.bf16.msra.mxu0 %v5269
    %5969 = vmatpush.bf16.msra.mxu0 %v5265
    %5970 = vmatpush.bf16.msra.mxu0 %v5261
    %5971 = vmatpush.bf16.msra.mxu0 %v5257
    %5972 = vmatmul.bf16.gmra.mxu0 %v4036
    %v5973 = vpop.f32.mrf.mxu0
    %v5974 = vadd.f32 %v5961, %v5973
    %v5975 = vpop.f32.mrf.mxu0
    %5976 = vdwg.mxu0
    %5977 = vmatpush.bf16.msra.mxu0 %v5317
    %5978 = vmatpush.bf16.msra.mxu0 %v5313
    %5979 = vmatpush.bf16.msra.mxu0 %v5309
    %5980 = vmatpush.bf16.msra.mxu0 %v5305
    %5981 = vmatpush.bf16.msra.mxu0 %v5301
    %5982 = vmatpush.bf16.msra.mxu0 %v5297
    %5983 = vmatpush.bf16.msra.mxu0 %v5293
    %5984 = vmatpush.bf16.msra.mxu0 %v5289
    %5985 = vmatmul.bf16.gmra.mxu0 %v4037
    %v5986 = vpop.f32.mrf.mxu0
    %v5987 = vadd.f32 %v5974, %v5986
    %v5988 = vpop.f32.mrf.mxu0
    %5989 = vdwg.mxu0
    %v5990 = vmul.f32 %v5675, 0.2
    %v5991 = vmul.f32 %v5779, 0.2
    %v5992 = vmul.f32 %v5883, 0.2
    %v5993 = vmul.f32 %v5987, 0.2
    %v5994 = vmax.f32 %v5675, %v5990
    %v5995 = vmax.f32 %v5779, %v5991
    %v5996 = vmax.f32 %v5883, %v5992
    %v5997 = vmax.f32 %v5987, %v5993
    %v5998 = vpack.c.bf16 %v5994, %v5994
    %v5999 = vpack.c.bf16 %v5995, %v5995
    %v6000 = vpack.c.bf16 %v5996, %v5996
    %v6001 = vpack.c.bf16 %v5997, %v5997
    %v6002 = vld [vmem:[#allocation7] sm:$0xff]
    %v6003 = vld [vmem:[#allocation7 + $0x8] sm:$0xff]
    %v6004 = vld [vmem:[#allocation7 + $0x10] sm:$0xff]
    %v6005 = vld [vmem:[#allocation7 + $0x18] sm:$0xff]
    %v6006 = vld [vmem:[#allocation7 + $0x20] sm:$0xff]
    %v6007 = vld [vmem:[#allocation7 + $0x28] sm:$0xff]
    %v6008 = vld [vmem:[#allocation7 + $0x30] sm:$0xff]
    %v6009 = vld [vmem:[#allocation7 + $0x38] sm:$0xff]
    %v6010 = vld [vmem:[#allocation7 + $0x40] sm:$0xff]
    %v6011 = vld [vmem:[#allocation7 + $0x48] sm:$0xff]
    %v6012 = vld [vmem:[#allocation7 + $0x50] sm:$0xff]
    %v6013 = vld [vmem:[#allocation7 + $0x58] sm:$0xff]
    %v6014 = vld [vmem:[#allocation7 + $0x60] sm:$0xff]
    %v6015 = vld [vmem:[#allocation7 + $0x68] sm:$0xff]
    %v6016 = vld [vmem:[#allocation7 + $0x70] sm:$0xff]
    %v6017 = vld [vmem:[#allocation7 + $0x78] sm:$0xff]
    %v6018 = vld [vmem:[#allocation7 + $0x80] sm:$0xff]
    %v6019 = vld [vmem:[#allocation7 + $0x88] sm:$0xff]
    %v6020 = vld [vmem:[#allocation7 + $0x90] sm:$0xff]
    %v6021 = vld [vmem:[#allocation7 + $0x98] sm:$0xff]
    %v6022 = vld [vmem:[#allocation7 + $0xa0] sm:$0xff]
    %v6023 = vld [vmem:[#allocation7 + $0xa8] sm:$0xff]
    %v6024 = vld [vmem:[#allocation7 + $0xb0] sm:$0xff]
    %v6025 = vld [vmem:[#allocation7 + $0xb8] sm:$0xff]
    %v6026 = vld [vmem:[#allocation7 + $0xc0] sm:$0xff]
    %v6027 = vld [vmem:[#allocation7 + $0xc8] sm:$0xff]
    %v6028 = vld [vmem:[#allocation7 + $0xd0] sm:$0xff]
    %v6029 = vld [vmem:[#allocation7 + $0xd8] sm:$0xff]
    %v6030 = vld [vmem:[#allocation7 + $0xe0] sm:$0xff]
    %v6031 = vld [vmem:[#allocation7 + $0xe8] sm:$0xff]
    %v6032 = vld [vmem:[#allocation7 + $0xf0] sm:$0xff]
    %v6033 = vld [vmem:[#allocation7 + $0xf8] sm:$0xff]
    %v6034 = vld [vmem:[#allocation7 + $0x100] sm:$0xff]
    %v6035 = vld [vmem:[#allocation7 + $0x108] sm:$0xff]
    %v6036 = vld [vmem:[#allocation7 + $0x110] sm:$0xff]
    %v6037 = vld [vmem:[#allocation7 + $0x118] sm:$0xff]
    %v6038 = vld [vmem:[#allocation7 + $0x120] sm:$0xff]
    %v6039 = vld [vmem:[#allocation7 + $0x128] sm:$0xff]
    %v6040 = vld [vmem:[#allocation7 + $0x130] sm:$0xff]
    %v6041 = vld [vmem:[#allocation7 + $0x138] sm:$0xff]
    %v6042 = vld [vmem:[#allocation7 + $0x140] sm:$0xff]
    %v6043 = vld [vmem:[#allocation7 + $0x148] sm:$0xff]
    %v6044 = vld [vmem:[#allocation7 + $0x150] sm:$0xff]
    %v6045 = vld [vmem:[#allocation7 + $0x158] sm:$0xff]
    %v6046 = vld [vmem:[#allocation7 + $0x160] sm:$0xff]
    %v6047 = vld [vmem:[#allocation7 + $0x168] sm:$0xff]
    %v6048 = vld [vmem:[#allocation7 + $0x170] sm:$0xff]
    %v6049 = vld [vmem:[#allocation7 + $0x178] sm:$0xff]
    %v6050 = vld [vmem:[#allocation7 + $0x180] sm:$0xff]
    %v6051 = vld [vmem:[#allocation7 + $0x188] sm:$0xff]
    %v6052 = vld [vmem:[#allocation7 + $0x190] sm:$0xff]
    %v6053 = vld [vmem:[#allocation7 + $0x198] sm:$0xff]
    %v6054 = vld [vmem:[#allocation7 + $0x1a0] sm:$0xff]
    %v6055 = vld [vmem:[#allocation7 + $0x1a8] sm:$0xff]
    %v6056 = vld [vmem:[#allocation7 + $0x1b0] sm:$0xff]
    %v6057 = vld [vmem:[#allocation7 + $0x1b8] sm:$0xff]
    %v6058 = vld [vmem:[#allocation7 + $0x1c0] sm:$0xff]
    %v6059 = vld [vmem:[#allocation7 + $0x1c8] sm:$0xff]
    %v6060 = vld [vmem:[#allocation7 + $0x1d0] sm:$0xff]
    %v6061 = vld [vmem:[#allocation7 + $0x1d8] sm:$0xff]
    %v6062 = vld [vmem:[#allocation7 + $0x1e0] sm:$0xff]
    %v6063 = vld [vmem:[#allocation7 + $0x1e8] sm:$0xff]
    %v6064 = vld [vmem:[#allocation7 + $0x1f0] sm:$0xff]
    %v6065 = vld [vmem:[#allocation7 + $0x1f8] sm:$0xff]
    %v6130 = vunpack.c.l.b16 %v6002
    %v6131 = vunpack.c.h.b16 %v6002
    %v6132 = vunpack.c.l.b16 %v6003
    %v6133 = vunpack.c.h.b16 %v6003
    %v6134 = vunpack.c.l.b16 %v6004
    %v6135 = vunpack.c.h.b16 %v6004
    %v6136 = vunpack.c.l.b16 %v6005
    %v6137 = vunpack.c.h.b16 %v6005
    %v6138 = vunpack.c.l.b16 %v6006
    %v6139 = vunpack.c.h.b16 %v6006
    %v6140 = vunpack.c.l.b16 %v6007
    %v6141 = vunpack.c.h.b16 %v6007
    %v6142 = vunpack.c.l.b16 %v6008
    %v6143 = vunpack.c.h.b16 %v6008
    %v6144 = vunpack.c.l.b16 %v6009
    %v6145 = vunpack.c.h.b16 %v6009
    %v6146 = vunpack.c.l.b16 %v6010
    %v6147 = vunpack.c.h.b16 %v6010
    %v6148 = vunpack.c.l.b16 %v6011
    %v6149 = vunpack.c.h.b16 %v6011
    %v6150 = vunpack.c.l.b16 %v6012
    %v6151 = vunpack.c.h.b16 %v6012
    %v6152 = vunpack.c.l.b16 %v6013
    %v6153 = vunpack.c.h.b16 %v6013
    %v6154 = vunpack.c.l.b16 %v6014
    %v6155 = vunpack.c.h.b16 %v6014
    %v6156 = vunpack.c.l.b16 %v6015
    %v6157 = vunpack.c.h.b16 %v6015
    %v6158 = vunpack.c.l.b16 %v6016
    %v6159 = vunpack.c.h.b16 %v6016
    %v6160 = vunpack.c.l.b16 %v6017
    %v6161 = vunpack.c.h.b16 %v6017
    %v6162 = vunpack.c.l.b16 %v6018
    %v6163 = vunpack.c.h.b16 %v6018
    %v6164 = vunpack.c.l.b16 %v6019
    %v6165 = vunpack.c.h.b16 %v6019
    %v6166 = vunpack.c.l.b16 %v6020
    %v6167 = vunpack.c.h.b16 %v6020
    %v6168 = vunpack.c.l.b16 %v6021
    %v6169 = vunpack.c.h.b16 %v6021
    %v6170 = vunpack.c.l.b16 %v6022
    %v6171 = vunpack.c.h.b16 %v6022
    %v6172 = vunpack.c.l.b16 %v6023
    %v6173 = vunpack.c.h.b16 %v6023
    %v6174 = vunpack.c.l.b16 %v6024
    %v6175 = vunpack.c.h.b16 %v6024
    %v6176 = vunpack.c.l.b16 %v6025
    %v6177 = vunpack.c.h.b16 %v6025
    %v6178 = vunpack.c.l.b16 %v6026
    %v6179 = vunpack.c.h.b16 %v6026
    %v6180 = vunpack.c.l.b16 %v6027
    %v6181 = vunpack.c.h.b16 %v6027
    %v6182 = vunpack.c.l.b16 %v6028
    %v6183 = vunpack.c.h.b16 %v6028
    %v6184 = vunpack.c.l.b16 %v6029
    %v6185 = vunpack.c.h.b16 %v6029
    %v6186 = vunpack.c.l.b16 %v6030
    %v6187 = vunpack.c.h.b16 %v6030
    %v6188 = vunpack.c.l.b16 %v6031
    %v6189 = vunpack.c.h.b16 %v6031
    %v6190 = vunpack.c.l.b16 %v6032
    %v6191 = vunpack.c.h.b16 %v6032
    %v6192 = vunpack.c.l.b16 %v6033
    %v6193 = vunpack.c.h.b16 %v6033
    %v6194 = vunpack.c.l.b16 %v6034
    %v6195 = vunpack.c.h.b16 %v6034
    %v6196 = vunpack.c.l.b16 %v6035
    %v6197 = vunpack.c.h.b16 %v6035
    %v6198 = vunpack.c.l.b16 %v6036
    %v6199 = vunpack.c.h.b16 %v6036
    %v6200 = vunpack.c.l.b16 %v6037
    %v6201 = vunpack.c.h.b16 %v6037
    %v6202 = vunpack.c.l.b16 %v6038
    %v6203 = vunpack.c.h.b16 %v6038
    %v6204 = vunpack.c.l.b16 %v6039
    %v6205 = vunpack.c.h.b16 %v6039
    %v6206 = vunpack.c.l.b16 %v6040
    %v6207 = vunpack.c.h.b16 %v6040
    %v6208 = vunpack.c.l.b16 %v6041
    %v6209 = vunpack.c.h.b16 %v6041
    %v6210 = vunpack.c.l.b16 %v6042
    %v6211 = vunpack.c.h.b16 %v6042
    %v6212 = vunpack.c.l.b16 %v6043
    %v6213 = vunpack.c.h.b16 %v6043
    %v6214 = vunpack.c.l.b16 %v6044
    %v6215 = vunpack.c.h.b16 %v6044
    %v6216 = vunpack.c.l.b16 %v6045
    %v6217 = vunpack.c.h.b16 %v6045
    %v6218 = vunpack.c.l.b16 %v6046
    %v6219 = vunpack.c.h.b16 %v6046
    %v6220 = vunpack.c.l.b16 %v6047
    %v6221 = vunpack.c.h.b16 %v6047
    %v6222 = vunpack.c.l.b16 %v6048
    %v6223 = vunpack.c.h.b16 %v6048
    %v6224 = vunpack.c.l.b16 %v6049
    %v6225 = vunpack.c.h.b16 %v6049
    %v6226 = vunpack.c.l.b16 %v6050
    %v6227 = vunpack.c.h.b16 %v6050
    %v6228 = vunpack.c.l.b16 %v6051
    %v6229 = vunpack.c.h.b16 %v6051
    %v6230 = vunpack.c.l.b16 %v6052
    %v6231 = vunpack.c.h.b16 %v6052
    %v6232 = vunpack.c.l.b16 %v6053
    %v6233 = vunpack.c.h.b16 %v6053
    %v6234 = vunpack.c.l.b16 %v6054
    %v6235 = vunpack.c.h.b16 %v6054
    %v6236 = vunpack.c.l.b16 %v6055
    %v6237 = vunpack.c.h.b16 %v6055
    %v6238 = vunpack.c.l.b16 %v6056
    %v6239 = vunpack.c.h.b16 %v6056
    %v6240 = vunpack.c.l.b16 %v6057
    %v6241 = vunpack.c.h.b16 %v6057
    %v6242 = vunpack.c.l.b16 %v6058
    %v6243 = vunpack.c.h.b16 %v6058
    %v6244 = vunpack.c.l.b16 %v6059
    %v6245 = vunpack.c.h.b16 %v6059
    %v6246 = vunpack.c.l.b16 %v6060
    %v6247 = vunpack.c.h.b16 %v6060
    %v6248 = vunpack.c.l.b16 %v6061
    %v6249 = vunpack.c.h.b16 %v6061
    %v6250 = vunpack.c.l.b16 %v6062
    %v6251 = vunpack.c.h.b16 %v6062
    %v6252 = vunpack.c.l.b16 %v6063
    %v6253 = vunpack.c.h.b16 %v6063
    %v6254 = vunpack.c.l.b16 %v6064
    %v6255 = vunpack.c.h.b16 %v6064
    %v6256 = vunpack.c.l.b16 %v6065
    %v6257 = vunpack.c.h.b16 %v6065
    %v6258 = vpack.c.b16 %v6132, %v6130
    %v6259 = vpack.c.b16 %v6133, %v6131
    %v6260 = vpack.c.b16 %v6136, %v6134
    %v6261 = vpack.c.b16 %v6137, %v6135
    %v6262 = vpack.c.b16 %v6140, %v6138
    %v6263 = vpack.c.b16 %v6141, %v6139
    %v6264 = vpack.c.b16 %v6144, %v6142
    %v6265 = vpack.c.b16 %v6145, %v6143
    %v6266 = vpack.c.b16 %v6148, %v6146
    %v6267 = vpack.c.b16 %v6149, %v6147
    %v6268 = vpack.c.b16 %v6152, %v6150
    %v6269 = vpack.c.b16 %v6153, %v6151
    %v6270 = vpack.c.b16 %v6156, %v6154
    %v6271 = vpack.c.b16 %v6157, %v6155
    %v6272 = vpack.c.b16 %v6160, %v6158
    %v6273 = vpack.c.b16 %v6161, %v6159
    %v6274 = vpack.c.b16 %v6164, %v6162
    %v6275 = vpack.c.b16 %v6165, %v6163
    %v6276 = vpack.c.b16 %v6168, %v6166
    %v6277 = vpack.c.b16 %v6169, %v6167
    %v6278 = vpack.c.b16 %v6172, %v6170
    %v6279 = vpack.c.b16 %v6173, %v6171
    %v6280 = vpack.c.b16 %v6176, %v6174
    %v6281 = vpack.c.b16 %v6177, %v6175
    %v6282 = vpack.c.b16 %v6180, %v6178
    %v6283 = vpack.c.b16 %v6181, %v6179
    %v6284 = vpack.c.b16 %v6184, %v6182
    %v6285 = vpack.c.b16 %v6185, %v6183
    %v6286 = vpack.c.b16 %v6188, %v6186
    %v6287 = vpack.c.b16 %v6189, %v6187
    %v6288 = vpack.c.b16 %v6192, %v6190
    %v6289 = vpack.c.b16 %v6193, %v6191
    %v6290 = vpack.c.b16 %v6196, %v6194
    %v6291 = vpack.c.b16 %v6197, %v6195
    %v6292 = vpack.c.b16 %v6200, %v6198
    %v6293 = vpack.c.b16 %v6201, %v6199
    %v6294 = vpack.c.b16 %v6204, %v6202
    %v6295 = vpack.c.b16 %v6205, %v6203
    %v6296 = vpack.c.b16 %v6208, %v6206
    %v6297 = vpack.c.b16 %v6209, %v6207
    %v6298 = vpack.c.b16 %v6212, %v6210
    %v6299 = vpack.c.b16 %v6213, %v6211
    %v6300 = vpack.c.b16 %v6216, %v6214
    %v6301 = vpack.c.b16 %v6217, %v6215
    %v6302 = vpack.c.b16 %v6220, %v6218
    %v6303 = vpack.c.b16 %v6221, %v6219
    %v6304 = vpack.c.b16 %v6224, %v6222
    %v6305 = vpack.c.b16 %v6225, %v6223
    %v6306 = vpack.c.b16 %v6228, %v6226
    %v6307 = vpack.c.b16 %v6229, %v6227
    %v6308 = vpack.c.b16 %v6232, %v6230
    %v6309 = vpack.c.b16 %v6233, %v6231
    %v6310 = vpack.c.b16 %v6236, %v6234
    %v6311 = vpack.c.b16 %v6237, %v6235
    %v6312 = vpack.c.b16 %v6240, %v6238
    %v6313 = vpack.c.b16 %v6241, %v6239
    %v6314 = vpack.c.b16 %v6244, %v6242
    %v6315 = vpack.c.b16 %v6245, %v6243
    %v6316 = vpack.c.b16 %v6248, %v6246
    %v6317 = vpack.c.b16 %v6249, %v6247
    %v6318 = vpack.c.b16 %v6252, %v6250
    %v6319 = vpack.c.b16 %v6253, %v6251
    %v6320 = vpack.c.b16 %v6256, %v6254
    %v6321 = vpack.c.b16 %v6257, %v6255
    %6386 = vmatpush.bf16.msra.mxu0 %v6272
    %6387 = vmatpush.bf16.msra.mxu0 %v6270
    %6388 = vmatpush.bf16.msra.mxu0 %v6268
    %6389 = vmatpush.bf16.msra.mxu0 %v6266
    %6390 = vmatpush.bf16.msra.mxu0 %v6264
    %6391 = vmatpush.bf16.msra.mxu0 %v6262
    %6392 = vmatpush.bf16.msra.mxu0 %v6260
    %6393 = vmatpush.bf16.msra.mxu0 %v6258
    %6394 = vmatmul.bf16.gmra.mxu0 %v5998
    %v6395 = vpop.f32.mrf.mxu0
    %v6396 = vadd.f32 0.0, %v6395
    %v6397 = vpop.f32.mrf.mxu0
    %6398 = vdwg.mxu0
    %6399 = vmatpush.bf16.msra.mxu0 %v6288
    %6400 = vmatpush.bf16.msra.mxu0 %v6286
    %6401 = vmatpush.bf16.msra.mxu0 %v6284
    %6402 = vmatpush.bf16.msra.mxu0 %v6282
    %6403 = vmatpush.bf16.msra.mxu0 %v6280
    %6404 = vmatpush.bf16.msra.mxu0 %v6278
    %6405 = vmatpush.bf16.msra.mxu0 %v6276
    %6406 = vmatpush.bf16.msra.mxu0 %v6274
    %6407 = vmatmul.bf16.gmra.mxu0 %v5999
    %v6408 = vpop.f32.mrf.mxu0
    %v6409 = vadd.f32 %v6396, %v6408
    %v6410 = vpop.f32.mrf.mxu0
    %6411 = vdwg.mxu0
    %6412 = vmatpush.bf16.msra.mxu0 %v6304
    %6413 = vmatpush.bf16.msra.mxu0 %v6302
    %6414 = vmatpush.bf16.msra.mxu0 %v6300
    %6415 = vmatpush.bf16.msra.mxu0 %v6298
    %6416 = vmatpush.bf16.msra.mxu0 %v6296
    %6417 = vmatpush.bf16.msra.mxu0 %v6294
    %6418 = vmatpush.bf16.msra.mxu0 %v6292
    %6419 = vmatpush.bf16.msra.mxu0 %v6290
    %6420 = vmatmul.bf16.gmra.mxu0 %v6000
    %v6421 = vpop.f32.mrf.mxu0
    %v6422 = vadd.f32 %v6409, %v6421
    %v6423 = vpop.f32.mrf.mxu0
    %6424 = vdwg.mxu0
    %6425 = vmatpush.bf16.msra.mxu0 %v6320
    %6426 = vmatpush.bf16.msra.mxu0 %v6318
    %6427 = vmatpush.bf16.msra.mxu0 %v6316
    %6428 = vmatpush.bf16.msra.mxu0 %v6314
    %6429 = vmatpush.bf16.msra.mxu0 %v6312
    %6430 = vmatpush.bf16.msra.mxu0 %v6310
    %6431 = vmatpush.bf16.msra.mxu0 %v6308
    %6432 = vmatpush.bf16.msra.mxu0 %v6306
    %6433 = vmatmul.bf16.gmra.mxu0 %v6001
    %v6434 = vpop.f32.mrf.mxu0
    %v6435 = vadd.f32 %v6422, %v6434
    %v6436 = vpop.f32.mrf.mxu0
    %6437 = vdwg.mxu0
    %6438 = vmatpush.bf16.msra.mxu0 %v6273
    %6439 = vmatpush.bf16.msra.mxu0 %v6271
    %6440 = vmatpush.bf16.msra.mxu0 %v6269
    %6441 = vmatpush.bf16.msra.mxu0 %v6267
    %6442 = vmatpush.bf16.msra.mxu0 %v6265
    %6443 = vmatpush.bf16.msra.mxu0 %v6263
    %6444 = vmatpush.bf16.msra.mxu0 %v6261
    %6445 = vmatpush.bf16.msra.mxu0 %v6259
    %6446 = vmatmul.bf16.gmra.mxu0 %v5998
    %v6447 = vpop.f32.mrf.mxu0
    %v6448 = vadd.f32 0.0, %v6447
    %v6449 = vpop.f32.mrf.mxu0
    %6450 = vdwg.mxu0
    %6451 = vmatpush.bf16.msra.mxu0 %v6289
    %6452 = vmatpush.bf16.msra.mxu0 %v6287
    %6453 = vmatpush.bf16.msra.mxu0 %v6285
    %6454 = vmatpush.bf16.msra.mxu0 %v6283
    %6455 = vmatpush.bf16.msra.mxu0 %v6281
    %6456 = vmatpush.bf16.msra.mxu0 %v6279
    %6457 = vmatpush.bf16.msra.mxu0 %v6277
    %6458 = vmatpush.bf16.msra.mxu0 %v6275
    %6459 = vmatmul.bf16.gmra.mxu0 %v5999
    %v6460 = vpop.f32.mrf.mxu0
    %v6461 = vadd.f32 %v6448, %v6460
    %v6462 = vpop.f32.mrf.mxu0
    %6463 = vdwg.mxu0
    %6464 = vmatpush.bf16.msra.mxu0 %v6305
    %6465 = vmatpush.bf16.msra.mxu0 %v6303
    %6466 = vmatpush.bf16.msra.mxu0 %v6301
    %6467 = vmatpush.bf16.msra.mxu0 %v6299
    %6468 = vmatpush.bf16.msra.mxu0 %v6297
    %6469 = vmatpush.bf16.msra.mxu0 %v6295
    %6470 = vmatpush.bf16.msra.mxu0 %v6293
    %6471 = vmatpush.bf16.msra.mxu0 %v6291
    %6472 = vmatmul.bf16.gmra.mxu0 %v6000
    %v6473 = vpop.f32.mrf.mxu0
    %v6474 = vadd.f32 %v6461, %v6473
    %v6475 = vpop.f32.mrf.mxu0
    %6476 = vdwg.mxu0
    %6477 = vmatpush.bf16.msra.mxu0 %v6321
    %6478 = vmatpush.bf16.msra.mxu0 %v6319
    %6479 = vmatpush.bf16.msra.mxu0 %v6317
    %6480 = vmatpush.bf16.msra.mxu0 %v6315
    %6481 = vmatpush.bf16.msra.mxu0 %v6313
    %6482 = vmatpush.bf16.msra.mxu0 %v6311
    %6483 = vmatpush.bf16.msra.mxu0 %v6309
    %6484 = vmatpush.bf16.msra.mxu0 %v6307
    %6485 = vmatmul.bf16.gmra.mxu0 %v6001
    %v6486 = vpop.f32.mrf.mxu0
    %v6487 = vadd.f32 %v6474, %v6486
    %v6488 = vpop.f32.mrf.mxu0
    %6489 = vdwg.mxu0
    %v6490 = vmul.f32 %v6435, 0.2
    %v6491 = vmul.f32 %v6487, 0.2
    %v6492 = vmax.f32 %v6435, %v6490
    %v6493 = vmax.f32 %v6487, %v6491
    %v6494 = vld [vmem:[#allocation9] sm:$0x3]
    %v6496 = vperm.slane %v6494, 0
    %v6497 = vperm.slane %v6494, 1
    %v6500 = vmul.f32 %v6492, %v6496
    %v6501 = vmul.f32 %v6493, %v6497
    %v6502 = vadd.f32 %v6500, %v6501
    %6503 = vadd.xlane.f32.xlu0 %v6502
    %v6504 = vpop.xlane.xlu0 %6503
    %v6505 = vsub.f32 0.0, %v6504
    %v6506 = vmul.f32 %v6505, 1.442695
    %v6507 = vpow.pop %v6506
    %v6508 = vadd.f32 %v6507, 1.0
    %v6509 = vrcp.pop %v6508
    %v6510 = vmul.f32 %v6508, %v6509
    %v6511 = vsub.f32 1.0, %v6510
    %v6512 = vmul.f32 %v6509, %v6511
    %v6513 = vadd.f32 %v6509, %v6512
    %vm6514 = vweird.f32 %v6508
    %vm6515 = vweird.f32 %v6509
    %vm6516 = vmor %vm6514, %vm6515
    %v6517 = vsel %vm6516, %v6509, %v6513
    %v6518 = vand.u32 2147483647, %v6508
    %vm6519 = vcmp.eq.f32.partialorder %v6518, 8.507059e+37
    %v6520 = vand.u32 %v6508, 2147483648
    %v6521 = vor.u32 1.1754944e-38, %v6520
    %v6522 = vsel %vm6519, %v6521, %v6517
    %v6523 = vmul.f32 1.0, %v6522
    %vm6524 = vcmask 7168
    %6525 = vst.msk [vmem:[%s5] sm:$0xff] %vm6524, %v6523
    // Predicated region
    $region42: #{tpu_custom_call.1} parent=1 // pred_check
      _
    $region43: #{tpu_custom_call.1} parent=1 // pred_check_branch
      %6527 = sbr.rel (0) target = $region45
    $region44: #{tpu_custom_call.1} parent=1 // pred_region
      _
    $region45: #{tpu_custom_call.1} parent=1 // pred_fallthru
      _
    // Predicated region
    $region46: #{tpu_custom_call.1} parent=1 // pred_check
      _
    $region47: #{tpu_custom_call.1} parent=1 // pred_check_branch
      %6529 = sbr.rel (0) target = $region49
    $region48: #{tpu_custom_call.1} parent=1 // pred_region
      _
    $region49: #{tpu_custom_call.1} parent=1 // pred_fallthru
      _
    %6530 = vsyncpa [#allocation3], 1
    %6531 = vsyncpa [#allocation5], 1
    %6532 = vsyncpa [#allocation8], 1

</llo_original>
